<compile_context>
chip_gen: v6e
topology: v6e:2x2x1
jax: 0.10.0
libtpu: 0.0.40
codegen_flags: <defaults>
</compile_context>

<pallas_src>
import functools
import math

import numpy as np
import jax
import jax.numpy as jnp
from jax import lax
from jax.experimental import pallas as pl
from jax.experimental.pallas import tpu as pltpu


def _prob_attention_kernel(q_ref, k_ref, v_ref, vcum_ref, cnt_ref, o_ref, *,
                           n_top, scale, L_Q, L_K, H, D):
    f32 = jnp.float32
    neg_inf = f32(-jnp.inf)

    qf = q_ref[0]                                   # (L_Q, H*D) bf16, lane-dense
    kf = k_ref[0]                                   # (L_K, H*D) bf16
    vf = v_ref[0]                                   # (L_K, H*D) bf16
    vcumf = vcum_ref[0]                             # (L_K, H*D) f32 prefix-sum of V
    cnt = cnt_ref[...].astype(f32)                  # (L_Q, L_K) sample multiplicities
    sampled = cnt > 0.0

    # Iotas / constants hoisted out of the head loop (JAX does not CSE broadcasts).
    col_k = lax.broadcasted_iota(jnp.int32, (1, L_K), 1).astype(f32)   # key index
    col_q = lax.broadcasted_iota(jnp.int32, (1, L_Q), 1).astype(f32)   # query index
    eye_q = (lax.broadcasted_iota(jnp.int32, (L_Q, L_Q), 0)
             == lax.broadcasted_iota(jnp.int32, (L_Q, L_Q), 1)).astype(f32)
    slot_iota = lax.broadcasted_iota(jnp.int32, (n_top, 1), 0)         # top-u slot id
    ones_col = jnp.ones((n_top, 1), f32)
    inv_lk = f32(1.0 / L_K)
    scale_f = f32(scale)

    # Static per-head loop.  Each head's context is stored straight into its
    # D-wide lane slice of the output block, so no head's temporaries stay live
    # past its store and there is no final lane concat.
    for h in range(H):
        lo, hi = h * D, (h + 1) * D
        q_h = qf[:, lo:hi]                          # (L_Q, D) bf16
        k_h = kf[:, lo:hi]                          # (L_K, D) bf16
        v_h = vf[:, lo:hi]                          # (L_K, D) bf16
        vcum_h = vcumf[:, lo:hi]                    # (L_Q, D) f32

        # Dense per-head scores (needed for the sparsity measure M and as the
        # source of the gathered top-u rows).  Standard QK^T dot_general.
        s = lax.dot_general(q_h, k_h, (((1,), (1,)), ((), ())),
                            preferred_element_type=f32)                # (L_Q, L_K)

        # Sparsity measure: M = max_sampled(S) - sum_sampled(S) / L_K.
        smax = jnp.max(jnp.where(sampled, s, neg_inf), axis=-1, keepdims=True)
        ssum = jnp.sum(cnt * s, axis=-1, keepdims=True)
        m = smax - ssum * inv_lk                                        # (L_Q, 1)

        # Lane-orient M once (one masked multiply + sublane reduce); the old
        # O(L^2) gt/eq rank matrices are gone.
        m_row = jnp.sum(eye_q * m, axis=0, keepdims=True)               # (1, L_Q)

        # Top-u selection: n_top-step threshold extraction, O(u*L_Q) VALU work.
        avail = jnp.ones((1, L_Q), f32)
        onehot = jnp.zeros((n_top, L_Q), f32)                           # (u, L_Q)
        for t in range(n_top):
            live = avail > 0.0
            cur = jnp.max(jnp.where(live, m_row, neg_inf), axis=-1, keepdims=True)
            cand = jnp.logical_and(live, m_row == cur)
            pos = jnp.min(jnp.where(cand, col_q, f32(L_Q)), axis=-1, keepdims=True)
            hit = (col_q == pos).astype(f32)                            # (1, L_Q) one-hot
            avail = avail - hit
            onehot = onehot + hit * (slot_iota == t).astype(f32)

        # Gather the u selected rows of S with a small MXU matmul (one-hot rows),
        # then run the ProbMask softmax + attn@V on (u, L_K) only.
        s_sel = lax.dot_general(onehot, s, (((1,), (0,)), ((), ())),
                                preferred_element_type=f32)             # (u, L_K)
        q_pos = jnp.sum(onehot * col_q, axis=-1, keepdims=True)         # (u, 1) query idx

        masked = jnp.where(col_k > q_pos, neg_inf, s_sel * scale_f)     # causal ProbMask
        rmax = jnp.max(masked, axis=-1, keepdims=True)
        p = jnp.exp(masked - rmax)
        denom = jnp.sum(p, axis=-1, keepdims=True)
        attn = p * pl.reciprocal(denom, approx=True)                    # EUP slot

        new_ctx = jnp.dot(attn.astype(v_h.dtype), v_h,
                          preferred_element_type=f32)                   # (u, D)

        # Scatter the u rows back over cumsum(V); the appended ones column gives an
        # exact 0/1 selected-row mask out of the same one-hot matmul.
        aug = jnp.concatenate([new_ctx, ones_col], axis=-1)             # (u, D+1)
        scat = lax.dot_general(onehot, aug, (((0,), (0,)), ((), ())),
                               preferred_element_type=f32)              # (L_Q, D+1)
        ctx_h = jnp.where(scat[:, D:] > 0.5, scat[:, :D], vcum_h)       # (L_Q, D)

        o_ref[0, :, lo:hi] = ctx_h.astype(o_ref.dtype)


def prob_attention_pallas(queries, keys, values, counts, n_top, scale):
    """queries/keys/values: (B, L, H, D) exactly as the PyTorch module receives them."""
    B, L_Q, H, D = queries.shape
    _, L_K, _, _ = keys.shape
    if L_Q != L_K:
        raise ValueError("masked (ProbMask) ProbAttention path requires L_Q == L_K")
    n_top = int(n_top)
    if not (1 <= n_top <= L_Q):
        raise ValueError("n_top must be in [1, L_Q]")
    if float(jnp.max(counts)) > 256.0:
        raise ValueError("sample multiplicities > 256 are not exact in bf16")
    HD = H * D

    # Free contiguous minor-dim merges — no transposes, no extra HBM passes.
    q = queries.reshape(B, L_Q, HD)
    k = keys.reshape(B, L_K, HD)
    v = values.reshape(B, L_K, HD)
    # Host-side prefix sum of V (the mask_flag=True context initializer); f32 to
    # match the reference cumsum exactly.
    vcum = jnp.cumsum(values.astype(jnp.float32), axis=1).reshape(B, L_K, HD)
    cnt = counts.astype(jnp.bfloat16)   # small integer multiplicities, exact in bf16

    kern = functools.partial(_prob_attention_kernel, n_top=n_top,
                             scale=float(scale), L_Q=L_Q, L_K=L_K, H=H, D=D)

    out = pl.pallas_call(
        kern,
        out_shape=jax.ShapeDtypeStruct((B, L_Q, HD), jnp.float32),
        grid=(B,),
        in_specs=[
            pl.BlockSpec((1, L_Q, HD), lambda b: (b, 0, 0)),
            pl.BlockSpec((1, L_K, HD), lambda b: (b, 0, 0)),
            pl.BlockSpec((1, L_K, HD), lambda b: (b, 0, 0)),
            pl.BlockSpec((1, L_K, HD), lambda b: (b, 0, 0)),
            # counts is shared by every step: constant block index -> DMA'd once.
            pl.BlockSpec((L_Q, L_K), lambda b: (0, 0)),
        ],
        out_specs=pl.BlockSpec((1, L_Q, HD), lambda b: (b, 0, 0)),
        compiler_params=pltpu.CompilerParams(
            dimension_semantics=("parallel",),
            vmem_limit_bytes=64 * 1024 * 1024),
    )(q, k, v, vcum, cnt)

    ctx = out.reshape(B, L_Q, H, D)     # free reshape back to (B, L, H, D)
    return ctx, None                    # output_attention=False -> None


def prob_attention_ref(queries, keys, values, counts, n_top, scale):
    """Pure-JAX reference mirroring the PyTorch forward (mask_flag=True), f32 math."""
    B, L_Q, H, D = queries.shape
    _, L_K, _, _ = keys.shape
    q = jnp.transpose(queries.astype(jnp.float32), (0, 2, 1, 3))
    k = jnp.transpose(keys.astype(jnp.float32), (0, 2, 1, 3))
    v = jnp.transpose(values.astype(jnp.float32), (0, 2, 1, 3))
    counts = counts.astype(jnp.float32)

    s = jnp.einsum('bhqd,bhkd->bhqk', q, k, precision=lax.Precision.HIGHEST)
    smax = jnp.max(jnp.where(counts[None, None] > 0, s, -jnp.inf), axis=-1)
    ssum = jnp.sum(counts[None, None] * s, axis=-1)
    m_measure = smax - ssum / L_K
    idx = lax.top_k(m_measure, int(n_top))[1]                    # (B, H, u)

    scores = jnp.take_along_axis(s, idx[..., None], axis=2) * scale
    mask = jnp.arange(L_K)[None, None, None, :] > idx[..., None]
    scores = jnp.where(mask, -jnp.inf, scores)
    attn = jax.nn.softmax(scores, axis=-1)
    newc = jnp.einsum('bhuk,bhkd->bhud', attn, v, precision=lax.Precision.HIGHEST)

    ctx = jnp.cumsum(v, axis=2)
    b_ix = jnp.arange(B)[:, None, None]
    h_ix = jnp.arange(H)[None, :, None]
    ctx = ctx.at[b_ix, h_ix, idx].set(newc)
    return jnp.transpose(ctx, (0, 2, 1, 3)), None


if __name__ == "__main__":
    key = jax.random.PRNGKey(0)
    kq, kk, kv, ks = jax.random.split(key, 4)

    B, L, H, D = 2, 16, 4, 32          # queries/keys/values: (B, L, H, D); H*D = 128
    queries32 = jax.random.normal(kq, (B, L, H, D), jnp.float32)
    keys32 = jax.random.normal(kk, (B, L, H, D), jnp.float32)
    values32 = jax.random.normal(kv, (B, L, H, D), jnp.float32)

    # bf16 activations: native MXU input dtype; kernel accumulates in f32.
    queries = queries32.astype(jnp.bfloat16)
    keys_ = keys32.astype(jnp.bfloat16)
    values = values32.astype(jnp.bfloat16)

    factor = 5
    L_Q = L_K = L
    U_part = min(int(factor * np.ceil(np.log(L_K))), L_K)   # sample_k
    n_top = min(int(factor * np.ceil(np.log(L_Q))), L_Q)    # u
    scale = 1.0 / math.sqrt(D)

    # Deterministic replacement for torch.randint key sampling (shared over B, H);
    # converted to per-(query, key) multiplicities so the kernel needs no gather.
    sample_idx = jax.random.randint(ks, (L_Q, U_part), 0, L_K)
    counts = jnp.zeros((L_Q, L_K), jnp.float32).at[
        jnp.arange(L_Q)[:, None], sample_idx].add(1.0)

    ctx, attn = prob_attention_pallas(queries, keys_, values, counts, n_top, scale)
    ctx = jax.block_until_ready(ctx)

    ctx_ref, _ = prob_attention_ref(queries, keys_, values, counts, n_top, scale)

    assert ctx.shape == (B, L, H, D)
    assert attn is None
    assert bool(jnp.all(jnp.isfinite(ctx)))
    if not jnp.allclose(ctx, ctx_ref, rtol=1e-2, atol=1e-2):
        raise AssertionError("Pallas kernel output mismatch vs JAX reference")
    print("KERNEL_OK")
</pallas_src>

<mosaic_0001>
module attributes {stable_mosaic.version = 11 : i64} {
  func.func @_prob_attention_kernel(%arg0: i32, %arg1: memref<1x16x128xbf16, #tpu.memory_space<vmem>>, %arg2: memref<1x16x128xbf16, #tpu.memory_space<vmem>>, %arg3: memref<1x16x128xbf16, #tpu.memory_space<vmem>>, %arg4: memref<1x16x128xf32, #tpu.memory_space<vmem>>, %arg5: memref<16x16xbf16, #tpu.memory_space<vmem>>, %arg6: memref<1x16x128xf32, #tpu.memory_space<vmem>>) attributes {dimension_semantics = [#tpu.dimension_semantics<parallel>], iteration_bounds = array<i64: 2>, scalar_prefetch = 0 : i64, scratch_operands = 0 : i64, tpu.core_type = #tpu.core_type<tc>, window_params = [{transform_indices = @transform_0, window_bounds = array<i64: 1, 16, 128>}, {transform_indices = @transform_1, window_bounds = array<i64: 1, 16, 128>}, {transform_indices = @transform_2, window_bounds = array<i64: 1, 16, 128>}, {transform_indices = @transform_3, window_bounds = array<i64: 1, 16, 128>}, {pipeline_mode = #tpu.pipeline_mode<synchronous>, transform_indices = @transform_4, window_bounds = array<i64: 16, 16>}, {transform_indices = @transform_5, window_bounds = array<i64: 1, 16, 128>}]} {
    %c0 = arith.constant 0 : index
    %c0_0 = arith.constant 0 : index
    %c0_1 = arith.constant 0 : index
    %0 = vector.load %arg1[%c0, %c0_0, %c0_1] : memref<1x16x128xbf16, #tpu.memory_space<vmem>>, vector<1x16x128xbf16>
    %1 = vector.shape_cast %0 : vector<1x16x128xbf16> to vector<16x128xbf16>
    %c0_2 = arith.constant 0 : index
    %c0_3 = arith.constant 0 : index
    %c0_4 = arith.constant 0 : index
    %2 = vector.load %arg2[%c0_2, %c0_3, %c0_4] : memref<1x16x128xbf16, #tpu.memory_space<vmem>>, vector<1x16x128xbf16>
    %3 = vector.shape_cast %2 : vector<1x16x128xbf16> to vector<16x128xbf16>
    %c0_5 = arith.constant 0 : index
    %c0_6 = arith.constant 0 : index
    %c0_7 = arith.constant 0 : index
    %4 = vector.load %arg3[%c0_5, %c0_6, %c0_7] : memref<1x16x128xbf16, #tpu.memory_space<vmem>>, vector<1x16x128xbf16>
    %5 = vector.shape_cast %4 : vector<1x16x128xbf16> to vector<16x128xbf16>
    %c0_8 = arith.constant 0 : index
    %c0_9 = arith.constant 0 : index
    %c0_10 = arith.constant 0 : index
    %6 = vector.load %arg4[%c0_8, %c0_9, %c0_10] : memref<1x16x128xf32, #tpu.memory_space<vmem>>, vector<1x16x128xf32>
    %7 = vector.shape_cast %6 : vector<1x16x128xf32> to vector<16x128xf32>
    %c0_11 = arith.constant 0 : index
    %c0_12 = arith.constant 0 : index
    %8 = vector.load %arg5[%c0_11, %c0_12] : memref<16x16xbf16, #tpu.memory_space<vmem>>, vector<16x16xbf16>
    %9 = arith.extf %8 : vector<16x16xbf16> to vector<16x16xf32>
    %cst = arith.constant 0.000000e+00 : f32
    %10 = vector.broadcast %cst : f32 to vector<16x16xf32>
    %11 = arith.cmpf ogt, %9, %10 : vector<16x16xf32>
    %12 = tpu.iota {dimensions = array<i32: 1>} : vector<1x16xi32>
    %13 = arith.sitofp %12 : vector<1x16xi32> to vector<1x16xf32>
    %14 = tpu.iota {dimensions = array<i32: 1>} : vector<1x16xi32>
    %15 = arith.sitofp %14 : vector<1x16xi32> to vector<1x16xf32>
    %16 = tpu.iota {dimensions = array<i32: 0>} : vector<16x16xi32>
    %17 = tpu.iota {dimensions = array<i32: 1>} : vector<16x16xi32>
    %18 = arith.cmpi eq, %16, %17 : vector<16x16xi32>
    %19 = arith.extui %18 : vector<16x16xi1> to vector<16x16xi32>
    %20 = arith.sitofp %19 : vector<16x16xi32> to vector<16x16xf32>
    %21 = tpu.iota {dimensions = array<i32: 0>} : vector<15x1xi32>
    %cst_13 = arith.constant 1.000000e+00 : f32
    %22 = vector.broadcast %cst_13 : f32 to vector<15x1xf32>
    %23 = vector.extract_strided_slice %1 {offsets = [0, 0], sizes = [16, 32], strides = [1, 1]} : vector<16x128xbf16> to vector<16x32xbf16>
    %24 = vector.extract_strided_slice %3 {offsets = [0, 0], sizes = [16, 32], strides = [1, 1]} : vector<16x128xbf16> to vector<16x32xbf16>
    %25 = vector.extract_strided_slice %5 {offsets = [0, 0], sizes = [16, 32], strides = [1, 1]} : vector<16x128xbf16> to vector<16x32xbf16>
    %26 = vector.extract_strided_slice %7 {offsets = [0, 0], sizes = [16, 32], strides = [1, 1]} : vector<16x128xf32> to vector<16x32xf32>
    %cst_14 = arith.constant dense<0.000000e+00> : vector<16x16xf32>
    %27 = tpu.matmul %23, %24, %cst_14 {dimension_numbers = #tpu.dot_dimension_numbers<[1], [1], [0], [0], [0, 0, 1, 0], [], []>} : vector<16x32xbf16>, vector<16x32xbf16>, vector<16x16xf32> -> vector<16x16xf32>
    %cst_15 = arith.constant 0xFF800000 : f32
    %28 = vector.broadcast %cst_15 : f32 to vector<16x16xf32>
    %29 = arith.select %11, %27, %28 : vector<16x16xi1>, vector<16x16xf32>
    %cst_16 = arith.constant dense<0xFF800000> : vector<16xf32>
    %30 = vector.multi_reduction <maximumf>, %29, %cst_16 [1] : vector<16x16xf32> to vector<16xf32>
    %31 = vector.shape_cast %30 : vector<16xf32> to vector<16x1xf32>
    %32 = arith.mulf %9, %27 : vector<16x16xf32>
    %cst_17 = arith.constant dense<0.000000e+00> : vector<16xf32>
    %33 = vector.multi_reduction <add>, %32, %cst_17 [1] : vector<16x16xf32> to vector<16xf32>
    %34 = vector.shape_cast %33 : vector<16xf32> to vector<16x1xf32>
    %cst_18 = arith.constant 6.250000e-02 : f32
    %35 = vector.broadcast %cst_18 : f32 to vector<16x1xf32>
    %36 = arith.mulf %34, %35 : vector<16x1xf32>
    %37 = arith.subf %31, %36 : vector<16x1xf32>
    %38 = vector.broadcast %37 : vector<16x1xf32> to vector<16x16xf32>
    %39 = arith.mulf %20, %38 : vector<16x16xf32>
    %cst_19 = arith.constant dense<0.000000e+00> : vector<16xf32>
    %40 = vector.multi_reduction <add>, %39, %cst_19 [0] : vector<16x16xf32> to vector<16xf32>
    %41 = vector.shape_cast %40 : vector<16xf32> to vector<1x16xf32>
    %cst_20 = arith.constant 1.000000e+00 : f32
    %42 = vector.broadcast %cst_20 : f32 to vector<1x16xf32>
    %cst_21 = arith.constant 0.000000e+00 : f32
    %43 = vector.broadcast %cst_21 : f32 to vector<15x16xf32>
    %cst_22 = arith.constant 0.000000e+00 : f32
    %44 = vector.broadcast %cst_22 : f32 to vector<1x16xf32>
    %45 = arith.cmpf ogt, %42, %44 : vector<1x16xf32>
    %cst_23 = arith.constant 0xFF800000 : f32
    %46 = vector.broadcast %cst_23 : f32 to vector<1x16xf32>
    %47 = arith.select %45, %41, %46 : vector<1x16xi1>, vector<1x16xf32>
    %cst_24 = arith.constant dense<0xFF800000> : vector<1xf32>
    %48 = vector.multi_reduction <maximumf>, %47, %cst_24 [1] : vector<1x16xf32> to vector<1xf32>
    %49 = vector.shape_cast %48 : vector<1xf32> to vector<1x1xf32>
    %50 = vector.broadcast %49 : vector<1x1xf32> to vector<1x16xf32>
    %51 = arith.cmpf oeq, %41, %50 : vector<1x16xf32>
    %52 = arith.andi %45, %51 : vector<1x16xi1>
    %cst_25 = arith.constant 1.600000e+01 : f32
    %53 = vector.broadcast %cst_25 : f32 to vector<1x16xf32>
    %54 = arith.select %52, %15, %53 : vector<1x16xi1>, vector<1x16xf32>
    %cst_26 = arith.constant dense<0x7F800000> : vector<1xf32>
    %55 = vector.multi_reduction <minimumf>, %54, %cst_26 [1] : vector<1x16xf32> to vector<1xf32>
    %56 = vector.shape_cast %55 : vector<1xf32> to vector<1x1xf32>
    %57 = vector.broadcast %56 : vector<1x1xf32> to vector<1x16xf32>
    %58 = arith.cmpf oeq, %15, %57 : vector<1x16xf32>
    %59 = arith.extui %58 : vector<1x16xi1> to vector<1x16xi32>
    %60 = arith.sitofp %59 : vector<1x16xi32> to vector<1x16xf32>
    %61 = arith.subf %42, %60 : vector<1x16xf32>
    %c0_i32 = arith.constant 0 : i32
    %62 = vector.broadcast %c0_i32 : i32 to vector<15x1xi32>
    %63 = arith.cmpi eq, %21, %62 : vector<15x1xi32>
    %64 = arith.extui %63 : vector<15x1xi1> to vector<15x1xi32>
    %65 = arith.sitofp %64 : vector<15x1xi32> to vector<15x1xf32>
    %66 = vector.broadcast %60 : vector<1x16xf32> to vector<15x16xf32>
    %67 = vector.broadcast %65 : vector<15x1xf32> to vector<15x16xf32>
    %68 = arith.mulf %66, %67 : vector<15x16xf32>
    %69 = arith.addf %43, %68 : vector<15x16xf32>
    %cst_27 = arith.constant 0.000000e+00 : f32
    %70 = vector.broadcast %cst_27 : f32 to vector<1x16xf32>
    %71 = arith.cmpf ogt, %61, %70 : vector<1x16xf32>
    %cst_28 = arith.constant 0xFF800000 : f32
    %72 = vector.broadcast %cst_28 : f32 to vector<1x16xf32>
    %73 = arith.select %71, %41, %72 : vector<1x16xi1>, vector<1x16xf32>
    %cst_29 = arith.constant dense<0xFF800000> : vector<1xf32>
    %74 = vector.multi_reduction <maximumf>, %73, %cst_29 [1] : vector<1x16xf32> to vector<1xf32>
    %75 = vector.shape_cast %74 : vector<1xf32> to vector<1x1xf32>
    %76 = vector.broadcast %75 : vector<1x1xf32> to vector<1x16xf32>
    %77 = arith.cmpf oeq, %41, %76 : vector<1x16xf32>
    %78 = arith.andi %71, %77 : vector<1x16xi1>
    %cst_30 = arith.constant 1.600000e+01 : f32
    %79 = vector.broadcast %cst_30 : f32 to vector<1x16xf32>
    %80 = arith.select %78, %15, %79 : vector<1x16xi1>, vector<1x16xf32>
    %cst_31 = arith.constant dense<0x7F800000> : vector<1xf32>
    %81 = vector.multi_reduction <minimumf>, %80, %cst_31 [1] : vector<1x16xf32> to vector<1xf32>
    %82 = vector.shape_cast %81 : vector<1xf32> to vector<1x1xf32>
    %83 = vector.broadcast %82 : vector<1x1xf32> to vector<1x16xf32>
    %84 = arith.cmpf oeq, %15, %83 : vector<1x16xf32>
    %85 = arith.extui %84 : vector<1x16xi1> to vector<1x16xi32>
    %86 = arith.sitofp %85 : vector<1x16xi32> to vector<1x16xf32>
    %87 = arith.subf %61, %86 : vector<1x16xf32>
    %c1_i32 = arith.constant 1 : i32
    %88 = vector.broadcast %c1_i32 : i32 to vector<15x1xi32>
    %89 = arith.cmpi eq, %21, %88 : vector<15x1xi32>
    %90 = arith.extui %89 : vector<15x1xi1> to vector<15x1xi32>
    %91 = arith.sitofp %90 : vector<15x1xi32> to vector<15x1xf32>
    %92 = vector.broadcast %86 : vector<1x16xf32> to vector<15x16xf32>
    %93 = vector.broadcast %91 : vector<15x1xf32> to vector<15x16xf32>
    %94 = arith.mulf %92, %93 : vector<15x16xf32>
    %95 = arith.addf %69, %94 : vector<15x16xf32>
    %cst_32 = arith.constant 0.000000e+00 : f32
    %96 = vector.broadcast %cst_32 : f32 to vector<1x16xf32>
    %97 = arith.cmpf ogt, %87, %96 : vector<1x16xf32>
    %cst_33 = arith.constant 0xFF800000 : f32
    %98 = vector.broadcast %cst_33 : f32 to vector<1x16xf32>
    %99 = arith.select %97, %41, %98 : vector<1x16xi1>, vector<1x16xf32>
    %cst_34 = arith.constant dense<0xFF800000> : vector<1xf32>
    %100 = vector.multi_reduction <maximumf>, %99, %cst_34 [1] : vector<1x16xf32> to vector<1xf32>
    %101 = vector.shape_cast %100 : vector<1xf32> to vector<1x1xf32>
    %102 = vector.broadcast %101 : vector<1x1xf32> to vector<1x16xf32>
    %103 = arith.cmpf oeq, %41, %102 : vector<1x16xf32>
    %104 = arith.andi %97, %103 : vector<1x16xi1>
    %cst_35 = arith.constant 1.600000e+01 : f32
    %105 = vector.broadcast %cst_35 : f32 to vector<1x16xf32>
    %106 = arith.select %104, %15, %105 : vector<1x16xi1>, vector<1x16xf32>
    %cst_36 = arith.constant dense<0x7F800000> : vector<1xf32>
    %107 = vector.multi_reduction <minimumf>, %106, %cst_36 [1] : vector<1x16xf32> to vector<1xf32>
    %108 = vector.shape_cast %107 : vector<1xf32> to vector<1x1xf32>
    %109 = vector.broadcast %108 : vector<1x1xf32> to vector<1x16xf32>
    %110 = arith.cmpf oeq, %15, %109 : vector<1x16xf32>
    %111 = arith.extui %110 : vector<1x16xi1> to vector<1x16xi32>
    %112 = arith.sitofp %111 : vector<1x16xi32> to vector<1x16xf32>
    %113 = arith.subf %87, %112 : vector<1x16xf32>
    %c2_i32 = arith.constant 2 : i32
    %114 = vector.broadcast %c2_i32 : i32 to vector<15x1xi32>
    %115 = arith.cmpi eq, %21, %114 : vector<15x1xi32>
    %116 = arith.extui %115 : vector<15x1xi1> to vector<15x1xi32>
    %117 = arith.sitofp %116 : vector<15x1xi32> to vector<15x1xf32>
    %118 = vector.broadcast %112 : vector<1x16xf32> to vector<15x16xf32>
    %119 = vector.broadcast %117 : vector<15x1xf32> to vector<15x16xf32>
    %120 = arith.mulf %118, %119 : vector<15x16xf32>
    %121 = arith.addf %95, %120 : vector<15x16xf32>
    %cst_37 = arith.constant 0.000000e+00 : f32
    %122 = vector.broadcast %cst_37 : f32 to vector<1x16xf32>
    %123 = arith.cmpf ogt, %113, %122 : vector<1x16xf32>
    %cst_38 = arith.constant 0xFF800000 : f32
    %124 = vector.broadcast %cst_38 : f32 to vector<1x16xf32>
    %125 = arith.select %123, %41, %124 : vector<1x16xi1>, vector<1x16xf32>
    %cst_39 = arith.constant dense<0xFF800000> : vector<1xf32>
    %126 = vector.multi_reduction <maximumf>, %125, %cst_39 [1] : vector<1x16xf32> to vector<1xf32>
    %127 = vector.shape_cast %126 : vector<1xf32> to vector<1x1xf32>
    %128 = vector.broadcast %127 : vector<1x1xf32> to vector<1x16xf32>
    %129 = arith.cmpf oeq, %41, %128 : vector<1x16xf32>
    %130 = arith.andi %123, %129 : vector<1x16xi1>
    %cst_40 = arith.constant 1.600000e+01 : f32
    %131 = vector.broadcast %cst_40 : f32 to vector<1x16xf32>
    %132 = arith.select %130, %15, %131 : vector<1x16xi1>, vector<1x16xf32>
    %cst_41 = arith.constant dense<0x7F800000> : vector<1xf32>
    %133 = vector.multi_reduction <minimumf>, %132, %cst_41 [1] : vector<1x16xf32> to vector<1xf32>
    %134 = vector.shape_cast %133 : vector<1xf32> to vector<1x1xf32>
    %135 = vector.broadcast %134 : vector<1x1xf32> to vector<1x16xf32>
    %136 = arith.cmpf oeq, %15, %135 : vector<1x16xf32>
    %137 = arith.extui %136 : vector<1x16xi1> to vector<1x16xi32>
    %138 = arith.sitofp %137 : vector<1x16xi32> to vector<1x16xf32>
    %139 = arith.subf %113, %138 : vector<1x16xf32>
    %c3_i32 = arith.constant 3 : i32
    %140 = vector.broadcast %c3_i32 : i32 to vector<15x1xi32>
    %141 = arith.cmpi eq, %21, %140 : vector<15x1xi32>
    %142 = arith.extui %141 : vector<15x1xi1> to vector<15x1xi32>
    %143 = arith.sitofp %142 : vector<15x1xi32> to vector<15x1xf32>
    %144 = vector.broadcast %138 : vector<1x16xf32> to vector<15x16xf32>
    %145 = vector.broadcast %143 : vector<15x1xf32> to vector<15x16xf32>
    %146 = arith.mulf %144, %145 : vector<15x16xf32>
    %147 = arith.addf %121, %146 : vector<15x16xf32>
    %cst_42 = arith.constant 0.000000e+00 : f32
    %148 = vector.broadcast %cst_42 : f32 to vector<1x16xf32>
    %149 = arith.cmpf ogt, %139, %148 : vector<1x16xf32>
    %cst_43 = arith.constant 0xFF800000 : f32
    %150 = vector.broadcast %cst_43 : f32 to vector<1x16xf32>
    %151 = arith.select %149, %41, %150 : vector<1x16xi1>, vector<1x16xf32>
    %cst_44 = arith.constant dense<0xFF800000> : vector<1xf32>
    %152 = vector.multi_reduction <maximumf>, %151, %cst_44 [1] : vector<1x16xf32> to vector<1xf32>
    %153 = vector.shape_cast %152 : vector<1xf32> to vector<1x1xf32>
    %154 = vector.broadcast %153 : vector<1x1xf32> to vector<1x16xf32>
    %155 = arith.cmpf oeq, %41, %154 : vector<1x16xf32>
    %156 = arith.andi %149, %155 : vector<1x16xi1>
    %cst_45 = arith.constant 1.600000e+01 : f32
    %157 = vector.broadcast %cst_45 : f32 to vector<1x16xf32>
    %158 = arith.select %156, %15, %157 : vector<1x16xi1>, vector<1x16xf32>
    %cst_46 = arith.constant dense<0x7F800000> : vector<1xf32>
    %159 = vector.multi_reduction <minimumf>, %158, %cst_46 [1] : vector<1x16xf32> to vector<1xf32>
    %160 = vector.shape_cast %159 : vector<1xf32> to vector<1x1xf32>
    %161 = vector.broadcast %160 : vector<1x1xf32> to vector<1x16xf32>
    %162 = arith.cmpf oeq, %15, %161 : vector<1x16xf32>
    %163 = arith.extui %162 : vector<1x16xi1> to vector<1x16xi32>
    %164 = arith.sitofp %163 : vector<1x16xi32> to vector<1x16xf32>
    %165 = arith.subf %139, %164 : vector<1x16xf32>
    %c4_i32 = arith.constant 4 : i32
    %166 = vector.broadcast %c4_i32 : i32 to vector<15x1xi32>
    %167 = arith.cmpi eq, %21, %166 : vector<15x1xi32>
    %168 = arith.extui %167 : vector<15x1xi1> to vector<15x1xi32>
    %169 = arith.sitofp %168 : vector<15x1xi32> to vector<15x1xf32>
    %170 = vector.broadcast %164 : vector<1x16xf32> to vector<15x16xf32>
    %171 = vector.broadcast %169 : vector<15x1xf32> to vector<15x16xf32>
    %172 = arith.mulf %170, %171 : vector<15x16xf32>
    %173 = arith.addf %147, %172 : vector<15x16xf32>
    %cst_47 = arith.constant 0.000000e+00 : f32
    %174 = vector.broadcast %cst_47 : f32 to vector<1x16xf32>
    %175 = arith.cmpf ogt, %165, %174 : vector<1x16xf32>
    %cst_48 = arith.constant 0xFF800000 : f32
    %176 = vector.broadcast %cst_48 : f32 to vector<1x16xf32>
    %177 = arith.select %175, %41, %176 : vector<1x16xi1>, vector<1x16xf32>
    %cst_49 = arith.constant dense<0xFF800000> : vector<1xf32>
    %178 = vector.multi_reduction <maximumf>, %177, %cst_49 [1] : vector<1x16xf32> to vector<1xf32>
    %179 = vector.shape_cast %178 : vector<1xf32> to vector<1x1xf32>
    %180 = vector.broadcast %179 : vector<1x1xf32> to vector<1x16xf32>
    %181 = arith.cmpf oeq, %41, %180 : vector<1x16xf32>
    %182 = arith.andi %175, %181 : vector<1x16xi1>
    %cst_50 = arith.constant 1.600000e+01 : f32
    %183 = vector.broadcast %cst_50 : f32 to vector<1x16xf32>
    %184 = arith.select %182, %15, %183 : vector<1x16xi1>, vector<1x16xf32>
    %cst_51 = arith.constant dense<0x7F800000> : vector<1xf32>
    %185 = vector.multi_reduction <minimumf>, %184, %cst_51 [1] : vector<1x16xf32> to vector<1xf32>
    %186 = vector.shape_cast %185 : vector<1xf32> to vector<1x1xf32>
    %187 = vector.broadcast %186 : vector<1x1xf32> to vector<1x16xf32>
    %188 = arith.cmpf oeq, %15, %187 : vector<1x16xf32>
    %189 = arith.extui %188 : vector<1x16xi1> to vector<1x16xi32>
    %190 = arith.sitofp %189 : vector<1x16xi32> to vector<1x16xf32>
    %191 = arith.subf %165, %190 : vector<1x16xf32>
    %c5_i32 = arith.constant 5 : i32
    %192 = vector.broadcast %c5_i32 : i32 to vector<15x1xi32>
    %193 = arith.cmpi eq, %21, %192 : vector<15x1xi32>
    %194 = arith.extui %193 : vector<15x1xi1> to vector<15x1xi32>
    %195 = arith.sitofp %194 : vector<15x1xi32> to vector<15x1xf32>
    %196 = vector.broadcast %190 : vector<1x16xf32> to vector<15x16xf32>
    %197 = vector.broadcast %195 : vector<15x1xf32> to vector<15x16xf32>
    %198 = arith.mulf %196, %197 : vector<15x16xf32>
    %199 = arith.addf %173, %198 : vector<15x16xf32>
    %cst_52 = arith.constant 0.000000e+00 : f32
    %200 = vector.broadcast %cst_52 : f32 to vector<1x16xf32>
    %201 = arith.cmpf ogt, %191, %200 : vector<1x16xf32>
    %cst_53 = arith.constant 0xFF800000 : f32
    %202 = vector.broadcast %cst_53 : f32 to vector<1x16xf32>
    %203 = arith.select %201, %41, %202 : vector<1x16xi1>, vector<1x16xf32>
    %cst_54 = arith.constant dense<0xFF800000> : vector<1xf32>
    %204 = vector.multi_reduction <maximumf>, %203, %cst_54 [1] : vector<1x16xf32> to vector<1xf32>
    %205 = vector.shape_cast %204 : vector<1xf32> to vector<1x1xf32>
    %206 = vector.broadcast %205 : vector<1x1xf32> to vector<1x16xf32>
    %207 = arith.cmpf oeq, %41, %206 : vector<1x16xf32>
    %208 = arith.andi %201, %207 : vector<1x16xi1>
    %cst_55 = arith.constant 1.600000e+01 : f32
    %209 = vector.broadcast %cst_55 : f32 to vector<1x16xf32>
    %210 = arith.select %208, %15, %209 : vector<1x16xi1>, vector<1x16xf32>
    %cst_56 = arith.constant dense<0x7F800000> : vector<1xf32>
    %211 = vector.multi_reduction <minimumf>, %210, %cst_56 [1] : vector<1x16xf32> to vector<1xf32>
    %212 = vector.shape_cast %211 : vector<1xf32> to vector<1x1xf32>
    %213 = vector.broadcast %212 : vector<1x1xf32> to vector<1x16xf32>
    %214 = arith.cmpf oeq, %15, %213 : vector<1x16xf32>
    %215 = arith.extui %214 : vector<1x16xi1> to vector<1x16xi32>
    %216 = arith.sitofp %215 : vector<1x16xi32> to vector<1x16xf32>
    %217 = arith.subf %191, %216 : vector<1x16xf32>
    %c6_i32 = arith.constant 6 : i32
    %218 = vector.broadcast %c6_i32 : i32 to vector<15x1xi32>
    %219 = arith.cmpi eq, %21, %218 : vector<15x1xi32>
    %220 = arith.extui %219 : vector<15x1xi1> to vector<15x1xi32>
    %221 = arith.sitofp %220 : vector<15x1xi32> to vector<15x1xf32>
    %222 = vector.broadcast %216 : vector<1x16xf32> to vector<15x16xf32>
    %223 = vector.broadcast %221 : vector<15x1xf32> to vector<15x16xf32>
    %224 = arith.mulf %222, %223 : vector<15x16xf32>
    %225 = arith.addf %199, %224 : vector<15x16xf32>
    %cst_57 = arith.constant 0.000000e+00 : f32
    %226 = vector.broadcast %cst_57 : f32 to vector<1x16xf32>
    %227 = arith.cmpf ogt, %217, %226 : vector<1x16xf32>
    %cst_58 = arith.constant 0xFF800000 : f32
    %228 = vector.broadcast %cst_58 : f32 to vector<1x16xf32>
    %229 = arith.select %227, %41, %228 : vector<1x16xi1>, vector<1x16xf32>
    %cst_59 = arith.constant dense<0xFF800000> : vector<1xf32>
    %230 = vector.multi_reduction <maximumf>, %229, %cst_59 [1] : vector<1x16xf32> to vector<1xf32>
    %231 = vector.shape_cast %230 : vector<1xf32> to vector<1x1xf32>
    %232 = vector.broadcast %231 : vector<1x1xf32> to vector<1x16xf32>
    %233 = arith.cmpf oeq, %41, %232 : vector<1x16xf32>
    %234 = arith.andi %227, %233 : vector<1x16xi1>
    %cst_60 = arith.constant 1.600000e+01 : f32
    %235 = vector.broadcast %cst_60 : f32 to vector<1x16xf32>
    %236 = arith.select %234, %15, %235 : vector<1x16xi1>, vector<1x16xf32>
    %cst_61 = arith.constant dense<0x7F800000> : vector<1xf32>
    %237 = vector.multi_reduction <minimumf>, %236, %cst_61 [1] : vector<1x16xf32> to vector<1xf32>
    %238 = vector.shape_cast %237 : vector<1xf32> to vector<1x1xf32>
    %239 = vector.broadcast %238 : vector<1x1xf32> to vector<1x16xf32>
    %240 = arith.cmpf oeq, %15, %239 : vector<1x16xf32>
    %241 = arith.extui %240 : vector<1x16xi1> to vector<1x16xi32>
    %242 = arith.sitofp %241 : vector<1x16xi32> to vector<1x16xf32>
    %243 = arith.subf %217, %242 : vector<1x16xf32>
    %c7_i32 = arith.constant 7 : i32
    %244 = vector.broadcast %c7_i32 : i32 to vector<15x1xi32>
    %245 = arith.cmpi eq, %21, %244 : vector<15x1xi32>
    %246 = arith.extui %245 : vector<15x1xi1> to vector<15x1xi32>
    %247 = arith.sitofp %246 : vector<15x1xi32> to vector<15x1xf32>
    %248 = vector.broadcast %242 : vector<1x16xf32> to vector<15x16xf32>
    %249 = vector.broadcast %247 : vector<15x1xf32> to vector<15x16xf32>
    %250 = arith.mulf %248, %249 : vector<15x16xf32>
    %251 = arith.addf %225, %250 : vector<15x16xf32>
    %cst_62 = arith.constant 0.000000e+00 : f32
    %252 = vector.broadcast %cst_62 : f32 to vector<1x16xf32>
    %253 = arith.cmpf ogt, %243, %252 : vector<1x16xf32>
    %cst_63 = arith.constant 0xFF800000 : f32
    %254 = vector.broadcast %cst_63 : f32 to vector<1x16xf32>
    %255 = arith.select %253, %41, %254 : vector<1x16xi1>, vector<1x16xf32>
    %cst_64 = arith.constant dense<0xFF800000> : vector<1xf32>
    %256 = vector.multi_reduction <maximumf>, %255, %cst_64 [1] : vector<1x16xf32> to vector<1xf32>
    %257 = vector.shape_cast %256 : vector<1xf32> to vector<1x1xf32>
    %258 = vector.broadcast %257 : vector<1x1xf32> to vector<1x16xf32>
    %259 = arith.cmpf oeq, %41, %258 : vector<1x16xf32>
    %260 = arith.andi %253, %259 : vector<1x16xi1>
    %cst_65 = arith.constant 1.600000e+01 : f32
    %261 = vector.broadcast %cst_65 : f32 to vector<1x16xf32>
    %262 = arith.select %260, %15, %261 : vector<1x16xi1>, vector<1x16xf32>
    %cst_66 = arith.constant dense<0x7F800000> : vector<1xf32>
    %263 = vector.multi_reduction <minimumf>, %262, %cst_66 [1] : vector<1x16xf32> to vector<1xf32>
    %264 = vector.shape_cast %263 : vector<1xf32> to vector<1x1xf32>
    %265 = vector.broadcast %264 : vector<1x1xf32> to vector<1x16xf32>
    %266 = arith.cmpf oeq, %15, %265 : vector<1x16xf32>
    %267 = arith.extui %266 : vector<1x16xi1> to vector<1x16xi32>
    %268 = arith.sitofp %267 : vector<1x16xi32> to vector<1x16xf32>
    %269 = arith.subf %243, %268 : vector<1x16xf32>
    %c8_i32 = arith.constant 8 : i32
    %270 = vector.broadcast %c8_i32 : i32 to vector<15x1xi32>
    %271 = arith.cmpi eq, %21, %270 : vector<15x1xi32>
    %272 = arith.extui %271 : vector<15x1xi1> to vector<15x1xi32>
    %273 = arith.sitofp %272 : vector<15x1xi32> to vector<15x1xf32>
    %274 = vector.broadcast %268 : vector<1x16xf32> to vector<15x16xf32>
    %275 = vector.broadcast %273 : vector<15x1xf32> to vector<15x16xf32>
    %276 = arith.mulf %274, %275 : vector<15x16xf32>
    %277 = arith.addf %251, %276 : vector<15x16xf32>
    %cst_67 = arith.constant 0.000000e+00 : f32
    %278 = vector.broadcast %cst_67 : f32 to vector<1x16xf32>
    %279 = arith.cmpf ogt, %269, %278 : vector<1x16xf32>
    %cst_68 = arith.constant 0xFF800000 : f32
    %280 = vector.broadcast %cst_68 : f32 to vector<1x16xf32>
    %281 = arith.select %279, %41, %280 : vector<1x16xi1>, vector<1x16xf32>
    %cst_69 = arith.constant dense<0xFF800000> : vector<1xf32>
    %282 = vector.multi_reduction <maximumf>, %281, %cst_69 [1] : vector<1x16xf32> to vector<1xf32>
    %283 = vector.shape_cast %282 : vector<1xf32> to vector<1x1xf32>
    %284 = vector.broadcast %283 : vector<1x1xf32> to vector<1x16xf32>
    %285 = arith.cmpf oeq, %41, %284 : vector<1x16xf32>
    %286 = arith.andi %279, %285 : vector<1x16xi1>
    %cst_70 = arith.constant 1.600000e+01 : f32
    %287 = vector.broadcast %cst_70 : f32 to vector<1x16xf32>
    %288 = arith.select %286, %15, %287 : vector<1x16xi1>, vector<1x16xf32>
    %cst_71 = arith.constant dense<0x7F800000> : vector<1xf32>
    %289 = vector.multi_reduction <minimumf>, %288, %cst_71 [1] : vector<1x16xf32> to vector<1xf32>
    %290 = vector.shape_cast %289 : vector<1xf32> to vector<1x1xf32>
    %291 = vector.broadcast %290 : vector<1x1xf32> to vector<1x16xf32>
    %292 = arith.cmpf oeq, %15, %291 : vector<1x16xf32>
    %293 = arith.extui %292 : vector<1x16xi1> to vector<1x16xi32>
    %294 = arith.sitofp %293 : vector<1x16xi32> to vector<1x16xf32>
    %295 = arith.subf %269, %294 : vector<1x16xf32>
    %c9_i32 = arith.constant 9 : i32
    %296 = vector.broadcast %c9_i32 : i32 to vector<15x1xi32>
    %297 = arith.cmpi eq, %21, %296 : vector<15x1xi32>
    %298 = arith.extui %297 : vector<15x1xi1> to vector<15x1xi32>
    %299 = arith.sitofp %298 : vector<15x1xi32> to vector<15x1xf32>
    %300 = vector.broadcast %294 : vector<1x16xf32> to vector<15x16xf32>
    %301 = vector.broadcast %299 : vector<15x1xf32> to vector<15x16xf32>
    %302 = arith.mulf %300, %301 : vector<15x16xf32>
    %303 = arith.addf %277, %302 : vector<15x16xf32>
    %cst_72 = arith.constant 0.000000e+00 : f32
    %304 = vector.broadcast %cst_72 : f32 to vector<1x16xf32>
    %305 = arith.cmpf ogt, %295, %304 : vector<1x16xf32>
    %cst_73 = arith.constant 0xFF800000 : f32
    %306 = vector.broadcast %cst_73 : f32 to vector<1x16xf32>
    %307 = arith.select %305, %41, %306 : vector<1x16xi1>, vector<1x16xf32>
    %cst_74 = arith.constant dense<0xFF800000> : vector<1xf32>
    %308 = vector.multi_reduction <maximumf>, %307, %cst_74 [1] : vector<1x16xf32> to vector<1xf32>
    %309 = vector.shape_cast %308 : vector<1xf32> to vector<1x1xf32>
    %310 = vector.broadcast %309 : vector<1x1xf32> to vector<1x16xf32>
    %311 = arith.cmpf oeq, %41, %310 : vector<1x16xf32>
    %312 = arith.andi %305, %311 : vector<1x16xi1>
    %cst_75 = arith.constant 1.600000e+01 : f32
    %313 = vector.broadcast %cst_75 : f32 to vector<1x16xf32>
    %314 = arith.select %312, %15, %313 : vector<1x16xi1>, vector<1x16xf32>
    %cst_76 = arith.constant dense<0x7F800000> : vector<1xf32>
    %315 = vector.multi_reduction <minimumf>, %314, %cst_76 [1] : vector<1x16xf32> to vector<1xf32>
    %316 = vector.shape_cast %315 : vector<1xf32> to vector<1x1xf32>
    %317 = vector.broadcast %316 : vector<1x1xf32> to vector<1x16xf32>
    %318 = arith.cmpf oeq, %15, %317 : vector<1x16xf32>
    %319 = arith.extui %318 : vector<1x16xi1> to vector<1x16xi32>
    %320 = arith.sitofp %319 : vector<1x16xi32> to vector<1x16xf32>
    %321 = arith.subf %295, %320 : vector<1x16xf32>
    %c10_i32 = arith.constant 10 : i32
    %322 = vector.broadcast %c10_i32 : i32 to vector<15x1xi32>
    %323 = arith.cmpi eq, %21, %322 : vector<15x1xi32>
    %324 = arith.extui %323 : vector<15x1xi1> to vector<15x1xi32>
    %325 = arith.sitofp %324 : vector<15x1xi32> to vector<15x1xf32>
    %326 = vector.broadcast %320 : vector<1x16xf32> to vector<15x16xf32>
    %327 = vector.broadcast %325 : vector<15x1xf32> to vector<15x16xf32>
    %328 = arith.mulf %326, %327 : vector<15x16xf32>
    %329 = arith.addf %303, %328 : vector<15x16xf32>
    %cst_77 = arith.constant 0.000000e+00 : f32
    %330 = vector.broadcast %cst_77 : f32 to vector<1x16xf32>
    %331 = arith.cmpf ogt, %321, %330 : vector<1x16xf32>
    %cst_78 = arith.constant 0xFF800000 : f32
    %332 = vector.broadcast %cst_78 : f32 to vector<1x16xf32>
    %333 = arith.select %331, %41, %332 : vector<1x16xi1>, vector<1x16xf32>
    %cst_79 = arith.constant dense<0xFF800000> : vector<1xf32>
    %334 = vector.multi_reduction <maximumf>, %333, %cst_79 [1] : vector<1x16xf32> to vector<1xf32>
    %335 = vector.shape_cast %334 : vector<1xf32> to vector<1x1xf32>
    %336 = vector.broadcast %335 : vector<1x1xf32> to vector<1x16xf32>
    %337 = arith.cmpf oeq, %41, %336 : vector<1x16xf32>
    %338 = arith.andi %331, %337 : vector<1x16xi1>
    %cst_80 = arith.constant 1.600000e+01 : f32
    %339 = vector.broadcast %cst_80 : f32 to vector<1x16xf32>
    %340 = arith.select %338, %15, %339 : vector<1x16xi1>, vector<1x16xf32>
    %cst_81 = arith.constant dense<0x7F800000> : vector<1xf32>
    %341 = vector.multi_reduction <minimumf>, %340, %cst_81 [1] : vector<1x16xf32> to vector<1xf32>
    %342 = vector.shape_cast %341 : vector<1xf32> to vector<1x1xf32>
    %343 = vector.broadcast %342 : vector<1x1xf32> to vector<1x16xf32>
    %344 = arith.cmpf oeq, %15, %343 : vector<1x16xf32>
    %345 = arith.extui %344 : vector<1x16xi1> to vector<1x16xi32>
    %346 = arith.sitofp %345 : vector<1x16xi32> to vector<1x16xf32>
    %347 = arith.subf %321, %346 : vector<1x16xf32>
    %c11_i32 = arith.constant 11 : i32
    %348 = vector.broadcast %c11_i32 : i32 to vector<15x1xi32>
    %349 = arith.cmpi eq, %21, %348 : vector<15x1xi32>
    %350 = arith.extui %349 : vector<15x1xi1> to vector<15x1xi32>
    %351 = arith.sitofp %350 : vector<15x1xi32> to vector<15x1xf32>
    %352 = vector.broadcast %346 : vector<1x16xf32> to vector<15x16xf32>
    %353 = vector.broadcast %351 : vector<15x1xf32> to vector<15x16xf32>
    %354 = arith.mulf %352, %353 : vector<15x16xf32>
    %355 = arith.addf %329, %354 : vector<15x16xf32>
    %cst_82 = arith.constant 0.000000e+00 : f32
    %356 = vector.broadcast %cst_82 : f32 to vector<1x16xf32>
    %357 = arith.cmpf ogt, %347, %356 : vector<1x16xf32>
    %cst_83 = arith.constant 0xFF800000 : f32
    %358 = vector.broadcast %cst_83 : f32 to vector<1x16xf32>
    %359 = arith.select %357, %41, %358 : vector<1x16xi1>, vector<1x16xf32>
    %cst_84 = arith.constant dense<0xFF800000> : vector<1xf32>
    %360 = vector.multi_reduction <maximumf>, %359, %cst_84 [1] : vector<1x16xf32> to vector<1xf32>
    %361 = vector.shape_cast %360 : vector<1xf32> to vector<1x1xf32>
    %362 = vector.broadcast %361 : vector<1x1xf32> to vector<1x16xf32>
    %363 = arith.cmpf oeq, %41, %362 : vector<1x16xf32>
    %364 = arith.andi %357, %363 : vector<1x16xi1>
    %cst_85 = arith.constant 1.600000e+01 : f32
    %365 = vector.broadcast %cst_85 : f32 to vector<1x16xf32>
    %366 = arith.select %364, %15, %365 : vector<1x16xi1>, vector<1x16xf32>
    %cst_86 = arith.constant dense<0x7F800000> : vector<1xf32>
    %367 = vector.multi_reduction <minimumf>, %366, %cst_86 [1] : vector<1x16xf32> to vector<1xf32>
    %368 = vector.shape_cast %367 : vector<1xf32> to vector<1x1xf32>
    %369 = vector.broadcast %368 : vector<1x1xf32> to vector<1x16xf32>
    %370 = arith.cmpf oeq, %15, %369 : vector<1x16xf32>
    %371 = arith.extui %370 : vector<1x16xi1> to vector<1x16xi32>
    %372 = arith.sitofp %371 : vector<1x16xi32> to vector<1x16xf32>
    %373 = arith.subf %347, %372 : vector<1x16xf32>
    %c12_i32 = arith.constant 12 : i32
    %374 = vector.broadcast %c12_i32 : i32 to vector<15x1xi32>
    %375 = arith.cmpi eq, %21, %374 : vector<15x1xi32>
    %376 = arith.extui %375 : vector<15x1xi1> to vector<15x1xi32>
    %377 = arith.sitofp %376 : vector<15x1xi32> to vector<15x1xf32>
    %378 = vector.broadcast %372 : vector<1x16xf32> to vector<15x16xf32>
    %379 = vector.broadcast %377 : vector<15x1xf32> to vector<15x16xf32>
    %380 = arith.mulf %378, %379 : vector<15x16xf32>
    %381 = arith.addf %355, %380 : vector<15x16xf32>
    %cst_87 = arith.constant 0.000000e+00 : f32
    %382 = vector.broadcast %cst_87 : f32 to vector<1x16xf32>
    %383 = arith.cmpf ogt, %373, %382 : vector<1x16xf32>
    %cst_88 = arith.constant 0xFF800000 : f32
    %384 = vector.broadcast %cst_88 : f32 to vector<1x16xf32>
    %385 = arith.select %383, %41, %384 : vector<1x16xi1>, vector<1x16xf32>
    %cst_89 = arith.constant dense<0xFF800000> : vector<1xf32>
    %386 = vector.multi_reduction <maximumf>, %385, %cst_89 [1] : vector<1x16xf32> to vector<1xf32>
    %387 = vector.shape_cast %386 : vector<1xf32> to vector<1x1xf32>
    %388 = vector.broadcast %387 : vector<1x1xf32> to vector<1x16xf32>
    %389 = arith.cmpf oeq, %41, %388 : vector<1x16xf32>
    %390 = arith.andi %383, %389 : vector<1x16xi1>
    %cst_90 = arith.constant 1.600000e+01 : f32
    %391 = vector.broadcast %cst_90 : f32 to vector<1x16xf32>
    %392 = arith.select %390, %15, %391 : vector<1x16xi1>, vector<1x16xf32>
    %cst_91 = arith.constant dense<0x7F800000> : vector<1xf32>
    %393 = vector.multi_reduction <minimumf>, %392, %cst_91 [1] : vector<1x16xf32> to vector<1xf32>
    %394 = vector.shape_cast %393 : vector<1xf32> to vector<1x1xf32>
    %395 = vector.broadcast %394 : vector<1x1xf32> to vector<1x16xf32>
    %396 = arith.cmpf oeq, %15, %395 : vector<1x16xf32>
    %397 = arith.extui %396 : vector<1x16xi1> to vector<1x16xi32>
    %398 = arith.sitofp %397 : vector<1x16xi32> to vector<1x16xf32>
    %399 = arith.subf %373, %398 : vector<1x16xf32>
    %c13_i32 = arith.constant 13 : i32
    %400 = vector.broadcast %c13_i32 : i32 to vector<15x1xi32>
    %401 = arith.cmpi eq, %21, %400 : vector<15x1xi32>
    %402 = arith.extui %401 : vector<15x1xi1> to vector<15x1xi32>
    %403 = arith.sitofp %402 : vector<15x1xi32> to vector<15x1xf32>
    %404 = vector.broadcast %398 : vector<1x16xf32> to vector<15x16xf32>
    %405 = vector.broadcast %403 : vector<15x1xf32> to vector<15x16xf32>
    %406 = arith.mulf %404, %405 : vector<15x16xf32>
    %407 = arith.addf %381, %406 : vector<15x16xf32>
    %cst_92 = arith.constant 0.000000e+00 : f32
    %408 = vector.broadcast %cst_92 : f32 to vector<1x16xf32>
    %409 = arith.cmpf ogt, %399, %408 : vector<1x16xf32>
    %cst_93 = arith.constant 0xFF800000 : f32
    %410 = vector.broadcast %cst_93 : f32 to vector<1x16xf32>
    %411 = arith.select %409, %41, %410 : vector<1x16xi1>, vector<1x16xf32>
    %cst_94 = arith.constant dense<0xFF800000> : vector<1xf32>
    %412 = vector.multi_reduction <maximumf>, %411, %cst_94 [1] : vector<1x16xf32> to vector<1xf32>
    %413 = vector.shape_cast %412 : vector<1xf32> to vector<1x1xf32>
    %414 = vector.broadcast %413 : vector<1x1xf32> to vector<1x16xf32>
    %415 = arith.cmpf oeq, %41, %414 : vector<1x16xf32>
    %416 = arith.andi %409, %415 : vector<1x16xi1>
    %cst_95 = arith.constant 1.600000e+01 : f32
    %417 = vector.broadcast %cst_95 : f32 to vector<1x16xf32>
    %418 = arith.select %416, %15, %417 : vector<1x16xi1>, vector<1x16xf32>
    %cst_96 = arith.constant dense<0x7F800000> : vector<1xf32>
    %419 = vector.multi_reduction <minimumf>, %418, %cst_96 [1] : vector<1x16xf32> to vector<1xf32>
    %420 = vector.shape_cast %419 : vector<1xf32> to vector<1x1xf32>
    %421 = vector.broadcast %420 : vector<1x1xf32> to vector<1x16xf32>
    %422 = arith.cmpf oeq, %15, %421 : vector<1x16xf32>
    %423 = arith.extui %422 : vector<1x16xi1> to vector<1x16xi32>
    %424 = arith.sitofp %423 : vector<1x16xi32> to vector<1x16xf32>
    %c14_i32 = arith.constant 14 : i32
    %425 = vector.broadcast %c14_i32 : i32 to vector<15x1xi32>
    %426 = arith.cmpi eq, %21, %425 : vector<15x1xi32>
    %427 = arith.extui %426 : vector<15x1xi1> to vector<15x1xi32>
    %428 = arith.sitofp %427 : vector<15x1xi32> to vector<15x1xf32>
    %429 = vector.broadcast %424 : vector<1x16xf32> to vector<15x16xf32>
    %430 = vector.broadcast %428 : vector<15x1xf32> to vector<15x16xf32>
    %431 = arith.mulf %429, %430 : vector<15x16xf32>
    %432 = arith.addf %407, %431 : vector<15x16xf32>
    %cst_97 = arith.constant dense<0.000000e+00> : vector<15x16xf32>
    %433 = tpu.matmul %432, %27, %cst_97 {dimension_numbers = #tpu.dot_dimension_numbers<[1], [0], [0], [1], [0, 0, 1, 1], [], []>} : vector<15x16xf32>, vector<16x16xf32>, vector<15x16xf32> -> vector<15x16xf32>
    %434 = vector.broadcast %15 : vector<1x16xf32> to vector<15x16xf32>
    %435 = arith.mulf %432, %434 : vector<15x16xf32>
    %cst_98 = arith.constant dense<0.000000e+00> : vector<15xf32>
    %436 = vector.multi_reduction <add>, %435, %cst_98 [1] : vector<15x16xf32> to vector<15xf32>
    %437 = vector.shape_cast %436 : vector<15xf32> to vector<15x1xf32>
    %438 = vector.broadcast %13 : vector<1x16xf32> to vector<15x16xf32>
    %439 = vector.broadcast %437 : vector<15x1xf32> to vector<15x16xf32>
    %440 = arith.cmpf ogt, %438, %439 : vector<15x16xf32>
    %cst_99 = arith.constant 0.176776692 : f32
    %441 = vector.broadcast %cst_99 : f32 to vector<15x16xf32>
    %442 = arith.mulf %433, %441 : vector<15x16xf32>
    %cst_100 = arith.constant 0xFF800000 : f32
    %443 = vector.broadcast %cst_100 : f32 to vector<15x16xf32>
    %444 = arith.select %440, %443, %442 : vector<15x16xi1>, vector<15x16xf32>
    %cst_101 = arith.constant dense<0xFF800000> : vector<15xf32>
    %445 = vector.multi_reduction <maximumf>, %444, %cst_101 [1] : vector<15x16xf32> to vector<15xf32>
    %446 = vector.shape_cast %445 : vector<15xf32> to vector<15x1xf32>
    %447 = vector.broadcast %446 : vector<15x1xf32> to vector<15x16xf32>
    %448 = arith.subf %444, %447 : vector<15x16xf32>
    %449 = math.exp %448 : vector<15x16xf32>
    %cst_102 = arith.constant dense<0.000000e+00> : vector<15xf32>
    %450 = vector.multi_reduction <add>, %449, %cst_102 [1] : vector<15x16xf32> to vector<15xf32>
    %451 = vector.shape_cast %450 : vector<15xf32> to vector<15x1xf32>
    %452 = tpu.reciprocal %451 {approx = true} : vector<15x1xf32> -> vector<15x1xf32>
    %453 = vector.broadcast %452 : vector<15x1xf32> to vector<15x16xf32>
    %454 = arith.mulf %449, %453 : vector<15x16xf32>
    %455 = arith.truncf %454 : vector<15x16xf32> to vector<15x16xbf16>
    %cst_103 = arith.constant dense<0.000000e+00> : vector<15x32xf32>
    %456 = tpu.matmul %455, %25, %cst_103 {dimension_numbers = #tpu.dot_dimension_numbers<[1], [0], [0], [1], [0, 0, 1, 1], [], []>} : vector<15x16xbf16>, vector<16x32xbf16>, vector<15x32xf32> -> vector<15x32xf32>
    %457 = tpu.concatenate %456, %22 in 1 : vector<15x32xf32>, vector<15x1xf32> -> vector<15x33xf32>
    %cst_104 = arith.constant dense<0.000000e+00> : vector<16x33xf32>
    %458 = tpu.matmul %432, %457, %cst_104 {dimension_numbers = #tpu.dot_dimension_numbers<[0], [0], [1], [1], [0, 1, 1, 1], [], []>} : vector<15x16xf32>, vector<15x33xf32>, vector<16x33xf32> -> vector<16x33xf32>
    %459 = vector.extract_strided_slice %458 {offsets = [0, 32], sizes = [16, 1], strides = [1, 1]} : vector<16x33xf32> to vector<16x1xf32>
    %cst_105 = arith.constant 5.000000e-01 : f32
    %460 = vector.broadcast %cst_105 : f32 to vector<16x1xf32>
    %461 = arith.cmpf ogt, %459, %460 : vector<16x1xf32>
    %462 = vector.extract_strided_slice %458 {offsets = [0, 0], sizes = [16, 32], strides = [1, 1]} : vector<16x33xf32> to vector<16x32xf32>
    %463 = vector.shape_cast %461 : vector<16x1xi1> to vector<16x1xi1>
    %464 = vector.broadcast %463 : vector<16x1xi1> to vector<16x32xi1>
    %465 = arith.select %464, %462, %26 : vector<16x32xi1>, vector<16x32xf32>
    %c0_106 = arith.constant 0 : index
    %c0_107 = arith.constant 0 : index
    %c0_108 = arith.constant 0 : index
    %466 = vector.load %arg6[%c0_106, %c0_107, %c0_108] : memref<1x16x128xf32, #tpu.memory_space<vmem>>, vector<1x16x32xf32>
    %467 = vector.shape_cast %466 : vector<1x16x32xf32> to vector<16x32xf32>
    %468 = vector.shape_cast %465 : vector<16x32xf32> to vector<1x16x32xf32>
    tpu.vector_store %arg6[%c0_106, %c0_107, %c0_108], %468 {strides = array<i32>} : memref<1x16x128xf32, #tpu.memory_space<vmem>>, vector<1x16x32xf32>,
    %469 = vector.extract_strided_slice %1 {offsets = [0, 32], sizes = [16, 32], strides = [1, 1]} : vector<16x128xbf16> to vector<16x32xbf16>
    %470 = vector.extract_strided_slice %3 {offsets = [0, 32], sizes = [16, 32], strides = [1, 1]} : vector<16x128xbf16> to vector<16x32xbf16>
    %471 = vector.extract_strided_slice %5 {offsets = [0, 32], sizes = [16, 32], strides = [1, 1]} : vector<16x128xbf16> to vector<16x32xbf16>
    %472 = vector.extract_strided_slice %7 {offsets = [0, 32], sizes = [16, 32], strides = [1, 1]} : vector<16x128xf32> to vector<16x32xf32>
    %cst_109 = arith.constant dense<0.000000e+00> : vector<16x16xf32>
    %473 = tpu.matmul %469, %470, %cst_109 {dimension_numbers = #tpu.dot_dimension_numbers<[1], [1], [0], [0], [0, 0, 1, 0], [], []>} : vector<16x32xbf16>, vector<16x32xbf16>, vector<16x16xf32> -> vector<16x16xf32>
    %cst_110 = arith.constant 0xFF800000 : f32
    %474 = vector.broadcast %cst_110 : f32 to vector<16x16xf32>
    %475 = arith.select %11, %473, %474 : vector<16x16xi1>, vector<16x16xf32>
    %cst_111 = arith.constant dense<0xFF800000> : vector<16xf32>
    %476 = vector.multi_reduction <maximumf>, %475, %cst_111 [1] : vector<16x16xf32> to vector<16xf32>
    %477 = vector.shape_cast %476 : vector<16xf32> to vector<16x1xf32>
    %478 = arith.mulf %9, %473 : vector<16x16xf32>
    %cst_112 = arith.constant dense<0.000000e+00> : vector<16xf32>
    %479 = vector.multi_reduction <add>, %478, %cst_112 [1] : vector<16x16xf32> to vector<16xf32>
    %480 = vector.shape_cast %479 : vector<16xf32> to vector<16x1xf32>
    %cst_113 = arith.constant 6.250000e-02 : f32
    %481 = vector.broadcast %cst_113 : f32 to vector<16x1xf32>
    %482 = arith.mulf %480, %481 : vector<16x1xf32>
    %483 = arith.subf %477, %482 : vector<16x1xf32>
    %484 = vector.broadcast %483 : vector<16x1xf32> to vector<16x16xf32>
    %485 = arith.mulf %20, %484 : vector<16x16xf32>
    %cst_114 = arith.constant dense<0.000000e+00> : vector<16xf32>
    %486 = vector.multi_reduction <add>, %485, %cst_114 [0] : vector<16x16xf32> to vector<16xf32>
    %487 = vector.shape_cast %486 : vector<16xf32> to vector<1x16xf32>
    %cst_115 = arith.constant 1.000000e+00 : f32
    %488 = vector.broadcast %cst_115 : f32 to vector<1x16xf32>
    %cst_116 = arith.constant 0.000000e+00 : f32
    %489 = vector.broadcast %cst_116 : f32 to vector<15x16xf32>
    %cst_117 = arith.constant 0.000000e+00 : f32
    %490 = vector.broadcast %cst_117 : f32 to vector<1x16xf32>
    %491 = arith.cmpf ogt, %488, %490 : vector<1x16xf32>
    %cst_118 = arith.constant 0xFF800000 : f32
    %492 = vector.broadcast %cst_118 : f32 to vector<1x16xf32>
    %493 = arith.select %491, %487, %492 : vector<1x16xi1>, vector<1x16xf32>
    %cst_119 = arith.constant dense<0xFF800000> : vector<1xf32>
    %494 = vector.multi_reduction <maximumf>, %493, %cst_119 [1] : vector<1x16xf32> to vector<1xf32>
    %495 = vector.shape_cast %494 : vector<1xf32> to vector<1x1xf32>
    %496 = vector.broadcast %495 : vector<1x1xf32> to vector<1x16xf32>
    %497 = arith.cmpf oeq, %487, %496 : vector<1x16xf32>
    %498 = arith.andi %491, %497 : vector<1x16xi1>
    %cst_120 = arith.constant 1.600000e+01 : f32
    %499 = vector.broadcast %cst_120 : f32 to vector<1x16xf32>
    %500 = arith.select %498, %15, %499 : vector<1x16xi1>, vector<1x16xf32>
    %cst_121 = arith.constant dense<0x7F800000> : vector<1xf32>
    %501 = vector.multi_reduction <minimumf>, %500, %cst_121 [1] : vector<1x16xf32> to vector<1xf32>
    %502 = vector.shape_cast %501 : vector<1xf32> to vector<1x1xf32>
    %503 = vector.broadcast %502 : vector<1x1xf32> to vector<1x16xf32>
    %504 = arith.cmpf oeq, %15, %503 : vector<1x16xf32>
    %505 = arith.extui %504 : vector<1x16xi1> to vector<1x16xi32>
    %506 = arith.sitofp %505 : vector<1x16xi32> to vector<1x16xf32>
    %507 = arith.subf %488, %506 : vector<1x16xf32>
    %c0_i32_122 = arith.constant 0 : i32
    %508 = vector.broadcast %c0_i32_122 : i32 to vector<15x1xi32>
    %509 = arith.cmpi eq, %21, %508 : vector<15x1xi32>
    %510 = arith.extui %509 : vector<15x1xi1> to vector<15x1xi32>
    %511 = arith.sitofp %510 : vector<15x1xi32> to vector<15x1xf32>
    %512 = vector.broadcast %506 : vector<1x16xf32> to vector<15x16xf32>
    %513 = vector.broadcast %511 : vector<15x1xf32> to vector<15x16xf32>
    %514 = arith.mulf %512, %513 : vector<15x16xf32>
    %515 = arith.addf %489, %514 : vector<15x16xf32>
    %cst_123 = arith.constant 0.000000e+00 : f32
    %516 = vector.broadcast %cst_123 : f32 to vector<1x16xf32>
    %517 = arith.cmpf ogt, %507, %516 : vector<1x16xf32>
    %cst_124 = arith.constant 0xFF800000 : f32
    %518 = vector.broadcast %cst_124 : f32 to vector<1x16xf32>
    %519 = arith.select %517, %487, %518 : vector<1x16xi1>, vector<1x16xf32>
    %cst_125 = arith.constant dense<0xFF800000> : vector<1xf32>
    %520 = vector.multi_reduction <maximumf>, %519, %cst_125 [1] : vector<1x16xf32> to vector<1xf32>
    %521 = vector.shape_cast %520 : vector<1xf32> to vector<1x1xf32>
    %522 = vector.broadcast %521 : vector<1x1xf32> to vector<1x16xf32>
    %523 = arith.cmpf oeq, %487, %522 : vector<1x16xf32>
    %524 = arith.andi %517, %523 : vector<1x16xi1>
    %cst_126 = arith.constant 1.600000e+01 : f32
    %525 = vector.broadcast %cst_126 : f32 to vector<1x16xf32>
    %526 = arith.select %524, %15, %525 : vector<1x16xi1>, vector<1x16xf32>
    %cst_127 = arith.constant dense<0x7F800000> : vector<1xf32>
    %527 = vector.multi_reduction <minimumf>, %526, %cst_127 [1] : vector<1x16xf32> to vector<1xf32>
    %528 = vector.shape_cast %527 : vector<1xf32> to vector<1x1xf32>
    %529 = vector.broadcast %528 : vector<1x1xf32> to vector<1x16xf32>
    %530 = arith.cmpf oeq, %15, %529 : vector<1x16xf32>
    %531 = arith.extui %530 : vector<1x16xi1> to vector<1x16xi32>
    %532 = arith.sitofp %531 : vector<1x16xi32> to vector<1x16xf32>
    %533 = arith.subf %507, %532 : vector<1x16xf32>
    %c1_i32_128 = arith.constant 1 : i32
    %534 = vector.broadcast %c1_i32_128 : i32 to vector<15x1xi32>
    %535 = arith.cmpi eq, %21, %534 : vector<15x1xi32>
    %536 = arith.extui %535 : vector<15x1xi1> to vector<15x1xi32>
    %537 = arith.sitofp %536 : vector<15x1xi32> to vector<15x1xf32>
    %538 = vector.broadcast %532 : vector<1x16xf32> to vector<15x16xf32>
    %539 = vector.broadcast %537 : vector<15x1xf32> to vector<15x16xf32>
    %540 = arith.mulf %538, %539 : vector<15x16xf32>
    %541 = arith.addf %515, %540 : vector<15x16xf32>
    %cst_129 = arith.constant 0.000000e+00 : f32
    %542 = vector.broadcast %cst_129 : f32 to vector<1x16xf32>
    %543 = arith.cmpf ogt, %533, %542 : vector<1x16xf32>
    %cst_130 = arith.constant 0xFF800000 : f32
    %544 = vector.broadcast %cst_130 : f32 to vector<1x16xf32>
    %545 = arith.select %543, %487, %544 : vector<1x16xi1>, vector<1x16xf32>
    %cst_131 = arith.constant dense<0xFF800000> : vector<1xf32>
    %546 = vector.multi_reduction <maximumf>, %545, %cst_131 [1] : vector<1x16xf32> to vector<1xf32>
    %547 = vector.shape_cast %546 : vector<1xf32> to vector<1x1xf32>
    %548 = vector.broadcast %547 : vector<1x1xf32> to vector<1x16xf32>
    %549 = arith.cmpf oeq, %487, %548 : vector<1x16xf32>
    %550 = arith.andi %543, %549 : vector<1x16xi1>
    %cst_132 = arith.constant 1.600000e+01 : f32
    %551 = vector.broadcast %cst_132 : f32 to vector<1x16xf32>
    %552 = arith.select %550, %15, %551 : vector<1x16xi1>, vector<1x16xf32>
    %cst_133 = arith.constant dense<0x7F800000> : vector<1xf32>
    %553 = vector.multi_reduction <minimumf>, %552, %cst_133 [1] : vector<1x16xf32> to vector<1xf32>
    %554 = vector.shape_cast %553 : vector<1xf32> to vector<1x1xf32>
    %555 = vector.broadcast %554 : vector<1x1xf32> to vector<1x16xf32>
    %556 = arith.cmpf oeq, %15, %555 : vector<1x16xf32>
    %557 = arith.extui %556 : vector<1x16xi1> to vector<1x16xi32>
    %558 = arith.sitofp %557 : vector<1x16xi32> to vector<1x16xf32>
    %559 = arith.subf %533, %558 : vector<1x16xf32>
    %c2_i32_134 = arith.constant 2 : i32
    %560 = vector.broadcast %c2_i32_134 : i32 to vector<15x1xi32>
    %561 = arith.cmpi eq, %21, %560 : vector<15x1xi32>
    %562 = arith.extui %561 : vector<15x1xi1> to vector<15x1xi32>
    %563 = arith.sitofp %562 : vector<15x1xi32> to vector<15x1xf32>
    %564 = vector.broadcast %558 : vector<1x16xf32> to vector<15x16xf32>
    %565 = vector.broadcast %563 : vector<15x1xf32> to vector<15x16xf32>
    %566 = arith.mulf %564, %565 : vector<15x16xf32>
    %567 = arith.addf %541, %566 : vector<15x16xf32>
    %cst_135 = arith.constant 0.000000e+00 : f32
    %568 = vector.broadcast %cst_135 : f32 to vector<1x16xf32>
    %569 = arith.cmpf ogt, %559, %568 : vector<1x16xf32>
    %cst_136 = arith.constant 0xFF800000 : f32
    %570 = vector.broadcast %cst_136 : f32 to vector<1x16xf32>
    %571 = arith.select %569, %487, %570 : vector<1x16xi1>, vector<1x16xf32>
    %cst_137 = arith.constant dense<0xFF800000> : vector<1xf32>
    %572 = vector.multi_reduction <maximumf>, %571, %cst_137 [1] : vector<1x16xf32> to vector<1xf32>
    %573 = vector.shape_cast %572 : vector<1xf32> to vector<1x1xf32>
    %574 = vector.broadcast %573 : vector<1x1xf32> to vector<1x16xf32>
    %575 = arith.cmpf oeq, %487, %574 : vector<1x16xf32>
    %576 = arith.andi %569, %575 : vector<1x16xi1>
    %cst_138 = arith.constant 1.600000e+01 : f32
    %577 = vector.broadcast %cst_138 : f32 to vector<1x16xf32>
    %578 = arith.select %576, %15, %577 : vector<1x16xi1>, vector<1x16xf32>
    %cst_139 = arith.constant dense<0x7F800000> : vector<1xf32>
    %579 = vector.multi_reduction <minimumf>, %578, %cst_139 [1] : vector<1x16xf32> to vector<1xf32>
    %580 = vector.shape_cast %579 : vector<1xf32> to vector<1x1xf32>
    %581 = vector.broadcast %580 : vector<1x1xf32> to vector<1x16xf32>
    %582 = arith.cmpf oeq, %15, %581 : vector<1x16xf32>
    %583 = arith.extui %582 : vector<1x16xi1> to vector<1x16xi32>
    %584 = arith.sitofp %583 : vector<1x16xi32> to vector<1x16xf32>
    %585 = arith.subf %559, %584 : vector<1x16xf32>
    %c3_i32_140 = arith.constant 3 : i32
    %586 = vector.broadcast %c3_i32_140 : i32 to vector<15x1xi32>
    %587 = arith.cmpi eq, %21, %586 : vector<15x1xi32>
    %588 = arith.extui %587 : vector<15x1xi1> to vector<15x1xi32>
    %589 = arith.sitofp %588 : vector<15x1xi32> to vector<15x1xf32>
    %590 = vector.broadcast %584 : vector<1x16xf32> to vector<15x16xf32>
    %591 = vector.broadcast %589 : vector<15x1xf32> to vector<15x16xf32>
    %592 = arith.mulf %590, %591 : vector<15x16xf32>
    %593 = arith.addf %567, %592 : vector<15x16xf32>
    %cst_141 = arith.constant 0.000000e+00 : f32
    %594 = vector.broadcast %cst_141 : f32 to vector<1x16xf32>
    %595 = arith.cmpf ogt, %585, %594 : vector<1x16xf32>
    %cst_142 = arith.constant 0xFF800000 : f32
    %596 = vector.broadcast %cst_142 : f32 to vector<1x16xf32>
    %597 = arith.select %595, %487, %596 : vector<1x16xi1>, vector<1x16xf32>
    %cst_143 = arith.constant dense<0xFF800000> : vector<1xf32>
    %598 = vector.multi_reduction <maximumf>, %597, %cst_143 [1] : vector<1x16xf32> to vector<1xf32>
    %599 = vector.shape_cast %598 : vector<1xf32> to vector<1x1xf32>
    %600 = vector.broadcast %599 : vector<1x1xf32> to vector<1x16xf32>
    %601 = arith.cmpf oeq, %487, %600 : vector<1x16xf32>
    %602 = arith.andi %595, %601 : vector<1x16xi1>
    %cst_144 = arith.constant 1.600000e+01 : f32
    %603 = vector.broadcast %cst_144 : f32 to vector<1x16xf32>
    %604 = arith.select %602, %15, %603 : vector<1x16xi1>, vector<1x16xf32>
    %cst_145 = arith.constant dense<0x7F800000> : vector<1xf32>
    %605 = vector.multi_reduction <minimumf>, %604, %cst_145 [1] : vector<1x16xf32> to vector<1xf32>
    %606 = vector.shape_cast %605 : vector<1xf32> to vector<1x1xf32>
    %607 = vector.broadcast %606 : vector<1x1xf32> to vector<1x16xf32>
    %608 = arith.cmpf oeq, %15, %607 : vector<1x16xf32>
    %609 = arith.extui %608 : vector<1x16xi1> to vector<1x16xi32>
    %610 = arith.sitofp %609 : vector<1x16xi32> to vector<1x16xf32>
    %611 = arith.subf %585, %610 : vector<1x16xf32>
    %c4_i32_146 = arith.constant 4 : i32
    %612 = vector.broadcast %c4_i32_146 : i32 to vector<15x1xi32>
    %613 = arith.cmpi eq, %21, %612 : vector<15x1xi32>
    %614 = arith.extui %613 : vector<15x1xi1> to vector<15x1xi32>
    %615 = arith.sitofp %614 : vector<15x1xi32> to vector<15x1xf32>
    %616 = vector.broadcast %610 : vector<1x16xf32> to vector<15x16xf32>
    %617 = vector.broadcast %615 : vector<15x1xf32> to vector<15x16xf32>
    %618 = arith.mulf %616, %617 : vector<15x16xf32>
    %619 = arith.addf %593, %618 : vector<15x16xf32>
    %cst_147 = arith.constant 0.000000e+00 : f32
    %620 = vector.broadcast %cst_147 : f32 to vector<1x16xf32>
    %621 = arith.cmpf ogt, %611, %620 : vector<1x16xf32>
    %cst_148 = arith.constant 0xFF800000 : f32
    %622 = vector.broadcast %cst_148 : f32 to vector<1x16xf32>
    %623 = arith.select %621, %487, %622 : vector<1x16xi1>, vector<1x16xf32>
    %cst_149 = arith.constant dense<0xFF800000> : vector<1xf32>
    %624 = vector.multi_reduction <maximumf>, %623, %cst_149 [1] : vector<1x16xf32> to vector<1xf32>
    %625 = vector.shape_cast %624 : vector<1xf32> to vector<1x1xf32>
    %626 = vector.broadcast %625 : vector<1x1xf32> to vector<1x16xf32>
    %627 = arith.cmpf oeq, %487, %626 : vector<1x16xf32>
    %628 = arith.andi %621, %627 : vector<1x16xi1>
    %cst_150 = arith.constant 1.600000e+01 : f32
    %629 = vector.broadcast %cst_150 : f32 to vector<1x16xf32>
    %630 = arith.select %628, %15, %629 : vector<1x16xi1>, vector<1x16xf32>
    %cst_151 = arith.constant dense<0x7F800000> : vector<1xf32>
    %631 = vector.multi_reduction <minimumf>, %630, %cst_151 [1] : vector<1x16xf32> to vector<1xf32>
    %632 = vector.shape_cast %631 : vector<1xf32> to vector<1x1xf32>
    %633 = vector.broadcast %632 : vector<1x1xf32> to vector<1x16xf32>
    %634 = arith.cmpf oeq, %15, %633 : vector<1x16xf32>
    %635 = arith.extui %634 : vector<1x16xi1> to vector<1x16xi32>
    %636 = arith.sitofp %635 : vector<1x16xi32> to vector<1x16xf32>
    %637 = arith.subf %611, %636 : vector<1x16xf32>
    %c5_i32_152 = arith.constant 5 : i32
    %638 = vector.broadcast %c5_i32_152 : i32 to vector<15x1xi32>
    %639 = arith.cmpi eq, %21, %638 : vector<15x1xi32>
    %640 = arith.extui %639 : vector<15x1xi1> to vector<15x1xi32>
    %641 = arith.sitofp %640 : vector<15x1xi32> to vector<15x1xf32>
    %642 = vector.broadcast %636 : vector<1x16xf32> to vector<15x16xf32>
    %643 = vector.broadcast %641 : vector<15x1xf32> to vector<15x16xf32>
    %644 = arith.mulf %642, %643 : vector<15x16xf32>
    %645 = arith.addf %619, %644 : vector<15x16xf32>
    %cst_153 = arith.constant 0.000000e+00 : f32
    %646 = vector.broadcast %cst_153 : f32 to vector<1x16xf32>
    %647 = arith.cmpf ogt, %637, %646 : vector<1x16xf32>
    %cst_154 = arith.constant 0xFF800000 : f32
    %648 = vector.broadcast %cst_154 : f32 to vector<1x16xf32>
    %649 = arith.select %647, %487, %648 : vector<1x16xi1>, vector<1x16xf32>
    %cst_155 = arith.constant dense<0xFF800000> : vector<1xf32>
    %650 = vector.multi_reduction <maximumf>, %649, %cst_155 [1] : vector<1x16xf32> to vector<1xf32>
    %651 = vector.shape_cast %650 : vector<1xf32> to vector<1x1xf32>
    %652 = vector.broadcast %651 : vector<1x1xf32> to vector<1x16xf32>
    %653 = arith.cmpf oeq, %487, %652 : vector<1x16xf32>
    %654 = arith.andi %647, %653 : vector<1x16xi1>
    %cst_156 = arith.constant 1.600000e+01 : f32
    %655 = vector.broadcast %cst_156 : f32 to vector<1x16xf32>
    %656 = arith.select %654, %15, %655 : vector<1x16xi1>, vector<1x16xf32>
    %cst_157 = arith.constant dense<0x7F800000> : vector<1xf32>
    %657 = vector.multi_reduction <minimumf>, %656, %cst_157 [1] : vector<1x16xf32> to vector<1xf32>
    %658 = vector.shape_cast %657 : vector<1xf32> to vector<1x1xf32>
    %659 = vector.broadcast %658 : vector<1x1xf32> to vector<1x16xf32>
    %660 = arith.cmpf oeq, %15, %659 : vector<1x16xf32>
    %661 = arith.extui %660 : vector<1x16xi1> to vector<1x16xi32>
    %662 = arith.sitofp %661 : vector<1x16xi32> to vector<1x16xf32>
    %663 = arith.subf %637, %662 : vector<1x16xf32>
    %c6_i32_158 = arith.constant 6 : i32
    %664 = vector.broadcast %c6_i32_158 : i32 to vector<15x1xi32>
    %665 = arith.cmpi eq, %21, %664 : vector<15x1xi32>
    %666 = arith.extui %665 : vector<15x1xi1> to vector<15x1xi32>
    %667 = arith.sitofp %666 : vector<15x1xi32> to vector<15x1xf32>
    %668 = vector.broadcast %662 : vector<1x16xf32> to vector<15x16xf32>
    %669 = vector.broadcast %667 : vector<15x1xf32> to vector<15x16xf32>
    %670 = arith.mulf %668, %669 : vector<15x16xf32>
    %671 = arith.addf %645, %670 : vector<15x16xf32>
    %cst_159 = arith.constant 0.000000e+00 : f32
    %672 = vector.broadcast %cst_159 : f32 to vector<1x16xf32>
    %673 = arith.cmpf ogt, %663, %672 : vector<1x16xf32>
    %cst_160 = arith.constant 0xFF800000 : f32
    %674 = vector.broadcast %cst_160 : f32 to vector<1x16xf32>
    %675 = arith.select %673, %487, %674 : vector<1x16xi1>, vector<1x16xf32>
    %cst_161 = arith.constant dense<0xFF800000> : vector<1xf32>
    %676 = vector.multi_reduction <maximumf>, %675, %cst_161 [1] : vector<1x16xf32> to vector<1xf32>
    %677 = vector.shape_cast %676 : vector<1xf32> to vector<1x1xf32>
    %678 = vector.broadcast %677 : vector<1x1xf32> to vector<1x16xf32>
    %679 = arith.cmpf oeq, %487, %678 : vector<1x16xf32>
    %680 = arith.andi %673, %679 : vector<1x16xi1>
    %cst_162 = arith.constant 1.600000e+01 : f32
    %681 = vector.broadcast %cst_162 : f32 to vector<1x16xf32>
    %682 = arith.select %680, %15, %681 : vector<1x16xi1>, vector<1x16xf32>
    %cst_163 = arith.constant dense<0x7F800000> : vector<1xf32>
    %683 = vector.multi_reduction <minimumf>, %682, %cst_163 [1] : vector<1x16xf32> to vector<1xf32>
    %684 = vector.shape_cast %683 : vector<1xf32> to vector<1x1xf32>
    %685 = vector.broadcast %684 : vector<1x1xf32> to vector<1x16xf32>
    %686 = arith.cmpf oeq, %15, %685 : vector<1x16xf32>
    %687 = arith.extui %686 : vector<1x16xi1> to vector<1x16xi32>
    %688 = arith.sitofp %687 : vector<1x16xi32> to vector<1x16xf32>
    %689 = arith.subf %663, %688 : vector<1x16xf32>
    %c7_i32_164 = arith.constant 7 : i32
    %690 = vector.broadcast %c7_i32_164 : i32 to vector<15x1xi32>
    %691 = arith.cmpi eq, %21, %690 : vector<15x1xi32>
    %692 = arith.extui %691 : vector<15x1xi1> to vector<15x1xi32>
    %693 = arith.sitofp %692 : vector<15x1xi32> to vector<15x1xf32>
    %694 = vector.broadcast %688 : vector<1x16xf32> to vector<15x16xf32>
    %695 = vector.broadcast %693 : vector<15x1xf32> to vector<15x16xf32>
    %696 = arith.mulf %694, %695 : vector<15x16xf32>
    %697 = arith.addf %671, %696 : vector<15x16xf32>
    %cst_165 = arith.constant 0.000000e+00 : f32
    %698 = vector.broadcast %cst_165 : f32 to vector<1x16xf32>
    %699 = arith.cmpf ogt, %689, %698 : vector<1x16xf32>
    %cst_166 = arith.constant 0xFF800000 : f32
    %700 = vector.broadcast %cst_166 : f32 to vector<1x16xf32>
    %701 = arith.select %699, %487, %700 : vector<1x16xi1>, vector<1x16xf32>
    %cst_167 = arith.constant dense<0xFF800000> : vector<1xf32>
    %702 = vector.multi_reduction <maximumf>, %701, %cst_167 [1] : vector<1x16xf32> to vector<1xf32>
    %703 = vector.shape_cast %702 : vector<1xf32> to vector<1x1xf32>
    %704 = vector.broadcast %703 : vector<1x1xf32> to vector<1x16xf32>
    %705 = arith.cmpf oeq, %487, %704 : vector<1x16xf32>
    %706 = arith.andi %699, %705 : vector<1x16xi1>
    %cst_168 = arith.constant 1.600000e+01 : f32
    %707 = vector.broadcast %cst_168 : f32 to vector<1x16xf32>
    %708 = arith.select %706, %15, %707 : vector<1x16xi1>, vector<1x16xf32>
    %cst_169 = arith.constant dense<0x7F800000> : vector<1xf32>
    %709 = vector.multi_reduction <minimumf>, %708, %cst_169 [1] : vector<1x16xf32> to vector<1xf32>
    %710 = vector.shape_cast %709 : vector<1xf32> to vector<1x1xf32>
    %711 = vector.broadcast %710 : vector<1x1xf32> to vector<1x16xf32>
    %712 = arith.cmpf oeq, %15, %711 : vector<1x16xf32>
    %713 = arith.extui %712 : vector<1x16xi1> to vector<1x16xi32>
    %714 = arith.sitofp %713 : vector<1x16xi32> to vector<1x16xf32>
    %715 = arith.subf %689, %714 : vector<1x16xf32>
    %c8_i32_170 = arith.constant 8 : i32
    %716 = vector.broadcast %c8_i32_170 : i32 to vector<15x1xi32>
    %717 = arith.cmpi eq, %21, %716 : vector<15x1xi32>
    %718 = arith.extui %717 : vector<15x1xi1> to vector<15x1xi32>
    %719 = arith.sitofp %718 : vector<15x1xi32> to vector<15x1xf32>
    %720 = vector.broadcast %714 : vector<1x16xf32> to vector<15x16xf32>
    %721 = vector.broadcast %719 : vector<15x1xf32> to vector<15x16xf32>
    %722 = arith.mulf %720, %721 : vector<15x16xf32>
    %723 = arith.addf %697, %722 : vector<15x16xf32>
    %cst_171 = arith.constant 0.000000e+00 : f32
    %724 = vector.broadcast %cst_171 : f32 to vector<1x16xf32>
    %725 = arith.cmpf ogt, %715, %724 : vector<1x16xf32>
    %cst_172 = arith.constant 0xFF800000 : f32
    %726 = vector.broadcast %cst_172 : f32 to vector<1x16xf32>
    %727 = arith.select %725, %487, %726 : vector<1x16xi1>, vector<1x16xf32>
    %cst_173 = arith.constant dense<0xFF800000> : vector<1xf32>
    %728 = vector.multi_reduction <maximumf>, %727, %cst_173 [1] : vector<1x16xf32> to vector<1xf32>
    %729 = vector.shape_cast %728 : vector<1xf32> to vector<1x1xf32>
    %730 = vector.broadcast %729 : vector<1x1xf32> to vector<1x16xf32>
    %731 = arith.cmpf oeq, %487, %730 : vector<1x16xf32>
    %732 = arith.andi %725, %731 : vector<1x16xi1>
    %cst_174 = arith.constant 1.600000e+01 : f32
    %733 = vector.broadcast %cst_174 : f32 to vector<1x16xf32>
    %734 = arith.select %732, %15, %733 : vector<1x16xi1>, vector<1x16xf32>
    %cst_175 = arith.constant dense<0x7F800000> : vector<1xf32>
    %735 = vector.multi_reduction <minimumf>, %734, %cst_175 [1] : vector<1x16xf32> to vector<1xf32>
    %736 = vector.shape_cast %735 : vector<1xf32> to vector<1x1xf32>
    %737 = vector.broadcast %736 : vector<1x1xf32> to vector<1x16xf32>
    %738 = arith.cmpf oeq, %15, %737 : vector<1x16xf32>
    %739 = arith.extui %738 : vector<1x16xi1> to vector<1x16xi32>
    %740 = arith.sitofp %739 : vector<1x16xi32> to vector<1x16xf32>
    %741 = arith.subf %715, %740 : vector<1x16xf32>
    %c9_i32_176 = arith.constant 9 : i32
    %742 = vector.broadcast %c9_i32_176 : i32 to vector<15x1xi32>
    %743 = arith.cmpi eq, %21, %742 : vector<15x1xi32>
    %744 = arith.extui %743 : vector<15x1xi1> to vector<15x1xi32>
    %745 = arith.sitofp %744 : vector<15x1xi32> to vector<15x1xf32>
    %746 = vector.broadcast %740 : vector<1x16xf32> to vector<15x16xf32>
    %747 = vector.broadcast %745 : vector<15x1xf32> to vector<15x16xf32>
    %748 = arith.mulf %746, %747 : vector<15x16xf32>
    %749 = arith.addf %723, %748 : vector<15x16xf32>
    %cst_177 = arith.constant 0.000000e+00 : f32
    %750 = vector.broadcast %cst_177 : f32 to vector<1x16xf32>
    %751 = arith.cmpf ogt, %741, %750 : vector<1x16xf32>
    %cst_178 = arith.constant 0xFF800000 : f32
    %752 = vector.broadcast %cst_178 : f32 to vector<1x16xf32>
    %753 = arith.select %751, %487, %752 : vector<1x16xi1>, vector<1x16xf32>
    %cst_179 = arith.constant dense<0xFF800000> : vector<1xf32>
    %754 = vector.multi_reduction <maximumf>, %753, %cst_179 [1] : vector<1x16xf32> to vector<1xf32>
    %755 = vector.shape_cast %754 : vector<1xf32> to vector<1x1xf32>
    %756 = vector.broadcast %755 : vector<1x1xf32> to vector<1x16xf32>
    %757 = arith.cmpf oeq, %487, %756 : vector<1x16xf32>
    %758 = arith.andi %751, %757 : vector<1x16xi1>
    %cst_180 = arith.constant 1.600000e+01 : f32
    %759 = vector.broadcast %cst_180 : f32 to vector<1x16xf32>
    %760 = arith.select %758, %15, %759 : vector<1x16xi1>, vector<1x16xf32>
    %cst_181 = arith.constant dense<0x7F800000> : vector<1xf32>
    %761 = vector.multi_reduction <minimumf>, %760, %cst_181 [1] : vector<1x16xf32> to vector<1xf32>
    %762 = vector.shape_cast %761 : vector<1xf32> to vector<1x1xf32>
    %763 = vector.broadcast %762 : vector<1x1xf32> to vector<1x16xf32>
    %764 = arith.cmpf oeq, %15, %763 : vector<1x16xf32>
    %765 = arith.extui %764 : vector<1x16xi1> to vector<1x16xi32>
    %766 = arith.sitofp %765 : vector<1x16xi32> to vector<1x16xf32>
    %767 = arith.subf %741, %766 : vector<1x16xf32>
    %c10_i32_182 = arith.constant 10 : i32
    %768 = vector.broadcast %c10_i32_182 : i32 to vector<15x1xi32>
    %769 = arith.cmpi eq, %21, %768 : vector<15x1xi32>
    %770 = arith.extui %769 : vector<15x1xi1> to vector<15x1xi32>
    %771 = arith.sitofp %770 : vector<15x1xi32> to vector<15x1xf32>
    %772 = vector.broadcast %766 : vector<1x16xf32> to vector<15x16xf32>
    %773 = vector.broadcast %771 : vector<15x1xf32> to vector<15x16xf32>
    %774 = arith.mulf %772, %773 : vector<15x16xf32>
    %775 = arith.addf %749, %774 : vector<15x16xf32>
    %cst_183 = arith.constant 0.000000e+00 : f32
    %776 = vector.broadcast %cst_183 : f32 to vector<1x16xf32>
    %777 = arith.cmpf ogt, %767, %776 : vector<1x16xf32>
    %cst_184 = arith.constant 0xFF800000 : f32
    %778 = vector.broadcast %cst_184 : f32 to vector<1x16xf32>
    %779 = arith.select %777, %487, %778 : vector<1x16xi1>, vector<1x16xf32>
    %cst_185 = arith.constant dense<0xFF800000> : vector<1xf32>
    %780 = vector.multi_reduction <maximumf>, %779, %cst_185 [1] : vector<1x16xf32> to vector<1xf32>
    %781 = vector.shape_cast %780 : vector<1xf32> to vector<1x1xf32>
    %782 = vector.broadcast %781 : vector<1x1xf32> to vector<1x16xf32>
    %783 = arith.cmpf oeq, %487, %782 : vector<1x16xf32>
    %784 = arith.andi %777, %783 : vector<1x16xi1>
    %cst_186 = arith.constant 1.600000e+01 : f32
    %785 = vector.broadcast %cst_186 : f32 to vector<1x16xf32>
    %786 = arith.select %784, %15, %785 : vector<1x16xi1>, vector<1x16xf32>
    %cst_187 = arith.constant dense<0x7F800000> : vector<1xf32>
    %787 = vector.multi_reduction <minimumf>, %786, %cst_187 [1] : vector<1x16xf32> to vector<1xf32>
    %788 = vector.shape_cast %787 : vector<1xf32> to vector<1x1xf32>
    %789 = vector.broadcast %788 : vector<1x1xf32> to vector<1x16xf32>
    %790 = arith.cmpf oeq, %15, %789 : vector<1x16xf32>
    %791 = arith.extui %790 : vector<1x16xi1> to vector<1x16xi32>
    %792 = arith.sitofp %791 : vector<1x16xi32> to vector<1x16xf32>
    %793 = arith.subf %767, %792 : vector<1x16xf32>
    %c11_i32_188 = arith.constant 11 : i32
    %794 = vector.broadcast %c11_i32_188 : i32 to vector<15x1xi32>
    %795 = arith.cmpi eq, %21, %794 : vector<15x1xi32>
    %796 = arith.extui %795 : vector<15x1xi1> to vector<15x1xi32>
    %797 = arith.sitofp %796 : vector<15x1xi32> to vector<15x1xf32>
    %798 = vector.broadcast %792 : vector<1x16xf32> to vector<15x16xf32>
    %799 = vector.broadcast %797 : vector<15x1xf32> to vector<15x16xf32>
    %800 = arith.mulf %798, %799 : vector<15x16xf32>
    %801 = arith.addf %775, %800 : vector<15x16xf32>
    %cst_189 = arith.constant 0.000000e+00 : f32
    %802 = vector.broadcast %cst_189 : f32 to vector<1x16xf32>
    %803 = arith.cmpf ogt, %793, %802 : vector<1x16xf32>
    %cst_190 = arith.constant 0xFF800000 : f32
    %804 = vector.broadcast %cst_190 : f32 to vector<1x16xf32>
    %805 = arith.select %803, %487, %804 : vector<1x16xi1>, vector<1x16xf32>
    %cst_191 = arith.constant dense<0xFF800000> : vector<1xf32>
    %806 = vector.multi_reduction <maximumf>, %805, %cst_191 [1] : vector<1x16xf32> to vector<1xf32>
    %807 = vector.shape_cast %806 : vector<1xf32> to vector<1x1xf32>
    %808 = vector.broadcast %807 : vector<1x1xf32> to vector<1x16xf32>
    %809 = arith.cmpf oeq, %487, %808 : vector<1x16xf32>
    %810 = arith.andi %803, %809 : vector<1x16xi1>
    %cst_192 = arith.constant 1.600000e+01 : f32
    %811 = vector.broadcast %cst_192 : f32 to vector<1x16xf32>
    %812 = arith.select %810, %15, %811 : vector<1x16xi1>, vector<1x16xf32>
    %cst_193 = arith.constant dense<0x7F800000> : vector<1xf32>
    %813 = vector.multi_reduction <minimumf>, %812, %cst_193 [1] : vector<1x16xf32> to vector<1xf32>
    %814 = vector.shape_cast %813 : vector<1xf32> to vector<1x1xf32>
    %815 = vector.broadcast %814 : vector<1x1xf32> to vector<1x16xf32>
    %816 = arith.cmpf oeq, %15, %815 : vector<1x16xf32>
    %817 = arith.extui %816 : vector<1x16xi1> to vector<1x16xi32>
    %818 = arith.sitofp %817 : vector<1x16xi32> to vector<1x16xf32>
    %819 = arith.subf %793, %818 : vector<1x16xf32>
    %c12_i32_194 = arith.constant 12 : i32
    %820 = vector.broadcast %c12_i32_194 : i32 to vector<15x1xi32>
    %821 = arith.cmpi eq, %21, %820 : vector<15x1xi32>
    %822 = arith.extui %821 : vector<15x1xi1> to vector<15x1xi32>
    %823 = arith.sitofp %822 : vector<15x1xi32> to vector<15x1xf32>
    %824 = vector.broadcast %818 : vector<1x16xf32> to vector<15x16xf32>
    %825 = vector.broadcast %823 : vector<15x1xf32> to vector<15x16xf32>
    %826 = arith.mulf %824, %825 : vector<15x16xf32>
    %827 = arith.addf %801, %826 : vector<15x16xf32>
    %cst_195 = arith.constant 0.000000e+00 : f32
    %828 = vector.broadcast %cst_195 : f32 to vector<1x16xf32>
    %829 = arith.cmpf ogt, %819, %828 : vector<1x16xf32>
    %cst_196 = arith.constant 0xFF800000 : f32
    %830 = vector.broadcast %cst_196 : f32 to vector<1x16xf32>
    %831 = arith.select %829, %487, %830 : vector<1x16xi1>, vector<1x16xf32>
    %cst_197 = arith.constant dense<0xFF800000> : vector<1xf32>
    %832 = vector.multi_reduction <maximumf>, %831, %cst_197 [1] : vector<1x16xf32> to vector<1xf32>
    %833 = vector.shape_cast %832 : vector<1xf32> to vector<1x1xf32>
    %834 = vector.broadcast %833 : vector<1x1xf32> to vector<1x16xf32>
    %835 = arith.cmpf oeq, %487, %834 : vector<1x16xf32>
    %836 = arith.andi %829, %835 : vector<1x16xi1>
    %cst_198 = arith.constant 1.600000e+01 : f32
    %837 = vector.broadcast %cst_198 : f32 to vector<1x16xf32>
    %838 = arith.select %836, %15, %837 : vector<1x16xi1>, vector<1x16xf32>
    %cst_199 = arith.constant dense<0x7F800000> : vector<1xf32>
    %839 = vector.multi_reduction <minimumf>, %838, %cst_199 [1] : vector<1x16xf32> to vector<1xf32>
    %840 = vector.shape_cast %839 : vector<1xf32> to vector<1x1xf32>
    %841 = vector.broadcast %840 : vector<1x1xf32> to vector<1x16xf32>
    %842 = arith.cmpf oeq, %15, %841 : vector<1x16xf32>
    %843 = arith.extui %842 : vector<1x16xi1> to vector<1x16xi32>
    %844 = arith.sitofp %843 : vector<1x16xi32> to vector<1x16xf32>
    %845 = arith.subf %819, %844 : vector<1x16xf32>
    %c13_i32_200 = arith.constant 13 : i32
    %846 = vector.broadcast %c13_i32_200 : i32 to vector<15x1xi32>
    %847 = arith.cmpi eq, %21, %846 : vector<15x1xi32>
    %848 = arith.extui %847 : vector<15x1xi1> to vector<15x1xi32>
    %849 = arith.sitofp %848 : vector<15x1xi32> to vector<15x1xf32>
    %850 = vector.broadcast %844 : vector<1x16xf32> to vector<15x16xf32>
    %851 = vector.broadcast %849 : vector<15x1xf32> to vector<15x16xf32>
    %852 = arith.mulf %850, %851 : vector<15x16xf32>
    %853 = arith.addf %827, %852 : vector<15x16xf32>
    %cst_201 = arith.constant 0.000000e+00 : f32
    %854 = vector.broadcast %cst_201 : f32 to vector<1x16xf32>
    %855 = arith.cmpf ogt, %845, %854 : vector<1x16xf32>
    %cst_202 = arith.constant 0xFF800000 : f32
    %856 = vector.broadcast %cst_202 : f32 to vector<1x16xf32>
    %857 = arith.select %855, %487, %856 : vector<1x16xi1>, vector<1x16xf32>
    %cst_203 = arith.constant dense<0xFF800000> : vector<1xf32>
    %858 = vector.multi_reduction <maximumf>, %857, %cst_203 [1] : vector<1x16xf32> to vector<1xf32>
    %859 = vector.shape_cast %858 : vector<1xf32> to vector<1x1xf32>
    %860 = vector.broadcast %859 : vector<1x1xf32> to vector<1x16xf32>
    %861 = arith.cmpf oeq, %487, %860 : vector<1x16xf32>
    %862 = arith.andi %855, %861 : vector<1x16xi1>
    %cst_204 = arith.constant 1.600000e+01 : f32
    %863 = vector.broadcast %cst_204 : f32 to vector<1x16xf32>
    %864 = arith.select %862, %15, %863 : vector<1x16xi1>, vector<1x16xf32>
    %cst_205 = arith.constant dense<0x7F800000> : vector<1xf32>
    %865 = vector.multi_reduction <minimumf>, %864, %cst_205 [1] : vector<1x16xf32> to vector<1xf32>
    %866 = vector.shape_cast %865 : vector<1xf32> to vector<1x1xf32>
    %867 = vector.broadcast %866 : vector<1x1xf32> to vector<1x16xf32>
    %868 = arith.cmpf oeq, %15, %867 : vector<1x16xf32>
    %869 = arith.extui %868 : vector<1x16xi1> to vector<1x16xi32>
    %870 = arith.sitofp %869 : vector<1x16xi32> to vector<1x16xf32>
    %c14_i32_206 = arith.constant 14 : i32
    %871 = vector.broadcast %c14_i32_206 : i32 to vector<15x1xi32>
    %872 = arith.cmpi eq, %21, %871 : vector<15x1xi32>
    %873 = arith.extui %872 : vector<15x1xi1> to vector<15x1xi32>
    %874 = arith.sitofp %873 : vector<15x1xi32> to vector<15x1xf32>
    %875 = vector.broadcast %870 : vector<1x16xf32> to vector<15x16xf32>
    %876 = vector.broadcast %874 : vector<15x1xf32> to vector<15x16xf32>
    %877 = arith.mulf %875, %876 : vector<15x16xf32>
    %878 = arith.addf %853, %877 : vector<15x16xf32>
    %cst_207 = arith.constant dense<0.000000e+00> : vector<15x16xf32>
    %879 = tpu.matmul %878, %473, %cst_207 {dimension_numbers = #tpu.dot_dimension_numbers<[1], [0], [0], [1], [0, 0, 1, 1], [], []>} : vector<15x16xf32>, vector<16x16xf32>, vector<15x16xf32> -> vector<15x16xf32>
    %880 = vector.broadcast %15 : vector<1x16xf32> to vector<15x16xf32>
    %881 = arith.mulf %878, %880 : vector<15x16xf32>
    %cst_208 = arith.constant dense<0.000000e+00> : vector<15xf32>
    %882 = vector.multi_reduction <add>, %881, %cst_208 [1] : vector<15x16xf32> to vector<15xf32>
    %883 = vector.shape_cast %882 : vector<15xf32> to vector<15x1xf32>
    %884 = vector.broadcast %13 : vector<1x16xf32> to vector<15x16xf32>
    %885 = vector.broadcast %883 : vector<15x1xf32> to vector<15x16xf32>
    %886 = arith.cmpf ogt, %884, %885 : vector<15x16xf32>
    %cst_209 = arith.constant 0.176776692 : f32
    %887 = vector.broadcast %cst_209 : f32 to vector<15x16xf32>
    %888 = arith.mulf %879, %887 : vector<15x16xf32>
    %cst_210 = arith.constant 0xFF800000 : f32
    %889 = vector.broadcast %cst_210 : f32 to vector<15x16xf32>
    %890 = arith.select %886, %889, %888 : vector<15x16xi1>, vector<15x16xf32>
    %cst_211 = arith.constant dense<0xFF800000> : vector<15xf32>
    %891 = vector.multi_reduction <maximumf>, %890, %cst_211 [1] : vector<15x16xf32> to vector<15xf32>
    %892 = vector.shape_cast %891 : vector<15xf32> to vector<15x1xf32>
    %893 = vector.broadcast %892 : vector<15x1xf32> to vector<15x16xf32>
    %894 = arith.subf %890, %893 : vector<15x16xf32>
    %895 = math.exp %894 : vector<15x16xf32>
    %cst_212 = arith.constant dense<0.000000e+00> : vector<15xf32>
    %896 = vector.multi_reduction <add>, %895, %cst_212 [1] : vector<15x16xf32> to vector<15xf32>
    %897 = vector.shape_cast %896 : vector<15xf32> to vector<15x1xf32>
    %898 = tpu.reciprocal %897 {approx = true} : vector<15x1xf32> -> vector<15x1xf32>
    %899 = vector.broadcast %898 : vector<15x1xf32> to vector<15x16xf32>
    %900 = arith.mulf %895, %899 : vector<15x16xf32>
    %901 = arith.truncf %900 : vector<15x16xf32> to vector<15x16xbf16>
    %cst_213 = arith.constant dense<0.000000e+00> : vector<15x32xf32>
    %902 = tpu.matmul %901, %471, %cst_213 {dimension_numbers = #tpu.dot_dimension_numbers<[1], [0], [0], [1], [0, 0, 1, 1], [], []>} : vector<15x16xbf16>, vector<16x32xbf16>, vector<15x32xf32> -> vector<15x32xf32>
    %903 = tpu.concatenate %902, %22 in 1 : vector<15x32xf32>, vector<15x1xf32> -> vector<15x33xf32>
    %cst_214 = arith.constant dense<0.000000e+00> : vector<16x33xf32>
    %904 = tpu.matmul %878, %903, %cst_214 {dimension_numbers = #tpu.dot_dimension_numbers<[0], [0], [1], [1], [0, 1, 1, 1], [], []>} : vector<15x16xf32>, vector<15x33xf32>, vector<16x33xf32> -> vector<16x33xf32>
    %905 = vector.extract_strided_slice %904 {offsets = [0, 32], sizes = [16, 1], strides = [1, 1]} : vector<16x33xf32> to vector<16x1xf32>
    %cst_215 = arith.constant 5.000000e-01 : f32
    %906 = vector.broadcast %cst_215 : f32 to vector<16x1xf32>
    %907 = arith.cmpf ogt, %905, %906 : vector<16x1xf32>
    %908 = vector.extract_strided_slice %904 {offsets = [0, 0], sizes = [16, 32], strides = [1, 1]} : vector<16x33xf32> to vector<16x32xf32>
    %909 = vector.shape_cast %907 : vector<16x1xi1> to vector<16x1xi1>
    %910 = vector.broadcast %909 : vector<16x1xi1> to vector<16x32xi1>
    %911 = arith.select %910, %908, %472 : vector<16x32xi1>, vector<16x32xf32>
    %c0_216 = arith.constant 0 : index
    %c0_217 = arith.constant 0 : index
    %c32 = arith.constant 32 : index
    %912 = vector.load %arg6[%c0_216, %c0_217, %c32] : memref<1x16x128xf32, #tpu.memory_space<vmem>>, vector<1x16x32xf32>
    %913 = vector.shape_cast %912 : vector<1x16x32xf32> to vector<16x32xf32>
    %914 = vector.shape_cast %911 : vector<16x32xf32> to vector<1x16x32xf32>
    tpu.vector_store %arg6[%c0_216, %c0_217, %c32], %914 {strides = array<i32>} : memref<1x16x128xf32, #tpu.memory_space<vmem>>, vector<1x16x32xf32>,
    %915 = vector.extract_strided_slice %1 {offsets = [0, 64], sizes = [16, 32], strides = [1, 1]} : vector<16x128xbf16> to vector<16x32xbf16>
    %916 = vector.extract_strided_slice %3 {offsets = [0, 64], sizes = [16, 32], strides = [1, 1]} : vector<16x128xbf16> to vector<16x32xbf16>
    %917 = vector.extract_strided_slice %5 {offsets = [0, 64], sizes = [16, 32], strides = [1, 1]} : vector<16x128xbf16> to vector<16x32xbf16>
    %918 = vector.extract_strided_slice %7 {offsets = [0, 64], sizes = [16, 32], strides = [1, 1]} : vector<16x128xf32> to vector<16x32xf32>
    %cst_218 = arith.constant dense<0.000000e+00> : vector<16x16xf32>
    %919 = tpu.matmul %915, %916, %cst_218 {dimension_numbers = #tpu.dot_dimension_numbers<[1], [1], [0], [0], [0, 0, 1, 0], [], []>} : vector<16x32xbf16>, vector<16x32xbf16>, vector<16x16xf32> -> vector<16x16xf32>
    %cst_219 = arith.constant 0xFF800000 : f32
    %920 = vector.broadcast %cst_219 : f32 to vector<16x16xf32>
    %921 = arith.select %11, %919, %920 : vector<16x16xi1>, vector<16x16xf32>
    %cst_220 = arith.constant dense<0xFF800000> : vector<16xf32>
    %922 = vector.multi_reduction <maximumf>, %921, %cst_220 [1] : vector<16x16xf32> to vector<16xf32>
    %923 = vector.shape_cast %922 : vector<16xf32> to vector<16x1xf32>
    %924 = arith.mulf %9, %919 : vector<16x16xf32>
    %cst_221 = arith.constant dense<0.000000e+00> : vector<16xf32>
    %925 = vector.multi_reduction <add>, %924, %cst_221 [1] : vector<16x16xf32> to vector<16xf32>
    %926 = vector.shape_cast %925 : vector<16xf32> to vector<16x1xf32>
    %cst_222 = arith.constant 6.250000e-02 : f32
    %927 = vector.broadcast %cst_222 : f32 to vector<16x1xf32>
    %928 = arith.mulf %926, %927 : vector<16x1xf32>
    %929 = arith.subf %923, %928 : vector<16x1xf32>
    %930 = vector.broadcast %929 : vector<16x1xf32> to vector<16x16xf32>
    %931 = arith.mulf %20, %930 : vector<16x16xf32>
    %cst_223 = arith.constant dense<0.000000e+00> : vector<16xf32>
    %932 = vector.multi_reduction <add>, %931, %cst_223 [0] : vector<16x16xf32> to vector<16xf32>
    %933 = vector.shape_cast %932 : vector<16xf32> to vector<1x16xf32>
    %cst_224 = arith.constant 1.000000e+00 : f32
    %934 = vector.broadcast %cst_224 : f32 to vector<1x16xf32>
    %cst_225 = arith.constant 0.000000e+00 : f32
    %935 = vector.broadcast %cst_225 : f32 to vector<15x16xf32>
    %cst_226 = arith.constant 0.000000e+00 : f32
    %936 = vector.broadcast %cst_226 : f32 to vector<1x16xf32>
    %937 = arith.cmpf ogt, %934, %936 : vector<1x16xf32>
    %cst_227 = arith.constant 0xFF800000 : f32
    %938 = vector.broadcast %cst_227 : f32 to vector<1x16xf32>
    %939 = arith.select %937, %933, %938 : vector<1x16xi1>, vector<1x16xf32>
    %cst_228 = arith.constant dense<0xFF800000> : vector<1xf32>
    %940 = vector.multi_reduction <maximumf>, %939, %cst_228 [1] : vector<1x16xf32> to vector<1xf32>
    %941 = vector.shape_cast %940 : vector<1xf32> to vector<1x1xf32>
    %942 = vector.broadcast %941 : vector<1x1xf32> to vector<1x16xf32>
    %943 = arith.cmpf oeq, %933, %942 : vector<1x16xf32>
    %944 = arith.andi %937, %943 : vector<1x16xi1>
    %cst_229 = arith.constant 1.600000e+01 : f32
    %945 = vector.broadcast %cst_229 : f32 to vector<1x16xf32>
    %946 = arith.select %944, %15, %945 : vector<1x16xi1>, vector<1x16xf32>
    %cst_230 = arith.constant dense<0x7F800000> : vector<1xf32>
    %947 = vector.multi_reduction <minimumf>, %946, %cst_230 [1] : vector<1x16xf32> to vector<1xf32>
    %948 = vector.shape_cast %947 : vector<1xf32> to vector<1x1xf32>
    %949 = vector.broadcast %948 : vector<1x1xf32> to vector<1x16xf32>
    %950 = arith.cmpf oeq, %15, %949 : vector<1x16xf32>
    %951 = arith.extui %950 : vector<1x16xi1> to vector<1x16xi32>
    %952 = arith.sitofp %951 : vector<1x16xi32> to vector<1x16xf32>
    %953 = arith.subf %934, %952 : vector<1x16xf32>
    %c0_i32_231 = arith.constant 0 : i32
    %954 = vector.broadcast %c0_i32_231 : i32 to vector<15x1xi32>
    %955 = arith.cmpi eq, %21, %954 : vector<15x1xi32>
    %956 = arith.extui %955 : vector<15x1xi1> to vector<15x1xi32>
    %957 = arith.sitofp %956 : vector<15x1xi32> to vector<15x1xf32>
    %958 = vector.broadcast %952 : vector<1x16xf32> to vector<15x16xf32>
    %959 = vector.broadcast %957 : vector<15x1xf32> to vector<15x16xf32>
    %960 = arith.mulf %958, %959 : vector<15x16xf32>
    %961 = arith.addf %935, %960 : vector<15x16xf32>
    %cst_232 = arith.constant 0.000000e+00 : f32
    %962 = vector.broadcast %cst_232 : f32 to vector<1x16xf32>
    %963 = arith.cmpf ogt, %953, %962 : vector<1x16xf32>
    %cst_233 = arith.constant 0xFF800000 : f32
    %964 = vector.broadcast %cst_233 : f32 to vector<1x16xf32>
    %965 = arith.select %963, %933, %964 : vector<1x16xi1>, vector<1x16xf32>
    %cst_234 = arith.constant dense<0xFF800000> : vector<1xf32>
    %966 = vector.multi_reduction <maximumf>, %965, %cst_234 [1] : vector<1x16xf32> to vector<1xf32>
    %967 = vector.shape_cast %966 : vector<1xf32> to vector<1x1xf32>
    %968 = vector.broadcast %967 : vector<1x1xf32> to vector<1x16xf32>
    %969 = arith.cmpf oeq, %933, %968 : vector<1x16xf32>
    %970 = arith.andi %963, %969 : vector<1x16xi1>
    %cst_235 = arith.constant 1.600000e+01 : f32
    %971 = vector.broadcast %cst_235 : f32 to vector<1x16xf32>
    %972 = arith.select %970, %15, %971 : vector<1x16xi1>, vector<1x16xf32>
    %cst_236 = arith.constant dense<0x7F800000> : vector<1xf32>
    %973 = vector.multi_reduction <minimumf>, %972, %cst_236 [1] : vector<1x16xf32> to vector<1xf32>
    %974 = vector.shape_cast %973 : vector<1xf32> to vector<1x1xf32>
    %975 = vector.broadcast %974 : vector<1x1xf32> to vector<1x16xf32>
    %976 = arith.cmpf oeq, %15, %975 : vector<1x16xf32>
    %977 = arith.extui %976 : vector<1x16xi1> to vector<1x16xi32>
    %978 = arith.sitofp %977 : vector<1x16xi32> to vector<1x16xf32>
    %979 = arith.subf %953, %978 : vector<1x16xf32>
    %c1_i32_237 = arith.constant 1 : i32
    %980 = vector.broadcast %c1_i32_237 : i32 to vector<15x1xi32>
    %981 = arith.cmpi eq, %21, %980 : vector<15x1xi32>
    %982 = arith.extui %981 : vector<15x1xi1> to vector<15x1xi32>
    %983 = arith.sitofp %982 : vector<15x1xi32> to vector<15x1xf32>
    %984 = vector.broadcast %978 : vector<1x16xf32> to vector<15x16xf32>
    %985 = vector.broadcast %983 : vector<15x1xf32> to vector<15x16xf32>
    %986 = arith.mulf %984, %985 : vector<15x16xf32>
    %987 = arith.addf %961, %986 : vector<15x16xf32>
    %cst_238 = arith.constant 0.000000e+00 : f32
    %988 = vector.broadcast %cst_238 : f32 to vector<1x16xf32>
    %989 = arith.cmpf ogt, %979, %988 : vector<1x16xf32>
    %cst_239 = arith.constant 0xFF800000 : f32
    %990 = vector.broadcast %cst_239 : f32 to vector<1x16xf32>
    %991 = arith.select %989, %933, %990 : vector<1x16xi1>, vector<1x16xf32>
    %cst_240 = arith.constant dense<0xFF800000> : vector<1xf32>
    %992 = vector.multi_reduction <maximumf>, %991, %cst_240 [1] : vector<1x16xf32> to vector<1xf32>
    %993 = vector.shape_cast %992 : vector<1xf32> to vector<1x1xf32>
    %994 = vector.broadcast %993 : vector<1x1xf32> to vector<1x16xf32>
    %995 = arith.cmpf oeq, %933, %994 : vector<1x16xf32>
    %996 = arith.andi %989, %995 : vector<1x16xi1>
    %cst_241 = arith.constant 1.600000e+01 : f32
    %997 = vector.broadcast %cst_241 : f32 to vector<1x16xf32>
    %998 = arith.select %996, %15, %997 : vector<1x16xi1>, vector<1x16xf32>
    %cst_242 = arith.constant dense<0x7F800000> : vector<1xf32>
    %999 = vector.multi_reduction <minimumf>, %998, %cst_242 [1] : vector<1x16xf32> to vector<1xf32>
    %1000 = vector.shape_cast %999 : vector<1xf32> to vector<1x1xf32>
    %1001 = vector.broadcast %1000 : vector<1x1xf32> to vector<1x16xf32>
    %1002 = arith.cmpf oeq, %15, %1001 : vector<1x16xf32>
    %1003 = arith.extui %1002 : vector<1x16xi1> to vector<1x16xi32>
    %1004 = arith.sitofp %1003 : vector<1x16xi32> to vector<1x16xf32>
    %1005 = arith.subf %979, %1004 : vector<1x16xf32>
    %c2_i32_243 = arith.constant 2 : i32
    %1006 = vector.broadcast %c2_i32_243 : i32 to vector<15x1xi32>
    %1007 = arith.cmpi eq, %21, %1006 : vector<15x1xi32>
    %1008 = arith.extui %1007 : vector<15x1xi1> to vector<15x1xi32>
    %1009 = arith.sitofp %1008 : vector<15x1xi32> to vector<15x1xf32>
    %1010 = vector.broadcast %1004 : vector<1x16xf32> to vector<15x16xf32>
    %1011 = vector.broadcast %1009 : vector<15x1xf32> to vector<15x16xf32>
    %1012 = arith.mulf %1010, %1011 : vector<15x16xf32>
    %1013 = arith.addf %987, %1012 : vector<15x16xf32>
    %cst_244 = arith.constant 0.000000e+00 : f32
    %1014 = vector.broadcast %cst_244 : f32 to vector<1x16xf32>
    %1015 = arith.cmpf ogt, %1005, %1014 : vector<1x16xf32>
    %cst_245 = arith.constant 0xFF800000 : f32
    %1016 = vector.broadcast %cst_245 : f32 to vector<1x16xf32>
    %1017 = arith.select %1015, %933, %1016 : vector<1x16xi1>, vector<1x16xf32>
    %cst_246 = arith.constant dense<0xFF800000> : vector<1xf32>
    %1018 = vector.multi_reduction <maximumf>, %1017, %cst_246 [1] : vector<1x16xf32> to vector<1xf32>
    %1019 = vector.shape_cast %1018 : vector<1xf32> to vector<1x1xf32>
    %1020 = vector.broadcast %1019 : vector<1x1xf32> to vector<1x16xf32>
    %1021 = arith.cmpf oeq, %933, %1020 : vector<1x16xf32>
    %1022 = arith.andi %1015, %1021 : vector<1x16xi1>
    %cst_247 = arith.constant 1.600000e+01 : f32
    %1023 = vector.broadcast %cst_247 : f32 to vector<1x16xf32>
    %1024 = arith.select %1022, %15, %1023 : vector<1x16xi1>, vector<1x16xf32>
    %cst_248 = arith.constant dense<0x7F800000> : vector<1xf32>
    %1025 = vector.multi_reduction <minimumf>, %1024, %cst_248 [1] : vector<1x16xf32> to vector<1xf32>
    %1026 = vector.shape_cast %1025 : vector<1xf32> to vector<1x1xf32>
    %1027 = vector.broadcast %1026 : vector<1x1xf32> to vector<1x16xf32>
    %1028 = arith.cmpf oeq, %15, %1027 : vector<1x16xf32>
    %1029 = arith.extui %1028 : vector<1x16xi1> to vector<1x16xi32>
    %1030 = arith.sitofp %1029 : vector<1x16xi32> to vector<1x16xf32>
    %1031 = arith.subf %1005, %1030 : vector<1x16xf32>
    %c3_i32_249 = arith.constant 3 : i32
    %1032 = vector.broadcast %c3_i32_249 : i32 to vector<15x1xi32>
    %1033 = arith.cmpi eq, %21, %1032 : vector<15x1xi32>
    %1034 = arith.extui %1033 : vector<15x1xi1> to vector<15x1xi32>
    %1035 = arith.sitofp %1034 : vector<15x1xi32> to vector<15x1xf32>
    %1036 = vector.broadcast %1030 : vector<1x16xf32> to vector<15x16xf32>
    %1037 = vector.broadcast %1035 : vector<15x1xf32> to vector<15x16xf32>
    %1038 = arith.mulf %1036, %1037 : vector<15x16xf32>
    %1039 = arith.addf %1013, %1038 : vector<15x16xf32>
    %cst_250 = arith.constant 0.000000e+00 : f32
    %1040 = vector.broadcast %cst_250 : f32 to vector<1x16xf32>
    %1041 = arith.cmpf ogt, %1031, %1040 : vector<1x16xf32>
    %cst_251 = arith.constant 0xFF800000 : f32
    %1042 = vector.broadcast %cst_251 : f32 to vector<1x16xf32>
    %1043 = arith.select %1041, %933, %1042 : vector<1x16xi1>, vector<1x16xf32>
    %cst_252 = arith.constant dense<0xFF800000> : vector<1xf32>
    %1044 = vector.multi_reduction <maximumf>, %1043, %cst_252 [1] : vector<1x16xf32> to vector<1xf32>
    %1045 = vector.shape_cast %1044 : vector<1xf32> to vector<1x1xf32>
    %1046 = vector.broadcast %1045 : vector<1x1xf32> to vector<1x16xf32>
    %1047 = arith.cmpf oeq, %933, %1046 : vector<1x16xf32>
    %1048 = arith.andi %1041, %1047 : vector<1x16xi1>
    %cst_253 = arith.constant 1.600000e+01 : f32
    %1049 = vector.broadcast %cst_253 : f32 to vector<1x16xf32>
    %1050 = arith.select %1048, %15, %1049 : vector<1x16xi1>, vector<1x16xf32>
    %cst_254 = arith.constant dense<0x7F800000> : vector<1xf32>
    %1051 = vector.multi_reduction <minimumf>, %1050, %cst_254 [1] : vector<1x16xf32> to vector<1xf32>
    %1052 = vector.shape_cast %1051 : vector<1xf32> to vector<1x1xf32>
    %1053 = vector.broadcast %1052 : vector<1x1xf32> to vector<1x16xf32>
    %1054 = arith.cmpf oeq, %15, %1053 : vector<1x16xf32>
    %1055 = arith.extui %1054 : vector<1x16xi1> to vector<1x16xi32>
    %1056 = arith.sitofp %1055 : vector<1x16xi32> to vector<1x16xf32>
    %1057 = arith.subf %1031, %1056 : vector<1x16xf32>
    %c4_i32_255 = arith.constant 4 : i32
    %1058 = vector.broadcast %c4_i32_255 : i32 to vector<15x1xi32>
    %1059 = arith.cmpi eq, %21, %1058 : vector<15x1xi32>
    %1060 = arith.extui %1059 : vector<15x1xi1> to vector<15x1xi32>
    %1061 = arith.sitofp %1060 : vector<15x1xi32> to vector<15x1xf32>
    %1062 = vector.broadcast %1056 : vector<1x16xf32> to vector<15x16xf32>
    %1063 = vector.broadcast %1061 : vector<15x1xf32> to vector<15x16xf32>
    %1064 = arith.mulf %1062, %1063 : vector<15x16xf32>
    %1065 = arith.addf %1039, %1064 : vector<15x16xf32>
    %cst_256 = arith.constant 0.000000e+00 : f32
    %1066 = vector.broadcast %cst_256 : f32 to vector<1x16xf32>
    %1067 = arith.cmpf ogt, %1057, %1066 : vector<1x16xf32>
    %cst_257 = arith.constant 0xFF800000 : f32
    %1068 = vector.broadcast %cst_257 : f32 to vector<1x16xf32>
    %1069 = arith.select %1067, %933, %1068 : vector<1x16xi1>, vector<1x16xf32>
    %cst_258 = arith.constant dense<0xFF800000> : vector<1xf32>
    %1070 = vector.multi_reduction <maximumf>, %1069, %cst_258 [1] : vector<1x16xf32> to vector<1xf32>
    %1071 = vector.shape_cast %1070 : vector<1xf32> to vector<1x1xf32>
    %1072 = vector.broadcast %1071 : vector<1x1xf32> to vector<1x16xf32>
    %1073 = arith.cmpf oeq, %933, %1072 : vector<1x16xf32>
    %1074 = arith.andi %1067, %1073 : vector<1x16xi1>
    %cst_259 = arith.constant 1.600000e+01 : f32
    %1075 = vector.broadcast %cst_259 : f32 to vector<1x16xf32>
    %1076 = arith.select %1074, %15, %1075 : vector<1x16xi1>, vector<1x16xf32>
    %cst_260 = arith.constant dense<0x7F800000> : vector<1xf32>
    %1077 = vector.multi_reduction <minimumf>, %1076, %cst_260 [1] : vector<1x16xf32> to vector<1xf32>
    %1078 = vector.shape_cast %1077 : vector<1xf32> to vector<1x1xf32>
    %1079 = vector.broadcast %1078 : vector<1x1xf32> to vector<1x16xf32>
    %1080 = arith.cmpf oeq, %15, %1079 : vector<1x16xf32>
    %1081 = arith.extui %1080 : vector<1x16xi1> to vector<1x16xi32>
    %1082 = arith.sitofp %1081 : vector<1x16xi32> to vector<1x16xf32>
    %1083 = arith.subf %1057, %1082 : vector<1x16xf32>
    %c5_i32_261 = arith.constant 5 : i32
    %1084 = vector.broadcast %c5_i32_261 : i32 to vector<15x1xi32>
    %1085 = arith.cmpi eq, %21, %1084 : vector<15x1xi32>
    %1086 = arith.extui %1085 : vector<15x1xi1> to vector<15x1xi32>
    %1087 = arith.sitofp %1086 : vector<15x1xi32> to vector<15x1xf32>
    %1088 = vector.broadcast %1082 : vector<1x16xf32> to vector<15x16xf32>
    %1089 = vector.broadcast %1087 : vector<15x1xf32> to vector<15x16xf32>
    %1090 = arith.mulf %1088, %1089 : vector<15x16xf32>
    %1091 = arith.addf %1065, %1090 : vector<15x16xf32>
    %cst_262 = arith.constant 0.000000e+00 : f32
    %1092 = vector.broadcast %cst_262 : f32 to vector<1x16xf32>
    %1093 = arith.cmpf ogt, %1083, %1092 : vector<1x16xf32>
    %cst_263 = arith.constant 0xFF800000 : f32
    %1094 = vector.broadcast %cst_263 : f32 to vector<1x16xf32>
    %1095 = arith.select %1093, %933, %1094 : vector<1x16xi1>, vector<1x16xf32>
    %cst_264 = arith.constant dense<0xFF800000> : vector<1xf32>
    %1096 = vector.multi_reduction <maximumf>, %1095, %cst_264 [1] : vector<1x16xf32> to vector<1xf32>
    %1097 = vector.shape_cast %1096 : vector<1xf32> to vector<1x1xf32>
    %1098 = vector.broadcast %1097 : vector<1x1xf32> to vector<1x16xf32>
    %1099 = arith.cmpf oeq, %933, %1098 : vector<1x16xf32>
    %1100 = arith.andi %1093, %1099 : vector<1x16xi1>
    %cst_265 = arith.constant 1.600000e+01 : f32
    %1101 = vector.broadcast %cst_265 : f32 to vector<1x16xf32>
    %1102 = arith.select %1100, %15, %1101 : vector<1x16xi1>, vector<1x16xf32>
    %cst_266 = arith.constant dense<0x7F800000> : vector<1xf32>
    %1103 = vector.multi_reduction <minimumf>, %1102, %cst_266 [1] : vector<1x16xf32> to vector<1xf32>
    %1104 = vector.shape_cast %1103 : vector<1xf32> to vector<1x1xf32>
    %1105 = vector.broadcast %1104 : vector<1x1xf32> to vector<1x16xf32>
    %1106 = arith.cmpf oeq, %15, %1105 : vector<1x16xf32>
    %1107 = arith.extui %1106 : vector<1x16xi1> to vector<1x16xi32>
    %1108 = arith.sitofp %1107 : vector<1x16xi32> to vector<1x16xf32>
    %1109 = arith.subf %1083, %1108 : vector<1x16xf32>
    %c6_i32_267 = arith.constant 6 : i32
    %1110 = vector.broadcast %c6_i32_267 : i32 to vector<15x1xi32>
    %1111 = arith.cmpi eq, %21, %1110 : vector<15x1xi32>
    %1112 = arith.extui %1111 : vector<15x1xi1> to vector<15x1xi32>
    %1113 = arith.sitofp %1112 : vector<15x1xi32> to vector<15x1xf32>
    %1114 = vector.broadcast %1108 : vector<1x16xf32> to vector<15x16xf32>
    %1115 = vector.broadcast %1113 : vector<15x1xf32> to vector<15x16xf32>
    %1116 = arith.mulf %1114, %1115 : vector<15x16xf32>
    %1117 = arith.addf %1091, %1116 : vector<15x16xf32>
    %cst_268 = arith.constant 0.000000e+00 : f32
    %1118 = vector.broadcast %cst_268 : f32 to vector<1x16xf32>
    %1119 = arith.cmpf ogt, %1109, %1118 : vector<1x16xf32>
    %cst_269 = arith.constant 0xFF800000 : f32
    %1120 = vector.broadcast %cst_269 : f32 to vector<1x16xf32>
    %1121 = arith.select %1119, %933, %1120 : vector<1x16xi1>, vector<1x16xf32>
    %cst_270 = arith.constant dense<0xFF800000> : vector<1xf32>
    %1122 = vector.multi_reduction <maximumf>, %1121, %cst_270 [1] : vector<1x16xf32> to vector<1xf32>
    %1123 = vector.shape_cast %1122 : vector<1xf32> to vector<1x1xf32>
    %1124 = vector.broadcast %1123 : vector<1x1xf32> to vector<1x16xf32>
    %1125 = arith.cmpf oeq, %933, %1124 : vector<1x16xf32>
    %1126 = arith.andi %1119, %1125 : vector<1x16xi1>
    %cst_271 = arith.constant 1.600000e+01 : f32
    %1127 = vector.broadcast %cst_271 : f32 to vector<1x16xf32>
    %1128 = arith.select %1126, %15, %1127 : vector<1x16xi1>, vector<1x16xf32>
    %cst_272 = arith.constant dense<0x7F800000> : vector<1xf32>
    %1129 = vector.multi_reduction <minimumf>, %1128, %cst_272 [1] : vector<1x16xf32> to vector<1xf32>
    %1130 = vector.shape_cast %1129 : vector<1xf32> to vector<1x1xf32>
    %1131 = vector.broadcast %1130 : vector<1x1xf32> to vector<1x16xf32>
    %1132 = arith.cmpf oeq, %15, %1131 : vector<1x16xf32>
    %1133 = arith.extui %1132 : vector<1x16xi1> to vector<1x16xi32>
    %1134 = arith.sitofp %1133 : vector<1x16xi32> to vector<1x16xf32>
    %1135 = arith.subf %1109, %1134 : vector<1x16xf32>
    %c7_i32_273 = arith.constant 7 : i32
    %1136 = vector.broadcast %c7_i32_273 : i32 to vector<15x1xi32>
    %1137 = arith.cmpi eq, %21, %1136 : vector<15x1xi32>
    %1138 = arith.extui %1137 : vector<15x1xi1> to vector<15x1xi32>
    %1139 = arith.sitofp %1138 : vector<15x1xi32> to vector<15x1xf32>
    %1140 = vector.broadcast %1134 : vector<1x16xf32> to vector<15x16xf32>
    %1141 = vector.broadcast %1139 : vector<15x1xf32> to vector<15x16xf32>
    %1142 = arith.mulf %1140, %1141 : vector<15x16xf32>
    %1143 = arith.addf %1117, %1142 : vector<15x16xf32>
    %cst_274 = arith.constant 0.000000e+00 : f32
    %1144 = vector.broadcast %cst_274 : f32 to vector<1x16xf32>
    %1145 = arith.cmpf ogt, %1135, %1144 : vector<1x16xf32>
    %cst_275 = arith.constant 0xFF800000 : f32
    %1146 = vector.broadcast %cst_275 : f32 to vector<1x16xf32>
    %1147 = arith.select %1145, %933, %1146 : vector<1x16xi1>, vector<1x16xf32>
    %cst_276 = arith.constant dense<0xFF800000> : vector<1xf32>
    %1148 = vector.multi_reduction <maximumf>, %1147, %cst_276 [1] : vector<1x16xf32> to vector<1xf32>
    %1149 = vector.shape_cast %1148 : vector<1xf32> to vector<1x1xf32>
    %1150 = vector.broadcast %1149 : vector<1x1xf32> to vector<1x16xf32>
    %1151 = arith.cmpf oeq, %933, %1150 : vector<1x16xf32>
    %1152 = arith.andi %1145, %1151 : vector<1x16xi1>
    %cst_277 = arith.constant 1.600000e+01 : f32
    %1153 = vector.broadcast %cst_277 : f32 to vector<1x16xf32>
    %1154 = arith.select %1152, %15, %1153 : vector<1x16xi1>, vector<1x16xf32>
    %cst_278 = arith.constant dense<0x7F800000> : vector<1xf32>
    %1155 = vector.multi_reduction <minimumf>, %1154, %cst_278 [1] : vector<1x16xf32> to vector<1xf32>
    %1156 = vector.shape_cast %1155 : vector<1xf32> to vector<1x1xf32>
    %1157 = vector.broadcast %1156 : vector<1x1xf32> to vector<1x16xf32>
    %1158 = arith.cmpf oeq, %15, %1157 : vector<1x16xf32>
    %1159 = arith.extui %1158 : vector<1x16xi1> to vector<1x16xi32>
    %1160 = arith.sitofp %1159 : vector<1x16xi32> to vector<1x16xf32>
    %1161 = arith.subf %1135, %1160 : vector<1x16xf32>
    %c8_i32_279 = arith.constant 8 : i32
    %1162 = vector.broadcast %c8_i32_279 : i32 to vector<15x1xi32>
    %1163 = arith.cmpi eq, %21, %1162 : vector<15x1xi32>
    %1164 = arith.extui %1163 : vector<15x1xi1> to vector<15x1xi32>
    %1165 = arith.sitofp %1164 : vector<15x1xi32> to vector<15x1xf32>
    %1166 = vector.broadcast %1160 : vector<1x16xf32> to vector<15x16xf32>
    %1167 = vector.broadcast %1165 : vector<15x1xf32> to vector<15x16xf32>
    %1168 = arith.mulf %1166, %1167 : vector<15x16xf32>
    %1169 = arith.addf %1143, %1168 : vector<15x16xf32>
    %cst_280 = arith.constant 0.000000e+00 : f32
    %1170 = vector.broadcast %cst_280 : f32 to vector<1x16xf32>
    %1171 = arith.cmpf ogt, %1161, %1170 : vector<1x16xf32>
    %cst_281 = arith.constant 0xFF800000 : f32
    %1172 = vector.broadcast %cst_281 : f32 to vector<1x16xf32>
    %1173 = arith.select %1171, %933, %1172 : vector<1x16xi1>, vector<1x16xf32>
    %cst_282 = arith.constant dense<0xFF800000> : vector<1xf32>
    %1174 = vector.multi_reduction <maximumf>, %1173, %cst_282 [1] : vector<1x16xf32> to vector<1xf32>
    %1175 = vector.shape_cast %1174 : vector<1xf32> to vector<1x1xf32>
    %1176 = vector.broadcast %1175 : vector<1x1xf32> to vector<1x16xf32>
    %1177 = arith.cmpf oeq, %933, %1176 : vector<1x16xf32>
    %1178 = arith.andi %1171, %1177 : vector<1x16xi1>
    %cst_283 = arith.constant 1.600000e+01 : f32
    %1179 = vector.broadcast %cst_283 : f32 to vector<1x16xf32>
    %1180 = arith.select %1178, %15, %1179 : vector<1x16xi1>, vector<1x16xf32>
    %cst_284 = arith.constant dense<0x7F800000> : vector<1xf32>
    %1181 = vector.multi_reduction <minimumf>, %1180, %cst_284 [1] : vector<1x16xf32> to vector<1xf32>
    %1182 = vector.shape_cast %1181 : vector<1xf32> to vector<1x1xf32>
    %1183 = vector.broadcast %1182 : vector<1x1xf32> to vector<1x16xf32>
    %1184 = arith.cmpf oeq, %15, %1183 : vector<1x16xf32>
    %1185 = arith.extui %1184 : vector<1x16xi1> to vector<1x16xi32>
    %1186 = arith.sitofp %1185 : vector<1x16xi32> to vector<1x16xf32>
    %1187 = arith.subf %1161, %1186 : vector<1x16xf32>
    %c9_i32_285 = arith.constant 9 : i32
    %1188 = vector.broadcast %c9_i32_285 : i32 to vector<15x1xi32>
    %1189 = arith.cmpi eq, %21, %1188 : vector<15x1xi32>
    %1190 = arith.extui %1189 : vector<15x1xi1> to vector<15x1xi32>
    %1191 = arith.sitofp %1190 : vector<15x1xi32> to vector<15x1xf32>
    %1192 = vector.broadcast %1186 : vector<1x16xf32> to vector<15x16xf32>
    %1193 = vector.broadcast %1191 : vector<15x1xf32> to vector<15x16xf32>
    %1194 = arith.mulf %1192, %1193 : vector<15x16xf32>
    %1195 = arith.addf %1169, %1194 : vector<15x16xf32>
    %cst_286 = arith.constant 0.000000e+00 : f32
    %1196 = vector.broadcast %cst_286 : f32 to vector<1x16xf32>
    %1197 = arith.cmpf ogt, %1187, %1196 : vector<1x16xf32>
    %cst_287 = arith.constant 0xFF800000 : f32
    %1198 = vector.broadcast %cst_287 : f32 to vector<1x16xf32>
    %1199 = arith.select %1197, %933, %1198 : vector<1x16xi1>, vector<1x16xf32>
    %cst_288 = arith.constant dense<0xFF800000> : vector<1xf32>
    %1200 = vector.multi_reduction <maximumf>, %1199, %cst_288 [1] : vector<1x16xf32> to vector<1xf32>
    %1201 = vector.shape_cast %1200 : vector<1xf32> to vector<1x1xf32>
    %1202 = vector.broadcast %1201 : vector<1x1xf32> to vector<1x16xf32>
    %1203 = arith.cmpf oeq, %933, %1202 : vector<1x16xf32>
    %1204 = arith.andi %1197, %1203 : vector<1x16xi1>
    %cst_289 = arith.constant 1.600000e+01 : f32
    %1205 = vector.broadcast %cst_289 : f32 to vector<1x16xf32>
    %1206 = arith.select %1204, %15, %1205 : vector<1x16xi1>, vector<1x16xf32>
    %cst_290 = arith.constant dense<0x7F800000> : vector<1xf32>
    %1207 = vector.multi_reduction <minimumf>, %1206, %cst_290 [1] : vector<1x16xf32> to vector<1xf32>
    %1208 = vector.shape_cast %1207 : vector<1xf32> to vector<1x1xf32>
    %1209 = vector.broadcast %1208 : vector<1x1xf32> to vector<1x16xf32>
    %1210 = arith.cmpf oeq, %15, %1209 : vector<1x16xf32>
    %1211 = arith.extui %1210 : vector<1x16xi1> to vector<1x16xi32>
    %1212 = arith.sitofp %1211 : vector<1x16xi32> to vector<1x16xf32>
    %1213 = arith.subf %1187, %1212 : vector<1x16xf32>
    %c10_i32_291 = arith.constant 10 : i32
    %1214 = vector.broadcast %c10_i32_291 : i32 to vector<15x1xi32>
    %1215 = arith.cmpi eq, %21, %1214 : vector<15x1xi32>
    %1216 = arith.extui %1215 : vector<15x1xi1> to vector<15x1xi32>
    %1217 = arith.sitofp %1216 : vector<15x1xi32> to vector<15x1xf32>
    %1218 = vector.broadcast %1212 : vector<1x16xf32> to vector<15x16xf32>
    %1219 = vector.broadcast %1217 : vector<15x1xf32> to vector<15x16xf32>
    %1220 = arith.mulf %1218, %1219 : vector<15x16xf32>
    %1221 = arith.addf %1195, %1220 : vector<15x16xf32>
    %cst_292 = arith.constant 0.000000e+00 : f32
    %1222 = vector.broadcast %cst_292 : f32 to vector<1x16xf32>
    %1223 = arith.cmpf ogt, %1213, %1222 : vector<1x16xf32>
    %cst_293 = arith.constant 0xFF800000 : f32
    %1224 = vector.broadcast %cst_293 : f32 to vector<1x16xf32>
    %1225 = arith.select %1223, %933, %1224 : vector<1x16xi1>, vector<1x16xf32>
    %cst_294 = arith.constant dense<0xFF800000> : vector<1xf32>
    %1226 = vector.multi_reduction <maximumf>, %1225, %cst_294 [1] : vector<1x16xf32> to vector<1xf32>
    %1227 = vector.shape_cast %1226 : vector<1xf32> to vector<1x1xf32>
    %1228 = vector.broadcast %1227 : vector<1x1xf32> to vector<1x16xf32>
    %1229 = arith.cmpf oeq, %933, %1228 : vector<1x16xf32>
    %1230 = arith.andi %1223, %1229 : vector<1x16xi1>
    %cst_295 = arith.constant 1.600000e+01 : f32
    %1231 = vector.broadcast %cst_295 : f32 to vector<1x16xf32>
    %1232 = arith.select %1230, %15, %1231 : vector<1x16xi1>, vector<1x16xf32>
    %cst_296 = arith.constant dense<0x7F800000> : vector<1xf32>
    %1233 = vector.multi_reduction <minimumf>, %1232, %cst_296 [1] : vector<1x16xf32> to vector<1xf32>
    %1234 = vector.shape_cast %1233 : vector<1xf32> to vector<1x1xf32>
    %1235 = vector.broadcast %1234 : vector<1x1xf32> to vector<1x16xf32>
    %1236 = arith.cmpf oeq, %15, %1235 : vector<1x16xf32>
    %1237 = arith.extui %1236 : vector<1x16xi1> to vector<1x16xi32>
    %1238 = arith.sitofp %1237 : vector<1x16xi32> to vector<1x16xf32>
    %1239 = arith.subf %1213, %1238 : vector<1x16xf32>
    %c11_i32_297 = arith.constant 11 : i32
    %1240 = vector.broadcast %c11_i32_297 : i32 to vector<15x1xi32>
    %1241 = arith.cmpi eq, %21, %1240 : vector<15x1xi32>
    %1242 = arith.extui %1241 : vector<15x1xi1> to vector<15x1xi32>
    %1243 = arith.sitofp %1242 : vector<15x1xi32> to vector<15x1xf32>
    %1244 = vector.broadcast %1238 : vector<1x16xf32> to vector<15x16xf32>
    %1245 = vector.broadcast %1243 : vector<15x1xf32> to vector<15x16xf32>
    %1246 = arith.mulf %1244, %1245 : vector<15x16xf32>
    %1247 = arith.addf %1221, %1246 : vector<15x16xf32>
    %cst_298 = arith.constant 0.000000e+00 : f32
    %1248 = vector.broadcast %cst_298 : f32 to vector<1x16xf32>
    %1249 = arith.cmpf ogt, %1239, %1248 : vector<1x16xf32>
    %cst_299 = arith.constant 0xFF800000 : f32
    %1250 = vector.broadcast %cst_299 : f32 to vector<1x16xf32>
    %1251 = arith.select %1249, %933, %1250 : vector<1x16xi1>, vector<1x16xf32>
    %cst_300 = arith.constant dense<0xFF800000> : vector<1xf32>
    %1252 = vector.multi_reduction <maximumf>, %1251, %cst_300 [1] : vector<1x16xf32> to vector<1xf32>
    %1253 = vector.shape_cast %1252 : vector<1xf32> to vector<1x1xf32>
    %1254 = vector.broadcast %1253 : vector<1x1xf32> to vector<1x16xf32>
    %1255 = arith.cmpf oeq, %933, %1254 : vector<1x16xf32>
    %1256 = arith.andi %1249, %1255 : vector<1x16xi1>
    %cst_301 = arith.constant 1.600000e+01 : f32
    %1257 = vector.broadcast %cst_301 : f32 to vector<1x16xf32>
    %1258 = arith.select %1256, %15, %1257 : vector<1x16xi1>, vector<1x16xf32>
    %cst_302 = arith.constant dense<0x7F800000> : vector<1xf32>
    %1259 = vector.multi_reduction <minimumf>, %1258, %cst_302 [1] : vector<1x16xf32> to vector<1xf32>
    %1260 = vector.shape_cast %1259 : vector<1xf32> to vector<1x1xf32>
    %1261 = vector.broadcast %1260 : vector<1x1xf32> to vector<1x16xf32>
    %1262 = arith.cmpf oeq, %15, %1261 : vector<1x16xf32>
    %1263 = arith.extui %1262 : vector<1x16xi1> to vector<1x16xi32>
    %1264 = arith.sitofp %1263 : vector<1x16xi32> to vector<1x16xf32>
    %1265 = arith.subf %1239, %1264 : vector<1x16xf32>
    %c12_i32_303 = arith.constant 12 : i32
    %1266 = vector.broadcast %c12_i32_303 : i32 to vector<15x1xi32>
    %1267 = arith.cmpi eq, %21, %1266 : vector<15x1xi32>
    %1268 = arith.extui %1267 : vector<15x1xi1> to vector<15x1xi32>
    %1269 = arith.sitofp %1268 : vector<15x1xi32> to vector<15x1xf32>
    %1270 = vector.broadcast %1264 : vector<1x16xf32> to vector<15x16xf32>
    %1271 = vector.broadcast %1269 : vector<15x1xf32> to vector<15x16xf32>
    %1272 = arith.mulf %1270, %1271 : vector<15x16xf32>
    %1273 = arith.addf %1247, %1272 : vector<15x16xf32>
    %cst_304 = arith.constant 0.000000e+00 : f32
    %1274 = vector.broadcast %cst_304 : f32 to vector<1x16xf32>
    %1275 = arith.cmpf ogt, %1265, %1274 : vector<1x16xf32>
    %cst_305 = arith.constant 0xFF800000 : f32
    %1276 = vector.broadcast %cst_305 : f32 to vector<1x16xf32>
    %1277 = arith.select %1275, %933, %1276 : vector<1x16xi1>, vector<1x16xf32>
    %cst_306 = arith.constant dense<0xFF800000> : vector<1xf32>
    %1278 = vector.multi_reduction <maximumf>, %1277, %cst_306 [1] : vector<1x16xf32> to vector<1xf32>
    %1279 = vector.shape_cast %1278 : vector<1xf32> to vector<1x1xf32>
    %1280 = vector.broadcast %1279 : vector<1x1xf32> to vector<1x16xf32>
    %1281 = arith.cmpf oeq, %933, %1280 : vector<1x16xf32>
    %1282 = arith.andi %1275, %1281 : vector<1x16xi1>
    %cst_307 = arith.constant 1.600000e+01 : f32
    %1283 = vector.broadcast %cst_307 : f32 to vector<1x16xf32>
    %1284 = arith.select %1282, %15, %1283 : vector<1x16xi1>, vector<1x16xf32>
    %cst_308 = arith.constant dense<0x7F800000> : vector<1xf32>
    %1285 = vector.multi_reduction <minimumf>, %1284, %cst_308 [1] : vector<1x16xf32> to vector<1xf32>
    %1286 = vector.shape_cast %1285 : vector<1xf32> to vector<1x1xf32>
    %1287 = vector.broadcast %1286 : vector<1x1xf32> to vector<1x16xf32>
    %1288 = arith.cmpf oeq, %15, %1287 : vector<1x16xf32>
    %1289 = arith.extui %1288 : vector<1x16xi1> to vector<1x16xi32>
    %1290 = arith.sitofp %1289 : vector<1x16xi32> to vector<1x16xf32>
    %1291 = arith.subf %1265, %1290 : vector<1x16xf32>
    %c13_i32_309 = arith.constant 13 : i32
    %1292 = vector.broadcast %c13_i32_309 : i32 to vector<15x1xi32>
    %1293 = arith.cmpi eq, %21, %1292 : vector<15x1xi32>
    %1294 = arith.extui %1293 : vector<15x1xi1> to vector<15x1xi32>
    %1295 = arith.sitofp %1294 : vector<15x1xi32> to vector<15x1xf32>
    %1296 = vector.broadcast %1290 : vector<1x16xf32> to vector<15x16xf32>
    %1297 = vector.broadcast %1295 : vector<15x1xf32> to vector<15x16xf32>
    %1298 = arith.mulf %1296, %1297 : vector<15x16xf32>
    %1299 = arith.addf %1273, %1298 : vector<15x16xf32>
    %cst_310 = arith.constant 0.000000e+00 : f32
    %1300 = vector.broadcast %cst_310 : f32 to vector<1x16xf32>
    %1301 = arith.cmpf ogt, %1291, %1300 : vector<1x16xf32>
    %cst_311 = arith.constant 0xFF800000 : f32
    %1302 = vector.broadcast %cst_311 : f32 to vector<1x16xf32>
    %1303 = arith.select %1301, %933, %1302 : vector<1x16xi1>, vector<1x16xf32>
    %cst_312 = arith.constant dense<0xFF800000> : vector<1xf32>
    %1304 = vector.multi_reduction <maximumf>, %1303, %cst_312 [1] : vector<1x16xf32> to vector<1xf32>
    %1305 = vector.shape_cast %1304 : vector<1xf32> to vector<1x1xf32>
    %1306 = vector.broadcast %1305 : vector<1x1xf32> to vector<1x16xf32>
    %1307 = arith.cmpf oeq, %933, %1306 : vector<1x16xf32>
    %1308 = arith.andi %1301, %1307 : vector<1x16xi1>
    %cst_313 = arith.constant 1.600000e+01 : f32
    %1309 = vector.broadcast %cst_313 : f32 to vector<1x16xf32>
    %1310 = arith.select %1308, %15, %1309 : vector<1x16xi1>, vector<1x16xf32>
    %cst_314 = arith.constant dense<0x7F800000> : vector<1xf32>
    %1311 = vector.multi_reduction <minimumf>, %1310, %cst_314 [1] : vector<1x16xf32> to vector<1xf32>
    %1312 = vector.shape_cast %1311 : vector<1xf32> to vector<1x1xf32>
    %1313 = vector.broadcast %1312 : vector<1x1xf32> to vector<1x16xf32>
    %1314 = arith.cmpf oeq, %15, %1313 : vector<1x16xf32>
    %1315 = arith.extui %1314 : vector<1x16xi1> to vector<1x16xi32>
    %1316 = arith.sitofp %1315 : vector<1x16xi32> to vector<1x16xf32>
    %c14_i32_315 = arith.constant 14 : i32
    %1317 = vector.broadcast %c14_i32_315 : i32 to vector<15x1xi32>
    %1318 = arith.cmpi eq, %21, %1317 : vector<15x1xi32>
    %1319 = arith.extui %1318 : vector<15x1xi1> to vector<15x1xi32>
    %1320 = arith.sitofp %1319 : vector<15x1xi32> to vector<15x1xf32>
    %1321 = vector.broadcast %1316 : vector<1x16xf32> to vector<15x16xf32>
    %1322 = vector.broadcast %1320 : vector<15x1xf32> to vector<15x16xf32>
    %1323 = arith.mulf %1321, %1322 : vector<15x16xf32>
    %1324 = arith.addf %1299, %1323 : vector<15x16xf32>
    %cst_316 = arith.constant dense<0.000000e+00> : vector<15x16xf32>
    %1325 = tpu.matmul %1324, %919, %cst_316 {dimension_numbers = #tpu.dot_dimension_numbers<[1], [0], [0], [1], [0, 0, 1, 1], [], []>} : vector<15x16xf32>, vector<16x16xf32>, vector<15x16xf32> -> vector<15x16xf32>
    %1326 = vector.broadcast %15 : vector<1x16xf32> to vector<15x16xf32>
    %1327 = arith.mulf %1324, %1326 : vector<15x16xf32>
    %cst_317 = arith.constant dense<0.000000e+00> : vector<15xf32>
    %1328 = vector.multi_reduction <add>, %1327, %cst_317 [1] : vector<15x16xf32> to vector<15xf32>
    %1329 = vector.shape_cast %1328 : vector<15xf32> to vector<15x1xf32>
    %1330 = vector.broadcast %13 : vector<1x16xf32> to vector<15x16xf32>
    %1331 = vector.broadcast %1329 : vector<15x1xf32> to vector<15x16xf32>
    %1332 = arith.cmpf ogt, %1330, %1331 : vector<15x16xf32>
    %cst_318 = arith.constant 0.176776692 : f32
    %1333 = vector.broadcast %cst_318 : f32 to vector<15x16xf32>
    %1334 = arith.mulf %1325, %1333 : vector<15x16xf32>
    %cst_319 = arith.constant 0xFF800000 : f32
    %1335 = vector.broadcast %cst_319 : f32 to vector<15x16xf32>
    %1336 = arith.select %1332, %1335, %1334 : vector<15x16xi1>, vector<15x16xf32>
    %cst_320 = arith.constant dense<0xFF800000> : vector<15xf32>
    %1337 = vector.multi_reduction <maximumf>, %1336, %cst_320 [1] : vector<15x16xf32> to vector<15xf32>
    %1338 = vector.shape_cast %1337 : vector<15xf32> to vector<15x1xf32>
    %1339 = vector.broadcast %1338 : vector<15x1xf32> to vector<15x16xf32>
    %1340 = arith.subf %1336, %1339 : vector<15x16xf32>
    %1341 = math.exp %1340 : vector<15x16xf32>
    %cst_321 = arith.constant dense<0.000000e+00> : vector<15xf32>
    %1342 = vector.multi_reduction <add>, %1341, %cst_321 [1] : vector<15x16xf32> to vector<15xf32>
    %1343 = vector.shape_cast %1342 : vector<15xf32> to vector<15x1xf32>
    %1344 = tpu.reciprocal %1343 {approx = true} : vector<15x1xf32> -> vector<15x1xf32>
    %1345 = vector.broadcast %1344 : vector<15x1xf32> to vector<15x16xf32>
    %1346 = arith.mulf %1341, %1345 : vector<15x16xf32>
    %1347 = arith.truncf %1346 : vector<15x16xf32> to vector<15x16xbf16>
    %cst_322 = arith.constant dense<0.000000e+00> : vector<15x32xf32>
    %1348 = tpu.matmul %1347, %917, %cst_322 {dimension_numbers = #tpu.dot_dimension_numbers<[1], [0], [0], [1], [0, 0, 1, 1], [], []>} : vector<15x16xbf16>, vector<16x32xbf16>, vector<15x32xf32> -> vector<15x32xf32>
    %1349 = tpu.concatenate %1348, %22 in 1 : vector<15x32xf32>, vector<15x1xf32> -> vector<15x33xf32>
    %cst_323 = arith.constant dense<0.000000e+00> : vector<16x33xf32>
    %1350 = tpu.matmul %1324, %1349, %cst_323 {dimension_numbers = #tpu.dot_dimension_numbers<[0], [0], [1], [1], [0, 1, 1, 1], [], []>} : vector<15x16xf32>, vector<15x33xf32>, vector<16x33xf32> -> vector<16x33xf32>
    %1351 = vector.extract_strided_slice %1350 {offsets = [0, 32], sizes = [16, 1], strides = [1, 1]} : vector<16x33xf32> to vector<16x1xf32>
    %cst_324 = arith.constant 5.000000e-01 : f32
    %1352 = vector.broadcast %cst_324 : f32 to vector<16x1xf32>
    %1353 = arith.cmpf ogt, %1351, %1352 : vector<16x1xf32>
    %1354 = vector.extract_strided_slice %1350 {offsets = [0, 0], sizes = [16, 32], strides = [1, 1]} : vector<16x33xf32> to vector<16x32xf32>
    %1355 = vector.shape_cast %1353 : vector<16x1xi1> to vector<16x1xi1>
    %1356 = vector.broadcast %1355 : vector<16x1xi1> to vector<16x32xi1>
    %1357 = arith.select %1356, %1354, %918 : vector<16x32xi1>, vector<16x32xf32>
    %c0_325 = arith.constant 0 : index
    %c0_326 = arith.constant 0 : index
    %c64 = arith.constant 64 : index
    %1358 = vector.load %arg6[%c0_325, %c0_326, %c64] : memref<1x16x128xf32, #tpu.memory_space<vmem>>, vector<1x16x32xf32>
    %1359 = vector.shape_cast %1358 : vector<1x16x32xf32> to vector<16x32xf32>
    %1360 = vector.shape_cast %1357 : vector<16x32xf32> to vector<1x16x32xf32>
    tpu.vector_store %arg6[%c0_325, %c0_326, %c64], %1360 {strides = array<i32>} : memref<1x16x128xf32, #tpu.memory_space<vmem>>, vector<1x16x32xf32>,
    %1361 = vector.extract_strided_slice %1 {offsets = [0, 96], sizes = [16, 32], strides = [1, 1]} : vector<16x128xbf16> to vector<16x32xbf16>
    %1362 = vector.extract_strided_slice %3 {offsets = [0, 96], sizes = [16, 32], strides = [1, 1]} : vector<16x128xbf16> to vector<16x32xbf16>
    %1363 = vector.extract_strided_slice %5 {offsets = [0, 96], sizes = [16, 32], strides = [1, 1]} : vector<16x128xbf16> to vector<16x32xbf16>
    %1364 = vector.extract_strided_slice %7 {offsets = [0, 96], sizes = [16, 32], strides = [1, 1]} : vector<16x128xf32> to vector<16x32xf32>
    %cst_327 = arith.constant dense<0.000000e+00> : vector<16x16xf32>
    %1365 = tpu.matmul %1361, %1362, %cst_327 {dimension_numbers = #tpu.dot_dimension_numbers<[1], [1], [0], [0], [0, 0, 1, 0], [], []>} : vector<16x32xbf16>, vector<16x32xbf16>, vector<16x16xf32> -> vector<16x16xf32>
    %cst_328 = arith.constant 0xFF800000 : f32
    %1366 = vector.broadcast %cst_328 : f32 to vector<16x16xf32>
    %1367 = arith.select %11, %1365, %1366 : vector<16x16xi1>, vector<16x16xf32>
    %cst_329 = arith.constant dense<0xFF800000> : vector<16xf32>
    %1368 = vector.multi_reduction <maximumf>, %1367, %cst_329 [1] : vector<16x16xf32> to vector<16xf32>
    %1369 = vector.shape_cast %1368 : vector<16xf32> to vector<16x1xf32>
    %1370 = arith.mulf %9, %1365 : vector<16x16xf32>
    %cst_330 = arith.constant dense<0.000000e+00> : vector<16xf32>
    %1371 = vector.multi_reduction <add>, %1370, %cst_330 [1] : vector<16x16xf32> to vector<16xf32>
    %1372 = vector.shape_cast %1371 : vector<16xf32> to vector<16x1xf32>
    %cst_331 = arith.constant 6.250000e-02 : f32
    %1373 = vector.broadcast %cst_331 : f32 to vector<16x1xf32>
    %1374 = arith.mulf %1372, %1373 : vector<16x1xf32>
    %1375 = arith.subf %1369, %1374 : vector<16x1xf32>
    %1376 = vector.broadcast %1375 : vector<16x1xf32> to vector<16x16xf32>
    %1377 = arith.mulf %20, %1376 : vector<16x16xf32>
    %cst_332 = arith.constant dense<0.000000e+00> : vector<16xf32>
    %1378 = vector.multi_reduction <add>, %1377, %cst_332 [0] : vector<16x16xf32> to vector<16xf32>
    %1379 = vector.shape_cast %1378 : vector<16xf32> to vector<1x16xf32>
    %cst_333 = arith.constant 1.000000e+00 : f32
    %1380 = vector.broadcast %cst_333 : f32 to vector<1x16xf32>
    %cst_334 = arith.constant 0.000000e+00 : f32
    %1381 = vector.broadcast %cst_334 : f32 to vector<15x16xf32>
    %cst_335 = arith.constant 0.000000e+00 : f32
    %1382 = vector.broadcast %cst_335 : f32 to vector<1x16xf32>
    %1383 = arith.cmpf ogt, %1380, %1382 : vector<1x16xf32>
    %cst_336 = arith.constant 0xFF800000 : f32
    %1384 = vector.broadcast %cst_336 : f32 to vector<1x16xf32>
    %1385 = arith.select %1383, %1379, %1384 : vector<1x16xi1>, vector<1x16xf32>
    %cst_337 = arith.constant dense<0xFF800000> : vector<1xf32>
    %1386 = vector.multi_reduction <maximumf>, %1385, %cst_337 [1] : vector<1x16xf32> to vector<1xf32>
    %1387 = vector.shape_cast %1386 : vector<1xf32> to vector<1x1xf32>
    %1388 = vector.broadcast %1387 : vector<1x1xf32> to vector<1x16xf32>
    %1389 = arith.cmpf oeq, %1379, %1388 : vector<1x16xf32>
    %1390 = arith.andi %1383, %1389 : vector<1x16xi1>
    %cst_338 = arith.constant 1.600000e+01 : f32
    %1391 = vector.broadcast %cst_338 : f32 to vector<1x16xf32>
    %1392 = arith.select %1390, %15, %1391 : vector<1x16xi1>, vector<1x16xf32>
    %cst_339 = arith.constant dense<0x7F800000> : vector<1xf32>
    %1393 = vector.multi_reduction <minimumf>, %1392, %cst_339 [1] : vector<1x16xf32> to vector<1xf32>
    %1394 = vector.shape_cast %1393 : vector<1xf32> to vector<1x1xf32>
    %1395 = vector.broadcast %1394 : vector<1x1xf32> to vector<1x16xf32>
    %1396 = arith.cmpf oeq, %15, %1395 : vector<1x16xf32>
    %1397 = arith.extui %1396 : vector<1x16xi1> to vector<1x16xi32>
    %1398 = arith.sitofp %1397 : vector<1x16xi32> to vector<1x16xf32>
    %1399 = arith.subf %1380, %1398 : vector<1x16xf32>
    %c0_i32_340 = arith.constant 0 : i32
    %1400 = vector.broadcast %c0_i32_340 : i32 to vector<15x1xi32>
    %1401 = arith.cmpi eq, %21, %1400 : vector<15x1xi32>
    %1402 = arith.extui %1401 : vector<15x1xi1> to vector<15x1xi32>
    %1403 = arith.sitofp %1402 : vector<15x1xi32> to vector<15x1xf32>
    %1404 = vector.broadcast %1398 : vector<1x16xf32> to vector<15x16xf32>
    %1405 = vector.broadcast %1403 : vector<15x1xf32> to vector<15x16xf32>
    %1406 = arith.mulf %1404, %1405 : vector<15x16xf32>
    %1407 = arith.addf %1381, %1406 : vector<15x16xf32>
    %cst_341 = arith.constant 0.000000e+00 : f32
    %1408 = vector.broadcast %cst_341 : f32 to vector<1x16xf32>
    %1409 = arith.cmpf ogt, %1399, %1408 : vector<1x16xf32>
    %cst_342 = arith.constant 0xFF800000 : f32
    %1410 = vector.broadcast %cst_342 : f32 to vector<1x16xf32>
    %1411 = arith.select %1409, %1379, %1410 : vector<1x16xi1>, vector<1x16xf32>
    %cst_343 = arith.constant dense<0xFF800000> : vector<1xf32>
    %1412 = vector.multi_reduction <maximumf>, %1411, %cst_343 [1] : vector<1x16xf32> to vector<1xf32>
    %1413 = vector.shape_cast %1412 : vector<1xf32> to vector<1x1xf32>
    %1414 = vector.broadcast %1413 : vector<1x1xf32> to vector<1x16xf32>
    %1415 = arith.cmpf oeq, %1379, %1414 : vector<1x16xf32>
    %1416 = arith.andi %1409, %1415 : vector<1x16xi1>
    %cst_344 = arith.constant 1.600000e+01 : f32
    %1417 = vector.broadcast %cst_344 : f32 to vector<1x16xf32>
    %1418 = arith.select %1416, %15, %1417 : vector<1x16xi1>, vector<1x16xf32>
    %cst_345 = arith.constant dense<0x7F800000> : vector<1xf32>
    %1419 = vector.multi_reduction <minimumf>, %1418, %cst_345 [1] : vector<1x16xf32> to vector<1xf32>
    %1420 = vector.shape_cast %1419 : vector<1xf32> to vector<1x1xf32>
    %1421 = vector.broadcast %1420 : vector<1x1xf32> to vector<1x16xf32>
    %1422 = arith.cmpf oeq, %15, %1421 : vector<1x16xf32>
    %1423 = arith.extui %1422 : vector<1x16xi1> to vector<1x16xi32>
    %1424 = arith.sitofp %1423 : vector<1x16xi32> to vector<1x16xf32>
    %1425 = arith.subf %1399, %1424 : vector<1x16xf32>
    %c1_i32_346 = arith.constant 1 : i32
    %1426 = vector.broadcast %c1_i32_346 : i32 to vector<15x1xi32>
    %1427 = arith.cmpi eq, %21, %1426 : vector<15x1xi32>
    %1428 = arith.extui %1427 : vector<15x1xi1> to vector<15x1xi32>
    %1429 = arith.sitofp %1428 : vector<15x1xi32> to vector<15x1xf32>
    %1430 = vector.broadcast %1424 : vector<1x16xf32> to vector<15x16xf32>
    %1431 = vector.broadcast %1429 : vector<15x1xf32> to vector<15x16xf32>
    %1432 = arith.mulf %1430, %1431 : vector<15x16xf32>
    %1433 = arith.addf %1407, %1432 : vector<15x16xf32>
    %cst_347 = arith.constant 0.000000e+00 : f32
    %1434 = vector.broadcast %cst_347 : f32 to vector<1x16xf32>
    %1435 = arith.cmpf ogt, %1425, %1434 : vector<1x16xf32>
    %cst_348 = arith.constant 0xFF800000 : f32
    %1436 = vector.broadcast %cst_348 : f32 to vector<1x16xf32>
    %1437 = arith.select %1435, %1379, %1436 : vector<1x16xi1>, vector<1x16xf32>
    %cst_349 = arith.constant dense<0xFF800000> : vector<1xf32>
    %1438 = vector.multi_reduction <maximumf>, %1437, %cst_349 [1] : vector<1x16xf32> to vector<1xf32>
    %1439 = vector.shape_cast %1438 : vector<1xf32> to vector<1x1xf32>
    %1440 = vector.broadcast %1439 : vector<1x1xf32> to vector<1x16xf32>
    %1441 = arith.cmpf oeq, %1379, %1440 : vector<1x16xf32>
    %1442 = arith.andi %1435, %1441 : vector<1x16xi1>
    %cst_350 = arith.constant 1.600000e+01 : f32
    %1443 = vector.broadcast %cst_350 : f32 to vector<1x16xf32>
    %1444 = arith.select %1442, %15, %1443 : vector<1x16xi1>, vector<1x16xf32>
    %cst_351 = arith.constant dense<0x7F800000> : vector<1xf32>
    %1445 = vector.multi_reduction <minimumf>, %1444, %cst_351 [1] : vector<1x16xf32> to vector<1xf32>
    %1446 = vector.shape_cast %1445 : vector<1xf32> to vector<1x1xf32>
    %1447 = vector.broadcast %1446 : vector<1x1xf32> to vector<1x16xf32>
    %1448 = arith.cmpf oeq, %15, %1447 : vector<1x16xf32>
    %1449 = arith.extui %1448 : vector<1x16xi1> to vector<1x16xi32>
    %1450 = arith.sitofp %1449 : vector<1x16xi32> to vector<1x16xf32>
    %1451 = arith.subf %1425, %1450 : vector<1x16xf32>
    %c2_i32_352 = arith.constant 2 : i32
    %1452 = vector.broadcast %c2_i32_352 : i32 to vector<15x1xi32>
    %1453 = arith.cmpi eq, %21, %1452 : vector<15x1xi32>
    %1454 = arith.extui %1453 : vector<15x1xi1> to vector<15x1xi32>
    %1455 = arith.sitofp %1454 : vector<15x1xi32> to vector<15x1xf32>
    %1456 = vector.broadcast %1450 : vector<1x16xf32> to vector<15x16xf32>
    %1457 = vector.broadcast %1455 : vector<15x1xf32> to vector<15x16xf32>
    %1458 = arith.mulf %1456, %1457 : vector<15x16xf32>
    %1459 = arith.addf %1433, %1458 : vector<15x16xf32>
    %cst_353 = arith.constant 0.000000e+00 : f32
    %1460 = vector.broadcast %cst_353 : f32 to vector<1x16xf32>
    %1461 = arith.cmpf ogt, %1451, %1460 : vector<1x16xf32>
    %cst_354 = arith.constant 0xFF800000 : f32
    %1462 = vector.broadcast %cst_354 : f32 to vector<1x16xf32>
    %1463 = arith.select %1461, %1379, %1462 : vector<1x16xi1>, vector<1x16xf32>
    %cst_355 = arith.constant dense<0xFF800000> : vector<1xf32>
    %1464 = vector.multi_reduction <maximumf>, %1463, %cst_355 [1] : vector<1x16xf32> to vector<1xf32>
    %1465 = vector.shape_cast %1464 : vector<1xf32> to vector<1x1xf32>
    %1466 = vector.broadcast %1465 : vector<1x1xf32> to vector<1x16xf32>
    %1467 = arith.cmpf oeq, %1379, %1466 : vector<1x16xf32>
    %1468 = arith.andi %1461, %1467 : vector<1x16xi1>
    %cst_356 = arith.constant 1.600000e+01 : f32
    %1469 = vector.broadcast %cst_356 : f32 to vector<1x16xf32>
    %1470 = arith.select %1468, %15, %1469 : vector<1x16xi1>, vector<1x16xf32>
    %cst_357 = arith.constant dense<0x7F800000> : vector<1xf32>
    %1471 = vector.multi_reduction <minimumf>, %1470, %cst_357 [1] : vector<1x16xf32> to vector<1xf32>
    %1472 = vector.shape_cast %1471 : vector<1xf32> to vector<1x1xf32>
    %1473 = vector.broadcast %1472 : vector<1x1xf32> to vector<1x16xf32>
    %1474 = arith.cmpf oeq, %15, %1473 : vector<1x16xf32>
    %1475 = arith.extui %1474 : vector<1x16xi1> to vector<1x16xi32>
    %1476 = arith.sitofp %1475 : vector<1x16xi32> to vector<1x16xf32>
    %1477 = arith.subf %1451, %1476 : vector<1x16xf32>
    %c3_i32_358 = arith.constant 3 : i32
    %1478 = vector.broadcast %c3_i32_358 : i32 to vector<15x1xi32>
    %1479 = arith.cmpi eq, %21, %1478 : vector<15x1xi32>
    %1480 = arith.extui %1479 : vector<15x1xi1> to vector<15x1xi32>
    %1481 = arith.sitofp %1480 : vector<15x1xi32> to vector<15x1xf32>
    %1482 = vector.broadcast %1476 : vector<1x16xf32> to vector<15x16xf32>
    %1483 = vector.broadcast %1481 : vector<15x1xf32> to vector<15x16xf32>
    %1484 = arith.mulf %1482, %1483 : vector<15x16xf32>
    %1485 = arith.addf %1459, %1484 : vector<15x16xf32>
    %cst_359 = arith.constant 0.000000e+00 : f32
    %1486 = vector.broadcast %cst_359 : f32 to vector<1x16xf32>
    %1487 = arith.cmpf ogt, %1477, %1486 : vector<1x16xf32>
    %cst_360 = arith.constant 0xFF800000 : f32
    %1488 = vector.broadcast %cst_360 : f32 to vector<1x16xf32>
    %1489 = arith.select %1487, %1379, %1488 : vector<1x16xi1>, vector<1x16xf32>
    %cst_361 = arith.constant dense<0xFF800000> : vector<1xf32>
    %1490 = vector.multi_reduction <maximumf>, %1489, %cst_361 [1] : vector<1x16xf32> to vector<1xf32>
    %1491 = vector.shape_cast %1490 : vector<1xf32> to vector<1x1xf32>
    %1492 = vector.broadcast %1491 : vector<1x1xf32> to vector<1x16xf32>
    %1493 = arith.cmpf oeq, %1379, %1492 : vector<1x16xf32>
    %1494 = arith.andi %1487, %1493 : vector<1x16xi1>
    %cst_362 = arith.constant 1.600000e+01 : f32
    %1495 = vector.broadcast %cst_362 : f32 to vector<1x16xf32>
    %1496 = arith.select %1494, %15, %1495 : vector<1x16xi1>, vector<1x16xf32>
    %cst_363 = arith.constant dense<0x7F800000> : vector<1xf32>
    %1497 = vector.multi_reduction <minimumf>, %1496, %cst_363 [1] : vector<1x16xf32> to vector<1xf32>
    %1498 = vector.shape_cast %1497 : vector<1xf32> to vector<1x1xf32>
    %1499 = vector.broadcast %1498 : vector<1x1xf32> to vector<1x16xf32>
    %1500 = arith.cmpf oeq, %15, %1499 : vector<1x16xf32>
    %1501 = arith.extui %1500 : vector<1x16xi1> to vector<1x16xi32>
    %1502 = arith.sitofp %1501 : vector<1x16xi32> to vector<1x16xf32>
    %1503 = arith.subf %1477, %1502 : vector<1x16xf32>
    %c4_i32_364 = arith.constant 4 : i32
    %1504 = vector.broadcast %c4_i32_364 : i32 to vector<15x1xi32>
    %1505 = arith.cmpi eq, %21, %1504 : vector<15x1xi32>
    %1506 = arith.extui %1505 : vector<15x1xi1> to vector<15x1xi32>
    %1507 = arith.sitofp %1506 : vector<15x1xi32> to vector<15x1xf32>
    %1508 = vector.broadcast %1502 : vector<1x16xf32> to vector<15x16xf32>
    %1509 = vector.broadcast %1507 : vector<15x1xf32> to vector<15x16xf32>
    %1510 = arith.mulf %1508, %1509 : vector<15x16xf32>
    %1511 = arith.addf %1485, %1510 : vector<15x16xf32>
    %cst_365 = arith.constant 0.000000e+00 : f32
    %1512 = vector.broadcast %cst_365 : f32 to vector<1x16xf32>
    %1513 = arith.cmpf ogt, %1503, %1512 : vector<1x16xf32>
    %cst_366 = arith.constant 0xFF800000 : f32
    %1514 = vector.broadcast %cst_366 : f32 to vector<1x16xf32>
    %1515 = arith.select %1513, %1379, %1514 : vector<1x16xi1>, vector<1x16xf32>
    %cst_367 = arith.constant dense<0xFF800000> : vector<1xf32>
    %1516 = vector.multi_reduction <maximumf>, %1515, %cst_367 [1] : vector<1x16xf32> to vector<1xf32>
    %1517 = vector.shape_cast %1516 : vector<1xf32> to vector<1x1xf32>
    %1518 = vector.broadcast %1517 : vector<1x1xf32> to vector<1x16xf32>
    %1519 = arith.cmpf oeq, %1379, %1518 : vector<1x16xf32>
    %1520 = arith.andi %1513, %1519 : vector<1x16xi1>
    %cst_368 = arith.constant 1.600000e+01 : f32
    %1521 = vector.broadcast %cst_368 : f32 to vector<1x16xf32>
    %1522 = arith.select %1520, %15, %1521 : vector<1x16xi1>, vector<1x16xf32>
    %cst_369 = arith.constant dense<0x7F800000> : vector<1xf32>
    %1523 = vector.multi_reduction <minimumf>, %1522, %cst_369 [1] : vector<1x16xf32> to vector<1xf32>
    %1524 = vector.shape_cast %1523 : vector<1xf32> to vector<1x1xf32>
    %1525 = vector.broadcast %1524 : vector<1x1xf32> to vector<1x16xf32>
    %1526 = arith.cmpf oeq, %15, %1525 : vector<1x16xf32>
    %1527 = arith.extui %1526 : vector<1x16xi1> to vector<1x16xi32>
    %1528 = arith.sitofp %1527 : vector<1x16xi32> to vector<1x16xf32>
    %1529 = arith.subf %1503, %1528 : vector<1x16xf32>
    %c5_i32_370 = arith.constant 5 : i32
    %1530 = vector.broadcast %c5_i32_370 : i32 to vector<15x1xi32>
    %1531 = arith.cmpi eq, %21, %1530 : vector<15x1xi32>
    %1532 = arith.extui %1531 : vector<15x1xi1> to vector<15x1xi32>
    %1533 = arith.sitofp %1532 : vector<15x1xi32> to vector<15x1xf32>
    %1534 = vector.broadcast %1528 : vector<1x16xf32> to vector<15x16xf32>
    %1535 = vector.broadcast %1533 : vector<15x1xf32> to vector<15x16xf32>
    %1536 = arith.mulf %1534, %1535 : vector<15x16xf32>
    %1537 = arith.addf %1511, %1536 : vector<15x16xf32>
    %cst_371 = arith.constant 0.000000e+00 : f32
    %1538 = vector.broadcast %cst_371 : f32 to vector<1x16xf32>
    %1539 = arith.cmpf ogt, %1529, %1538 : vector<1x16xf32>
    %cst_372 = arith.constant 0xFF800000 : f32
    %1540 = vector.broadcast %cst_372 : f32 to vector<1x16xf32>
    %1541 = arith.select %1539, %1379, %1540 : vector<1x16xi1>, vector<1x16xf32>
    %cst_373 = arith.constant dense<0xFF800000> : vector<1xf32>
    %1542 = vector.multi_reduction <maximumf>, %1541, %cst_373 [1] : vector<1x16xf32> to vector<1xf32>
    %1543 = vector.shape_cast %1542 : vector<1xf32> to vector<1x1xf32>
    %1544 = vector.broadcast %1543 : vector<1x1xf32> to vector<1x16xf32>
    %1545 = arith.cmpf oeq, %1379, %1544 : vector<1x16xf32>
    %1546 = arith.andi %1539, %1545 : vector<1x16xi1>
    %cst_374 = arith.constant 1.600000e+01 : f32
    %1547 = vector.broadcast %cst_374 : f32 to vector<1x16xf32>
    %1548 = arith.select %1546, %15, %1547 : vector<1x16xi1>, vector<1x16xf32>
    %cst_375 = arith.constant dense<0x7F800000> : vector<1xf32>
    %1549 = vector.multi_reduction <minimumf>, %1548, %cst_375 [1] : vector<1x16xf32> to vector<1xf32>
    %1550 = vector.shape_cast %1549 : vector<1xf32> to vector<1x1xf32>
    %1551 = vector.broadcast %1550 : vector<1x1xf32> to vector<1x16xf32>
    %1552 = arith.cmpf oeq, %15, %1551 : vector<1x16xf32>
    %1553 = arith.extui %1552 : vector<1x16xi1> to vector<1x16xi32>
    %1554 = arith.sitofp %1553 : vector<1x16xi32> to vector<1x16xf32>
    %1555 = arith.subf %1529, %1554 : vector<1x16xf32>
    %c6_i32_376 = arith.constant 6 : i32
    %1556 = vector.broadcast %c6_i32_376 : i32 to vector<15x1xi32>
    %1557 = arith.cmpi eq, %21, %1556 : vector<15x1xi32>
    %1558 = arith.extui %1557 : vector<15x1xi1> to vector<15x1xi32>
    %1559 = arith.sitofp %1558 : vector<15x1xi32> to vector<15x1xf32>
    %1560 = vector.broadcast %1554 : vector<1x16xf32> to vector<15x16xf32>
    %1561 = vector.broadcast %1559 : vector<15x1xf32> to vector<15x16xf32>
    %1562 = arith.mulf %1560, %1561 : vector<15x16xf32>
    %1563 = arith.addf %1537, %1562 : vector<15x16xf32>
    %cst_377 = arith.constant 0.000000e+00 : f32
    %1564 = vector.broadcast %cst_377 : f32 to vector<1x16xf32>
    %1565 = arith.cmpf ogt, %1555, %1564 : vector<1x16xf32>
    %cst_378 = arith.constant 0xFF800000 : f32
    %1566 = vector.broadcast %cst_378 : f32 to vector<1x16xf32>
    %1567 = arith.select %1565, %1379, %1566 : vector<1x16xi1>, vector<1x16xf32>
    %cst_379 = arith.constant dense<0xFF800000> : vector<1xf32>
    %1568 = vector.multi_reduction <maximumf>, %1567, %cst_379 [1] : vector<1x16xf32> to vector<1xf32>
    %1569 = vector.shape_cast %1568 : vector<1xf32> to vector<1x1xf32>
    %1570 = vector.broadcast %1569 : vector<1x1xf32> to vector<1x16xf32>
    %1571 = arith.cmpf oeq, %1379, %1570 : vector<1x16xf32>
    %1572 = arith.andi %1565, %1571 : vector<1x16xi1>
    %cst_380 = arith.constant 1.600000e+01 : f32
    %1573 = vector.broadcast %cst_380 : f32 to vector<1x16xf32>
    %1574 = arith.select %1572, %15, %1573 : vector<1x16xi1>, vector<1x16xf32>
    %cst_381 = arith.constant dense<0x7F800000> : vector<1xf32>
    %1575 = vector.multi_reduction <minimumf>, %1574, %cst_381 [1] : vector<1x16xf32> to vector<1xf32>
    %1576 = vector.shape_cast %1575 : vector<1xf32> to vector<1x1xf32>
    %1577 = vector.broadcast %1576 : vector<1x1xf32> to vector<1x16xf32>
    %1578 = arith.cmpf oeq, %15, %1577 : vector<1x16xf32>
    %1579 = arith.extui %1578 : vector<1x16xi1> to vector<1x16xi32>
    %1580 = arith.sitofp %1579 : vector<1x16xi32> to vector<1x16xf32>
    %1581 = arith.subf %1555, %1580 : vector<1x16xf32>
    %c7_i32_382 = arith.constant 7 : i32
    %1582 = vector.broadcast %c7_i32_382 : i32 to vector<15x1xi32>
    %1583 = arith.cmpi eq, %21, %1582 : vector<15x1xi32>
    %1584 = arith.extui %1583 : vector<15x1xi1> to vector<15x1xi32>
    %1585 = arith.sitofp %1584 : vector<15x1xi32> to vector<15x1xf32>
    %1586 = vector.broadcast %1580 : vector<1x16xf32> to vector<15x16xf32>
    %1587 = vector.broadcast %1585 : vector<15x1xf32> to vector<15x16xf32>
    %1588 = arith.mulf %1586, %1587 : vector<15x16xf32>
    %1589 = arith.addf %1563, %1588 : vector<15x16xf32>
    %cst_383 = arith.constant 0.000000e+00 : f32
    %1590 = vector.broadcast %cst_383 : f32 to vector<1x16xf32>
    %1591 = arith.cmpf ogt, %1581, %1590 : vector<1x16xf32>
    %cst_384 = arith.constant 0xFF800000 : f32
    %1592 = vector.broadcast %cst_384 : f32 to vector<1x16xf32>
    %1593 = arith.select %1591, %1379, %1592 : vector<1x16xi1>, vector<1x16xf32>
    %cst_385 = arith.constant dense<0xFF800000> : vector<1xf32>
    %1594 = vector.multi_reduction <maximumf>, %1593, %cst_385 [1] : vector<1x16xf32> to vector<1xf32>
    %1595 = vector.shape_cast %1594 : vector<1xf32> to vector<1x1xf32>
    %1596 = vector.broadcast %1595 : vector<1x1xf32> to vector<1x16xf32>
    %1597 = arith.cmpf oeq, %1379, %1596 : vector<1x16xf32>
    %1598 = arith.andi %1591, %1597 : vector<1x16xi1>
    %cst_386 = arith.constant 1.600000e+01 : f32
    %1599 = vector.broadcast %cst_386 : f32 to vector<1x16xf32>
    %1600 = arith.select %1598, %15, %1599 : vector<1x16xi1>, vector<1x16xf32>
    %cst_387 = arith.constant dense<0x7F800000> : vector<1xf32>
    %1601 = vector.multi_reduction <minimumf>, %1600, %cst_387 [1] : vector<1x16xf32> to vector<1xf32>
    %1602 = vector.shape_cast %1601 : vector<1xf32> to vector<1x1xf32>
    %1603 = vector.broadcast %1602 : vector<1x1xf32> to vector<1x16xf32>
    %1604 = arith.cmpf oeq, %15, %1603 : vector<1x16xf32>
    %1605 = arith.extui %1604 : vector<1x16xi1> to vector<1x16xi32>
    %1606 = arith.sitofp %1605 : vector<1x16xi32> to vector<1x16xf32>
    %1607 = arith.subf %1581, %1606 : vector<1x16xf32>
    %c8_i32_388 = arith.constant 8 : i32
    %1608 = vector.broadcast %c8_i32_388 : i32 to vector<15x1xi32>
    %1609 = arith.cmpi eq, %21, %1608 : vector<15x1xi32>
    %1610 = arith.extui %1609 : vector<15x1xi1> to vector<15x1xi32>
    %1611 = arith.sitofp %1610 : vector<15x1xi32> to vector<15x1xf32>
    %1612 = vector.broadcast %1606 : vector<1x16xf32> to vector<15x16xf32>
    %1613 = vector.broadcast %1611 : vector<15x1xf32> to vector<15x16xf32>
    %1614 = arith.mulf %1612, %1613 : vector<15x16xf32>
    %1615 = arith.addf %1589, %1614 : vector<15x16xf32>
    %cst_389 = arith.constant 0.000000e+00 : f32
    %1616 = vector.broadcast %cst_389 : f32 to vector<1x16xf32>
    %1617 = arith.cmpf ogt, %1607, %1616 : vector<1x16xf32>
    %cst_390 = arith.constant 0xFF800000 : f32
    %1618 = vector.broadcast %cst_390 : f32 to vector<1x16xf32>
    %1619 = arith.select %1617, %1379, %1618 : vector<1x16xi1>, vector<1x16xf32>
    %cst_391 = arith.constant dense<0xFF800000> : vector<1xf32>
    %1620 = vector.multi_reduction <maximumf>, %1619, %cst_391 [1] : vector<1x16xf32> to vector<1xf32>
    %1621 = vector.shape_cast %1620 : vector<1xf32> to vector<1x1xf32>
    %1622 = vector.broadcast %1621 : vector<1x1xf32> to vector<1x16xf32>
    %1623 = arith.cmpf oeq, %1379, %1622 : vector<1x16xf32>
    %1624 = arith.andi %1617, %1623 : vector<1x16xi1>
    %cst_392 = arith.constant 1.600000e+01 : f32
    %1625 = vector.broadcast %cst_392 : f32 to vector<1x16xf32>
    %1626 = arith.select %1624, %15, %1625 : vector<1x16xi1>, vector<1x16xf32>
    %cst_393 = arith.constant dense<0x7F800000> : vector<1xf32>
    %1627 = vector.multi_reduction <minimumf>, %1626, %cst_393 [1] : vector<1x16xf32> to vector<1xf32>
    %1628 = vector.shape_cast %1627 : vector<1xf32> to vector<1x1xf32>
    %1629 = vector.broadcast %1628 : vector<1x1xf32> to vector<1x16xf32>
    %1630 = arith.cmpf oeq, %15, %1629 : vector<1x16xf32>
    %1631 = arith.extui %1630 : vector<1x16xi1> to vector<1x16xi32>
    %1632 = arith.sitofp %1631 : vector<1x16xi32> to vector<1x16xf32>
    %1633 = arith.subf %1607, %1632 : vector<1x16xf32>
    %c9_i32_394 = arith.constant 9 : i32
    %1634 = vector.broadcast %c9_i32_394 : i32 to vector<15x1xi32>
    %1635 = arith.cmpi eq, %21, %1634 : vector<15x1xi32>
    %1636 = arith.extui %1635 : vector<15x1xi1> to vector<15x1xi32>
    %1637 = arith.sitofp %1636 : vector<15x1xi32> to vector<15x1xf32>
    %1638 = vector.broadcast %1632 : vector<1x16xf32> to vector<15x16xf32>
    %1639 = vector.broadcast %1637 : vector<15x1xf32> to vector<15x16xf32>
    %1640 = arith.mulf %1638, %1639 : vector<15x16xf32>
    %1641 = arith.addf %1615, %1640 : vector<15x16xf32>
    %cst_395 = arith.constant 0.000000e+00 : f32
    %1642 = vector.broadcast %cst_395 : f32 to vector<1x16xf32>
    %1643 = arith.cmpf ogt, %1633, %1642 : vector<1x16xf32>
    %cst_396 = arith.constant 0xFF800000 : f32
    %1644 = vector.broadcast %cst_396 : f32 to vector<1x16xf32>
    %1645 = arith.select %1643, %1379, %1644 : vector<1x16xi1>, vector<1x16xf32>
    %cst_397 = arith.constant dense<0xFF800000> : vector<1xf32>
    %1646 = vector.multi_reduction <maximumf>, %1645, %cst_397 [1] : vector<1x16xf32> to vector<1xf32>
    %1647 = vector.shape_cast %1646 : vector<1xf32> to vector<1x1xf32>
    %1648 = vector.broadcast %1647 : vector<1x1xf32> to vector<1x16xf32>
    %1649 = arith.cmpf oeq, %1379, %1648 : vector<1x16xf32>
    %1650 = arith.andi %1643, %1649 : vector<1x16xi1>
    %cst_398 = arith.constant 1.600000e+01 : f32
    %1651 = vector.broadcast %cst_398 : f32 to vector<1x16xf32>
    %1652 = arith.select %1650, %15, %1651 : vector<1x16xi1>, vector<1x16xf32>
    %cst_399 = arith.constant dense<0x7F800000> : vector<1xf32>
    %1653 = vector.multi_reduction <minimumf>, %1652, %cst_399 [1] : vector<1x16xf32> to vector<1xf32>
    %1654 = vector.shape_cast %1653 : vector<1xf32> to vector<1x1xf32>
    %1655 = vector.broadcast %1654 : vector<1x1xf32> to vector<1x16xf32>
    %1656 = arith.cmpf oeq, %15, %1655 : vector<1x16xf32>
    %1657 = arith.extui %1656 : vector<1x16xi1> to vector<1x16xi32>
    %1658 = arith.sitofp %1657 : vector<1x16xi32> to vector<1x16xf32>
    %1659 = arith.subf %1633, %1658 : vector<1x16xf32>
    %c10_i32_400 = arith.constant 10 : i32
    %1660 = vector.broadcast %c10_i32_400 : i32 to vector<15x1xi32>
    %1661 = arith.cmpi eq, %21, %1660 : vector<15x1xi32>
    %1662 = arith.extui %1661 : vector<15x1xi1> to vector<15x1xi32>
    %1663 = arith.sitofp %1662 : vector<15x1xi32> to vector<15x1xf32>
    %1664 = vector.broadcast %1658 : vector<1x16xf32> to vector<15x16xf32>
    %1665 = vector.broadcast %1663 : vector<15x1xf32> to vector<15x16xf32>
    %1666 = arith.mulf %1664, %1665 : vector<15x16xf32>
    %1667 = arith.addf %1641, %1666 : vector<15x16xf32>
    %cst_401 = arith.constant 0.000000e+00 : f32
    %1668 = vector.broadcast %cst_401 : f32 to vector<1x16xf32>
    %1669 = arith.cmpf ogt, %1659, %1668 : vector<1x16xf32>
    %cst_402 = arith.constant 0xFF800000 : f32
    %1670 = vector.broadcast %cst_402 : f32 to vector<1x16xf32>
    %1671 = arith.select %1669, %1379, %1670 : vector<1x16xi1>, vector<1x16xf32>
    %cst_403 = arith.constant dense<0xFF800000> : vector<1xf32>
    %1672 = vector.multi_reduction <maximumf>, %1671, %cst_403 [1] : vector<1x16xf32> to vector<1xf32>
    %1673 = vector.shape_cast %1672 : vector<1xf32> to vector<1x1xf32>
    %1674 = vector.broadcast %1673 : vector<1x1xf32> to vector<1x16xf32>
    %1675 = arith.cmpf oeq, %1379, %1674 : vector<1x16xf32>
    %1676 = arith.andi %1669, %1675 : vector<1x16xi1>
    %cst_404 = arith.constant 1.600000e+01 : f32
    %1677 = vector.broadcast %cst_404 : f32 to vector<1x16xf32>
    %1678 = arith.select %1676, %15, %1677 : vector<1x16xi1>, vector<1x16xf32>
    %cst_405 = arith.constant dense<0x7F800000> : vector<1xf32>
    %1679 = vector.multi_reduction <minimumf>, %1678, %cst_405 [1] : vector<1x16xf32> to vector<1xf32>
    %1680 = vector.shape_cast %1679 : vector<1xf32> to vector<1x1xf32>
    %1681 = vector.broadcast %1680 : vector<1x1xf32> to vector<1x16xf32>
    %1682 = arith.cmpf oeq, %15, %1681 : vector<1x16xf32>
    %1683 = arith.extui %1682 : vector<1x16xi1> to vector<1x16xi32>
    %1684 = arith.sitofp %1683 : vector<1x16xi32> to vector<1x16xf32>
    %1685 = arith.subf %1659, %1684 : vector<1x16xf32>
    %c11_i32_406 = arith.constant 11 : i32
    %1686 = vector.broadcast %c11_i32_406 : i32 to vector<15x1xi32>
    %1687 = arith.cmpi eq, %21, %1686 : vector<15x1xi32>
    %1688 = arith.extui %1687 : vector<15x1xi1> to vector<15x1xi32>
    %1689 = arith.sitofp %1688 : vector<15x1xi32> to vector<15x1xf32>
    %1690 = vector.broadcast %1684 : vector<1x16xf32> to vector<15x16xf32>
    %1691 = vector.broadcast %1689 : vector<15x1xf32> to vector<15x16xf32>
    %1692 = arith.mulf %1690, %1691 : vector<15x16xf32>
    %1693 = arith.addf %1667, %1692 : vector<15x16xf32>
    %cst_407 = arith.constant 0.000000e+00 : f32
    %1694 = vector.broadcast %cst_407 : f32 to vector<1x16xf32>
    %1695 = arith.cmpf ogt, %1685, %1694 : vector<1x16xf32>
    %cst_408 = arith.constant 0xFF800000 : f32
    %1696 = vector.broadcast %cst_408 : f32 to vector<1x16xf32>
    %1697 = arith.select %1695, %1379, %1696 : vector<1x16xi1>, vector<1x16xf32>
    %cst_409 = arith.constant dense<0xFF800000> : vector<1xf32>
    %1698 = vector.multi_reduction <maximumf>, %1697, %cst_409 [1] : vector<1x16xf32> to vector<1xf32>
    %1699 = vector.shape_cast %1698 : vector<1xf32> to vector<1x1xf32>
    %1700 = vector.broadcast %1699 : vector<1x1xf32> to vector<1x16xf32>
    %1701 = arith.cmpf oeq, %1379, %1700 : vector<1x16xf32>
    %1702 = arith.andi %1695, %1701 : vector<1x16xi1>
    %cst_410 = arith.constant 1.600000e+01 : f32
    %1703 = vector.broadcast %cst_410 : f32 to vector<1x16xf32>
    %1704 = arith.select %1702, %15, %1703 : vector<1x16xi1>, vector<1x16xf32>
    %cst_411 = arith.constant dense<0x7F800000> : vector<1xf32>
    %1705 = vector.multi_reduction <minimumf>, %1704, %cst_411 [1] : vector<1x16xf32> to vector<1xf32>
    %1706 = vector.shape_cast %1705 : vector<1xf32> to vector<1x1xf32>
    %1707 = vector.broadcast %1706 : vector<1x1xf32> to vector<1x16xf32>
    %1708 = arith.cmpf oeq, %15, %1707 : vector<1x16xf32>
    %1709 = arith.extui %1708 : vector<1x16xi1> to vector<1x16xi32>
    %1710 = arith.sitofp %1709 : vector<1x16xi32> to vector<1x16xf32>
    %1711 = arith.subf %1685, %1710 : vector<1x16xf32>
    %c12_i32_412 = arith.constant 12 : i32
    %1712 = vector.broadcast %c12_i32_412 : i32 to vector<15x1xi32>
    %1713 = arith.cmpi eq, %21, %1712 : vector<15x1xi32>
    %1714 = arith.extui %1713 : vector<15x1xi1> to vector<15x1xi32>
    %1715 = arith.sitofp %1714 : vector<15x1xi32> to vector<15x1xf32>
    %1716 = vector.broadcast %1710 : vector<1x16xf32> to vector<15x16xf32>
    %1717 = vector.broadcast %1715 : vector<15x1xf32> to vector<15x16xf32>
    %1718 = arith.mulf %1716, %1717 : vector<15x16xf32>
    %1719 = arith.addf %1693, %1718 : vector<15x16xf32>
    %cst_413 = arith.constant 0.000000e+00 : f32
    %1720 = vector.broadcast %cst_413 : f32 to vector<1x16xf32>
    %1721 = arith.cmpf ogt, %1711, %1720 : vector<1x16xf32>
    %cst_414 = arith.constant 0xFF800000 : f32
    %1722 = vector.broadcast %cst_414 : f32 to vector<1x16xf32>
    %1723 = arith.select %1721, %1379, %1722 : vector<1x16xi1>, vector<1x16xf32>
    %cst_415 = arith.constant dense<0xFF800000> : vector<1xf32>
    %1724 = vector.multi_reduction <maximumf>, %1723, %cst_415 [1] : vector<1x16xf32> to vector<1xf32>
    %1725 = vector.shape_cast %1724 : vector<1xf32> to vector<1x1xf32>
    %1726 = vector.broadcast %1725 : vector<1x1xf32> to vector<1x16xf32>
    %1727 = arith.cmpf oeq, %1379, %1726 : vector<1x16xf32>
    %1728 = arith.andi %1721, %1727 : vector<1x16xi1>
    %cst_416 = arith.constant 1.600000e+01 : f32
    %1729 = vector.broadcast %cst_416 : f32 to vector<1x16xf32>
    %1730 = arith.select %1728, %15, %1729 : vector<1x16xi1>, vector<1x16xf32>
    %cst_417 = arith.constant dense<0x7F800000> : vector<1xf32>
    %1731 = vector.multi_reduction <minimumf>, %1730, %cst_417 [1] : vector<1x16xf32> to vector<1xf32>
    %1732 = vector.shape_cast %1731 : vector<1xf32> to vector<1x1xf32>
    %1733 = vector.broadcast %1732 : vector<1x1xf32> to vector<1x16xf32>
    %1734 = arith.cmpf oeq, %15, %1733 : vector<1x16xf32>
    %1735 = arith.extui %1734 : vector<1x16xi1> to vector<1x16xi32>
    %1736 = arith.sitofp %1735 : vector<1x16xi32> to vector<1x16xf32>
    %1737 = arith.subf %1711, %1736 : vector<1x16xf32>
    %c13_i32_418 = arith.constant 13 : i32
    %1738 = vector.broadcast %c13_i32_418 : i32 to vector<15x1xi32>
    %1739 = arith.cmpi eq, %21, %1738 : vector<15x1xi32>
    %1740 = arith.extui %1739 : vector<15x1xi1> to vector<15x1xi32>
    %1741 = arith.sitofp %1740 : vector<15x1xi32> to vector<15x1xf32>
    %1742 = vector.broadcast %1736 : vector<1x16xf32> to vector<15x16xf32>
    %1743 = vector.broadcast %1741 : vector<15x1xf32> to vector<15x16xf32>
    %1744 = arith.mulf %1742, %1743 : vector<15x16xf32>
    %1745 = arith.addf %1719, %1744 : vector<15x16xf32>
    %cst_419 = arith.constant 0.000000e+00 : f32
    %1746 = vector.broadcast %cst_419 : f32 to vector<1x16xf32>
    %1747 = arith.cmpf ogt, %1737, %1746 : vector<1x16xf32>
    %cst_420 = arith.constant 0xFF800000 : f32
    %1748 = vector.broadcast %cst_420 : f32 to vector<1x16xf32>
    %1749 = arith.select %1747, %1379, %1748 : vector<1x16xi1>, vector<1x16xf32>
    %cst_421 = arith.constant dense<0xFF800000> : vector<1xf32>
    %1750 = vector.multi_reduction <maximumf>, %1749, %cst_421 [1] : vector<1x16xf32> to vector<1xf32>
    %1751 = vector.shape_cast %1750 : vector<1xf32> to vector<1x1xf32>
    %1752 = vector.broadcast %1751 : vector<1x1xf32> to vector<1x16xf32>
    %1753 = arith.cmpf oeq, %1379, %1752 : vector<1x16xf32>
    %1754 = arith.andi %1747, %1753 : vector<1x16xi1>
    %cst_422 = arith.constant 1.600000e+01 : f32
    %1755 = vector.broadcast %cst_422 : f32 to vector<1x16xf32>
    %1756 = arith.select %1754, %15, %1755 : vector<1x16xi1>, vector<1x16xf32>
    %cst_423 = arith.constant dense<0x7F800000> : vector<1xf32>
    %1757 = vector.multi_reduction <minimumf>, %1756, %cst_423 [1] : vector<1x16xf32> to vector<1xf32>
    %1758 = vector.shape_cast %1757 : vector<1xf32> to vector<1x1xf32>
    %1759 = vector.broadcast %1758 : vector<1x1xf32> to vector<1x16xf32>
    %1760 = arith.cmpf oeq, %15, %1759 : vector<1x16xf32>
    %1761 = arith.extui %1760 : vector<1x16xi1> to vector<1x16xi32>
    %1762 = arith.sitofp %1761 : vector<1x16xi32> to vector<1x16xf32>
    %c14_i32_424 = arith.constant 14 : i32
    %1763 = vector.broadcast %c14_i32_424 : i32 to vector<15x1xi32>
    %1764 = arith.cmpi eq, %21, %1763 : vector<15x1xi32>
    %1765 = arith.extui %1764 : vector<15x1xi1> to vector<15x1xi32>
    %1766 = arith.sitofp %1765 : vector<15x1xi32> to vector<15x1xf32>
    %1767 = vector.broadcast %1762 : vector<1x16xf32> to vector<15x16xf32>
    %1768 = vector.broadcast %1766 : vector<15x1xf32> to vector<15x16xf32>
    %1769 = arith.mulf %1767, %1768 : vector<15x16xf32>
    %1770 = arith.addf %1745, %1769 : vector<15x16xf32>
    %cst_425 = arith.constant dense<0.000000e+00> : vector<15x16xf32>
    %1771 = tpu.matmul %1770, %1365, %cst_425 {dimension_numbers = #tpu.dot_dimension_numbers<[1], [0], [0], [1], [0, 0, 1, 1], [], []>} : vector<15x16xf32>, vector<16x16xf32>, vector<15x16xf32> -> vector<15x16xf32>
    %1772 = vector.broadcast %15 : vector<1x16xf32> to vector<15x16xf32>
    %1773 = arith.mulf %1770, %1772 : vector<15x16xf32>
    %cst_426 = arith.constant dense<0.000000e+00> : vector<15xf32>
    %1774 = vector.multi_reduction <add>, %1773, %cst_426 [1] : vector<15x16xf32> to vector<15xf32>
    %1775 = vector.shape_cast %1774 : vector<15xf32> to vector<15x1xf32>
    %1776 = vector.broadcast %13 : vector<1x16xf32> to vector<15x16xf32>
    %1777 = vector.broadcast %1775 : vector<15x1xf32> to vector<15x16xf32>
    %1778 = arith.cmpf ogt, %1776, %1777 : vector<15x16xf32>
    %cst_427 = arith.constant 0.176776692 : f32
    %1779 = vector.broadcast %cst_427 : f32 to vector<15x16xf32>
    %1780 = arith.mulf %1771, %1779 : vector<15x16xf32>
    %cst_428 = arith.constant 0xFF800000 : f32
    %1781 = vector.broadcast %cst_428 : f32 to vector<15x16xf32>
    %1782 = arith.select %1778, %1781, %1780 : vector<15x16xi1>, vector<15x16xf32>
    %cst_429 = arith.constant dense<0xFF800000> : vector<15xf32>
    %1783 = vector.multi_reduction <maximumf>, %1782, %cst_429 [1] : vector<15x16xf32> to vector<15xf32>
    %1784 = vector.shape_cast %1783 : vector<15xf32> to vector<15x1xf32>
    %1785 = vector.broadcast %1784 : vector<15x1xf32> to vector<15x16xf32>
    %1786 = arith.subf %1782, %1785 : vector<15x16xf32>
    %1787 = math.exp %1786 : vector<15x16xf32>
    %cst_430 = arith.constant dense<0.000000e+00> : vector<15xf32>
    %1788 = vector.multi_reduction <add>, %1787, %cst_430 [1] : vector<15x16xf32> to vector<15xf32>
    %1789 = vector.shape_cast %1788 : vector<15xf32> to vector<15x1xf32>
    %1790 = tpu.reciprocal %1789 {approx = true} : vector<15x1xf32> -> vector<15x1xf32>
    %1791 = vector.broadcast %1790 : vector<15x1xf32> to vector<15x16xf32>
    %1792 = arith.mulf %1787, %1791 : vector<15x16xf32>
    %1793 = arith.truncf %1792 : vector<15x16xf32> to vector<15x16xbf16>
    %cst_431 = arith.constant dense<0.000000e+00> : vector<15x32xf32>
    %1794 = tpu.matmul %1793, %1363, %cst_431 {dimension_numbers = #tpu.dot_dimension_numbers<[1], [0], [0], [1], [0, 0, 1, 1], [], []>} : vector<15x16xbf16>, vector<16x32xbf16>, vector<15x32xf32> -> vector<15x32xf32>
    %1795 = tpu.concatenate %1794, %22 in 1 : vector<15x32xf32>, vector<15x1xf32> -> vector<15x33xf32>
    %cst_432 = arith.constant dense<0.000000e+00> : vector<16x33xf32>
    %1796 = tpu.matmul %1770, %1795, %cst_432 {dimension_numbers = #tpu.dot_dimension_numbers<[0], [0], [1], [1], [0, 1, 1, 1], [], []>} : vector<15x16xf32>, vector<15x33xf32>, vector<16x33xf32> -> vector<16x33xf32>
    %1797 = vector.extract_strided_slice %1796 {offsets = [0, 32], sizes = [16, 1], strides = [1, 1]} : vector<16x33xf32> to vector<16x1xf32>
    %cst_433 = arith.constant 5.000000e-01 : f32
    %1798 = vector.broadcast %cst_433 : f32 to vector<16x1xf32>
    %1799 = arith.cmpf ogt, %1797, %1798 : vector<16x1xf32>
    %1800 = vector.extract_strided_slice %1796 {offsets = [0, 0], sizes = [16, 32], strides = [1, 1]} : vector<16x33xf32> to vector<16x32xf32>
    %1801 = vector.shape_cast %1799 : vector<16x1xi1> to vector<16x1xi1>
    %1802 = vector.broadcast %1801 : vector<16x1xi1> to vector<16x32xi1>
    %1803 = arith.select %1802, %1800, %1364 : vector<16x32xi1>, vector<16x32xf32>
    %c0_434 = arith.constant 0 : index
    %c0_435 = arith.constant 0 : index
    %c96 = arith.constant 96 : index
    %1804 = vector.load %arg6[%c0_434, %c0_435, %c96] : memref<1x16x128xf32, #tpu.memory_space<vmem>>, vector<1x16x32xf32>
    %1805 = vector.shape_cast %1804 : vector<1x16x32xf32> to vector<16x32xf32>
    %1806 = vector.shape_cast %1803 : vector<16x32xf32> to vector<1x16x32xf32>
    tpu.vector_store %arg6[%c0_434, %c0_435, %c96], %1806 {strides = array<i32>} : memref<1x16x128xf32, #tpu.memory_space<vmem>>, vector<1x16x32xf32>,
    return
  }
  func.func @transform_0(%arg0: i32) -> (i32, i32, i32) {
    %c0_i32 = arith.constant 0 : i32
    %c0_i32_0 = arith.constant 0 : i32
    %c0_i32_1 = arith.constant 0 : i32
    return %arg0, %c0_i32, %c0_i32_0 : i32, i32, i32
  }
  func.func @transform_1(%arg0: i32) -> (i32, i32, i32) {
    %c0_i32 = arith.constant 0 : i32
    %c0_i32_0 = arith.constant 0 : i32
    %c0_i32_1 = arith.constant 0 : i32
    return %arg0, %c0_i32, %c0_i32_0 : i32, i32, i32
  }
  func.func @transform_2(%arg0: i32) -> (i32, i32, i32) {
    %c0_i32 = arith.constant 0 : i32
    %c0_i32_0 = arith.constant 0 : i32
    %c0_i32_1 = arith.constant 0 : i32
    return %arg0, %c0_i32, %c0_i32_0 : i32, i32, i32
  }
  func.func @transform_3(%arg0: i32) -> (i32, i32, i32) {
    %c0_i32 = arith.constant 0 : i32
    %c0_i32_0 = arith.constant 0 : i32
    %c0_i32_1 = arith.constant 0 : i32
    return %arg0, %c0_i32, %c0_i32_0 : i32, i32, i32
  }
  func.func @transform_4(%arg0: i32) -> (i32, i32) {
    %c0_i32 = arith.constant 0 : i32
    %c0_i32_0 = arith.constant 0 : i32
    %c0_i32_1 = arith.constant 0 : i32
    return %c0_i32, %c0_i32_0 : i32, i32
  }
  func.func @transform_5(%arg0: i32) -> (i32, i32, i32) {
    %c0_i32 = arith.constant 0 : i32
    %c0_i32_0 = arith.constant 0 : i32
    %c0_i32_1 = arith.constant 0 : i32
    return %arg0, %c0_i32, %c0_i32_0 : i32, i32, i32
  }
}

</mosaic_0001>

<llo_original>
// kernel: tpu_custom_call.1
$region0: #{tpu_custom_call.1}
  #allocation0 [shape = 'u32[]', space=smem, size = 0x4, offset = 0x4, fixed_abs, tag = 'smem constant byte address 0x4 - core index']
  #allocation1 [shape = 'u32[144,128]{1,0:T(1,128)}', space=vmem, size = 0x12000, scoped, tag = 'internal scratch']
  %s0 = inlined_call_operand.hbm [shape: bf16[2,16,128], index: 0, kind: input, shape index: {}]
  %s1 = inlined_call_operand.hbm [shape: bf16[2,16,128], index: 1, kind: input, shape index: {}]
  %s2 = inlined_call_operand.hbm [shape: bf16[2,16,128], index: 2, kind: input, shape index: {}]
  %s3 = inlined_call_operand.hbm [shape: f32[2,16,128], index: 3, kind: input, shape index: {}]
  %s4 = inlined_call_operand.hbm [shape: bf16[16,16], index: 4, kind: input, shape index: {}]
  %s5 = inlined_call_operand.hbm [shape: f32[2,16,128], index: 5, kind: output, shape index: {}]
  %s6 = sld [smem:[#allocation0]]
  $region73: #{tpu_custom_call.1} parent=0
    _
  %s8 = ssub.s32 1, %s6
  %s9 = scalar_select 0, %s8, %s6
  $region1: #{tpu_custom_call.1} parent=0
    #allocation2 [shape = 'u8[8192]{0}', space=vmem, size = 0x2000, scoped, tag = 'input window, operand 0']
    #allocation3 [shape = 's32[2]{0}', space=sflag, size = 0x8, scoped, tag = 'scoped memory for tpu_custom_call.1']
    #allocation4 [shape = 's32[2]{0}', space=sflag, size = 0x8, scoped, tag = 'scoped memory for tpu_custom_call.1']
    #allocation5 [shape = 'u8[8192]{0}', space=vmem, size = 0x2000, scoped, tag = 'input window, operand 1']
    #allocation6 [shape = 's32[2]{0}', space=sflag, size = 0x8, scoped, tag = 'scoped memory for tpu_custom_call.1']
    #allocation7 [shape = 'u8[8192]{0}', space=vmem, size = 0x2000, scoped, tag = 'input window, operand 2']
    #allocation8 [shape = 'u8[16384]{0}', space=vmem, size = 0x4000, scoped, tag = 'input window, operand 3']
    #allocation9 [shape = 's32[2]{0}', space=sflag, size = 0x8, scoped, tag = 'scoped memory for tpu_custom_call.1']
    #allocation10 [shape = 'u8[4096]{0}', space=vmem, size = 0x1000, scoped, tag = 'input window, operand 4, single buffered']
    #allocation11 [shape = 'u8[16384]{0}', space=vmem, size = 0x4000, scoped, tag = 'output window, operand 0']
    %10 = vsyncpa [#allocation3], 0
    %s11 = scalar_lea.sflag [#allocation3], 1
    %12 = vsyncpa %s11, 0
    %13 = vsyncpa [#allocation6], 0
    %s14 = scalar_lea.sflag [#allocation6], 1
    %15 = vsyncpa %s14, 0
    %16 = vsyncpa [#allocation9], 0
    %s17 = scalar_lea.sflag [#allocation9], 1
    %18 = vsyncpa %s17, 0
    %19 = vsyncpa [#allocation4], 0
    %s20 = scalar_lea.sflag [#allocation4], 1
    %21 = vsyncpa %s20, 0
    loop: start=0, step=1, limit=4
    $region2: #{tpu_custom_call.1} parent=1 // loop_pre_header
      _
    $region3: #{tpu_custom_call.1} parent=1 // loop_header
      %s23 = sphi 0, %s27
      %p24 = scmp.ge.s32.totalorder %s23, 4
      %s33 = sphi 0, %s35
      %s36 = sphi 0, %s33
      %s37 = sphi 0, %s36
      %s53 = sphi 0, %s37
      %s59 = sphi 0, %s61
      %s62 = sphi 0, %s59
      %s63 = sphi 0, %s62
      %s79 = sphi 0, %s63
      %s85 = sphi 0, %s87
      %s88 = sphi 0, %s85
      %s89 = sphi 0, %s88
      %s105 = sphi 0, %s89
      %s111 = sphi 0, %s113
      %s114 = sphi 0, %s111
      %s115 = sphi 0, %s114
      %s131 = sphi 0, %s115
      %s135 = sphi 0, %s135
      %s137 = sphi 0, %s135
      %s138 = sphi 0, %s137
      %s152 = sphi 0, %s138
      %s158 = sphi 0, %s160
      %s161 = sphi 0, %s158
      %s162 = sphi 0, %s161
      %s178 = sphi 0, %s162
    $region4: #{tpu_custom_call.1} parent=1 // loop_header_branch
      %26 = sbr.rel (%p24) target = $region8
    $region5: #{tpu_custom_call.1} parent=1 // loop_body
      %s28 = ssub.s32 %s23, 1
      %s29 = ssub.s32 %s23, 2
      %s30 = sadd.s32 %s23, 1
      %s31 = ssub.s32 %s23, %s30
      %p32 = scmp.eq.s32.totalorder %s31, 0
      %s34 = sadd.s32 %s33, 1
      %s35 = scalar_select %p32, %s33, %s34
      %p38 = pneg %p32
      %p39 = scmp.eq.s32.totalorder %s23, 1
      %p40 = por %p38, %p39
      %p41 = scmp.ne.s32.totalorder %s33, %s36
      %p42 = scmp.eq.s32.totalorder %s23, 0
      %p43 = por %p41, %p42
      %p44 = scmp.ne.s32.totalorder %s33, %s36
      %p45 = scmp.eq.s32.totalorder %s28, 1
      %p46 = por %p44, %p45
      %p47 = scmp.ne.s32.totalorder %s36, %s37
      %p48 = scmp.eq.s32.totalorder %s28, 0
      %p49 = por %p47, %p48
      %p50 = scmp.ne.s32.totalorder %s36, %s37
      %p51 = scmp.eq.s32.totalorder %s29, 1
      %p52 = por %p50, %p51
      %p54 = scmp.ne.s32.totalorder %s37, %s53
      %p55 = scmp.eq.s32.totalorder %s29, 0
      %p56 = por %p54, %p55
      %s57 = ssub.s32 %s23, %s30
      %p58 = scmp.eq.s32.totalorder %s57, 0
      %s60 = sadd.s32 %s59, 1
      %s61 = scalar_select %p58, %s59, %s60
      %p64 = pneg %p58
      %p65 = scmp.eq.s32.totalorder %s23, 1
      %p66 = por %p64, %p65
      %p67 = scmp.ne.s32.totalorder %s59, %s62
      %p68 = scmp.eq.s32.totalorder %s23, 0
      %p69 = por %p67, %p68
      %p70 = scmp.ne.s32.totalorder %s59, %s62
      %p71 = scmp.eq.s32.totalorder %s28, 1
      %p72 = por %p70, %p71
      %p73 = scmp.ne.s32.totalorder %s62, %s63
      %p74 = scmp.eq.s32.totalorder %s28, 0
      %p75 = por %p73, %p74
      %p76 = scmp.ne.s32.totalorder %s62, %s63
      %p77 = scmp.eq.s32.totalorder %s29, 1
      %p78 = por %p76, %p77
      %p80 = scmp.ne.s32.totalorder %s63, %s79
      %p81 = scmp.eq.s32.totalorder %s29, 0
      %p82 = por %p80, %p81
      %s83 = ssub.s32 %s23, %s30
      %p84 = scmp.eq.s32.totalorder %s83, 0
      %s86 = sadd.s32 %s85, 1
      %s87 = scalar_select %p84, %s85, %s86
      %p90 = pneg %p84
      %p91 = scmp.eq.s32.totalorder %s23, 1
      %p92 = por %p90, %p91
      %p93 = scmp.ne.s32.totalorder %s85, %s88
      %p94 = scmp.eq.s32.totalorder %s23, 0
      %p95 = por %p93, %p94
      %p96 = scmp.ne.s32.totalorder %s85, %s88
      %p97 = scmp.eq.s32.totalorder %s28, 1
      %p98 = por %p96, %p97
      %p99 = scmp.ne.s32.totalorder %s88, %s89
      %p100 = scmp.eq.s32.totalorder %s28, 0
      %p101 = por %p99, %p100
      %p102 = scmp.ne.s32.totalorder %s88, %s89
      %p103 = scmp.eq.s32.totalorder %s29, 1
      %p104 = por %p102, %p103
      %p106 = scmp.ne.s32.totalorder %s89, %s105
      %p107 = scmp.eq.s32.totalorder %s29, 0
      %p108 = por %p106, %p107
      %s109 = ssub.s32 %s23, %s30
      %p110 = scmp.eq.s32.totalorder %s109, 0
      %s112 = sadd.s32 %s111, 1
      %s113 = scalar_select %p110, %s111, %s112
      %p116 = pneg %p110
      %p117 = scmp.eq.s32.totalorder %s23, 1
      %p118 = por %p116, %p117
      %p119 = scmp.ne.s32.totalorder %s111, %s114
      %p120 = scmp.eq.s32.totalorder %s23, 0
      %p121 = por %p119, %p120
      %p122 = scmp.ne.s32.totalorder %s111, %s114
      %p123 = scmp.eq.s32.totalorder %s28, 1
      %p124 = por %p122, %p123
      %p125 = scmp.ne.s32.totalorder %s114, %s115
      %p126 = scmp.eq.s32.totalorder %s28, 0
      %p127 = por %p125, %p126
      %p128 = scmp.ne.s32.totalorder %s114, %s115
      %p129 = scmp.eq.s32.totalorder %s29, 1
      %p130 = por %p128, %p129
      %p132 = scmp.ne.s32.totalorder %s115, %s131
      %p133 = scmp.eq.s32.totalorder %s29, 0
      %p134 = por %p132, %p133
      %s136 = sadd.s32 %s135, 1
      %p139 = scmp.eq.s32.totalorder %s23, 1
      %p140 = scmp.ne.s32.totalorder %s135, %s137
      %p141 = scmp.eq.s32.totalorder %s23, 0
      %p142 = por %p140, %p141
      %p143 = scmp.ne.s32.totalorder %s135, %s137
      %p144 = scmp.eq.s32.totalorder %s28, 1
      %p145 = por %p143, %p144
      %p146 = scmp.ne.s32.totalorder %s137, %s138
      %p147 = scmp.eq.s32.totalorder %s28, 0
      %p148 = por %p146, %p147
      %p149 = scmp.ne.s32.totalorder %s137, %s138
      %p150 = scmp.eq.s32.totalorder %s29, 1
      %p151 = por %p149, %p150
      %p153 = scmp.ne.s32.totalorder %s138, %s152
      %p154 = scmp.eq.s32.totalorder %s29, 0
      %p155 = por %p153, %p154
      %s156 = ssub.s32 %s23, %s30
      %p157 = scmp.eq.s32.totalorder %s156, 0
      %s159 = sadd.s32 %s158, 1
      %s160 = scalar_select %p157, %s158, %s159
      %p163 = pneg %p157
      %p164 = scmp.eq.s32.totalorder %s23, 1
      %p165 = por %p163, %p164
      %p166 = scmp.ne.s32.totalorder %s158, %s161
      %p167 = scmp.eq.s32.totalorder %s23, 0
      %p168 = por %p166, %p167
      %p169 = scmp.ne.s32.totalorder %s158, %s161
      %p170 = scmp.eq.s32.totalorder %s28, 1
      %p171 = por %p169, %p170
      %p172 = scmp.ne.s32.totalorder %s161, %s162
      %p173 = scmp.eq.s32.totalorder %s28, 0
      %p174 = por %p172, %p173
      %p175 = scmp.ne.s32.totalorder %s161, %s162
      %p176 = scmp.eq.s32.totalorder %s29, 1
      %p177 = por %p175, %p176
      %p179 = scmp.ne.s32.totalorder %s162, %s178
      %p180 = scmp.eq.s32.totalorder %s29, 0
      %p181 = por %p179, %p180
      %p182 = scmp.le.s32.totalorder 1, %s23
      %p183 = scmp.lt.s32.totalorder %s23, 3
      %p184 = pnand %p182, %p183
      %p185 = pneg %p184
      // Predicated region
      $region9: #{tpu_custom_call.1} parent=5 // pred_check
        _
      $region10: #{tpu_custom_call.1} parent=5 // pred_check_branch
        %187 = sbr.rel (%p184) target = $region12
      $region11: #{tpu_custom_call.1} parent=5 // pred_region
        %s188 = ssub.s32 %s23, 1
        // Predicated region
        $region13: #{tpu_custom_call.1} parent=11 // pred_check
          %p189 = pneg %p148
        $region14: #{tpu_custom_call.1} parent=11 // pred_check_branch
          %191 = sbr.rel (%p189) target = $region16
        $region15: #{tpu_custom_call.1} parent=11 // pred_region
          %s193 = ssub.s32 128, 128
          %194 = vsyncadd [#allocation9], %s193
          %s195 = sshll.u32 [#allocation10], 4
          %s196 = int_to_ptr.vmem [resolvable:$true] %s195
          %201 = dma.hbm_to_vmem [thread:$0]  %s4, 128, %s196, [#allocation9], 64, 64, 4
        $region16: #{tpu_custom_call.1} parent=11 // pred_fallthru
          _
      $region12: #{tpu_custom_call.1} parent=5 // pred_fallthru
        _
      %p202 = scmp.lt.s32.totalorder %s23, 2
      // Predicated region
      $region17: #{tpu_custom_call.1} parent=5 // pred_check
        %p203 = pneg %p202
      $region18: #{tpu_custom_call.1} parent=5 // pred_check_branch
        %205 = sbr.rel (%p203) target = $region20
      $region19: #{tpu_custom_call.1} parent=5 // pred_region
        // Predicated region
        $region21: #{tpu_custom_call.1} parent=19 // pred_check
          %p206 = pneg %p43
        $region22: #{tpu_custom_call.1} parent=19 // pred_check_branch
          %208 = sbr.rel (%p206) target = $region24
        $region23: #{tpu_custom_call.1} parent=19 // pred_region
          %s209 = sand.u32 %s33, 1
          %s210 = scalar_lea.sflag [#allocation3], %s209
          %s211 = sand.u32 %s33, 1
          %s212 = smul.addr %s211, 8
          %s213 = scalar_lea.vmem [#allocation2], %s212
          %s215 = ssub.s32 128, 128
          %216 = vsyncadd %s210, %s215
          %s217 = smul.addr %s23, 2
          %s218 = smul.addr %s217, 64
          %s219 = scalar_lea.hbm %s0, %s218
          %s220 = sshll.u32 %s213, 4
          %s221 = int_to_ptr.vmem [resolvable:$true] %s220
          %226 = dma.hbm_to_vmem [thread:$0]  %s219, 128, %s221, %s210, 64, 64, 4
        $region24: #{tpu_custom_call.1} parent=19 // pred_fallthru
          _
        // Predicated region
        $region25: #{tpu_custom_call.1} parent=19 // pred_check
          %p227 = pneg %p69
        $region26: #{tpu_custom_call.1} parent=19 // pred_check_branch
          %229 = sbr.rel (%p227) target = $region28
        $region27: #{tpu_custom_call.1} parent=19 // pred_region
          %s230 = sand.u32 %s23, 1
          %s231 = scalar_lea.sflag [#allocation6], %s230
          %s232 = sand.u32 %s59, 1
          %s233 = smul.addr %s232, 8
          %s234 = scalar_lea.vmem [#allocation5], %s233
          %s236 = ssub.s32 128, 128
          %237 = vsyncadd %s231, %s236
          %s238 = smul.addr %s23, 2
          %s239 = smul.addr %s238, 64
          %s240 = scalar_lea.hbm %s1, %s239
          %s241 = sshll.u32 %s234, 4
          %s242 = int_to_ptr.vmem [resolvable:$true] %s241
          %247 = dma.hbm_to_vmem [thread:$0]  %s240, 128, %s242, %s231, 64, 64, 4
        $region28: #{tpu_custom_call.1} parent=19 // pred_fallthru
          _
        // Predicated region
        $region29: #{tpu_custom_call.1} parent=19 // pred_check
          %p248 = pneg %p95
        $region30: #{tpu_custom_call.1} parent=19 // pred_check_branch
          %250 = sbr.rel (%p248) target = $region32
        $region31: #{tpu_custom_call.1} parent=19 // pred_region
          %s251 = sand.u32 %s23, 1
          %s252 = scalar_lea.sflag [#allocation6], %s251
          %s253 = sand.u32 %s85, 1
          %s254 = smul.addr %s253, 8
          %s255 = scalar_lea.vmem [#allocation7], %s254
          %s257 = ssub.s32 128, 128
          %258 = vsyncadd %s252, %s257
          %s259 = smul.addr %s23, 2
          %s260 = smul.addr %s259, 64
          %s261 = scalar_lea.hbm %s2, %s260
          %s262 = sshll.u32 %s255, 4
          %s263 = int_to_ptr.vmem [resolvable:$true] %s262
          %268 = dma.hbm_to_vmem [thread:$0]  %s261, 128, %s263, %s252, 64, 64, 4
        $region32: #{tpu_custom_call.1} parent=19 // pred_fallthru
          _
        // Predicated region
        $region33: #{tpu_custom_call.1} parent=19 // pred_check
          %p269 = pneg %p121
        $region34: #{tpu_custom_call.1} parent=19 // pred_check_branch
          %271 = sbr.rel (%p269) target = $region36
        $region35: #{tpu_custom_call.1} parent=19 // pred_region
          %s272 = sand.u32 %s23, 1
          %s273 = scalar_lea.sflag [#allocation9], %s272
          %s274 = sand.u32 %s111, 1
          %s275 = smul.addr %s274, 16
          %s276 = scalar_lea.vmem [#allocation8], %s275
          %s278 = ssub.s32 256, 256
          %279 = vsyncadd %s273, %s278
          %s280 = smul.addr %s23, 2
          %s281 = smul.addr %s280, 128
          %s282 = scalar_lea.hbm %s3, %s281
          %s283 = sshll.u32 %s276, 4
          %s284 = int_to_ptr.vmem [resolvable:$true] %s283
          %289 = dma.hbm_to_vmem [thread:$0]  %s282, 256, %s284, %s273, 128, 128, 8
        $region36: #{tpu_custom_call.1} parent=19 // pred_fallthru
          _
      $region20: #{tpu_custom_call.1} parent=5 // pred_fallthru
        _
      %p290 = scmp.le.s32.totalorder 1, %s23
      %p291 = scmp.lt.s32.totalorder %s23, 3
      %p292 = pnand %p290, %p291
      %p293 = pneg %p292
      // Predicated region
      $region37: #{tpu_custom_call.1} parent=5 // pred_check
        _
      $region38: #{tpu_custom_call.1} parent=5 // pred_check_branch
        %295 = sbr.rel (%p292) target = $region40
      $region39: #{tpu_custom_call.1} parent=5 // pred_region
        %s296 = ssub.s32 %s23, 1
        %s297 = sand.u32 %s36, 1
        %s298 = scalar_lea.sflag [#allocation3], %s297
        %s299 = sand.u32 %s36, 1
        %s300 = smul.addr %s299, 8
        %s301 = scalar_lea.vmem [#allocation2], %s300
        // Predicated region
        $region41: #{tpu_custom_call.1} parent=39 // pred_check
          %p302 = pneg %p49
        $region42: #{tpu_custom_call.1} parent=39 // pred_check_branch
          %304 = sbr.rel (%p302) target = $region44
        $region43: #{tpu_custom_call.1} parent=39 // pred_region
          %305 = dma.done %s298, 128
        $region44: #{tpu_custom_call.1} parent=39 // pred_fallthru
          _
        %s306 = sand.u32 %s28, 1
        %s307 = scalar_lea.sflag [#allocation6], %s306
        %s308 = sand.u32 %s62, 1
        %s309 = smul.addr %s308, 8
        %s310 = scalar_lea.vmem [#allocation5], %s309
        // Predicated region
        $region45: #{tpu_custom_call.1} parent=39 // pred_check
          %p311 = pneg %p75
        $region46: #{tpu_custom_call.1} parent=39 // pred_check_branch
          %313 = sbr.rel (%p311) target = $region48
        $region47: #{tpu_custom_call.1} parent=39 // pred_region
          %314 = dma.done %s307, 128
        $region48: #{tpu_custom_call.1} parent=39 // pred_fallthru
          _
        %s315 = sand.u32 %s28, 1
        %s316 = scalar_lea.sflag [#allocation6], %s315
        %s317 = sand.u32 %s88, 1
        %s318 = smul.addr %s317, 8
        %s319 = scalar_lea.vmem [#allocation7], %s318
        // Predicated region
        $region49: #{tpu_custom_call.1} parent=39 // pred_check
          %p320 = pneg %p101
        $region50: #{tpu_custom_call.1} parent=39 // pred_check_branch
          %322 = sbr.rel (%p320) target = $region52
        $region51: #{tpu_custom_call.1} parent=39 // pred_region
          %323 = dma.done %s316, 128
        $region52: #{tpu_custom_call.1} parent=39 // pred_fallthru
          _
        %s324 = sand.u32 %s28, 1
        %s325 = scalar_lea.sflag [#allocation9], %s324
        %s326 = sand.u32 %s114, 1
        %s327 = smul.addr %s326, 16
        %s328 = scalar_lea.vmem [#allocation8], %s327
        // Predicated region
        $region53: #{tpu_custom_call.1} parent=39 // pred_check
          %p329 = pneg %p127
        $region54: #{tpu_custom_call.1} parent=39 // pred_check_branch
          %331 = sbr.rel (%p329) target = $region56
        $region55: #{tpu_custom_call.1} parent=39 // pred_region
          %332 = dma.done %s325, 256
        $region56: #{tpu_custom_call.1} parent=39 // pred_fallthru
          _
        // Predicated region
        $region57: #{tpu_custom_call.1} parent=39 // pred_check
          %p333 = pneg %p148
        $region58: #{tpu_custom_call.1} parent=39 // pred_check_branch
          %335 = sbr.rel (%p333) target = $region60
        $region59: #{tpu_custom_call.1} parent=39 // pred_region
          %336 = dma.done [#allocation9], 128
        $region60: #{tpu_custom_call.1} parent=39 // pred_fallthru
          _
        %s337 = sand.u32 %s36, 1
        %s338 = scalar_lea.sflag [#allocation3], %s337
        %s339 = sand.u32 %s36, 1
        %s340 = smul.addr %s339, 8
        %s341 = scalar_lea.vmem [#allocation2], %s340
        %p342 = pneg %p49
        %p343 = pneg %p46
        %s344 = sand.u32 %s28, 1
        %s345 = scalar_lea.sflag [#allocation6], %s344
        %s346 = sand.u32 %s62, 1
        %s347 = smul.addr %s346, 8
        %s348 = scalar_lea.vmem [#allocation5], %s347
        %p349 = pneg %p75
        %p350 = pneg %p72
        %s351 = sand.u32 %s28, 1
        %s352 = scalar_lea.sflag [#allocation6], %s351
        %s353 = sand.u32 %s88, 1
        %s354 = smul.addr %s353, 8
        %s355 = scalar_lea.vmem [#allocation7], %s354
        %p356 = pneg %p101
        %p357 = pneg %p98
        %s358 = sand.u32 %s28, 1
        %s359 = scalar_lea.sflag [#allocation9], %s358
        %s360 = sand.u32 %s114, 1
        %s361 = smul.addr %s360, 16
        %s362 = scalar_lea.vmem [#allocation8], %s361
        %p363 = pneg %p127
        %p364 = pneg %p124
        %p365 = pneg %p148
        %p366 = pneg %p145
        %p367 = pneg %p174
        %p368 = pneg %p171
        %s369 = sand.u32 %s161, 1
        %s370 = scalar_lea.sflag [#allocation4], %s369
        %s371 = sand.u32 %s161, 1
        %s372 = smul.addr %s371, 16
        %s373 = scalar_lea.vmem [#allocation11], %s372
        %v375 = vld [vmem:[%s301] sm:$0xf]
        %v376 = vld [vmem:[%s301 + $0x4] sm:$0xf]
        %v377 = vld [vmem:[%s310] sm:$0xf]
        %v378 = vld [vmem:[%s310 + $0x4] sm:$0xf]
        %v379 = vld [vmem:[%s319] sm:$0xf]
        %v380 = vld [vmem:[%s319 + $0x4] sm:$0xf]
        %v381 = vld [vmem:[%s328] sm:$0xff]
        %v382 = vld [vmem:[%s328 + $0x8] sm:$0xff]
        %v383 = vld [vmem:[#allocation10] sm:$0xf]
        %v384 = vld [vmem:[#allocation10 + $0x4] sm:$0xf]
        %v385 = vunpack.c.l.bf16 %v383
        %v386 = vunpack.c.l.bf16 %v384
        %vm387 = vcmp.gt.f32.partialorder %v385, 0.0
        %vm388 = vcmp.gt.f32.partialorder %v386, 0.0
        %v389 = vlaneseq
        %v390 = vand.u32 %v389, 127
        %v391 = vcvt.s32.f32 %v390
        %v392 = vlaneseq
        %v393 = vshrl.u32 %v392, 7
        %v394 = vadd.s32 %v393, 8
        %vm395 = vcmp.eq.s32.totalorder %v393, %v390
        %vm396 = vcmp.eq.s32.totalorder %v394, %v390
        %v397 = vsel %vm395, 1, 0
        %v398 = vsel %vm396, 1, 0
        %v399 = vcvt.s32.f32 %v397
        %v400 = vcvt.s32.f32 %v398
        %v403 = vunpack.c.l.b16 %v375
        %v404 = vunpack.c.l.b16 %v376
        %v405 = vpack.c.b16 %v404, %v403
        %v408 = vunpack.c.l.b16 %v377
        %v409 = vunpack.c.l.b16 %v378
        %v410 = vpack.c.b16 %v409, %v408
        %vm411 = vcmask 261120
        %v413 = vsel %vm411, %v405, 0
        %v416 = vsel %vm411, %v410, 0
        %418 = vmatprep.subr.bf16.mxu0 0
        %419 = vmatpush1.bf16.xpose.msra.mxu0 0
        %420 = vmatprep.subr.bf16.mxu0 0
        %421 = vmatpush1.bf16.xpose.msra.mxu0 0
        %422 = vmatprep.subr.bf16.mxu0 0
        %423 = vmatpush1.bf16.xpose.msra.mxu0 0
        %424 = vmatprep.subr.bf16.mxu0 0
        %425 = vmatpush1.bf16.xpose.msra.mxu0 0
        %426 = vmatprep.subr.bf16.mxu0 0
        %427 = vmatpush1.bf16.xpose.msra.mxu0 0
        %428 = vmatprep.subr.bf16.mxu0 0
        %429 = vmatpush1.bf16.xpose.msra.mxu0 0
        %430 = vmatprep.subr.bf16.mxu0 0
        %431 = vmatpush1.bf16.xpose.msra.mxu0 0
        %432 = vmatprep.subr.bf16.mxu0 0
        %433 = vmatpush1.bf16.xpose.msra.mxu0 %v416
        %434 = vmatprep.subr.bf16.mxu0 0
        %435 = vmatpush2.bf16.xpose.msra.mxu0 0
        %436 = vmatprep.subr.bf16.mxu0 0
        %437 = vmatpush2.bf16.xpose.msra.mxu0 0
        %438 = vmatprep.subr.bf16.mxu0 0
        %439 = vmatpush2.bf16.xpose.msra.mxu0 0
        %440 = vmatprep.subr.bf16.mxu0 0
        %441 = vmatpush2.bf16.xpose.msra.mxu0 0
        %442 = vmatprep.subr.bf16.mxu0 0
        %443 = vmatpush2.bf16.xpose.msra.mxu0 0
        %444 = vmatprep.subr.bf16.mxu0 0
        %445 = vmatpush2.bf16.xpose.msra.mxu0 0
        %446 = vmatprep.subr.bf16.mxu0 0
        %447 = vmatpush2.bf16.xpose.msra.mxu0 0
        %448 = vmatprep.subr.bf16.mxu0 0
        %449 = vmatpush2.bf16.xpose.msra.mxu0 0
        %450 = vmatprep.mubr.bf16.mxu0 0
        %451 = vmatmul.mubr.bf16.gmra.mxu0 %v413
        %v452 = vpop.f32.mrf.mxu0
        %v453 = vadd.f32 0.0, %v452
        %v454 = vpop.f32.mrf.mxu0
        %v455 = vpop.f32.mrf.mxu0
        %v456 = vadd.f32 0.0, %v455
        %v457 = vpop.f32.mrf.mxu0
        %458 = vdwg.mxu0
        %v459 = vsel %vm387, %v453, -inf
        %v460 = vsel %vm388, %v456, -inf
        %vm461 = vcmask 130048
        %v462 = vsel %vm461, %v459, -inf
        %463 = vmax.xlane.f32.xlu0 %v462
        %v464 = vpop.xlane.xlu0 %463
        %v465 = vsel %vm461, %v460, -inf
        %466 = vmax.xlane.f32.xlu0 %v465
        %v467 = vpop.xlane.xlu0 %466
        %v468 = vmul.f32 %v385, %v453
        %v469 = vmul.f32 %v386, %v456
        %v470 = vsel %vm461, %v468, 0.0
        %471 = vadd.xlane.f32.xlu0 %v470
        %v472 = vpop.xlane.xlu0 %471
        %v473 = vsel %vm461, %v469, 0.0
        %474 = vadd.xlane.f32.xlu0 %v473
        %v475 = vpop.xlane.xlu0 %474
        %v476 = vmul.f32 %v472, 0.0625
        %v477 = vmul.f32 %v475, 0.0625
        %v478 = vsub.f32 %v464, %v476
        %v479 = vsub.f32 %v467, %v477
        %v480 = vmul.f32 %v399, %v478
        %v481 = vmul.f32 %v400, %v479
        %v482 = vsel %vm461, %v480, 0.0
        %v483 = vsel %vm461, %v481, 0.0
        %v484 = vadd.f32 %v482, %v483
        %v485 = vrot.slane %v484, 4
        %v486 = vadd.f32 %v484, %v485
        %v487 = vrot.slane %v486, 2
        %v488 = vadd.f32 %v486, %v487
        %v489 = vrot.slane %v488, 1
        %v490 = vadd.f32 %v488, %v489
        %vm491 = vcmp.gt.f32.partialorder 1.0, 0.0
        %v492 = vsel %vm491, %v490, -inf
        %v493 = vsel %vm461, %v492, -inf
        %494 = vmax.xlane.f32.xlu0 %v493
        %v495 = vpop.xlane.xlu0 %494
        %vm496 = vcmp.eq.f32.partialorder %v490, %v495
        %vm497 = vmand %vm491, %vm496
        %v498 = vsel %vm497, %v391, 16.0
        %v499 = vsel %vm461, %v498, inf
        %500 = vmin.xlane.f32.xlu0 %v499
        %v501 = vpop.xlane.xlu0 %500
        %vm502 = vcmp.eq.f32.partialorder %v391, %v501
        %v503 = vsel %vm502, 1, 0
        %v504 = vcvt.s32.f32 %v503
        %v505 = vsub.f32 1.0, %v504
        %vm506 = vcmp.eq.s32.totalorder %v393, 0
        %vm507 = vcmp.eq.s32.totalorder %v394, 0
        %v508 = vsel %vm506, 1, 0
        %v509 = vsel %vm507, 1, 0
        %v510 = vcvt.s32.f32 %v508
        %v511 = vcvt.s32.f32 %v509
        %v512 = vmul.f32 %v504, %v510
        %v513 = vmul.f32 %v504, %v511
        %v514 = vadd.f32 %v512, 0.0
        %v515 = vadd.f32 %v513, 0.0
        %vm516 = vcmp.gt.f32.partialorder %v505, 0.0
        %v517 = vsel %vm516, %v490, -inf
        %v518 = vsel %vm461, %v517, -inf
        %519 = vmax.xlane.f32.xlu0 %v518
        %v520 = vpop.xlane.xlu0 %519
        %vm521 = vcmp.eq.f32.partialorder %v490, %v520
        %vm522 = vmand %vm516, %vm521
        %v523 = vsel %vm522, %v391, 16.0
        %v524 = vsel %vm461, %v523, inf
        %525 = vmin.xlane.f32.xlu0 %v524
        %v526 = vpop.xlane.xlu0 %525
        %vm527 = vcmp.eq.f32.partialorder %v391, %v526
        %v528 = vsel %vm527, 1, 0
        %v529 = vcvt.s32.f32 %v528
        %v530 = vsub.f32 %v505, %v529
        %vm531 = vcmp.eq.s32.totalorder %v393, 1
        %vm532 = vcmp.eq.s32.totalorder %v394, 1
        %v533 = vsel %vm531, 1, 0
        %v534 = vsel %vm532, 1, 0
        %v535 = vcvt.s32.f32 %v533
        %v536 = vcvt.s32.f32 %v534
        %v537 = vmul.f32 %v529, %v535
        %v538 = vmul.f32 %v529, %v536
        %v539 = vadd.f32 %v514, %v537
        %v540 = vadd.f32 %v515, %v538
        %vm541 = vcmp.gt.f32.partialorder %v530, 0.0
        %v542 = vsel %vm541, %v490, -inf
        %v543 = vsel %vm461, %v542, -inf
        %544 = vmax.xlane.f32.xlu0 %v543
        %v545 = vpop.xlane.xlu0 %544
        %vm546 = vcmp.eq.f32.partialorder %v490, %v545
        %vm547 = vmand %vm541, %vm546
        %v548 = vsel %vm547, %v391, 16.0
        %v549 = vsel %vm461, %v548, inf
        %550 = vmin.xlane.f32.xlu0 %v549
        %v551 = vpop.xlane.xlu0 %550
        %vm552 = vcmp.eq.f32.partialorder %v391, %v551
        %v553 = vsel %vm552, 1, 0
        %v554 = vcvt.s32.f32 %v553
        %v555 = vsub.f32 %v530, %v554
        %vm556 = vcmp.eq.s32.totalorder %v393, 2
        %vm557 = vcmp.eq.s32.totalorder %v394, 2
        %v558 = vsel %vm556, 1, 0
        %v559 = vsel %vm557, 1, 0
        %v560 = vcvt.s32.f32 %v558
        %v561 = vcvt.s32.f32 %v559
        %v562 = vmul.f32 %v554, %v560
        %v563 = vmul.f32 %v554, %v561
        %v564 = vadd.f32 %v539, %v562
        %v565 = vadd.f32 %v540, %v563
        %vm566 = vcmp.gt.f32.partialorder %v555, 0.0
        %v567 = vsel %vm566, %v490, -inf
        %v568 = vsel %vm461, %v567, -inf
        %569 = vmax.xlane.f32.xlu0 %v568
        %v570 = vpop.xlane.xlu0 %569
        %vm571 = vcmp.eq.f32.partialorder %v490, %v570
        %vm572 = vmand %vm566, %vm571
        %v573 = vsel %vm572, %v391, 16.0
        %v574 = vsel %vm461, %v573, inf
        %575 = vmin.xlane.f32.xlu0 %v574
        %v576 = vpop.xlane.xlu0 %575
        %vm577 = vcmp.eq.f32.partialorder %v391, %v576
        %v578 = vsel %vm577, 1, 0
        %v579 = vcvt.s32.f32 %v578
        %v580 = vsub.f32 %v555, %v579
        %vm581 = vcmp.eq.s32.totalorder %v393, 3
        %vm582 = vcmp.eq.s32.totalorder %v394, 3
        %v583 = vsel %vm581, 1, 0
        %v584 = vsel %vm582, 1, 0
        %v585 = vcvt.s32.f32 %v583
        %v586 = vcvt.s32.f32 %v584
        %v587 = vmul.f32 %v579, %v585
        %v588 = vmul.f32 %v579, %v586
        %v589 = vadd.f32 %v564, %v587
        %v590 = vadd.f32 %v565, %v588
        %vm591 = vcmp.gt.f32.partialorder %v580, 0.0
        %v592 = vsel %vm591, %v490, -inf
        %v593 = vsel %vm461, %v592, -inf
        %594 = vmax.xlane.f32.xlu0 %v593
        %v595 = vpop.xlane.xlu0 %594
        %vm596 = vcmp.eq.f32.partialorder %v490, %v595
        %vm597 = vmand %vm591, %vm596
        %v598 = vsel %vm597, %v391, 16.0
        %v599 = vsel %vm461, %v598, inf
        %600 = vmin.xlane.f32.xlu0 %v599
        %v601 = vpop.xlane.xlu0 %600
        %vm602 = vcmp.eq.f32.partialorder %v391, %v601
        %v603 = vsel %vm602, 1, 0
        %v604 = vcvt.s32.f32 %v603
        %v605 = vsub.f32 %v580, %v604
        %vm606 = vcmp.eq.s32.totalorder %v393, 4
        %vm607 = vcmp.eq.s32.totalorder %v394, 4
        %v608 = vsel %vm606, 1, 0
        %v609 = vsel %vm607, 1, 0
        %v610 = vcvt.s32.f32 %v608
        %v611 = vcvt.s32.f32 %v609
        %v612 = vmul.f32 %v604, %v610
        %v613 = vmul.f32 %v604, %v611
        %v614 = vadd.f32 %v589, %v612
        %v615 = vadd.f32 %v590, %v613
        %vm616 = vcmp.gt.f32.partialorder %v605, 0.0
        %v617 = vsel %vm616, %v490, -inf
        %v618 = vsel %vm461, %v617, -inf
        %619 = vmax.xlane.f32.xlu0 %v618
        %v620 = vpop.xlane.xlu0 %619
        %vm621 = vcmp.eq.f32.partialorder %v490, %v620
        %vm622 = vmand %vm616, %vm621
        %v623 = vsel %vm622, %v391, 16.0
        %v624 = vsel %vm461, %v623, inf
        %625 = vmin.xlane.f32.xlu0 %v624
        %v626 = vpop.xlane.xlu0 %625
        %vm627 = vcmp.eq.f32.partialorder %v391, %v626
        %v628 = vsel %vm627, 1, 0
        %v629 = vcvt.s32.f32 %v628
        %v630 = vsub.f32 %v605, %v629
        %vm631 = vcmp.eq.s32.totalorder %v393, 5
        %vm632 = vcmp.eq.s32.totalorder %v394, 5
        %v633 = vsel %vm631, 1, 0
        %v634 = vsel %vm632, 1, 0
        %v635 = vcvt.s32.f32 %v633
        %v636 = vcvt.s32.f32 %v634
        %v637 = vmul.f32 %v629, %v635
        %v638 = vmul.f32 %v629, %v636
        %v639 = vadd.f32 %v614, %v637
        %v640 = vadd.f32 %v615, %v638
        %vm641 = vcmp.gt.f32.partialorder %v630, 0.0
        %v642 = vsel %vm641, %v490, -inf
        %v643 = vsel %vm461, %v642, -inf
        %644 = vmax.xlane.f32.xlu0 %v643
        %v645 = vpop.xlane.xlu0 %644
        %vm646 = vcmp.eq.f32.partialorder %v490, %v645
        %vm647 = vmand %vm641, %vm646
        %v648 = vsel %vm647, %v391, 16.0
        %v649 = vsel %vm461, %v648, inf
        %650 = vmin.xlane.f32.xlu0 %v649
        %v651 = vpop.xlane.xlu0 %650
        %vm652 = vcmp.eq.f32.partialorder %v391, %v651
        %v653 = vsel %vm652, 1, 0
        %v654 = vcvt.s32.f32 %v653
        %v655 = vsub.f32 %v630, %v654
        %vm656 = vcmp.eq.s32.totalorder %v393, 6
        %vm657 = vcmp.eq.s32.totalorder %v394, 6
        %v658 = vsel %vm656, 1, 0
        %v659 = vsel %vm657, 1, 0
        %v660 = vcvt.s32.f32 %v658
        %v661 = vcvt.s32.f32 %v659
        %v662 = vmul.f32 %v654, %v660
        %v663 = vmul.f32 %v654, %v661
        %v664 = vadd.f32 %v639, %v662
        %v665 = vadd.f32 %v640, %v663
        %vm666 = vcmp.gt.f32.partialorder %v655, 0.0
        %v667 = vsel %vm666, %v490, -inf
        %v668 = vsel %vm461, %v667, -inf
        %669 = vmax.xlane.f32.xlu0 %v668
        %v670 = vpop.xlane.xlu0 %669
        %vm671 = vcmp.eq.f32.partialorder %v490, %v670
        %vm672 = vmand %vm666, %vm671
        %v673 = vsel %vm672, %v391, 16.0
        %v674 = vsel %vm461, %v673, inf
        %675 = vmin.xlane.f32.xlu0 %v674
        %v676 = vpop.xlane.xlu0 %675
        %vm677 = vcmp.eq.f32.partialorder %v391, %v676
        %v678 = vsel %vm677, 1, 0
        %v679 = vcvt.s32.f32 %v678
        %v680 = vsub.f32 %v655, %v679
        %vm681 = vcmp.eq.s32.totalorder %v393, 7
        %vm682 = vcmp.eq.s32.totalorder %v394, 7
        %v683 = vsel %vm681, 1, 0
        %v684 = vsel %vm682, 1, 0
        %v685 = vcvt.s32.f32 %v683
        %v686 = vcvt.s32.f32 %v684
        %v687 = vmul.f32 %v679, %v685
        %v688 = vmul.f32 %v679, %v686
        %v689 = vadd.f32 %v664, %v687
        %v690 = vadd.f32 %v665, %v688
        %vm691 = vcmp.gt.f32.partialorder %v680, 0.0
        %v692 = vsel %vm691, %v490, -inf
        %v693 = vsel %vm461, %v692, -inf
        %694 = vmax.xlane.f32.xlu0 %v693
        %v695 = vpop.xlane.xlu0 %694
        %vm696 = vcmp.eq.f32.partialorder %v490, %v695
        %vm697 = vmand %vm691, %vm696
        %v698 = vsel %vm697, %v391, 16.0
        %v699 = vsel %vm461, %v698, inf
        %700 = vmin.xlane.f32.xlu0 %v699
        %v701 = vpop.xlane.xlu0 %700
        %vm702 = vcmp.eq.f32.partialorder %v391, %v701
        %v703 = vsel %vm702, 1, 0
        %v704 = vcvt.s32.f32 %v703
        %v705 = vsub.f32 %v680, %v704
        %vm706 = vcmp.eq.s32.totalorder %v393, 8
        %vm707 = vcmp.eq.s32.totalorder %v394, 8
        %v708 = vsel %vm706, 1, 0
        %v709 = vsel %vm707, 1, 0
        %v710 = vcvt.s32.f32 %v708
        %v711 = vcvt.s32.f32 %v709
        %v712 = vmul.f32 %v704, %v710
        %v713 = vmul.f32 %v704, %v711
        %v714 = vadd.f32 %v689, %v712
        %v715 = vadd.f32 %v690, %v713
        %vm716 = vcmp.gt.f32.partialorder %v705, 0.0
        %v717 = vsel %vm716, %v490, -inf
        %v718 = vsel %vm461, %v717, -inf
        %719 = vmax.xlane.f32.xlu0 %v718
        %v720 = vpop.xlane.xlu0 %719
        %vm721 = vcmp.eq.f32.partialorder %v490, %v720
        %vm722 = vmand %vm716, %vm721
        %v723 = vsel %vm722, %v391, 16.0
        %v724 = vsel %vm461, %v723, inf
        %725 = vmin.xlane.f32.xlu0 %v724
        %v726 = vpop.xlane.xlu0 %725
        %vm727 = vcmp.eq.f32.partialorder %v391, %v726
        %v728 = vsel %vm727, 1, 0
        %v729 = vcvt.s32.f32 %v728
        %v730 = vsub.f32 %v705, %v729
        %vm731 = vcmp.eq.s32.totalorder %v393, 9
        %vm732 = vcmp.eq.s32.totalorder %v394, 9
        %v733 = vsel %vm731, 1, 0
        %v734 = vsel %vm732, 1, 0
        %v735 = vcvt.s32.f32 %v733
        %v736 = vcvt.s32.f32 %v734
        %v737 = vmul.f32 %v729, %v735
        %v738 = vmul.f32 %v729, %v736
        %v739 = vadd.f32 %v714, %v737
        %v740 = vadd.f32 %v715, %v738
        %vm741 = vcmp.gt.f32.partialorder %v730, 0.0
        %v742 = vsel %vm741, %v490, -inf
        %v743 = vsel %vm461, %v742, -inf
        %744 = vmax.xlane.f32.xlu0 %v743
        %v745 = vpop.xlane.xlu0 %744
        %vm746 = vcmp.eq.f32.partialorder %v490, %v745
        %vm747 = vmand %vm741, %vm746
        %v748 = vsel %vm747, %v391, 16.0
        %v749 = vsel %vm461, %v748, inf
        %750 = vmin.xlane.f32.xlu0 %v749
        %v751 = vpop.xlane.xlu0 %750
        %vm752 = vcmp.eq.f32.partialorder %v391, %v751
        %v753 = vsel %vm752, 1, 0
        %v754 = vcvt.s32.f32 %v753
        %v755 = vsub.f32 %v730, %v754
        %vm756 = vcmp.eq.s32.totalorder %v393, 10
        %vm757 = vcmp.eq.s32.totalorder %v394, 10
        %v758 = vsel %vm756, 1, 0
        %v759 = vsel %vm757, 1, 0
        %v760 = vcvt.s32.f32 %v758
        %v761 = vcvt.s32.f32 %v759
        %v762 = vmul.f32 %v754, %v760
        %v763 = vmul.f32 %v754, %v761
        %v764 = vadd.f32 %v739, %v762
        %v765 = vadd.f32 %v740, %v763
        %vm766 = vcmp.gt.f32.partialorder %v755, 0.0
        %v767 = vsel %vm766, %v490, -inf
        %v768 = vsel %vm461, %v767, -inf
        %769 = vmax.xlane.f32.xlu0 %v768
        %v770 = vpop.xlane.xlu0 %769
        %vm771 = vcmp.eq.f32.partialorder %v490, %v770
        %vm772 = vmand %vm766, %vm771
        %v773 = vsel %vm772, %v391, 16.0
        %v774 = vsel %vm461, %v773, inf
        %775 = vmin.xlane.f32.xlu0 %v774
        %v776 = vpop.xlane.xlu0 %775
        %vm777 = vcmp.eq.f32.partialorder %v391, %v776
        %v778 = vsel %vm777, 1, 0
        %v779 = vcvt.s32.f32 %v778
        %v780 = vsub.f32 %v755, %v779
        %vm781 = vcmp.eq.s32.totalorder %v393, 11
        %vm782 = vcmp.eq.s32.totalorder %v394, 11
        %v783 = vsel %vm781, 1, 0
        %v784 = vsel %vm782, 1, 0
        %v785 = vcvt.s32.f32 %v783
        %v786 = vcvt.s32.f32 %v784
        %v787 = vmul.f32 %v779, %v785
        %v788 = vmul.f32 %v779, %v786
        %v789 = vadd.f32 %v764, %v787
        %v790 = vadd.f32 %v765, %v788
        %vm791 = vcmp.gt.f32.partialorder %v780, 0.0
        %v792 = vsel %vm791, %v490, -inf
        %v793 = vsel %vm461, %v792, -inf
        %794 = vmax.xlane.f32.xlu0 %v793
        %v795 = vpop.xlane.xlu0 %794
        %vm796 = vcmp.eq.f32.partialorder %v490, %v795
        %vm797 = vmand %vm791, %vm796
        %v798 = vsel %vm797, %v391, 16.0
        %v799 = vsel %vm461, %v798, inf
        %800 = vmin.xlane.f32.xlu0 %v799
        %v801 = vpop.xlane.xlu0 %800
        %vm802 = vcmp.eq.f32.partialorder %v391, %v801
        %v803 = vsel %vm802, 1, 0
        %v804 = vcvt.s32.f32 %v803
        %v805 = vsub.f32 %v780, %v804
        %vm806 = vcmp.eq.s32.totalorder %v393, 12
        %vm807 = vcmp.eq.s32.totalorder %v394, 12
        %v808 = vsel %vm806, 1, 0
        %v809 = vsel %vm807, 1, 0
        %v810 = vcvt.s32.f32 %v808
        %v811 = vcvt.s32.f32 %v809
        %v812 = vmul.f32 %v804, %v810
        %v813 = vmul.f32 %v804, %v811
        %v814 = vadd.f32 %v789, %v812
        %v815 = vadd.f32 %v790, %v813
        %vm816 = vcmp.gt.f32.partialorder %v805, 0.0
        %v817 = vsel %vm816, %v490, -inf
        %v818 = vsel %vm461, %v817, -inf
        %819 = vmax.xlane.f32.xlu0 %v818
        %v820 = vpop.xlane.xlu0 %819
        %vm821 = vcmp.eq.f32.partialorder %v490, %v820
        %vm822 = vmand %vm816, %vm821
        %v823 = vsel %vm822, %v391, 16.0
        %v824 = vsel %vm461, %v823, inf
        %825 = vmin.xlane.f32.xlu0 %v824
        %v826 = vpop.xlane.xlu0 %825
        %vm827 = vcmp.eq.f32.partialorder %v391, %v826
        %v828 = vsel %vm827, 1, 0
        %v829 = vcvt.s32.f32 %v828
        %v830 = vsub.f32 %v805, %v829
        %vm831 = vcmp.eq.s32.totalorder %v393, 13
        %vm832 = vcmp.eq.s32.totalorder %v394, 13
        %v833 = vsel %vm831, 1, 0
        %v834 = vsel %vm832, 1, 0
        %v835 = vcvt.s32.f32 %v833
        %v836 = vcvt.s32.f32 %v834
        %v837 = vmul.f32 %v829, %v835
        %v838 = vmul.f32 %v829, %v836
        %v839 = vadd.f32 %v814, %v837
        %v840 = vadd.f32 %v815, %v838
        %vm841 = vcmp.gt.f32.partialorder %v830, 0.0
        %v842 = vsel %vm841, %v490, -inf
        %v843 = vsel %vm461, %v842, -inf
        %844 = vmax.xlane.f32.xlu0 %v843
        %v845 = vpop.xlane.xlu0 %844
        %vm846 = vcmp.eq.f32.partialorder %v490, %v845
        %vm847 = vmand %vm841, %vm846
        %v848 = vsel %vm847, %v391, 16.0
        %v849 = vsel %vm461, %v848, inf
        %850 = vmin.xlane.f32.xlu0 %v849
        %v851 = vpop.xlane.xlu0 %850
        %vm852 = vcmp.eq.f32.partialorder %v391, %v851
        %v853 = vsel %vm852, 1, 0
        %v854 = vcvt.s32.f32 %v853
        %vm855 = vcmp.eq.s32.totalorder %v393, 14
        %vm856 = vcmp.eq.s32.totalorder %v394, 14
        %v857 = vsel %vm855, 1, 0
        %v858 = vsel %vm856, 1, 0
        %v859 = vcvt.s32.f32 %v857
        %v860 = vcvt.s32.f32 %v858
        %v861 = vmul.f32 %v854, %v859
        %v862 = vmul.f32 %v854, %v860
        %v863 = vadd.f32 %v839, %v861
        %v864 = vadd.f32 %v840, %v862
        %v866 = vsel %vm461, %v863, 0
        %v869 = vsel %vm461, %v864, 0
        %871 = vmatprep.subr.mxu0 0.0
        %872 = vmatpush1.msra.mxu0 0.0
        %873 = vmatprep.subr.mxu0 0.0
        %874 = vmatpush1.msra.mxu0 0.0
        %875 = vmatprep.subr.mxu0 0.0
        %876 = vmatpush1.msra.mxu0 0.0
        %877 = vmatprep.subr.mxu0 0.0
        %878 = vmatpush1.msra.mxu0 0.0
        %879 = vmatprep.subr.mxu0 0.0
        %880 = vmatpush1.msra.mxu0 0.0
        %881 = vmatprep.subr.mxu0 0.0
        %882 = vmatpush1.msra.mxu0 0.0
        %883 = vmatprep.subr.mxu0 0.0
        %884 = vmatpush1.msra.mxu0 0.0
        %885 = vmatprep.subr.mxu0 0.0
        %886 = vmatpush1.msra.mxu0 0.0
        %887 = vmatprep.subr.mxu0 0.0
        %888 = vmatpush1.msra.mxu0 0.0
        %889 = vmatprep.subr.mxu0 0.0
        %890 = vmatpush1.msra.mxu0 0.0
        %891 = vmatprep.subr.mxu0 0.0
        %892 = vmatpush1.msra.mxu0 0.0
        %893 = vmatprep.subr.mxu0 0.0
        %894 = vmatpush1.msra.mxu0 0.0
        %895 = vmatprep.subr.mxu0 0.0
        %896 = vmatpush1.msra.mxu0 0.0
        %897 = vmatprep.subr.mxu0 0.0
        %898 = vmatpush1.msra.mxu0 0.0
        %899 = vmatprep.subr.mxu0 0.0
        %900 = vmatpush1.msra.mxu0 %v456
        %901 = vmatprep.subr.mxu0 0.0
        %902 = vmatpush1.msra.mxu0 %v453
        %903 = vmatprep.subr.mxu0 0.0
        %904 = vmatpush2.msra.mxu0 0.0
        %905 = vmatprep.subr.mxu0 0.0
        %906 = vmatpush2.msra.mxu0 0.0
        %907 = vmatprep.subr.mxu0 0.0
        %908 = vmatpush2.msra.mxu0 0.0
        %909 = vmatprep.subr.mxu0 0.0
        %910 = vmatpush2.msra.mxu0 0.0
        %911 = vmatprep.subr.mxu0 0.0
        %912 = vmatpush2.msra.mxu0 0.0
        %913 = vmatprep.subr.mxu0 0.0
        %914 = vmatpush2.msra.mxu0 0.0
        %915 = vmatprep.subr.mxu0 0.0
        %916 = vmatpush2.msra.mxu0 0.0
        %917 = vmatprep.subr.mxu0 0.0
        %918 = vmatpush2.msra.mxu0 0.0
        %919 = vmatprep.subr.mxu0 0.0
        %920 = vmatpush2.msra.mxu0 0.0
        %921 = vmatprep.subr.mxu0 0.0
        %922 = vmatpush2.msra.mxu0 0.0
        %923 = vmatprep.subr.mxu0 0.0
        %924 = vmatpush2.msra.mxu0 0.0
        %925 = vmatprep.subr.mxu0 0.0
        %926 = vmatpush2.msra.mxu0 0.0
        %927 = vmatprep.subr.mxu0 0.0
        %928 = vmatpush2.msra.mxu0 0.0
        %929 = vmatprep.subr.mxu0 0.0
        %930 = vmatpush2.msra.mxu0 0.0
        %931 = vmatprep.subr.mxu0 0.0
        %932 = vmatpush2.msra.mxu0 0.0
        %933 = vmatprep.subr.mxu0 0.0
        %934 = vmatpush2.msra.mxu0 0.0
        %935 = vmatprep.mubr.f32.mxu0 0.0
        %936 = vmatmul.mubr.f32.gmra.mxu0 %v866
        %v937 = vpop.f32.mrf.mxu0
        %v938 = vadd.f32 0.0, %v937
        %v939 = vpop.f32.mrf.mxu0
        %940 = vmatprep.mubr.f32.mxu0 0.0
        %941 = vmatmul.mubr.f32.gmra.mxu0 %v869
        %v942 = vpop.f32.mrf.mxu0
        %v943 = vadd.f32 0.0, %v942
        %v944 = vpop.f32.mrf.mxu0
        %945 = vdwg.mxu0
        %v946 = vmul.f32 %v863, %v391
        %v947 = vmul.f32 %v864, %v391
        %v948 = vsel %vm461, %v946, 0.0
        %949 = vadd.xlane.f32.xlu0 %v948
        %v950 = vpop.xlane.xlu0 %949
        %vm951 = vcmask 129024
        %v952 = vsel %vm951, %v947, 0.0
        %953 = vadd.xlane.f32.xlu0 %v952
        %v954 = vpop.xlane.xlu0 %953
        %vm955 = vcmp.gt.f32.partialorder %v391, %v950
        %vm956 = vcmp.gt.f32.partialorder %v391, %v954
        %v957 = vmul.f32 %v938, 0.17677669
        %v958 = vmul.f32 %v943, 0.17677669
        %v959 = vsel %vm955, -inf, %v957
        %v960 = vsel %vm956, -inf, %v958
        %v961 = vsel %vm461, %v959, -inf
        %962 = vmax.xlane.f32.xlu0 %v961
        %v963 = vpop.xlane.xlu0 %962
        %v964 = vsel %vm951, %v960, -inf
        %965 = vmax.xlane.f32.xlu0 %v964
        %v966 = vpop.xlane.xlu0 %965
        %v967 = vsub.f32 %v959, %v963
        %v968 = vsub.f32 %v960, %v966
        %v969 = vmul.f32 %v967, 1.442695
        %v970 = vpow.pop %v969
        %v971 = vmul.f32 %v968, 1.442695
        %v972 = vpow.pop %v971
        %v973 = vsel %vm461, %v970, 0.0
        %974 = vadd.xlane.f32.xlu0 %v973
        %v975 = vpop.xlane.xlu0 %974
        %v976 = vsel %vm951, %v972, 0.0
        %977 = vadd.xlane.f32.xlu0 %v976
        %v978 = vpop.xlane.xlu0 %977
        %v979 = vrcp.pop %v975
        %v980 = vrcp.pop %v978
        %v981 = vmul.f32 %v970, %v979
        %v982 = vmul.f32 %v972, %v980
        %v983 = vpack.c.bf16 %v982, %v981
        %v986 = vunpack.c.l.b16 %v379
        %v987 = vunpack.c.l.b16 %v380
        %v988 = vpack.c.b16 %v987, %v986
        %v991 = vsel %vm461, %v983, 0
        %993 = vmatprep.subr.bf16.mxu0 0
        %994 = vmatpush1.bf16.msra.mxu0 0
        %995 = vmatprep.subr.bf16.mxu0 0
        %996 = vmatpush1.bf16.msra.mxu0 0
        %997 = vmatprep.subr.bf16.mxu0 0
        %998 = vmatpush1.bf16.msra.mxu0 0
        %999 = vmatprep.subr.bf16.mxu0 0
        %1000 = vmatpush1.bf16.msra.mxu0 0
        %1001 = vmatprep.subr.bf16.mxu0 0
        %1002 = vmatpush1.bf16.msra.mxu0 0
        %1003 = vmatprep.subr.bf16.mxu0 0
        %1004 = vmatpush1.bf16.msra.mxu0 0
        %1005 = vmatprep.subr.bf16.mxu0 0
        %1006 = vmatpush1.bf16.msra.mxu0 0
        %1007 = vmatprep.subr.bf16.mxu0 0
        %1008 = vmatpush1.bf16.msra.mxu0 %v988
        %1009 = vmatprep.subr.bf16.mxu0 0
        %1010 = vmatpush2.bf16.msra.mxu0 0
        %1011 = vmatprep.subr.bf16.mxu0 0
        %1012 = vmatpush2.bf16.msra.mxu0 0
        %1013 = vmatprep.subr.bf16.mxu0 0
        %1014 = vmatpush2.bf16.msra.mxu0 0
        %1015 = vmatprep.subr.bf16.mxu0 0
        %1016 = vmatpush2.bf16.msra.mxu0 0
        %1017 = vmatprep.subr.bf16.mxu0 0
        %1018 = vmatpush2.bf16.msra.mxu0 0
        %1019 = vmatprep.subr.bf16.mxu0 0
        %1020 = vmatpush2.bf16.msra.mxu0 0
        %1021 = vmatprep.subr.bf16.mxu0 0
        %1022 = vmatpush2.bf16.msra.mxu0 0
        %1023 = vmatprep.subr.bf16.mxu0 0
        %1024 = vmatpush2.bf16.msra.mxu0 0
        %1025 = vmatprep.mubr.bf16.mxu0 0
        %1026 = vmatmul.mubr.bf16.gmra.mxu0 %v991
        %v1027 = vpop.f32.mrf.mxu0
        %v1028 = vadd.f32 0.0, %v1027
        %v1029 = vpop.f32.mrf.mxu0
        %v1030 = vpop.f32.mrf.mxu0
        %v1031 = vadd.f32 0.0, %v1030
        %v1032 = vpop.f32.mrf.mxu0
        %1033 = vdwg.mxu0
        %v1034 = vsel %vm411, %v1028, 1.0
        %v1035 = vsel %vm411, %v1031, 1.0
        %1036 = vxpose.xlu0.b32.start [1/16] %v863, 128
        %1037 = vxpose.xlu0.b32.cont [2/16] %v864, 128
        %1038 = vxpose.xlu0.b32.cont [3/16] 0.0, 128
        %1039 = vxpose.xlu0.b32.cont [4/16] 0.0, 128
        %1040 = vxpose.xlu0.b32.cont [5/16] 0.0, 128
        %1041 = vxpose.xlu0.b32.cont [6/16] 0.0, 128
        %1042 = vxpose.xlu0.b32.cont [7/16] 0.0, 128
        %1043 = vxpose.xlu0.b32.cont [8/16] 0.0, 128
        %1044 = vxpose.xlu0.b32.cont [9/16] 0.0, 128
        %1045 = vxpose.xlu0.b32.cont [10/16] 0.0, 128
        %1046 = vxpose.xlu0.b32.cont [11/16] 0.0, 128
        %1047 = vxpose.xlu0.b32.cont [12/16] 0.0, 128
        %1048 = vxpose.xlu0.b32.cont [13/16] 0.0, 128
        %1049 = vxpose.xlu0.b32.cont [14/16] 0.0, 128
        %1050 = vxpose.xlu0.b32.cont [15/16] 0.0, 128
        %1051 = vxpose.xlu0.b32.end [16/16] 0.0, 128
        %v1052 = vpop.trf.xlu0
        %v1053 = vpop.trf.xlu0
        %v1054 = vpop.trf.xlu0
        %v1055 = vpop.trf.xlu0
        %v1056 = vpop.trf.xlu0
        %v1057 = vpop.trf.xlu0
        %v1058 = vpop.trf.xlu0
        %v1059 = vpop.trf.xlu0
        %v1060 = vpop.trf.xlu0
        %v1061 = vpop.trf.xlu0
        %v1062 = vpop.trf.xlu0
        %v1063 = vpop.trf.xlu0
        %v1064 = vpop.trf.xlu0
        %v1065 = vpop.trf.xlu0
        %v1066 = vpop.trf.xlu0
        %v1067 = vpop.trf.xlu0
        %vm1068 = vcmask 121856
        %v1070 = vsel %vm1068, %v1052, 0
        %v1073 = vsel %vm1068, %v1053, 0
        %vm1075 = vcmask 1046528
        %v1077 = vsel %vm1075, %v1035, 0
        %1079 = vmatprep.subr.mxu0 0.0
        %1080 = vmatpush1.msra.mxu0 0.0
        %1081 = vmatprep.subr.mxu0 0.0
        %1082 = vmatpush1.msra.mxu0 0.0
        %1083 = vmatprep.subr.mxu0 0.0
        %1084 = vmatpush1.msra.mxu0 0.0
        %1085 = vmatprep.subr.mxu0 0.0
        %1086 = vmatpush1.msra.mxu0 0.0
        %1087 = vmatprep.subr.mxu0 0.0
        %1088 = vmatpush1.msra.mxu0 0.0
        %1089 = vmatprep.subr.mxu0 0.0
        %1090 = vmatpush1.msra.mxu0 0.0
        %1091 = vmatprep.subr.mxu0 0.0
        %1092 = vmatpush1.msra.mxu0 0.0
        %1093 = vmatprep.subr.mxu0 0.0
        %1094 = vmatpush1.msra.mxu0 0.0
        %1095 = vmatprep.subr.mxu0 0.0
        %1096 = vmatpush1.msra.mxu0 0.0
        %1097 = vmatprep.subr.mxu0 0.0
        %1098 = vmatpush1.msra.mxu0 0.0
        %1099 = vmatprep.subr.mxu0 0.0
        %1100 = vmatpush1.msra.mxu0 0.0
        %1101 = vmatprep.subr.mxu0 0.0
        %1102 = vmatpush1.msra.mxu0 0.0
        %1103 = vmatprep.subr.mxu0 0.0
        %1104 = vmatpush1.msra.mxu0 0.0
        %1105 = vmatprep.subr.mxu0 0.0
        %1106 = vmatpush1.msra.mxu0 0.0
        %1107 = vmatprep.subr.mxu0 0.0
        %1108 = vmatpush1.msra.mxu0 %v1077
        %1109 = vmatprep.subr.mxu0 0.0
        %1110 = vmatpush1.msra.mxu0 %v1034
        %1111 = vmatprep.subr.mxu0 0.0
        %1112 = vmatpush2.msra.mxu0 0.0
        %1113 = vmatprep.subr.mxu0 0.0
        %1114 = vmatpush2.msra.mxu0 0.0
        %1115 = vmatprep.subr.mxu0 0.0
        %1116 = vmatpush2.msra.mxu0 0.0
        %1117 = vmatprep.subr.mxu0 0.0
        %1118 = vmatpush2.msra.mxu0 0.0
        %1119 = vmatprep.subr.mxu0 0.0
        %1120 = vmatpush2.msra.mxu0 0.0
        %1121 = vmatprep.subr.mxu0 0.0
        %1122 = vmatpush2.msra.mxu0 0.0
        %1123 = vmatprep.subr.mxu0 0.0
        %1124 = vmatpush2.msra.mxu0 0.0
        %1125 = vmatprep.subr.mxu0 0.0
        %1126 = vmatpush2.msra.mxu0 0.0
        %1127 = vmatprep.subr.mxu0 0.0
        %1128 = vmatpush2.msra.mxu0 0.0
        %1129 = vmatprep.subr.mxu0 0.0
        %1130 = vmatpush2.msra.mxu0 0.0
        %1131 = vmatprep.subr.mxu0 0.0
        %1132 = vmatpush2.msra.mxu0 0.0
        %1133 = vmatprep.subr.mxu0 0.0
        %1134 = vmatpush2.msra.mxu0 0.0
        %1135 = vmatprep.subr.mxu0 0.0
        %1136 = vmatpush2.msra.mxu0 0.0
        %1137 = vmatprep.subr.mxu0 0.0
        %1138 = vmatpush2.msra.mxu0 0.0
        %1139 = vmatprep.subr.mxu0 0.0
        %1140 = vmatpush2.msra.mxu0 0.0
        %1141 = vmatprep.subr.mxu0 0.0
        %1142 = vmatpush2.msra.mxu0 0.0
        %1143 = vmatprep.mubr.f32.mxu0 0.0
        %1144 = vmatmul.mubr.f32.gmra.mxu0 %v1070
        %v1145 = vpop.f32.mrf.mxu0
        %v1146 = vadd.f32 0.0, %v1145
        %v1147 = vpop.f32.mrf.mxu0
        %1148 = vmatprep.mubr.f32.mxu0 0.0
        %1149 = vmatmul.mubr.f32.gmra.mxu0 %v1073
        %v1150 = vpop.f32.mrf.mxu0
        %v1151 = vadd.f32 0.0, %v1150
        %v1152 = vpop.f32.mrf.mxu0
        %1153 = vdwg.mxu0
        %vm1154 = vcmp.gt.f32.partialorder %v1146, 0.5
        %vm1155 = vcmp.gt.f32.partialorder %v1151, 0.5
        %v1156 = vsel %vm1154, 1, 0
        %v1157 = vsel %vm1155, 1, 0
        %1158 = vset.pattern.permute.xlu0 32
        %1159 = vperm.xlu0 %1158, %v1156
        %v1160 = vpop.permute.xlu0 %1159
        %1161 = vset.pattern.permute.xlu0 32
        %1162 = vperm.xlu0 %1161, %v1157
        %v1163 = vpop.permute.xlu0 %1162
        %vm1164 = vcmp.eq.s32.totalorder %v1160, 1
        %vm1165 = vcmp.eq.s32.totalorder %v1163, 1
        %v1166 = vsel %vm1164, %v1146, %v381
        %v1167 = vsel %vm1165, %v1151, %v382
        %1168 = vst.msk [vmem:[%s373] sm:$0xff] %vm411, %v1166
        %1169 = vst.msk [vmem:[%s373 + $0x8] sm:$0xff] %vm411, %v1167
        %1170 = vrot.lane.b32.xlu0 %v405, 96
        %v1171 = vpop.permute.xlu0 %1170
        %1172 = vrot.lane.b32.xlu0 %v410, 96
        %v1173 = vpop.permute.xlu0 %1172
        %v1175 = vsel %vm411, %v1171, 0
        %v1178 = vsel %vm411, %v1173, 0
        %1180 = vmatprep.subr.bf16.mxu0 0
        %1181 = vmatpush1.bf16.xpose.msra.mxu0 0
        %1182 = vmatprep.subr.bf16.mxu0 0
        %1183 = vmatpush1.bf16.xpose.msra.mxu0 0
        %1184 = vmatprep.subr.bf16.mxu0 0
        %1185 = vmatpush1.bf16.xpose.msra.mxu0 0
        %1186 = vmatprep.subr.bf16.mxu0 0
        %1187 = vmatpush1.bf16.xpose.msra.mxu0 0
        %1188 = vmatprep.subr.bf16.mxu0 0
        %1189 = vmatpush1.bf16.xpose.msra.mxu0 0
        %1190 = vmatprep.subr.bf16.mxu0 0
        %1191 = vmatpush1.bf16.xpose.msra.mxu0 0
        %1192 = vmatprep.subr.bf16.mxu0 0
        %1193 = vmatpush1.bf16.xpose.msra.mxu0 0
        %1194 = vmatprep.subr.bf16.mxu0 0
        %1195 = vmatpush1.bf16.xpose.msra.mxu0 %v1178
        %1196 = vmatprep.subr.bf16.mxu0 0
        %1197 = vmatpush2.bf16.xpose.msra.mxu0 0
        %1198 = vmatprep.subr.bf16.mxu0 0
        %1199 = vmatpush2.bf16.xpose.msra.mxu0 0
        %1200 = vmatprep.subr.bf16.mxu0 0
        %1201 = vmatpush2.bf16.xpose.msra.mxu0 0
        %1202 = vmatprep.subr.bf16.mxu0 0
        %1203 = vmatpush2.bf16.xpose.msra.mxu0 0
        %1204 = vmatprep.subr.bf16.mxu0 0
        %1205 = vmatpush2.bf16.xpose.msra.mxu0 0
        %1206 = vmatprep.subr.bf16.mxu0 0
        %1207 = vmatpush2.bf16.xpose.msra.mxu0 0
        %1208 = vmatprep.subr.bf16.mxu0 0
        %1209 = vmatpush2.bf16.xpose.msra.mxu0 0
        %1210 = vmatprep.subr.bf16.mxu0 0
        %1211 = vmatpush2.bf16.xpose.msra.mxu0 0
        %1212 = vmatprep.mubr.bf16.mxu0 0
        %1213 = vmatmul.mubr.bf16.gmra.mxu0 %v1175
        %v1214 = vpop.f32.mrf.mxu0
        %v1215 = vadd.f32 0.0, %v1214
        %v1216 = vpop.f32.mrf.mxu0
        %v1217 = vpop.f32.mrf.mxu0
        %v1218 = vadd.f32 0.0, %v1217
        %v1219 = vpop.f32.mrf.mxu0
        %1220 = vdwg.mxu0
        %v1221 = vsel %vm387, %v1215, -inf
        %v1222 = vsel %vm388, %v1218, -inf
        %v1223 = vsel %vm461, %v1221, -inf
        %1224 = vmax.xlane.f32.xlu0 %v1223
        %v1225 = vpop.xlane.xlu0 %1224
        %v1226 = vsel %vm461, %v1222, -inf
        %1227 = vmax.xlane.f32.xlu0 %v1226
        %v1228 = vpop.xlane.xlu0 %1227
        %v1229 = vmul.f32 %v385, %v1215
        %v1230 = vmul.f32 %v386, %v1218
        %v1231 = vsel %vm461, %v1229, 0.0
        %1232 = vadd.xlane.f32.xlu0 %v1231
        %v1233 = vpop.xlane.xlu0 %1232
        %v1234 = vsel %vm461, %v1230, 0.0
        %1235 = vadd.xlane.f32.xlu0 %v1234
        %v1236 = vpop.xlane.xlu0 %1235
        %v1237 = vmul.f32 %v1233, 0.0625
        %v1238 = vmul.f32 %v1236, 0.0625
        %v1239 = vsub.f32 %v1225, %v1237
        %v1240 = vsub.f32 %v1228, %v1238
        %v1241 = vmul.f32 %v399, %v1239
        %v1242 = vmul.f32 %v400, %v1240
        %v1243 = vsel %vm461, %v1241, 0.0
        %v1244 = vsel %vm461, %v1242, 0.0
        %v1245 = vadd.f32 %v1243, %v1244
        %v1246 = vrot.slane %v1245, 4
        %v1247 = vadd.f32 %v1245, %v1246
        %v1248 = vrot.slane %v1247, 2
        %v1249 = vadd.f32 %v1247, %v1248
        %v1250 = vrot.slane %v1249, 1
        %v1251 = vadd.f32 %v1249, %v1250
        %v1252 = vsel %vm491, %v1251, -inf
        %v1253 = vsel %vm461, %v1252, -inf
        %1254 = vmax.xlane.f32.xlu0 %v1253
        %v1255 = vpop.xlane.xlu0 %1254
        %vm1256 = vcmp.eq.f32.partialorder %v1251, %v1255
        %vm1257 = vmand %vm491, %vm1256
        %v1258 = vsel %vm1257, %v391, 16.0
        %v1259 = vsel %vm461, %v1258, inf
        %1260 = vmin.xlane.f32.xlu0 %v1259
        %v1261 = vpop.xlane.xlu0 %1260
        %vm1262 = vcmp.eq.f32.partialorder %v391, %v1261
        %v1263 = vsel %vm1262, 1, 0
        %v1264 = vcvt.s32.f32 %v1263
        %v1265 = vsub.f32 1.0, %v1264
        %v1266 = vmul.f32 %v1264, %v510
        %v1267 = vmul.f32 %v1264, %v511
        %v1268 = vadd.f32 %v1266, 0.0
        %v1269 = vadd.f32 %v1267, 0.0
        %vm1270 = vcmp.gt.f32.partialorder %v1265, 0.0
        %v1271 = vsel %vm1270, %v1251, -inf
        %v1272 = vsel %vm461, %v1271, -inf
        %1273 = vmax.xlane.f32.xlu0 %v1272
        %v1274 = vpop.xlane.xlu0 %1273
        %vm1275 = vcmp.eq.f32.partialorder %v1251, %v1274
        %vm1276 = vmand %vm1270, %vm1275
        %v1277 = vsel %vm1276, %v391, 16.0
        %v1278 = vsel %vm461, %v1277, inf
        %1279 = vmin.xlane.f32.xlu0 %v1278
        %v1280 = vpop.xlane.xlu0 %1279
        %vm1281 = vcmp.eq.f32.partialorder %v391, %v1280
        %v1282 = vsel %vm1281, 1, 0
        %v1283 = vcvt.s32.f32 %v1282
        %v1284 = vsub.f32 %v1265, %v1283
        %v1285 = vmul.f32 %v1283, %v535
        %v1286 = vmul.f32 %v1283, %v536
        %v1287 = vadd.f32 %v1268, %v1285
        %v1288 = vadd.f32 %v1269, %v1286
        %vm1289 = vcmp.gt.f32.partialorder %v1284, 0.0
        %v1290 = vsel %vm1289, %v1251, -inf
        %v1291 = vsel %vm461, %v1290, -inf
        %1292 = vmax.xlane.f32.xlu0 %v1291
        %v1293 = vpop.xlane.xlu0 %1292
        %vm1294 = vcmp.eq.f32.partialorder %v1251, %v1293
        %vm1295 = vmand %vm1289, %vm1294
        %v1296 = vsel %vm1295, %v391, 16.0
        %v1297 = vsel %vm461, %v1296, inf
        %1298 = vmin.xlane.f32.xlu0 %v1297
        %v1299 = vpop.xlane.xlu0 %1298
        %vm1300 = vcmp.eq.f32.partialorder %v391, %v1299
        %v1301 = vsel %vm1300, 1, 0
        %v1302 = vcvt.s32.f32 %v1301
        %v1303 = vsub.f32 %v1284, %v1302
        %v1304 = vmul.f32 %v1302, %v560
        %v1305 = vmul.f32 %v1302, %v561
        %v1306 = vadd.f32 %v1287, %v1304
        %v1307 = vadd.f32 %v1288, %v1305
        %vm1308 = vcmp.gt.f32.partialorder %v1303, 0.0
        %v1309 = vsel %vm1308, %v1251, -inf
        %v1310 = vsel %vm461, %v1309, -inf
        %1311 = vmax.xlane.f32.xlu0 %v1310
        %v1312 = vpop.xlane.xlu0 %1311
        %vm1313 = vcmp.eq.f32.partialorder %v1251, %v1312
        %vm1314 = vmand %vm1308, %vm1313
        %v1315 = vsel %vm1314, %v391, 16.0
        %v1316 = vsel %vm461, %v1315, inf
        %1317 = vmin.xlane.f32.xlu0 %v1316
        %v1318 = vpop.xlane.xlu0 %1317
        %vm1319 = vcmp.eq.f32.partialorder %v391, %v1318
        %v1320 = vsel %vm1319, 1, 0
        %v1321 = vcvt.s32.f32 %v1320
        %v1322 = vsub.f32 %v1303, %v1321
        %v1323 = vmul.f32 %v1321, %v585
        %v1324 = vmul.f32 %v1321, %v586
        %v1325 = vadd.f32 %v1306, %v1323
        %v1326 = vadd.f32 %v1307, %v1324
        %vm1327 = vcmp.gt.f32.partialorder %v1322, 0.0
        %v1328 = vsel %vm1327, %v1251, -inf
        %v1329 = vsel %vm461, %v1328, -inf
        %1330 = vmax.xlane.f32.xlu0 %v1329
        %v1331 = vpop.xlane.xlu0 %1330
        %vm1332 = vcmp.eq.f32.partialorder %v1251, %v1331
        %vm1333 = vmand %vm1327, %vm1332
        %v1334 = vsel %vm1333, %v391, 16.0
        %v1335 = vsel %vm461, %v1334, inf
        %1336 = vmin.xlane.f32.xlu0 %v1335
        %v1337 = vpop.xlane.xlu0 %1336
        %vm1338 = vcmp.eq.f32.partialorder %v391, %v1337
        %v1339 = vsel %vm1338, 1, 0
        %v1340 = vcvt.s32.f32 %v1339
        %v1341 = vsub.f32 %v1322, %v1340
        %v1342 = vmul.f32 %v1340, %v610
        %v1343 = vmul.f32 %v1340, %v611
        %v1344 = vadd.f32 %v1325, %v1342
        %v1345 = vadd.f32 %v1326, %v1343
        %vm1346 = vcmp.gt.f32.partialorder %v1341, 0.0
        %v1347 = vsel %vm1346, %v1251, -inf
        %v1348 = vsel %vm461, %v1347, -inf
        %1349 = vmax.xlane.f32.xlu0 %v1348
        %v1350 = vpop.xlane.xlu0 %1349
        %vm1351 = vcmp.eq.f32.partialorder %v1251, %v1350
        %vm1352 = vmand %vm1346, %vm1351
        %v1353 = vsel %vm1352, %v391, 16.0
        %v1354 = vsel %vm461, %v1353, inf
        %1355 = vmin.xlane.f32.xlu0 %v1354
        %v1356 = vpop.xlane.xlu0 %1355
        %vm1357 = vcmp.eq.f32.partialorder %v391, %v1356
        %v1358 = vsel %vm1357, 1, 0
        %v1359 = vcvt.s32.f32 %v1358
        %v1360 = vsub.f32 %v1341, %v1359
        %v1361 = vmul.f32 %v1359, %v635
        %v1362 = vmul.f32 %v1359, %v636
        %v1363 = vadd.f32 %v1344, %v1361
        %v1364 = vadd.f32 %v1345, %v1362
        %vm1365 = vcmp.gt.f32.partialorder %v1360, 0.0
        %v1366 = vsel %vm1365, %v1251, -inf
        %v1367 = vsel %vm461, %v1366, -inf
        %1368 = vmax.xlane.f32.xlu0 %v1367
        %v1369 = vpop.xlane.xlu0 %1368
        %vm1370 = vcmp.eq.f32.partialorder %v1251, %v1369
        %vm1371 = vmand %vm1365, %vm1370
        %v1372 = vsel %vm1371, %v391, 16.0
        %v1373 = vsel %vm461, %v1372, inf
        %1374 = vmin.xlane.f32.xlu0 %v1373
        %v1375 = vpop.xlane.xlu0 %1374
        %vm1376 = vcmp.eq.f32.partialorder %v391, %v1375
        %v1377 = vsel %vm1376, 1, 0
        %v1378 = vcvt.s32.f32 %v1377
        %v1379 = vsub.f32 %v1360, %v1378
        %v1380 = vmul.f32 %v1378, %v660
        %v1381 = vmul.f32 %v1378, %v661
        %v1382 = vadd.f32 %v1363, %v1380
        %v1383 = vadd.f32 %v1364, %v1381
        %vm1384 = vcmp.gt.f32.partialorder %v1379, 0.0
        %v1385 = vsel %vm1384, %v1251, -inf
        %v1386 = vsel %vm461, %v1385, -inf
        %1387 = vmax.xlane.f32.xlu0 %v1386
        %v1388 = vpop.xlane.xlu0 %1387
        %vm1389 = vcmp.eq.f32.partialorder %v1251, %v1388
        %vm1390 = vmand %vm1384, %vm1389
        %v1391 = vsel %vm1390, %v391, 16.0
        %v1392 = vsel %vm461, %v1391, inf
        %1393 = vmin.xlane.f32.xlu0 %v1392
        %v1394 = vpop.xlane.xlu0 %1393
        %vm1395 = vcmp.eq.f32.partialorder %v391, %v1394
        %v1396 = vsel %vm1395, 1, 0
        %v1397 = vcvt.s32.f32 %v1396
        %v1398 = vsub.f32 %v1379, %v1397
        %v1399 = vmul.f32 %v1397, %v685
        %v1400 = vmul.f32 %v1397, %v686
        %v1401 = vadd.f32 %v1382, %v1399
        %v1402 = vadd.f32 %v1383, %v1400
        %vm1403 = vcmp.gt.f32.partialorder %v1398, 0.0
        %v1404 = vsel %vm1403, %v1251, -inf
        %v1405 = vsel %vm461, %v1404, -inf
        %1406 = vmax.xlane.f32.xlu0 %v1405
        %v1407 = vpop.xlane.xlu0 %1406
        %vm1408 = vcmp.eq.f32.partialorder %v1251, %v1407
        %vm1409 = vmand %vm1403, %vm1408
        %v1410 = vsel %vm1409, %v391, 16.0
        %v1411 = vsel %vm461, %v1410, inf
        %1412 = vmin.xlane.f32.xlu0 %v1411
        %v1413 = vpop.xlane.xlu0 %1412
        %vm1414 = vcmp.eq.f32.partialorder %v391, %v1413
        %v1415 = vsel %vm1414, 1, 0
        %v1416 = vcvt.s32.f32 %v1415
        %v1417 = vsub.f32 %v1398, %v1416
        %v1418 = vmul.f32 %v1416, %v710
        %v1419 = vmul.f32 %v1416, %v711
        %v1420 = vadd.f32 %v1401, %v1418
        %v1421 = vadd.f32 %v1402, %v1419
        %vm1422 = vcmp.gt.f32.partialorder %v1417, 0.0
        %v1423 = vsel %vm1422, %v1251, -inf
        %v1424 = vsel %vm461, %v1423, -inf
        %1425 = vmax.xlane.f32.xlu0 %v1424
        %v1426 = vpop.xlane.xlu0 %1425
        %vm1427 = vcmp.eq.f32.partialorder %v1251, %v1426
        %vm1428 = vmand %vm1422, %vm1427
        %v1429 = vsel %vm1428, %v391, 16.0
        %v1430 = vsel %vm461, %v1429, inf
        %1431 = vmin.xlane.f32.xlu0 %v1430
        %v1432 = vpop.xlane.xlu0 %1431
        %vm1433 = vcmp.eq.f32.partialorder %v391, %v1432
        %v1434 = vsel %vm1433, 1, 0
        %v1435 = vcvt.s32.f32 %v1434
        %v1436 = vsub.f32 %v1417, %v1435
        %v1437 = vmul.f32 %v1435, %v735
        %v1438 = vmul.f32 %v1435, %v736
        %v1439 = vadd.f32 %v1420, %v1437
        %v1440 = vadd.f32 %v1421, %v1438
        %vm1441 = vcmp.gt.f32.partialorder %v1436, 0.0
        %v1442 = vsel %vm1441, %v1251, -inf
        %v1443 = vsel %vm461, %v1442, -inf
        %1444 = vmax.xlane.f32.xlu0 %v1443
        %v1445 = vpop.xlane.xlu0 %1444
        %vm1446 = vcmp.eq.f32.partialorder %v1251, %v1445
        %vm1447 = vmand %vm1441, %vm1446
        %v1448 = vsel %vm1447, %v391, 16.0
        %v1449 = vsel %vm461, %v1448, inf
        %1450 = vmin.xlane.f32.xlu0 %v1449
        %v1451 = vpop.xlane.xlu0 %1450
        %vm1452 = vcmp.eq.f32.partialorder %v391, %v1451
        %v1453 = vsel %vm1452, 1, 0
        %v1454 = vcvt.s32.f32 %v1453
        %v1455 = vsub.f32 %v1436, %v1454
        %v1456 = vmul.f32 %v1454, %v760
        %v1457 = vmul.f32 %v1454, %v761
        %v1458 = vadd.f32 %v1439, %v1456
        %v1459 = vadd.f32 %v1440, %v1457
        %vm1460 = vcmp.gt.f32.partialorder %v1455, 0.0
        %v1461 = vsel %vm1460, %v1251, -inf
        %v1462 = vsel %vm461, %v1461, -inf
        %1463 = vmax.xlane.f32.xlu0 %v1462
        %v1464 = vpop.xlane.xlu0 %1463
        %vm1465 = vcmp.eq.f32.partialorder %v1251, %v1464
        %vm1466 = vmand %vm1460, %vm1465
        %v1467 = vsel %vm1466, %v391, 16.0
        %v1468 = vsel %vm461, %v1467, inf
        %1469 = vmin.xlane.f32.xlu0 %v1468
        %v1470 = vpop.xlane.xlu0 %1469
        %vm1471 = vcmp.eq.f32.partialorder %v391, %v1470
        %v1472 = vsel %vm1471, 1, 0
        %v1473 = vcvt.s32.f32 %v1472
        %v1474 = vsub.f32 %v1455, %v1473
        %v1475 = vmul.f32 %v1473, %v785
        %v1476 = vmul.f32 %v1473, %v786
        %v1477 = vadd.f32 %v1458, %v1475
        %v1478 = vadd.f32 %v1459, %v1476
        %vm1479 = vcmp.gt.f32.partialorder %v1474, 0.0
        %v1480 = vsel %vm1479, %v1251, -inf
        %v1481 = vsel %vm461, %v1480, -inf
        %1482 = vmax.xlane.f32.xlu0 %v1481
        %v1483 = vpop.xlane.xlu0 %1482
        %vm1484 = vcmp.eq.f32.partialorder %v1251, %v1483
        %vm1485 = vmand %vm1479, %vm1484
        %v1486 = vsel %vm1485, %v391, 16.0
        %v1487 = vsel %vm461, %v1486, inf
        %1488 = vmin.xlane.f32.xlu0 %v1487
        %v1489 = vpop.xlane.xlu0 %1488
        %vm1490 = vcmp.eq.f32.partialorder %v391, %v1489
        %v1491 = vsel %vm1490, 1, 0
        %v1492 = vcvt.s32.f32 %v1491
        %v1493 = vsub.f32 %v1474, %v1492
        %v1494 = vmul.f32 %v1492, %v810
        %v1495 = vmul.f32 %v1492, %v811
        %v1496 = vadd.f32 %v1477, %v1494
        %v1497 = vadd.f32 %v1478, %v1495
        %vm1498 = vcmp.gt.f32.partialorder %v1493, 0.0
        %v1499 = vsel %vm1498, %v1251, -inf
        %v1500 = vsel %vm461, %v1499, -inf
        %1501 = vmax.xlane.f32.xlu0 %v1500
        %v1502 = vpop.xlane.xlu0 %1501
        %vm1503 = vcmp.eq.f32.partialorder %v1251, %v1502
        %vm1504 = vmand %vm1498, %vm1503
        %v1505 = vsel %vm1504, %v391, 16.0
        %v1506 = vsel %vm461, %v1505, inf
        %1507 = vmin.xlane.f32.xlu0 %v1506
        %v1508 = vpop.xlane.xlu0 %1507
        %vm1509 = vcmp.eq.f32.partialorder %v391, %v1508
        %v1510 = vsel %vm1509, 1, 0
        %v1511 = vcvt.s32.f32 %v1510
        %v1512 = vsub.f32 %v1493, %v1511
        %v1513 = vmul.f32 %v1511, %v835
        %v1514 = vmul.f32 %v1511, %v836
        %v1515 = vadd.f32 %v1496, %v1513
        %v1516 = vadd.f32 %v1497, %v1514
        %vm1517 = vcmp.gt.f32.partialorder %v1512, 0.0
        %v1518 = vsel %vm1517, %v1251, -inf
        %v1519 = vsel %vm461, %v1518, -inf
        %1520 = vmax.xlane.f32.xlu0 %v1519
        %v1521 = vpop.xlane.xlu0 %1520
        %vm1522 = vcmp.eq.f32.partialorder %v1251, %v1521
        %vm1523 = vmand %vm1517, %vm1522
        %v1524 = vsel %vm1523, %v391, 16.0
        %v1525 = vsel %vm461, %v1524, inf
        %1526 = vmin.xlane.f32.xlu0 %v1525
        %v1527 = vpop.xlane.xlu0 %1526
        %vm1528 = vcmp.eq.f32.partialorder %v391, %v1527
        %v1529 = vsel %vm1528, 1, 0
        %v1530 = vcvt.s32.f32 %v1529
        %v1531 = vmul.f32 %v1530, %v859
        %v1532 = vmul.f32 %v1530, %v860
        %v1533 = vadd.f32 %v1515, %v1531
        %v1534 = vadd.f32 %v1516, %v1532
        %v1536 = vsel %vm461, %v1533, 0
        %v1539 = vsel %vm461, %v1534, 0
        %1541 = vmatprep.subr.mxu0 0.0
        %1542 = vmatpush1.msra.mxu0 0.0
        %1543 = vmatprep.subr.mxu0 0.0
        %1544 = vmatpush1.msra.mxu0 0.0
        %1545 = vmatprep.subr.mxu0 0.0
        %1546 = vmatpush1.msra.mxu0 0.0
        %1547 = vmatprep.subr.mxu0 0.0
        %1548 = vmatpush1.msra.mxu0 0.0
        %1549 = vmatprep.subr.mxu0 0.0
        %1550 = vmatpush1.msra.mxu0 0.0
        %1551 = vmatprep.subr.mxu0 0.0
        %1552 = vmatpush1.msra.mxu0 0.0
        %1553 = vmatprep.subr.mxu0 0.0
        %1554 = vmatpush1.msra.mxu0 0.0
        %1555 = vmatprep.subr.mxu0 0.0
        %1556 = vmatpush1.msra.mxu0 0.0
        %1557 = vmatprep.subr.mxu0 0.0
        %1558 = vmatpush1.msra.mxu0 0.0
        %1559 = vmatprep.subr.mxu0 0.0
        %1560 = vmatpush1.msra.mxu0 0.0
        %1561 = vmatprep.subr.mxu0 0.0
        %1562 = vmatpush1.msra.mxu0 0.0
        %1563 = vmatprep.subr.mxu0 0.0
        %1564 = vmatpush1.msra.mxu0 0.0
        %1565 = vmatprep.subr.mxu0 0.0
        %1566 = vmatpush1.msra.mxu0 0.0
        %1567 = vmatprep.subr.mxu0 0.0
        %1568 = vmatpush1.msra.mxu0 0.0
        %1569 = vmatprep.subr.mxu0 0.0
        %1570 = vmatpush1.msra.mxu0 %v1218
        %1571 = vmatprep.subr.mxu0 0.0
        %1572 = vmatpush1.msra.mxu0 %v1215
        %1573 = vmatprep.subr.mxu0 0.0
        %1574 = vmatpush2.msra.mxu0 0.0
        %1575 = vmatprep.subr.mxu0 0.0
        %1576 = vmatpush2.msra.mxu0 0.0
        %1577 = vmatprep.subr.mxu0 0.0
        %1578 = vmatpush2.msra.mxu0 0.0
        %1579 = vmatprep.subr.mxu0 0.0
        %1580 = vmatpush2.msra.mxu0 0.0
        %1581 = vmatprep.subr.mxu0 0.0
        %1582 = vmatpush2.msra.mxu0 0.0
        %1583 = vmatprep.subr.mxu0 0.0
        %1584 = vmatpush2.msra.mxu0 0.0
        %1585 = vmatprep.subr.mxu0 0.0
        %1586 = vmatpush2.msra.mxu0 0.0
        %1587 = vmatprep.subr.mxu0 0.0
        %1588 = vmatpush2.msra.mxu0 0.0
        %1589 = vmatprep.subr.mxu0 0.0
        %1590 = vmatpush2.msra.mxu0 0.0
        %1591 = vmatprep.subr.mxu0 0.0
        %1592 = vmatpush2.msra.mxu0 0.0
        %1593 = vmatprep.subr.mxu0 0.0
        %1594 = vmatpush2.msra.mxu0 0.0
        %1595 = vmatprep.subr.mxu0 0.0
        %1596 = vmatpush2.msra.mxu0 0.0
        %1597 = vmatprep.subr.mxu0 0.0
        %1598 = vmatpush2.msra.mxu0 0.0
        %1599 = vmatprep.subr.mxu0 0.0
        %1600 = vmatpush2.msra.mxu0 0.0
        %1601 = vmatprep.subr.mxu0 0.0
        %1602 = vmatpush2.msra.mxu0 0.0
        %1603 = vmatprep.subr.mxu0 0.0
        %1604 = vmatpush2.msra.mxu0 0.0
        %1605 = vmatprep.mubr.f32.mxu0 0.0
        %1606 = vmatmul.mubr.f32.gmra.mxu0 %v1536
        %v1607 = vpop.f32.mrf.mxu0
        %v1608 = vadd.f32 0.0, %v1607
        %v1609 = vpop.f32.mrf.mxu0
        %1610 = vmatprep.mubr.f32.mxu0 0.0
        %1611 = vmatmul.mubr.f32.gmra.mxu0 %v1539
        %v1612 = vpop.f32.mrf.mxu0
        %v1613 = vadd.f32 0.0, %v1612
        %v1614 = vpop.f32.mrf.mxu0
        %1615 = vdwg.mxu0
        %v1616 = vmul.f32 %v1533, %v391
        %v1617 = vmul.f32 %v1534, %v391
        %v1618 = vsel %vm461, %v1616, 0.0
        %1619 = vadd.xlane.f32.xlu0 %v1618
        %v1620 = vpop.xlane.xlu0 %1619
        %v1621 = vsel %vm951, %v1617, 0.0
        %1622 = vadd.xlane.f32.xlu0 %v1621
        %v1623 = vpop.xlane.xlu0 %1622
        %vm1624 = vcmp.gt.f32.partialorder %v391, %v1620
        %vm1625 = vcmp.gt.f32.partialorder %v391, %v1623
        %v1626 = vmul.f32 %v1608, 0.17677669
        %v1627 = vmul.f32 %v1613, 0.17677669
        %v1628 = vsel %vm1624, -inf, %v1626
        %v1629 = vsel %vm1625, -inf, %v1627
        %v1630 = vsel %vm461, %v1628, -inf
        %1631 = vmax.xlane.f32.xlu0 %v1630
        %v1632 = vpop.xlane.xlu0 %1631
        %v1633 = vsel %vm951, %v1629, -inf
        %1634 = vmax.xlane.f32.xlu0 %v1633
        %v1635 = vpop.xlane.xlu0 %1634
        %v1636 = vsub.f32 %v1628, %v1632
        %v1637 = vsub.f32 %v1629, %v1635
        %v1638 = vmul.f32 %v1636, 1.442695
        %v1639 = vpow.pop %v1638
        %v1640 = vmul.f32 %v1637, 1.442695
        %v1641 = vpow.pop %v1640
        %v1642 = vsel %vm461, %v1639, 0.0
        %1643 = vadd.xlane.f32.xlu0 %v1642
        %v1644 = vpop.xlane.xlu0 %1643
        %v1645 = vsel %vm951, %v1641, 0.0
        %1646 = vadd.xlane.f32.xlu0 %v1645
        %v1647 = vpop.xlane.xlu0 %1646
        %v1648 = vrcp.pop %v1644
        %v1649 = vrcp.pop %v1647
        %v1650 = vmul.f32 %v1639, %v1648
        %v1651 = vmul.f32 %v1641, %v1649
        %v1652 = vpack.c.bf16 %v1651, %v1650
        %1653 = vrot.lane.b32.xlu0 %v988, 96
        %v1654 = vpop.permute.xlu0 %1653
        %v1657 = vsel %vm461, %v1652, 0
        %1659 = vmatprep.subr.bf16.mxu0 0
        %1660 = vmatpush1.bf16.msra.mxu0 0
        %1661 = vmatprep.subr.bf16.mxu0 0
        %1662 = vmatpush1.bf16.msra.mxu0 0
        %1663 = vmatprep.subr.bf16.mxu0 0
        %1664 = vmatpush1.bf16.msra.mxu0 0
        %1665 = vmatprep.subr.bf16.mxu0 0
        %1666 = vmatpush1.bf16.msra.mxu0 0
        %1667 = vmatprep.subr.bf16.mxu0 0
        %1668 = vmatpush1.bf16.msra.mxu0 0
        %1669 = vmatprep.subr.bf16.mxu0 0
        %1670 = vmatpush1.bf16.msra.mxu0 0
        %1671 = vmatprep.subr.bf16.mxu0 0
        %1672 = vmatpush1.bf16.msra.mxu0 0
        %1673 = vmatprep.subr.bf16.mxu0 0
        %1674 = vmatpush1.bf16.msra.mxu0 %v1654
        %1675 = vmatprep.subr.bf16.mxu0 0
        %1676 = vmatpush2.bf16.msra.mxu0 0
        %1677 = vmatprep.subr.bf16.mxu0 0
        %1678 = vmatpush2.bf16.msra.mxu0 0
        %1679 = vmatprep.subr.bf16.mxu0 0
        %1680 = vmatpush2.bf16.msra.mxu0 0
        %1681 = vmatprep.subr.bf16.mxu0 0
        %1682 = vmatpush2.bf16.msra.mxu0 0
        %1683 = vmatprep.subr.bf16.mxu0 0
        %1684 = vmatpush2.bf16.msra.mxu0 0
        %1685 = vmatprep.subr.bf16.mxu0 0
        %1686 = vmatpush2.bf16.msra.mxu0 0
        %1687 = vmatprep.subr.bf16.mxu0 0
        %1688 = vmatpush2.bf16.msra.mxu0 0
        %1689 = vmatprep.subr.bf16.mxu0 0
        %1690 = vmatpush2.bf16.msra.mxu0 0
        %1691 = vmatprep.mubr.bf16.mxu0 0
        %1692 = vmatmul.mubr.bf16.gmra.mxu0 %v1657
        %v1693 = vpop.f32.mrf.mxu0
        %v1694 = vadd.f32 0.0, %v1693
        %v1695 = vpop.f32.mrf.mxu0
        %v1696 = vpop.f32.mrf.mxu0
        %v1697 = vadd.f32 0.0, %v1696
        %v1698 = vpop.f32.mrf.mxu0
        %1699 = vdwg.mxu0
        %v1700 = vsel %vm411, %v1694, 1.0
        %v1701 = vsel %vm411, %v1697, 1.0
        %1702 = vxpose.xlu0.b32.start [1/16] %v1533, 128
        %1703 = vxpose.xlu0.b32.cont [2/16] %v1534, 128
        %1704 = vxpose.xlu0.b32.cont [3/16] 0.0, 128
        %1705 = vxpose.xlu0.b32.cont [4/16] 0.0, 128
        %1706 = vxpose.xlu0.b32.cont [5/16] 0.0, 128
        %1707 = vxpose.xlu0.b32.cont [6/16] 0.0, 128
        %1708 = vxpose.xlu0.b32.cont [7/16] 0.0, 128
        %1709 = vxpose.xlu0.b32.cont [8/16] 0.0, 128
        %1710 = vxpose.xlu0.b32.cont [9/16] 0.0, 128
        %1711 = vxpose.xlu0.b32.cont [10/16] 0.0, 128
        %1712 = vxpose.xlu0.b32.cont [11/16] 0.0, 128
        %1713 = vxpose.xlu0.b32.cont [12/16] 0.0, 128
        %1714 = vxpose.xlu0.b32.cont [13/16] 0.0, 128
        %1715 = vxpose.xlu0.b32.cont [14/16] 0.0, 128
        %1716 = vxpose.xlu0.b32.cont [15/16] 0.0, 128
        %1717 = vxpose.xlu0.b32.end [16/16] 0.0, 128
        %v1718 = vpop.trf.xlu0
        %v1719 = vpop.trf.xlu0
        %v1720 = vpop.trf.xlu0
        %v1721 = vpop.trf.xlu0
        %v1722 = vpop.trf.xlu0
        %v1723 = vpop.trf.xlu0
        %v1724 = vpop.trf.xlu0
        %v1725 = vpop.trf.xlu0
        %v1726 = vpop.trf.xlu0
        %v1727 = vpop.trf.xlu0
        %v1728 = vpop.trf.xlu0
        %v1729 = vpop.trf.xlu0
        %v1730 = vpop.trf.xlu0
        %v1731 = vpop.trf.xlu0
        %v1732 = vpop.trf.xlu0
        %v1733 = vpop.trf.xlu0
        %v1735 = vsel %vm1068, %v1718, 0
        %v1738 = vsel %vm1068, %v1719, 0
        %v1741 = vsel %vm1075, %v1701, 0
        %1743 = vmatprep.subr.mxu0 0.0
        %1744 = vmatpush1.msra.mxu0 0.0
        %1745 = vmatprep.subr.mxu0 0.0
        %1746 = vmatpush1.msra.mxu0 0.0
        %1747 = vmatprep.subr.mxu0 0.0
        %1748 = vmatpush1.msra.mxu0 0.0
        %1749 = vmatprep.subr.mxu0 0.0
        %1750 = vmatpush1.msra.mxu0 0.0
        %1751 = vmatprep.subr.mxu0 0.0
        %1752 = vmatpush1.msra.mxu0 0.0
        %1753 = vmatprep.subr.mxu0 0.0
        %1754 = vmatpush1.msra.mxu0 0.0
        %1755 = vmatprep.subr.mxu0 0.0
        %1756 = vmatpush1.msra.mxu0 0.0
        %1757 = vmatprep.subr.mxu0 0.0
        %1758 = vmatpush1.msra.mxu0 0.0
        %1759 = vmatprep.subr.mxu0 0.0
        %1760 = vmatpush1.msra.mxu0 0.0
        %1761 = vmatprep.subr.mxu0 0.0
        %1762 = vmatpush1.msra.mxu0 0.0
        %1763 = vmatprep.subr.mxu0 0.0
        %1764 = vmatpush1.msra.mxu0 0.0
        %1765 = vmatprep.subr.mxu0 0.0
        %1766 = vmatpush1.msra.mxu0 0.0
        %1767 = vmatprep.subr.mxu0 0.0
        %1768 = vmatpush1.msra.mxu0 0.0
        %1769 = vmatprep.subr.mxu0 0.0
        %1770 = vmatpush1.msra.mxu0 0.0
        %1771 = vmatprep.subr.mxu0 0.0
        %1772 = vmatpush1.msra.mxu0 %v1741
        %1773 = vmatprep.subr.mxu0 0.0
        %1774 = vmatpush1.msra.mxu0 %v1700
        %1775 = vmatprep.subr.mxu0 0.0
        %1776 = vmatpush2.msra.mxu0 0.0
        %1777 = vmatprep.subr.mxu0 0.0
        %1778 = vmatpush2.msra.mxu0 0.0
        %1779 = vmatprep.subr.mxu0 0.0
        %1780 = vmatpush2.msra.mxu0 0.0
        %1781 = vmatprep.subr.mxu0 0.0
        %1782 = vmatpush2.msra.mxu0 0.0
        %1783 = vmatprep.subr.mxu0 0.0
        %1784 = vmatpush2.msra.mxu0 0.0
        %1785 = vmatprep.subr.mxu0 0.0
        %1786 = vmatpush2.msra.mxu0 0.0
        %1787 = vmatprep.subr.mxu0 0.0
        %1788 = vmatpush2.msra.mxu0 0.0
        %1789 = vmatprep.subr.mxu0 0.0
        %1790 = vmatpush2.msra.mxu0 0.0
        %1791 = vmatprep.subr.mxu0 0.0
        %1792 = vmatpush2.msra.mxu0 0.0
        %1793 = vmatprep.subr.mxu0 0.0
        %1794 = vmatpush2.msra.mxu0 0.0
        %1795 = vmatprep.subr.mxu0 0.0
        %1796 = vmatpush2.msra.mxu0 0.0
        %1797 = vmatprep.subr.mxu0 0.0
        %1798 = vmatpush2.msra.mxu0 0.0
        %1799 = vmatprep.subr.mxu0 0.0
        %1800 = vmatpush2.msra.mxu0 0.0
        %1801 = vmatprep.subr.mxu0 0.0
        %1802 = vmatpush2.msra.mxu0 0.0
        %1803 = vmatprep.subr.mxu0 0.0
        %1804 = vmatpush2.msra.mxu0 0.0
        %1805 = vmatprep.subr.mxu0 0.0
        %1806 = vmatpush2.msra.mxu0 0.0
        %1807 = vmatprep.mubr.f32.mxu0 0.0
        %1808 = vmatmul.mubr.f32.gmra.mxu0 %v1735
        %v1809 = vpop.f32.mrf.mxu0
        %v1810 = vadd.f32 0.0, %v1809
        %v1811 = vpop.f32.mrf.mxu0
        %1812 = vmatprep.mubr.f32.mxu0 0.0
        %1813 = vmatmul.mubr.f32.gmra.mxu0 %v1738
        %v1814 = vpop.f32.mrf.mxu0
        %v1815 = vadd.f32 0.0, %v1814
        %v1816 = vpop.f32.mrf.mxu0
        %1817 = vdwg.mxu0
        %vm1818 = vcmp.gt.f32.partialorder %v1810, 0.5
        %vm1819 = vcmp.gt.f32.partialorder %v1815, 0.5
        %v1820 = vsel %vm1818, 1, 0
        %v1821 = vsel %vm1819, 1, 0
        %1822 = vset.pattern.permute.xlu0 32
        %1823 = vperm.xlu0 %1822, %v1820
        %v1824 = vpop.permute.xlu0 %1823
        %1825 = vset.pattern.permute.xlu0 32
        %1826 = vperm.xlu0 %1825, %v1821
        %v1827 = vpop.permute.xlu0 %1826
        %vm1828 = vcmp.eq.s32.totalorder %v1824, 1
        %vm1829 = vcmp.eq.s32.totalorder %v1827, 1
        %1832 = vrot.lane.b32.xlu0 %v381, 96
        %v1833 = vpop.permute.xlu0 %1832
        %1834 = vrot.lane.b32.xlu0 %v382, 96
        %v1835 = vpop.permute.xlu0 %1834
        %v1838 = vsel %vm1828, %v1810, %v1833
        %v1839 = vsel %vm1829, %v1815, %v1835
        %1842 = vrot.lane.b32.xlu0 %v1838, 32
        %v1843 = vpop.permute.xlu0 %1842
        %1844 = vrot.lane.b32.xlu0 %v1839, 32
        %v1845 = vpop.permute.xlu0 %1844
        %vm1848 = vcmask 523520
        %1849 = vst.msk [vmem:[%s373] sm:$0xff] %vm1848, %v1843
        %1850 = vst.msk [vmem:[%s373 + $0x8] sm:$0xff] %vm1848, %v1845
        %1851 = vrot.lane.b32.xlu0 %v405, 64
        %v1852 = vpop.permute.xlu0 %1851
        %1853 = vrot.lane.b32.xlu0 %v410, 64
        %v1854 = vpop.permute.xlu0 %1853
        %v1856 = vsel %vm411, %v1852, 0
        %v1859 = vsel %vm411, %v1854, 0
        %1861 = vmatprep.subr.bf16.mxu0 0
        %1862 = vmatpush1.bf16.xpose.msra.mxu0 0
        %1863 = vmatprep.subr.bf16.mxu0 0
        %1864 = vmatpush1.bf16.xpose.msra.mxu0 0
        %1865 = vmatprep.subr.bf16.mxu0 0
        %1866 = vmatpush1.bf16.xpose.msra.mxu0 0
        %1867 = vmatprep.subr.bf16.mxu0 0
        %1868 = vmatpush1.bf16.xpose.msra.mxu0 0
        %1869 = vmatprep.subr.bf16.mxu0 0
        %1870 = vmatpush1.bf16.xpose.msra.mxu0 0
        %1871 = vmatprep.subr.bf16.mxu0 0
        %1872 = vmatpush1.bf16.xpose.msra.mxu0 0
        %1873 = vmatprep.subr.bf16.mxu0 0
        %1874 = vmatpush1.bf16.xpose.msra.mxu0 0
        %1875 = vmatprep.subr.bf16.mxu0 0
        %1876 = vmatpush1.bf16.xpose.msra.mxu0 %v1859
        %1877 = vmatprep.subr.bf16.mxu0 0
        %1878 = vmatpush2.bf16.xpose.msra.mxu0 0
        %1879 = vmatprep.subr.bf16.mxu0 0
        %1880 = vmatpush2.bf16.xpose.msra.mxu0 0
        %1881 = vmatprep.subr.bf16.mxu0 0
        %1882 = vmatpush2.bf16.xpose.msra.mxu0 0
        %1883 = vmatprep.subr.bf16.mxu0 0
        %1884 = vmatpush2.bf16.xpose.msra.mxu0 0
        %1885 = vmatprep.subr.bf16.mxu0 0
        %1886 = vmatpush2.bf16.xpose.msra.mxu0 0
        %1887 = vmatprep.subr.bf16.mxu0 0
        %1888 = vmatpush2.bf16.xpose.msra.mxu0 0
        %1889 = vmatprep.subr.bf16.mxu0 0
        %1890 = vmatpush2.bf16.xpose.msra.mxu0 0
        %1891 = vmatprep.subr.bf16.mxu0 0
        %1892 = vmatpush2.bf16.xpose.msra.mxu0 0
        %1893 = vmatprep.mubr.bf16.mxu0 0
        %1894 = vmatmul.mubr.bf16.gmra.mxu0 %v1856
        %v1895 = vpop.f32.mrf.mxu0
        %v1896 = vadd.f32 0.0, %v1895
        %v1897 = vpop.f32.mrf.mxu0
        %v1898 = vpop.f32.mrf.mxu0
        %v1899 = vadd.f32 0.0, %v1898
        %v1900 = vpop.f32.mrf.mxu0
        %1901 = vdwg.mxu0
        %v1902 = vsel %vm387, %v1896, -inf
        %v1903 = vsel %vm388, %v1899, -inf
        %v1904 = vsel %vm461, %v1902, -inf
        %1905 = vmax.xlane.f32.xlu0 %v1904
        %v1906 = vpop.xlane.xlu0 %1905
        %v1907 = vsel %vm461, %v1903, -inf
        %1908 = vmax.xlane.f32.xlu0 %v1907
        %v1909 = vpop.xlane.xlu0 %1908
        %v1910 = vmul.f32 %v385, %v1896
        %v1911 = vmul.f32 %v386, %v1899
        %v1912 = vsel %vm461, %v1910, 0.0
        %1913 = vadd.xlane.f32.xlu0 %v1912
        %v1914 = vpop.xlane.xlu0 %1913
        %v1915 = vsel %vm461, %v1911, 0.0
        %1916 = vadd.xlane.f32.xlu0 %v1915
        %v1917 = vpop.xlane.xlu0 %1916
        %v1918 = vmul.f32 %v1914, 0.0625
        %v1919 = vmul.f32 %v1917, 0.0625
        %v1920 = vsub.f32 %v1906, %v1918
        %v1921 = vsub.f32 %v1909, %v1919
        %v1922 = vmul.f32 %v399, %v1920
        %v1923 = vmul.f32 %v400, %v1921
        %v1924 = vsel %vm461, %v1922, 0.0
        %v1925 = vsel %vm461, %v1923, 0.0
        %v1926 = vadd.f32 %v1924, %v1925
        %v1927 = vrot.slane %v1926, 4
        %v1928 = vadd.f32 %v1926, %v1927
        %v1929 = vrot.slane %v1928, 2
        %v1930 = vadd.f32 %v1928, %v1929
        %v1931 = vrot.slane %v1930, 1
        %v1932 = vadd.f32 %v1930, %v1931
        %v1933 = vsel %vm491, %v1932, -inf
        %v1934 = vsel %vm461, %v1933, -inf
        %1935 = vmax.xlane.f32.xlu0 %v1934
        %v1936 = vpop.xlane.xlu0 %1935
        %vm1937 = vcmp.eq.f32.partialorder %v1932, %v1936
        %vm1938 = vmand %vm491, %vm1937
        %v1939 = vsel %vm1938, %v391, 16.0
        %v1940 = vsel %vm461, %v1939, inf
        %1941 = vmin.xlane.f32.xlu0 %v1940
        %v1942 = vpop.xlane.xlu0 %1941
        %vm1943 = vcmp.eq.f32.partialorder %v391, %v1942
        %v1944 = vsel %vm1943, 1, 0
        %v1945 = vcvt.s32.f32 %v1944
        %v1946 = vsub.f32 1.0, %v1945
        %v1947 = vmul.f32 %v1945, %v510
        %v1948 = vmul.f32 %v1945, %v511
        %v1949 = vadd.f32 %v1947, 0.0
        %v1950 = vadd.f32 %v1948, 0.0
        %vm1951 = vcmp.gt.f32.partialorder %v1946, 0.0
        %v1952 = vsel %vm1951, %v1932, -inf
        %v1953 = vsel %vm461, %v1952, -inf
        %1954 = vmax.xlane.f32.xlu0 %v1953
        %v1955 = vpop.xlane.xlu0 %1954
        %vm1956 = vcmp.eq.f32.partialorder %v1932, %v1955
        %vm1957 = vmand %vm1951, %vm1956
        %v1958 = vsel %vm1957, %v391, 16.0
        %v1959 = vsel %vm461, %v1958, inf
        %1960 = vmin.xlane.f32.xlu0 %v1959
        %v1961 = vpop.xlane.xlu0 %1960
        %vm1962 = vcmp.eq.f32.partialorder %v391, %v1961
        %v1963 = vsel %vm1962, 1, 0
        %v1964 = vcvt.s32.f32 %v1963
        %v1965 = vsub.f32 %v1946, %v1964
        %v1966 = vmul.f32 %v1964, %v535
        %v1967 = vmul.f32 %v1964, %v536
        %v1968 = vadd.f32 %v1949, %v1966
        %v1969 = vadd.f32 %v1950, %v1967
        %vm1970 = vcmp.gt.f32.partialorder %v1965, 0.0
        %v1971 = vsel %vm1970, %v1932, -inf
        %v1972 = vsel %vm461, %v1971, -inf
        %1973 = vmax.xlane.f32.xlu0 %v1972
        %v1974 = vpop.xlane.xlu0 %1973
        %vm1975 = vcmp.eq.f32.partialorder %v1932, %v1974
        %vm1976 = vmand %vm1970, %vm1975
        %v1977 = vsel %vm1976, %v391, 16.0
        %v1978 = vsel %vm461, %v1977, inf
        %1979 = vmin.xlane.f32.xlu0 %v1978
        %v1980 = vpop.xlane.xlu0 %1979
        %vm1981 = vcmp.eq.f32.partialorder %v391, %v1980
        %v1982 = vsel %vm1981, 1, 0
        %v1983 = vcvt.s32.f32 %v1982
        %v1984 = vsub.f32 %v1965, %v1983
        %v1985 = vmul.f32 %v1983, %v560
        %v1986 = vmul.f32 %v1983, %v561
        %v1987 = vadd.f32 %v1968, %v1985
        %v1988 = vadd.f32 %v1969, %v1986
        %vm1989 = vcmp.gt.f32.partialorder %v1984, 0.0
        %v1990 = vsel %vm1989, %v1932, -inf
        %v1991 = vsel %vm461, %v1990, -inf
        %1992 = vmax.xlane.f32.xlu0 %v1991
        %v1993 = vpop.xlane.xlu0 %1992
        %vm1994 = vcmp.eq.f32.partialorder %v1932, %v1993
        %vm1995 = vmand %vm1989, %vm1994
        %v1996 = vsel %vm1995, %v391, 16.0
        %v1997 = vsel %vm461, %v1996, inf
        %1998 = vmin.xlane.f32.xlu0 %v1997
        %v1999 = vpop.xlane.xlu0 %1998
        %vm2000 = vcmp.eq.f32.partialorder %v391, %v1999
        %v2001 = vsel %vm2000, 1, 0
        %v2002 = vcvt.s32.f32 %v2001
        %v2003 = vsub.f32 %v1984, %v2002
        %v2004 = vmul.f32 %v2002, %v585
        %v2005 = vmul.f32 %v2002, %v586
        %v2006 = vadd.f32 %v1987, %v2004
        %v2007 = vadd.f32 %v1988, %v2005
        %vm2008 = vcmp.gt.f32.partialorder %v2003, 0.0
        %v2009 = vsel %vm2008, %v1932, -inf
        %v2010 = vsel %vm461, %v2009, -inf
        %2011 = vmax.xlane.f32.xlu0 %v2010
        %v2012 = vpop.xlane.xlu0 %2011
        %vm2013 = vcmp.eq.f32.partialorder %v1932, %v2012
        %vm2014 = vmand %vm2008, %vm2013
        %v2015 = vsel %vm2014, %v391, 16.0
        %v2016 = vsel %vm461, %v2015, inf
        %2017 = vmin.xlane.f32.xlu0 %v2016
        %v2018 = vpop.xlane.xlu0 %2017
        %vm2019 = vcmp.eq.f32.partialorder %v391, %v2018
        %v2020 = vsel %vm2019, 1, 0
        %v2021 = vcvt.s32.f32 %v2020
        %v2022 = vsub.f32 %v2003, %v2021
        %v2023 = vmul.f32 %v2021, %v610
        %v2024 = vmul.f32 %v2021, %v611
        %v2025 = vadd.f32 %v2006, %v2023
        %v2026 = vadd.f32 %v2007, %v2024
        %vm2027 = vcmp.gt.f32.partialorder %v2022, 0.0
        %v2028 = vsel %vm2027, %v1932, -inf
        %v2029 = vsel %vm461, %v2028, -inf
        %2030 = vmax.xlane.f32.xlu0 %v2029
        %v2031 = vpop.xlane.xlu0 %2030
        %vm2032 = vcmp.eq.f32.partialorder %v1932, %v2031
        %vm2033 = vmand %vm2027, %vm2032
        %v2034 = vsel %vm2033, %v391, 16.0
        %v2035 = vsel %vm461, %v2034, inf
        %2036 = vmin.xlane.f32.xlu0 %v2035
        %v2037 = vpop.xlane.xlu0 %2036
        %vm2038 = vcmp.eq.f32.partialorder %v391, %v2037
        %v2039 = vsel %vm2038, 1, 0
        %v2040 = vcvt.s32.f32 %v2039
        %v2041 = vsub.f32 %v2022, %v2040
        %v2042 = vmul.f32 %v2040, %v635
        %v2043 = vmul.f32 %v2040, %v636
        %v2044 = vadd.f32 %v2025, %v2042
        %v2045 = vadd.f32 %v2026, %v2043
        %vm2046 = vcmp.gt.f32.partialorder %v2041, 0.0
        %v2047 = vsel %vm2046, %v1932, -inf
        %v2048 = vsel %vm461, %v2047, -inf
        %2049 = vmax.xlane.f32.xlu0 %v2048
        %v2050 = vpop.xlane.xlu0 %2049
        %vm2051 = vcmp.eq.f32.partialorder %v1932, %v2050
        %vm2052 = vmand %vm2046, %vm2051
        %v2053 = vsel %vm2052, %v391, 16.0
        %v2054 = vsel %vm461, %v2053, inf
        %2055 = vmin.xlane.f32.xlu0 %v2054
        %v2056 = vpop.xlane.xlu0 %2055
        %vm2057 = vcmp.eq.f32.partialorder %v391, %v2056
        %v2058 = vsel %vm2057, 1, 0
        %v2059 = vcvt.s32.f32 %v2058
        %v2060 = vsub.f32 %v2041, %v2059
        %v2061 = vmul.f32 %v2059, %v660
        %v2062 = vmul.f32 %v2059, %v661
        %v2063 = vadd.f32 %v2044, %v2061
        %v2064 = vadd.f32 %v2045, %v2062
        %vm2065 = vcmp.gt.f32.partialorder %v2060, 0.0
        %v2066 = vsel %vm2065, %v1932, -inf
        %v2067 = vsel %vm461, %v2066, -inf
        %2068 = vmax.xlane.f32.xlu0 %v2067
        %v2069 = vpop.xlane.xlu0 %2068
        %vm2070 = vcmp.eq.f32.partialorder %v1932, %v2069
        %vm2071 = vmand %vm2065, %vm2070
        %v2072 = vsel %vm2071, %v391, 16.0
        %v2073 = vsel %vm461, %v2072, inf
        %2074 = vmin.xlane.f32.xlu0 %v2073
        %v2075 = vpop.xlane.xlu0 %2074
        %vm2076 = vcmp.eq.f32.partialorder %v391, %v2075
        %v2077 = vsel %vm2076, 1, 0
        %v2078 = vcvt.s32.f32 %v2077
        %v2079 = vsub.f32 %v2060, %v2078
        %v2080 = vmul.f32 %v2078, %v685
        %v2081 = vmul.f32 %v2078, %v686
        %v2082 = vadd.f32 %v2063, %v2080
        %v2083 = vadd.f32 %v2064, %v2081
        %vm2084 = vcmp.gt.f32.partialorder %v2079, 0.0
        %v2085 = vsel %vm2084, %v1932, -inf
        %v2086 = vsel %vm461, %v2085, -inf
        %2087 = vmax.xlane.f32.xlu0 %v2086
        %v2088 = vpop.xlane.xlu0 %2087
        %vm2089 = vcmp.eq.f32.partialorder %v1932, %v2088
        %vm2090 = vmand %vm2084, %vm2089
        %v2091 = vsel %vm2090, %v391, 16.0
        %v2092 = vsel %vm461, %v2091, inf
        %2093 = vmin.xlane.f32.xlu0 %v2092
        %v2094 = vpop.xlane.xlu0 %2093
        %vm2095 = vcmp.eq.f32.partialorder %v391, %v2094
        %v2096 = vsel %vm2095, 1, 0
        %v2097 = vcvt.s32.f32 %v2096
        %v2098 = vsub.f32 %v2079, %v2097
        %v2099 = vmul.f32 %v2097, %v710
        %v2100 = vmul.f32 %v2097, %v711
        %v2101 = vadd.f32 %v2082, %v2099
        %v2102 = vadd.f32 %v2083, %v2100
        %vm2103 = vcmp.gt.f32.partialorder %v2098, 0.0
        %v2104 = vsel %vm2103, %v1932, -inf
        %v2105 = vsel %vm461, %v2104, -inf
        %2106 = vmax.xlane.f32.xlu0 %v2105
        %v2107 = vpop.xlane.xlu0 %2106
        %vm2108 = vcmp.eq.f32.partialorder %v1932, %v2107
        %vm2109 = vmand %vm2103, %vm2108
        %v2110 = vsel %vm2109, %v391, 16.0
        %v2111 = vsel %vm461, %v2110, inf
        %2112 = vmin.xlane.f32.xlu0 %v2111
        %v2113 = vpop.xlane.xlu0 %2112
        %vm2114 = vcmp.eq.f32.partialorder %v391, %v2113
        %v2115 = vsel %vm2114, 1, 0
        %v2116 = vcvt.s32.f32 %v2115
        %v2117 = vsub.f32 %v2098, %v2116
        %v2118 = vmul.f32 %v2116, %v735
        %v2119 = vmul.f32 %v2116, %v736
        %v2120 = vadd.f32 %v2101, %v2118
        %v2121 = vadd.f32 %v2102, %v2119
        %vm2122 = vcmp.gt.f32.partialorder %v2117, 0.0
        %v2123 = vsel %vm2122, %v1932, -inf
        %v2124 = vsel %vm461, %v2123, -inf
        %2125 = vmax.xlane.f32.xlu0 %v2124
        %v2126 = vpop.xlane.xlu0 %2125
        %vm2127 = vcmp.eq.f32.partialorder %v1932, %v2126
        %vm2128 = vmand %vm2122, %vm2127
        %v2129 = vsel %vm2128, %v391, 16.0
        %v2130 = vsel %vm461, %v2129, inf
        %2131 = vmin.xlane.f32.xlu0 %v2130
        %v2132 = vpop.xlane.xlu0 %2131
        %vm2133 = vcmp.eq.f32.partialorder %v391, %v2132
        %v2134 = vsel %vm2133, 1, 0
        %v2135 = vcvt.s32.f32 %v2134
        %v2136 = vsub.f32 %v2117, %v2135
        %v2137 = vmul.f32 %v2135, %v760
        %v2138 = vmul.f32 %v2135, %v761
        %v2139 = vadd.f32 %v2120, %v2137
        %v2140 = vadd.f32 %v2121, %v2138
        %vm2141 = vcmp.gt.f32.partialorder %v2136, 0.0
        %v2142 = vsel %vm2141, %v1932, -inf
        %v2143 = vsel %vm461, %v2142, -inf
        %2144 = vmax.xlane.f32.xlu0 %v2143
        %v2145 = vpop.xlane.xlu0 %2144
        %vm2146 = vcmp.eq.f32.partialorder %v1932, %v2145
        %vm2147 = vmand %vm2141, %vm2146
        %v2148 = vsel %vm2147, %v391, 16.0
        %v2149 = vsel %vm461, %v2148, inf
        %2150 = vmin.xlane.f32.xlu0 %v2149
        %v2151 = vpop.xlane.xlu0 %2150
        %vm2152 = vcmp.eq.f32.partialorder %v391, %v2151
        %v2153 = vsel %vm2152, 1, 0
        %v2154 = vcvt.s32.f32 %v2153
        %v2155 = vsub.f32 %v2136, %v2154
        %v2156 = vmul.f32 %v2154, %v785
        %v2157 = vmul.f32 %v2154, %v786
        %v2158 = vadd.f32 %v2139, %v2156
        %v2159 = vadd.f32 %v2140, %v2157
        %vm2160 = vcmp.gt.f32.partialorder %v2155, 0.0
        %v2161 = vsel %vm2160, %v1932, -inf
        %v2162 = vsel %vm461, %v2161, -inf
        %2163 = vmax.xlane.f32.xlu0 %v2162
        %v2164 = vpop.xlane.xlu0 %2163
        %vm2165 = vcmp.eq.f32.partialorder %v1932, %v2164
        %vm2166 = vmand %vm2160, %vm2165
        %v2167 = vsel %vm2166, %v391, 16.0
        %v2168 = vsel %vm461, %v2167, inf
        %2169 = vmin.xlane.f32.xlu0 %v2168
        %v2170 = vpop.xlane.xlu0 %2169
        %vm2171 = vcmp.eq.f32.partialorder %v391, %v2170
        %v2172 = vsel %vm2171, 1, 0
        %v2173 = vcvt.s32.f32 %v2172
        %v2174 = vsub.f32 %v2155, %v2173
        %v2175 = vmul.f32 %v2173, %v810
        %v2176 = vmul.f32 %v2173, %v811
        %v2177 = vadd.f32 %v2158, %v2175
        %v2178 = vadd.f32 %v2159, %v2176
        %vm2179 = vcmp.gt.f32.partialorder %v2174, 0.0
        %v2180 = vsel %vm2179, %v1932, -inf
        %v2181 = vsel %vm461, %v2180, -inf
        %2182 = vmax.xlane.f32.xlu0 %v2181
        %v2183 = vpop.xlane.xlu0 %2182
        %vm2184 = vcmp.eq.f32.partialorder %v1932, %v2183
        %vm2185 = vmand %vm2179, %vm2184
        %v2186 = vsel %vm2185, %v391, 16.0
        %v2187 = vsel %vm461, %v2186, inf
        %2188 = vmin.xlane.f32.xlu0 %v2187
        %v2189 = vpop.xlane.xlu0 %2188
        %vm2190 = vcmp.eq.f32.partialorder %v391, %v2189
        %v2191 = vsel %vm2190, 1, 0
        %v2192 = vcvt.s32.f32 %v2191
        %v2193 = vsub.f32 %v2174, %v2192
        %v2194 = vmul.f32 %v2192, %v835
        %v2195 = vmul.f32 %v2192, %v836
        %v2196 = vadd.f32 %v2177, %v2194
        %v2197 = vadd.f32 %v2178, %v2195
        %vm2198 = vcmp.gt.f32.partialorder %v2193, 0.0
        %v2199 = vsel %vm2198, %v1932, -inf
        %v2200 = vsel %vm461, %v2199, -inf
        %2201 = vmax.xlane.f32.xlu0 %v2200
        %v2202 = vpop.xlane.xlu0 %2201
        %vm2203 = vcmp.eq.f32.partialorder %v1932, %v2202
        %vm2204 = vmand %vm2198, %vm2203
        %v2205 = vsel %vm2204, %v391, 16.0
        %v2206 = vsel %vm461, %v2205, inf
        %2207 = vmin.xlane.f32.xlu0 %v2206
        %v2208 = vpop.xlane.xlu0 %2207
        %vm2209 = vcmp.eq.f32.partialorder %v391, %v2208
        %v2210 = vsel %vm2209, 1, 0
        %v2211 = vcvt.s32.f32 %v2210
        %v2212 = vmul.f32 %v2211, %v859
        %v2213 = vmul.f32 %v2211, %v860
        %v2214 = vadd.f32 %v2196, %v2212
        %v2215 = vadd.f32 %v2197, %v2213
        %v2217 = vsel %vm461, %v2214, 0
        %v2220 = vsel %vm461, %v2215, 0
        %2222 = vmatprep.subr.mxu0 0.0
        %2223 = vmatpush1.msra.mxu0 0.0
        %2224 = vmatprep.subr.mxu0 0.0
        %2225 = vmatpush1.msra.mxu0 0.0
        %2226 = vmatprep.subr.mxu0 0.0
        %2227 = vmatpush1.msra.mxu0 0.0
        %2228 = vmatprep.subr.mxu0 0.0
        %2229 = vmatpush1.msra.mxu0 0.0
        %2230 = vmatprep.subr.mxu0 0.0
        %2231 = vmatpush1.msra.mxu0 0.0
        %2232 = vmatprep.subr.mxu0 0.0
        %2233 = vmatpush1.msra.mxu0 0.0
        %2234 = vmatprep.subr.mxu0 0.0
        %2235 = vmatpush1.msra.mxu0 0.0
        %2236 = vmatprep.subr.mxu0 0.0
        %2237 = vmatpush1.msra.mxu0 0.0
        %2238 = vmatprep.subr.mxu0 0.0
        %2239 = vmatpush1.msra.mxu0 0.0
        %2240 = vmatprep.subr.mxu0 0.0
        %2241 = vmatpush1.msra.mxu0 0.0
        %2242 = vmatprep.subr.mxu0 0.0
        %2243 = vmatpush1.msra.mxu0 0.0
        %2244 = vmatprep.subr.mxu0 0.0
        %2245 = vmatpush1.msra.mxu0 0.0
        %2246 = vmatprep.subr.mxu0 0.0
        %2247 = vmatpush1.msra.mxu0 0.0
        %2248 = vmatprep.subr.mxu0 0.0
        %2249 = vmatpush1.msra.mxu0 0.0
        %2250 = vmatprep.subr.mxu0 0.0
        %2251 = vmatpush1.msra.mxu0 %v1899
        %2252 = vmatprep.subr.mxu0 0.0
        %2253 = vmatpush1.msra.mxu0 %v1896
        %2254 = vmatprep.subr.mxu0 0.0
        %2255 = vmatpush2.msra.mxu0 0.0
        %2256 = vmatprep.subr.mxu0 0.0
        %2257 = vmatpush2.msra.mxu0 0.0
        %2258 = vmatprep.subr.mxu0 0.0
        %2259 = vmatpush2.msra.mxu0 0.0
        %2260 = vmatprep.subr.mxu0 0.0
        %2261 = vmatpush2.msra.mxu0 0.0
        %2262 = vmatprep.subr.mxu0 0.0
        %2263 = vmatpush2.msra.mxu0 0.0
        %2264 = vmatprep.subr.mxu0 0.0
        %2265 = vmatpush2.msra.mxu0 0.0
        %2266 = vmatprep.subr.mxu0 0.0
        %2267 = vmatpush2.msra.mxu0 0.0
        %2268 = vmatprep.subr.mxu0 0.0
        %2269 = vmatpush2.msra.mxu0 0.0
        %2270 = vmatprep.subr.mxu0 0.0
        %2271 = vmatpush2.msra.mxu0 0.0
        %2272 = vmatprep.subr.mxu0 0.0
        %2273 = vmatpush2.msra.mxu0 0.0
        %2274 = vmatprep.subr.mxu0 0.0
        %2275 = vmatpush2.msra.mxu0 0.0
        %2276 = vmatprep.subr.mxu0 0.0
        %2277 = vmatpush2.msra.mxu0 0.0
        %2278 = vmatprep.subr.mxu0 0.0
        %2279 = vmatpush2.msra.mxu0 0.0
        %2280 = vmatprep.subr.mxu0 0.0
        %2281 = vmatpush2.msra.mxu0 0.0
        %2282 = vmatprep.subr.mxu0 0.0
        %2283 = vmatpush2.msra.mxu0 0.0
        %2284 = vmatprep.subr.mxu0 0.0
        %2285 = vmatpush2.msra.mxu0 0.0
        %2286 = vmatprep.mubr.f32.mxu0 0.0
        %2287 = vmatmul.mubr.f32.gmra.mxu0 %v2217
        %v2288 = vpop.f32.mrf.mxu0
        %v2289 = vadd.f32 0.0, %v2288
        %v2290 = vpop.f32.mrf.mxu0
        %2291 = vmatprep.mubr.f32.mxu0 0.0
        %2292 = vmatmul.mubr.f32.gmra.mxu0 %v2220
        %v2293 = vpop.f32.mrf.mxu0
        %v2294 = vadd.f32 0.0, %v2293
        %v2295 = vpop.f32.mrf.mxu0
        %2296 = vdwg.mxu0
        %v2297 = vmul.f32 %v2214, %v391
        %v2298 = vmul.f32 %v2215, %v391
        %v2299 = vsel %vm461, %v2297, 0.0
        %2300 = vadd.xlane.f32.xlu0 %v2299
        %v2301 = vpop.xlane.xlu0 %2300
        %v2302 = vsel %vm951, %v2298, 0.0
        %2303 = vadd.xlane.f32.xlu0 %v2302
        %v2304 = vpop.xlane.xlu0 %2303
        %vm2305 = vcmp.gt.f32.partialorder %v391, %v2301
        %vm2306 = vcmp.gt.f32.partialorder %v391, %v2304
        %v2307 = vmul.f32 %v2289, 0.17677669
        %v2308 = vmul.f32 %v2294, 0.17677669
        %v2309 = vsel %vm2305, -inf, %v2307
        %v2310 = vsel %vm2306, -inf, %v2308
        %v2311 = vsel %vm461, %v2309, -inf
        %2312 = vmax.xlane.f32.xlu0 %v2311
        %v2313 = vpop.xlane.xlu0 %2312
        %v2314 = vsel %vm951, %v2310, -inf
        %2315 = vmax.xlane.f32.xlu0 %v2314
        %v2316 = vpop.xlane.xlu0 %2315
        %v2317 = vsub.f32 %v2309, %v2313
        %v2318 = vsub.f32 %v2310, %v2316
        %v2319 = vmul.f32 %v2317, 1.442695
        %v2320 = vpow.pop %v2319
        %v2321 = vmul.f32 %v2318, 1.442695
        %v2322 = vpow.pop %v2321
        %v2323 = vsel %vm461, %v2320, 0.0
        %2324 = vadd.xlane.f32.xlu0 %v2323
        %v2325 = vpop.xlane.xlu0 %2324
        %v2326 = vsel %vm951, %v2322, 0.0
        %2327 = vadd.xlane.f32.xlu0 %v2326
        %v2328 = vpop.xlane.xlu0 %2327
        %v2329 = vrcp.pop %v2325
        %v2330 = vrcp.pop %v2328
        %v2331 = vmul.f32 %v2320, %v2329
        %v2332 = vmul.f32 %v2322, %v2330
        %v2333 = vpack.c.bf16 %v2332, %v2331
        %2334 = vrot.lane.b32.xlu0 %v988, 64
        %v2335 = vpop.permute.xlu0 %2334
        %v2338 = vsel %vm461, %v2333, 0
        %2340 = vmatprep.subr.bf16.mxu0 0
        %2341 = vmatpush1.bf16.msra.mxu0 0
        %2342 = vmatprep.subr.bf16.mxu0 0
        %2343 = vmatpush1.bf16.msra.mxu0 0
        %2344 = vmatprep.subr.bf16.mxu0 0
        %2345 = vmatpush1.bf16.msra.mxu0 0
        %2346 = vmatprep.subr.bf16.mxu0 0
        %2347 = vmatpush1.bf16.msra.mxu0 0
        %2348 = vmatprep.subr.bf16.mxu0 0
        %2349 = vmatpush1.bf16.msra.mxu0 0
        %2350 = vmatprep.subr.bf16.mxu0 0
        %2351 = vmatpush1.bf16.msra.mxu0 0
        %2352 = vmatprep.subr.bf16.mxu0 0
        %2353 = vmatpush1.bf16.msra.mxu0 0
        %2354 = vmatprep.subr.bf16.mxu0 0
        %2355 = vmatpush1.bf16.msra.mxu0 %v2335
        %2356 = vmatprep.subr.bf16.mxu0 0
        %2357 = vmatpush2.bf16.msra.mxu0 0
        %2358 = vmatprep.subr.bf16.mxu0 0
        %2359 = vmatpush2.bf16.msra.mxu0 0
        %2360 = vmatprep.subr.bf16.mxu0 0
        %2361 = vmatpush2.bf16.msra.mxu0 0
        %2362 = vmatprep.subr.bf16.mxu0 0
        %2363 = vmatpush2.bf16.msra.mxu0 0
        %2364 = vmatprep.subr.bf16.mxu0 0
        %2365 = vmatpush2.bf16.msra.mxu0 0
        %2366 = vmatprep.subr.bf16.mxu0 0
        %2367 = vmatpush2.bf16.msra.mxu0 0
        %2368 = vmatprep.subr.bf16.mxu0 0
        %2369 = vmatpush2.bf16.msra.mxu0 0
        %2370 = vmatprep.subr.bf16.mxu0 0
        %2371 = vmatpush2.bf16.msra.mxu0 0
        %2372 = vmatprep.mubr.bf16.mxu0 0
        %2373 = vmatmul.mubr.bf16.gmra.mxu0 %v2338
        %v2374 = vpop.f32.mrf.mxu0
        %v2375 = vadd.f32 0.0, %v2374
        %v2376 = vpop.f32.mrf.mxu0
        %v2377 = vpop.f32.mrf.mxu0
        %v2378 = vadd.f32 0.0, %v2377
        %v2379 = vpop.f32.mrf.mxu0
        %2380 = vdwg.mxu0
        %v2381 = vsel %vm411, %v2375, 1.0
        %v2382 = vsel %vm411, %v2378, 1.0
        %2383 = vxpose.xlu0.b32.start [1/16] %v2214, 128
        %2384 = vxpose.xlu0.b32.cont [2/16] %v2215, 128
        %2385 = vxpose.xlu0.b32.cont [3/16] 0.0, 128
        %2386 = vxpose.xlu0.b32.cont [4/16] 0.0, 128
        %2387 = vxpose.xlu0.b32.cont [5/16] 0.0, 128
        %2388 = vxpose.xlu0.b32.cont [6/16] 0.0, 128
        %2389 = vxpose.xlu0.b32.cont [7/16] 0.0, 128
        %2390 = vxpose.xlu0.b32.cont [8/16] 0.0, 128
        %2391 = vxpose.xlu0.b32.cont [9/16] 0.0, 128
        %2392 = vxpose.xlu0.b32.cont [10/16] 0.0, 128
        %2393 = vxpose.xlu0.b32.cont [11/16] 0.0, 128
        %2394 = vxpose.xlu0.b32.cont [12/16] 0.0, 128
        %2395 = vxpose.xlu0.b32.cont [13/16] 0.0, 128
        %2396 = vxpose.xlu0.b32.cont [14/16] 0.0, 128
        %2397 = vxpose.xlu0.b32.cont [15/16] 0.0, 128
        %2398 = vxpose.xlu0.b32.end [16/16] 0.0, 128
        %v2399 = vpop.trf.xlu0
        %v2400 = vpop.trf.xlu0
        %v2401 = vpop.trf.xlu0
        %v2402 = vpop.trf.xlu0
        %v2403 = vpop.trf.xlu0
        %v2404 = vpop.trf.xlu0
        %v2405 = vpop.trf.xlu0
        %v2406 = vpop.trf.xlu0
        %v2407 = vpop.trf.xlu0
        %v2408 = vpop.trf.xlu0
        %v2409 = vpop.trf.xlu0
        %v2410 = vpop.trf.xlu0
        %v2411 = vpop.trf.xlu0
        %v2412 = vpop.trf.xlu0
        %v2413 = vpop.trf.xlu0
        %v2414 = vpop.trf.xlu0
        %v2416 = vsel %vm1068, %v2399, 0
        %v2419 = vsel %vm1068, %v2400, 0
        %v2422 = vsel %vm1075, %v2382, 0
        %2424 = vmatprep.subr.mxu0 0.0
        %2425 = vmatpush1.msra.mxu0 0.0
        %2426 = vmatprep.subr.mxu0 0.0
        %2427 = vmatpush1.msra.mxu0 0.0
        %2428 = vmatprep.subr.mxu0 0.0
        %2429 = vmatpush1.msra.mxu0 0.0
        %2430 = vmatprep.subr.mxu0 0.0
        %2431 = vmatpush1.msra.mxu0 0.0
        %2432 = vmatprep.subr.mxu0 0.0
        %2433 = vmatpush1.msra.mxu0 0.0
        %2434 = vmatprep.subr.mxu0 0.0
        %2435 = vmatpush1.msra.mxu0 0.0
        %2436 = vmatprep.subr.mxu0 0.0
        %2437 = vmatpush1.msra.mxu0 0.0
        %2438 = vmatprep.subr.mxu0 0.0
        %2439 = vmatpush1.msra.mxu0 0.0
        %2440 = vmatprep.subr.mxu0 0.0
        %2441 = vmatpush1.msra.mxu0 0.0
        %2442 = vmatprep.subr.mxu0 0.0
        %2443 = vmatpush1.msra.mxu0 0.0
        %2444 = vmatprep.subr.mxu0 0.0
        %2445 = vmatpush1.msra.mxu0 0.0
        %2446 = vmatprep.subr.mxu0 0.0
        %2447 = vmatpush1.msra.mxu0 0.0
        %2448 = vmatprep.subr.mxu0 0.0
        %2449 = vmatpush1.msra.mxu0 0.0
        %2450 = vmatprep.subr.mxu0 0.0
        %2451 = vmatpush1.msra.mxu0 0.0
        %2452 = vmatprep.subr.mxu0 0.0
        %2453 = vmatpush1.msra.mxu0 %v2422
        %2454 = vmatprep.subr.mxu0 0.0
        %2455 = vmatpush1.msra.mxu0 %v2381
        %2456 = vmatprep.subr.mxu0 0.0
        %2457 = vmatpush2.msra.mxu0 0.0
        %2458 = vmatprep.subr.mxu0 0.0
        %2459 = vmatpush2.msra.mxu0 0.0
        %2460 = vmatprep.subr.mxu0 0.0
        %2461 = vmatpush2.msra.mxu0 0.0
        %2462 = vmatprep.subr.mxu0 0.0
        %2463 = vmatpush2.msra.mxu0 0.0
        %2464 = vmatprep.subr.mxu0 0.0
        %2465 = vmatpush2.msra.mxu0 0.0
        %2466 = vmatprep.subr.mxu0 0.0
        %2467 = vmatpush2.msra.mxu0 0.0
        %2468 = vmatprep.subr.mxu0 0.0
        %2469 = vmatpush2.msra.mxu0 0.0
        %2470 = vmatprep.subr.mxu0 0.0
        %2471 = vmatpush2.msra.mxu0 0.0
        %2472 = vmatprep.subr.mxu0 0.0
        %2473 = vmatpush2.msra.mxu0 0.0
        %2474 = vmatprep.subr.mxu0 0.0
        %2475 = vmatpush2.msra.mxu0 0.0
        %2476 = vmatprep.subr.mxu0 0.0
        %2477 = vmatpush2.msra.mxu0 0.0
        %2478 = vmatprep.subr.mxu0 0.0
        %2479 = vmatpush2.msra.mxu0 0.0
        %2480 = vmatprep.subr.mxu0 0.0
        %2481 = vmatpush2.msra.mxu0 0.0
        %2482 = vmatprep.subr.mxu0 0.0
        %2483 = vmatpush2.msra.mxu0 0.0
        %2484 = vmatprep.subr.mxu0 0.0
        %2485 = vmatpush2.msra.mxu0 0.0
        %2486 = vmatprep.subr.mxu0 0.0
        %2487 = vmatpush2.msra.mxu0 0.0
        %2488 = vmatprep.mubr.f32.mxu0 0.0
        %2489 = vmatmul.mubr.f32.gmra.mxu0 %v2416
        %v2490 = vpop.f32.mrf.mxu0
        %v2491 = vadd.f32 0.0, %v2490
        %v2492 = vpop.f32.mrf.mxu0
        %2493 = vmatprep.mubr.f32.mxu0 0.0
        %2494 = vmatmul.mubr.f32.gmra.mxu0 %v2419
        %v2495 = vpop.f32.mrf.mxu0
        %v2496 = vadd.f32 0.0, %v2495
        %v2497 = vpop.f32.mrf.mxu0
        %2498 = vdwg.mxu0
        %vm2499 = vcmp.gt.f32.partialorder %v2491, 0.5
        %vm2500 = vcmp.gt.f32.partialorder %v2496, 0.5
        %v2501 = vsel %vm2499, 1, 0
        %v2502 = vsel %vm2500, 1, 0
        %2503 = vset.pattern.permute.xlu0 32
        %2504 = vperm.xlu0 %2503, %v2501
        %v2505 = vpop.permute.xlu0 %2504
        %2506 = vset.pattern.permute.xlu0 32
        %2507 = vperm.xlu0 %2506, %v2502
        %v2508 = vpop.permute.xlu0 %2507
        %vm2509 = vcmp.eq.s32.totalorder %v2505, 1
        %vm2510 = vcmp.eq.s32.totalorder %v2508, 1
        %2511 = vrot.lane.b32.xlu0 %v381, 64
        %v2512 = vpop.permute.xlu0 %2511
        %2513 = vrot.lane.b32.xlu0 %v382, 64
        %v2514 = vpop.permute.xlu0 %2513
        %v2517 = vsel %vm2509, %v2491, %v2512
        %v2518 = vsel %vm2510, %v2496, %v2514
        %2521 = vrot.lane.b32.xlu0 %v2517, 64
        %v2522 = vpop.permute.xlu0 %2521
        %2523 = vrot.lane.b32.xlu0 %v2518, 64
        %v2524 = vpop.permute.xlu0 %2523
        %vm2527 = vcmask 785920
        %2528 = vst.msk [vmem:[%s373] sm:$0xff] %vm2527, %v2522
        %2529 = vst.msk [vmem:[%s373 + $0x8] sm:$0xff] %vm2527, %v2524
        %2530 = vrot.lane.b32.xlu0 %v405, 32
        %v2531 = vpop.permute.xlu0 %2530
        %2532 = vrot.lane.b32.xlu0 %v410, 32
        %v2533 = vpop.permute.xlu0 %2532
        %v2535 = vsel %vm411, %v2531, 0
        %v2538 = vsel %vm411, %v2533, 0
        %2540 = vmatprep.subr.bf16.mxu0 0
        %2541 = vmatpush1.bf16.xpose.msra.mxu0 0
        %2542 = vmatprep.subr.bf16.mxu0 0
        %2543 = vmatpush1.bf16.xpose.msra.mxu0 0
        %2544 = vmatprep.subr.bf16.mxu0 0
        %2545 = vmatpush1.bf16.xpose.msra.mxu0 0
        %2546 = vmatprep.subr.bf16.mxu0 0
        %2547 = vmatpush1.bf16.xpose.msra.mxu0 0
        %2548 = vmatprep.subr.bf16.mxu0 0
        %2549 = vmatpush1.bf16.xpose.msra.mxu0 0
        %2550 = vmatprep.subr.bf16.mxu0 0
        %2551 = vmatpush1.bf16.xpose.msra.mxu0 0
        %2552 = vmatprep.subr.bf16.mxu0 0
        %2553 = vmatpush1.bf16.xpose.msra.mxu0 0
        %2554 = vmatprep.subr.bf16.mxu0 0
        %2555 = vmatpush1.bf16.xpose.msra.mxu0 %v2538
        %2556 = vmatprep.subr.bf16.mxu0 0
        %2557 = vmatpush2.bf16.xpose.msra.mxu0 0
        %2558 = vmatprep.subr.bf16.mxu0 0
        %2559 = vmatpush2.bf16.xpose.msra.mxu0 0
        %2560 = vmatprep.subr.bf16.mxu0 0
        %2561 = vmatpush2.bf16.xpose.msra.mxu0 0
        %2562 = vmatprep.subr.bf16.mxu0 0
        %2563 = vmatpush2.bf16.xpose.msra.mxu0 0
        %2564 = vmatprep.subr.bf16.mxu0 0
        %2565 = vmatpush2.bf16.xpose.msra.mxu0 0
        %2566 = vmatprep.subr.bf16.mxu0 0
        %2567 = vmatpush2.bf16.xpose.msra.mxu0 0
        %2568 = vmatprep.subr.bf16.mxu0 0
        %2569 = vmatpush2.bf16.xpose.msra.mxu0 0
        %2570 = vmatprep.subr.bf16.mxu0 0
        %2571 = vmatpush2.bf16.xpose.msra.mxu0 0
        %2572 = vmatprep.mubr.bf16.mxu0 0
        %2573 = vmatmul.mubr.bf16.gmra.mxu0 %v2535
        %v2574 = vpop.f32.mrf.mxu0
        %v2575 = vadd.f32 0.0, %v2574
        %v2576 = vpop.f32.mrf.mxu0
        %v2577 = vpop.f32.mrf.mxu0
        %v2578 = vadd.f32 0.0, %v2577
        %v2579 = vpop.f32.mrf.mxu0
        %2580 = vdwg.mxu0
        %v2581 = vsel %vm387, %v2575, -inf
        %v2582 = vsel %vm388, %v2578, -inf
        %v2583 = vsel %vm461, %v2581, -inf
        %2584 = vmax.xlane.f32.xlu0 %v2583
        %v2585 = vpop.xlane.xlu0 %2584
        %v2586 = vsel %vm461, %v2582, -inf
        %2587 = vmax.xlane.f32.xlu0 %v2586
        %v2588 = vpop.xlane.xlu0 %2587
        %v2589 = vmul.f32 %v385, %v2575
        %v2590 = vmul.f32 %v386, %v2578
        %v2591 = vsel %vm461, %v2589, 0.0
        %2592 = vadd.xlane.f32.xlu0 %v2591
        %v2593 = vpop.xlane.xlu0 %2592
        %v2594 = vsel %vm461, %v2590, 0.0
        %2595 = vadd.xlane.f32.xlu0 %v2594
        %v2596 = vpop.xlane.xlu0 %2595
        %v2597 = vmul.f32 %v2593, 0.0625
        %v2598 = vmul.f32 %v2596, 0.0625
        %v2599 = vsub.f32 %v2585, %v2597
        %v2600 = vsub.f32 %v2588, %v2598
        %v2601 = vmul.f32 %v399, %v2599
        %v2602 = vmul.f32 %v400, %v2600
        %v2603 = vsel %vm461, %v2601, 0.0
        %v2604 = vsel %vm461, %v2602, 0.0
        %v2605 = vadd.f32 %v2603, %v2604
        %v2606 = vrot.slane %v2605, 4
        %v2607 = vadd.f32 %v2605, %v2606
        %v2608 = vrot.slane %v2607, 2
        %v2609 = vadd.f32 %v2607, %v2608
        %v2610 = vrot.slane %v2609, 1
        %v2611 = vadd.f32 %v2609, %v2610
        %v2612 = vsel %vm491, %v2611, -inf
        %v2613 = vsel %vm461, %v2612, -inf
        %2614 = vmax.xlane.f32.xlu0 %v2613
        %v2615 = vpop.xlane.xlu0 %2614
        %vm2616 = vcmp.eq.f32.partialorder %v2611, %v2615
        %vm2617 = vmand %vm491, %vm2616
        %v2618 = vsel %vm2617, %v391, 16.0
        %v2619 = vsel %vm461, %v2618, inf
        %2620 = vmin.xlane.f32.xlu0 %v2619
        %v2621 = vpop.xlane.xlu0 %2620
        %vm2622 = vcmp.eq.f32.partialorder %v391, %v2621
        %v2623 = vsel %vm2622, 1, 0
        %v2624 = vcvt.s32.f32 %v2623
        %v2625 = vsub.f32 1.0, %v2624
        %v2626 = vmul.f32 %v2624, %v510
        %v2627 = vmul.f32 %v2624, %v511
        %v2628 = vadd.f32 %v2626, 0.0
        %v2629 = vadd.f32 %v2627, 0.0
        %vm2630 = vcmp.gt.f32.partialorder %v2625, 0.0
        %v2631 = vsel %vm2630, %v2611, -inf
        %v2632 = vsel %vm461, %v2631, -inf
        %2633 = vmax.xlane.f32.xlu0 %v2632
        %v2634 = vpop.xlane.xlu0 %2633
        %vm2635 = vcmp.eq.f32.partialorder %v2611, %v2634
        %vm2636 = vmand %vm2630, %vm2635
        %v2637 = vsel %vm2636, %v391, 16.0
        %v2638 = vsel %vm461, %v2637, inf
        %2639 = vmin.xlane.f32.xlu0 %v2638
        %v2640 = vpop.xlane.xlu0 %2639
        %vm2641 = vcmp.eq.f32.partialorder %v391, %v2640
        %v2642 = vsel %vm2641, 1, 0
        %v2643 = vcvt.s32.f32 %v2642
        %v2644 = vsub.f32 %v2625, %v2643
        %v2645 = vmul.f32 %v2643, %v535
        %v2646 = vmul.f32 %v2643, %v536
        %v2647 = vadd.f32 %v2628, %v2645
        %v2648 = vadd.f32 %v2629, %v2646
        %vm2649 = vcmp.gt.f32.partialorder %v2644, 0.0
        %v2650 = vsel %vm2649, %v2611, -inf
        %v2651 = vsel %vm461, %v2650, -inf
        %2652 = vmax.xlane.f32.xlu0 %v2651
        %v2653 = vpop.xlane.xlu0 %2652
        %vm2654 = vcmp.eq.f32.partialorder %v2611, %v2653
        %vm2655 = vmand %vm2649, %vm2654
        %v2656 = vsel %vm2655, %v391, 16.0
        %v2657 = vsel %vm461, %v2656, inf
        %2658 = vmin.xlane.f32.xlu0 %v2657
        %v2659 = vpop.xlane.xlu0 %2658
        %vm2660 = vcmp.eq.f32.partialorder %v391, %v2659
        %v2661 = vsel %vm2660, 1, 0
        %v2662 = vcvt.s32.f32 %v2661
        %v2663 = vsub.f32 %v2644, %v2662
        %v2664 = vmul.f32 %v2662, %v560
        %v2665 = vmul.f32 %v2662, %v561
        %v2666 = vadd.f32 %v2647, %v2664
        %v2667 = vadd.f32 %v2648, %v2665
        %vm2668 = vcmp.gt.f32.partialorder %v2663, 0.0
        %v2669 = vsel %vm2668, %v2611, -inf
        %v2670 = vsel %vm461, %v2669, -inf
        %2671 = vmax.xlane.f32.xlu0 %v2670
        %v2672 = vpop.xlane.xlu0 %2671
        %vm2673 = vcmp.eq.f32.partialorder %v2611, %v2672
        %vm2674 = vmand %vm2668, %vm2673
        %v2675 = vsel %vm2674, %v391, 16.0
        %v2676 = vsel %vm461, %v2675, inf
        %2677 = vmin.xlane.f32.xlu0 %v2676
        %v2678 = vpop.xlane.xlu0 %2677
        %vm2679 = vcmp.eq.f32.partialorder %v391, %v2678
        %v2680 = vsel %vm2679, 1, 0
        %v2681 = vcvt.s32.f32 %v2680
        %v2682 = vsub.f32 %v2663, %v2681
        %v2683 = vmul.f32 %v2681, %v585
        %v2684 = vmul.f32 %v2681, %v586
        %v2685 = vadd.f32 %v2666, %v2683
        %v2686 = vadd.f32 %v2667, %v2684
        %vm2687 = vcmp.gt.f32.partialorder %v2682, 0.0
        %v2688 = vsel %vm2687, %v2611, -inf
        %v2689 = vsel %vm461, %v2688, -inf
        %2690 = vmax.xlane.f32.xlu0 %v2689
        %v2691 = vpop.xlane.xlu0 %2690
        %vm2692 = vcmp.eq.f32.partialorder %v2611, %v2691
        %vm2693 = vmand %vm2687, %vm2692
        %v2694 = vsel %vm2693, %v391, 16.0
        %v2695 = vsel %vm461, %v2694, inf
        %2696 = vmin.xlane.f32.xlu0 %v2695
        %v2697 = vpop.xlane.xlu0 %2696
        %vm2698 = vcmp.eq.f32.partialorder %v391, %v2697
        %v2699 = vsel %vm2698, 1, 0
        %v2700 = vcvt.s32.f32 %v2699
        %v2701 = vsub.f32 %v2682, %v2700
        %v2702 = vmul.f32 %v2700, %v610
        %v2703 = vmul.f32 %v2700, %v611
        %v2704 = vadd.f32 %v2685, %v2702
        %v2705 = vadd.f32 %v2686, %v2703
        %vm2706 = vcmp.gt.f32.partialorder %v2701, 0.0
        %v2707 = vsel %vm2706, %v2611, -inf
        %v2708 = vsel %vm461, %v2707, -inf
        %2709 = vmax.xlane.f32.xlu0 %v2708
        %v2710 = vpop.xlane.xlu0 %2709
        %vm2711 = vcmp.eq.f32.partialorder %v2611, %v2710
        %vm2712 = vmand %vm2706, %vm2711
        %v2713 = vsel %vm2712, %v391, 16.0
        %v2714 = vsel %vm461, %v2713, inf
        %2715 = vmin.xlane.f32.xlu0 %v2714
        %v2716 = vpop.xlane.xlu0 %2715
        %vm2717 = vcmp.eq.f32.partialorder %v391, %v2716
        %v2718 = vsel %vm2717, 1, 0
        %v2719 = vcvt.s32.f32 %v2718
        %v2720 = vsub.f32 %v2701, %v2719
        %v2721 = vmul.f32 %v2719, %v635
        %v2722 = vmul.f32 %v2719, %v636
        %v2723 = vadd.f32 %v2704, %v2721
        %v2724 = vadd.f32 %v2705, %v2722
        %vm2725 = vcmp.gt.f32.partialorder %v2720, 0.0
        %v2726 = vsel %vm2725, %v2611, -inf
        %v2727 = vsel %vm461, %v2726, -inf
        %2728 = vmax.xlane.f32.xlu0 %v2727
        %v2729 = vpop.xlane.xlu0 %2728
        %vm2730 = vcmp.eq.f32.partialorder %v2611, %v2729
        %vm2731 = vmand %vm2725, %vm2730
        %v2732 = vsel %vm2731, %v391, 16.0
        %v2733 = vsel %vm461, %v2732, inf
        %2734 = vmin.xlane.f32.xlu0 %v2733
        %v2735 = vpop.xlane.xlu0 %2734
        %vm2736 = vcmp.eq.f32.partialorder %v391, %v2735
        %v2737 = vsel %vm2736, 1, 0
        %v2738 = vcvt.s32.f32 %v2737
        %v2739 = vsub.f32 %v2720, %v2738
        %v2740 = vmul.f32 %v2738, %v660
        %v2741 = vmul.f32 %v2738, %v661
        %v2742 = vadd.f32 %v2723, %v2740
        %v2743 = vadd.f32 %v2724, %v2741
        %vm2744 = vcmp.gt.f32.partialorder %v2739, 0.0
        %v2745 = vsel %vm2744, %v2611, -inf
        %v2746 = vsel %vm461, %v2745, -inf
        %2747 = vmax.xlane.f32.xlu0 %v2746
        %v2748 = vpop.xlane.xlu0 %2747
        %vm2749 = vcmp.eq.f32.partialorder %v2611, %v2748
        %vm2750 = vmand %vm2744, %vm2749
        %v2751 = vsel %vm2750, %v391, 16.0
        %v2752 = vsel %vm461, %v2751, inf
        %2753 = vmin.xlane.f32.xlu0 %v2752
        %v2754 = vpop.xlane.xlu0 %2753
        %vm2755 = vcmp.eq.f32.partialorder %v391, %v2754
        %v2756 = vsel %vm2755, 1, 0
        %v2757 = vcvt.s32.f32 %v2756
        %v2758 = vsub.f32 %v2739, %v2757
        %v2759 = vmul.f32 %v2757, %v685
        %v2760 = vmul.f32 %v2757, %v686
        %v2761 = vadd.f32 %v2742, %v2759
        %v2762 = vadd.f32 %v2743, %v2760
        %vm2763 = vcmp.gt.f32.partialorder %v2758, 0.0
        %v2764 = vsel %vm2763, %v2611, -inf
        %v2765 = vsel %vm461, %v2764, -inf
        %2766 = vmax.xlane.f32.xlu0 %v2765
        %v2767 = vpop.xlane.xlu0 %2766
        %vm2768 = vcmp.eq.f32.partialorder %v2611, %v2767
        %vm2769 = vmand %vm2763, %vm2768
        %v2770 = vsel %vm2769, %v391, 16.0
        %v2771 = vsel %vm461, %v2770, inf
        %2772 = vmin.xlane.f32.xlu0 %v2771
        %v2773 = vpop.xlane.xlu0 %2772
        %vm2774 = vcmp.eq.f32.partialorder %v391, %v2773
        %v2775 = vsel %vm2774, 1, 0
        %v2776 = vcvt.s32.f32 %v2775
        %v2777 = vsub.f32 %v2758, %v2776
        %v2778 = vmul.f32 %v2776, %v710
        %v2779 = vmul.f32 %v2776, %v711
        %v2780 = vadd.f32 %v2761, %v2778
        %v2781 = vadd.f32 %v2762, %v2779
        %vm2782 = vcmp.gt.f32.partialorder %v2777, 0.0
        %v2783 = vsel %vm2782, %v2611, -inf
        %v2784 = vsel %vm461, %v2783, -inf
        %2785 = vmax.xlane.f32.xlu0 %v2784
        %v2786 = vpop.xlane.xlu0 %2785
        %vm2787 = vcmp.eq.f32.partialorder %v2611, %v2786
        %vm2788 = vmand %vm2782, %vm2787
        %v2789 = vsel %vm2788, %v391, 16.0
        %v2790 = vsel %vm461, %v2789, inf
        %2791 = vmin.xlane.f32.xlu0 %v2790
        %v2792 = vpop.xlane.xlu0 %2791
        %vm2793 = vcmp.eq.f32.partialorder %v391, %v2792
        %v2794 = vsel %vm2793, 1, 0
        %v2795 = vcvt.s32.f32 %v2794
        %v2796 = vsub.f32 %v2777, %v2795
        %v2797 = vmul.f32 %v2795, %v735
        %v2798 = vmul.f32 %v2795, %v736
        %v2799 = vadd.f32 %v2780, %v2797
        %v2800 = vadd.f32 %v2781, %v2798
        %vm2801 = vcmp.gt.f32.partialorder %v2796, 0.0
        %v2802 = vsel %vm2801, %v2611, -inf
        %v2803 = vsel %vm461, %v2802, -inf
        %2804 = vmax.xlane.f32.xlu0 %v2803
        %v2805 = vpop.xlane.xlu0 %2804
        %vm2806 = vcmp.eq.f32.partialorder %v2611, %v2805
        %vm2807 = vmand %vm2801, %vm2806
        %v2808 = vsel %vm2807, %v391, 16.0
        %v2809 = vsel %vm461, %v2808, inf
        %2810 = vmin.xlane.f32.xlu0 %v2809
        %v2811 = vpop.xlane.xlu0 %2810
        %vm2812 = vcmp.eq.f32.partialorder %v391, %v2811
        %v2813 = vsel %vm2812, 1, 0
        %v2814 = vcvt.s32.f32 %v2813
        %v2815 = vsub.f32 %v2796, %v2814
        %v2816 = vmul.f32 %v2814, %v760
        %v2817 = vmul.f32 %v2814, %v761
        %v2818 = vadd.f32 %v2799, %v2816
        %v2819 = vadd.f32 %v2800, %v2817
        %vm2820 = vcmp.gt.f32.partialorder %v2815, 0.0
        %v2821 = vsel %vm2820, %v2611, -inf
        %v2822 = vsel %vm461, %v2821, -inf
        %2823 = vmax.xlane.f32.xlu0 %v2822
        %v2824 = vpop.xlane.xlu0 %2823
        %vm2825 = vcmp.eq.f32.partialorder %v2611, %v2824
        %vm2826 = vmand %vm2820, %vm2825
        %v2827 = vsel %vm2826, %v391, 16.0
        %v2828 = vsel %vm461, %v2827, inf
        %2829 = vmin.xlane.f32.xlu0 %v2828
        %v2830 = vpop.xlane.xlu0 %2829
        %vm2831 = vcmp.eq.f32.partialorder %v391, %v2830
        %v2832 = vsel %vm2831, 1, 0
        %v2833 = vcvt.s32.f32 %v2832
        %v2834 = vsub.f32 %v2815, %v2833
        %v2835 = vmul.f32 %v2833, %v785
        %v2836 = vmul.f32 %v2833, %v786
        %v2837 = vadd.f32 %v2818, %v2835
        %v2838 = vadd.f32 %v2819, %v2836
        %vm2839 = vcmp.gt.f32.partialorder %v2834, 0.0
        %v2840 = vsel %vm2839, %v2611, -inf
        %v2841 = vsel %vm461, %v2840, -inf
        %2842 = vmax.xlane.f32.xlu0 %v2841
        %v2843 = vpop.xlane.xlu0 %2842
        %vm2844 = vcmp.eq.f32.partialorder %v2611, %v2843
        %vm2845 = vmand %vm2839, %vm2844
        %v2846 = vsel %vm2845, %v391, 16.0
        %v2847 = vsel %vm461, %v2846, inf
        %2848 = vmin.xlane.f32.xlu0 %v2847
        %v2849 = vpop.xlane.xlu0 %2848
        %vm2850 = vcmp.eq.f32.partialorder %v391, %v2849
        %v2851 = vsel %vm2850, 1, 0
        %v2852 = vcvt.s32.f32 %v2851
        %v2853 = vsub.f32 %v2834, %v2852
        %v2854 = vmul.f32 %v2852, %v810
        %v2855 = vmul.f32 %v2852, %v811
        %v2856 = vadd.f32 %v2837, %v2854
        %v2857 = vadd.f32 %v2838, %v2855
        %vm2858 = vcmp.gt.f32.partialorder %v2853, 0.0
        %v2859 = vsel %vm2858, %v2611, -inf
        %v2860 = vsel %vm461, %v2859, -inf
        %2861 = vmax.xlane.f32.xlu0 %v2860
        %v2862 = vpop.xlane.xlu0 %2861
        %vm2863 = vcmp.eq.f32.partialorder %v2611, %v2862
        %vm2864 = vmand %vm2858, %vm2863
        %v2865 = vsel %vm2864, %v391, 16.0
        %v2866 = vsel %vm461, %v2865, inf
        %2867 = vmin.xlane.f32.xlu0 %v2866
        %v2868 = vpop.xlane.xlu0 %2867
        %vm2869 = vcmp.eq.f32.partialorder %v391, %v2868
        %v2870 = vsel %vm2869, 1, 0
        %v2871 = vcvt.s32.f32 %v2870
        %v2872 = vsub.f32 %v2853, %v2871
        %v2873 = vmul.f32 %v2871, %v835
        %v2874 = vmul.f32 %v2871, %v836
        %v2875 = vadd.f32 %v2856, %v2873
        %v2876 = vadd.f32 %v2857, %v2874
        %vm2877 = vcmp.gt.f32.partialorder %v2872, 0.0
        %v2878 = vsel %vm2877, %v2611, -inf
        %v2879 = vsel %vm461, %v2878, -inf
        %2880 = vmax.xlane.f32.xlu0 %v2879
        %v2881 = vpop.xlane.xlu0 %2880
        %vm2882 = vcmp.eq.f32.partialorder %v2611, %v2881
        %vm2883 = vmand %vm2877, %vm2882
        %v2884 = vsel %vm2883, %v391, 16.0
        %v2885 = vsel %vm461, %v2884, inf
        %2886 = vmin.xlane.f32.xlu0 %v2885
        %v2887 = vpop.xlane.xlu0 %2886
        %vm2888 = vcmp.eq.f32.partialorder %v391, %v2887
        %v2889 = vsel %vm2888, 1, 0
        %v2890 = vcvt.s32.f32 %v2889
        %v2891 = vmul.f32 %v2890, %v859
        %v2892 = vmul.f32 %v2890, %v860
        %v2893 = vadd.f32 %v2875, %v2891
        %v2894 = vadd.f32 %v2876, %v2892
        %v2896 = vsel %vm461, %v2893, 0
        %v2899 = vsel %vm461, %v2894, 0
        %2901 = vmatprep.subr.mxu0 0.0
        %2902 = vmatpush1.msra.mxu0 0.0
        %2903 = vmatprep.subr.mxu0 0.0
        %2904 = vmatpush1.msra.mxu0 0.0
        %2905 = vmatprep.subr.mxu0 0.0
        %2906 = vmatpush1.msra.mxu0 0.0
        %2907 = vmatprep.subr.mxu0 0.0
        %2908 = vmatpush1.msra.mxu0 0.0
        %2909 = vmatprep.subr.mxu0 0.0
        %2910 = vmatpush1.msra.mxu0 0.0
        %2911 = vmatprep.subr.mxu0 0.0
        %2912 = vmatpush1.msra.mxu0 0.0
        %2913 = vmatprep.subr.mxu0 0.0
        %2914 = vmatpush1.msra.mxu0 0.0
        %2915 = vmatprep.subr.mxu0 0.0
        %2916 = vmatpush1.msra.mxu0 0.0
        %2917 = vmatprep.subr.mxu0 0.0
        %2918 = vmatpush1.msra.mxu0 0.0
        %2919 = vmatprep.subr.mxu0 0.0
        %2920 = vmatpush1.msra.mxu0 0.0
        %2921 = vmatprep.subr.mxu0 0.0
        %2922 = vmatpush1.msra.mxu0 0.0
        %2923 = vmatprep.subr.mxu0 0.0
        %2924 = vmatpush1.msra.mxu0 0.0
        %2925 = vmatprep.subr.mxu0 0.0
        %2926 = vmatpush1.msra.mxu0 0.0
        %2927 = vmatprep.subr.mxu0 0.0
        %2928 = vmatpush1.msra.mxu0 0.0
        %2929 = vmatprep.subr.mxu0 0.0
        %2930 = vmatpush1.msra.mxu0 %v2578
        %2931 = vmatprep.subr.mxu0 0.0
        %2932 = vmatpush1.msra.mxu0 %v2575
        %2933 = vmatprep.subr.mxu0 0.0
        %2934 = vmatpush2.msra.mxu0 0.0
        %2935 = vmatprep.subr.mxu0 0.0
        %2936 = vmatpush2.msra.mxu0 0.0
        %2937 = vmatprep.subr.mxu0 0.0
        %2938 = vmatpush2.msra.mxu0 0.0
        %2939 = vmatprep.subr.mxu0 0.0
        %2940 = vmatpush2.msra.mxu0 0.0
        %2941 = vmatprep.subr.mxu0 0.0
        %2942 = vmatpush2.msra.mxu0 0.0
        %2943 = vmatprep.subr.mxu0 0.0
        %2944 = vmatpush2.msra.mxu0 0.0
        %2945 = vmatprep.subr.mxu0 0.0
        %2946 = vmatpush2.msra.mxu0 0.0
        %2947 = vmatprep.subr.mxu0 0.0
        %2948 = vmatpush2.msra.mxu0 0.0
        %2949 = vmatprep.subr.mxu0 0.0
        %2950 = vmatpush2.msra.mxu0 0.0
        %2951 = vmatprep.subr.mxu0 0.0
        %2952 = vmatpush2.msra.mxu0 0.0
        %2953 = vmatprep.subr.mxu0 0.0
        %2954 = vmatpush2.msra.mxu0 0.0
        %2955 = vmatprep.subr.mxu0 0.0
        %2956 = vmatpush2.msra.mxu0 0.0
        %2957 = vmatprep.subr.mxu0 0.0
        %2958 = vmatpush2.msra.mxu0 0.0
        %2959 = vmatprep.subr.mxu0 0.0
        %2960 = vmatpush2.msra.mxu0 0.0
        %2961 = vmatprep.subr.mxu0 0.0
        %2962 = vmatpush2.msra.mxu0 0.0
        %2963 = vmatprep.subr.mxu0 0.0
        %2964 = vmatpush2.msra.mxu0 0.0
        %2965 = vmatprep.mubr.f32.mxu0 0.0
        %2966 = vmatmul.mubr.f32.gmra.mxu0 %v2896
        %v2967 = vpop.f32.mrf.mxu0
        %v2968 = vadd.f32 0.0, %v2967
        %v2969 = vpop.f32.mrf.mxu0
        %2970 = vmatprep.mubr.f32.mxu0 0.0
        %2971 = vmatmul.mubr.f32.gmra.mxu0 %v2899
        %v2972 = vpop.f32.mrf.mxu0
        %v2973 = vadd.f32 0.0, %v2972
        %v2974 = vpop.f32.mrf.mxu0
        %2975 = vdwg.mxu0
        %v2976 = vmul.f32 %v2893, %v391
        %v2977 = vmul.f32 %v2894, %v391
        %v2978 = vsel %vm461, %v2976, 0.0
        %2979 = vadd.xlane.f32.xlu0 %v2978
        %v2980 = vpop.xlane.xlu0 %2979
        %v2981 = vsel %vm951, %v2977, 0.0
        %2982 = vadd.xlane.f32.xlu0 %v2981
        %v2983 = vpop.xlane.xlu0 %2982
        %vm2984 = vcmp.gt.f32.partialorder %v391, %v2980
        %vm2985 = vcmp.gt.f32.partialorder %v391, %v2983
        %v2986 = vmul.f32 %v2968, 0.17677669
        %v2987 = vmul.f32 %v2973, 0.17677669
        %v2988 = vsel %vm2984, -inf, %v2986
        %v2989 = vsel %vm2985, -inf, %v2987
        %v2990 = vsel %vm461, %v2988, -inf
        %2991 = vmax.xlane.f32.xlu0 %v2990
        %v2992 = vpop.xlane.xlu0 %2991
        %v2993 = vsel %vm951, %v2989, -inf
        %2994 = vmax.xlane.f32.xlu0 %v2993
        %v2995 = vpop.xlane.xlu0 %2994
        %v2996 = vsub.f32 %v2988, %v2992
        %v2997 = vsub.f32 %v2989, %v2995
        %v2998 = vmul.f32 %v2996, 1.442695
        %v2999 = vpow.pop %v2998
        %v3000 = vmul.f32 %v2997, 1.442695
        %v3001 = vpow.pop %v3000
        %v3002 = vsel %vm461, %v2999, 0.0
        %3003 = vadd.xlane.f32.xlu0 %v3002
        %v3004 = vpop.xlane.xlu0 %3003
        %v3005 = vsel %vm951, %v3001, 0.0
        %3006 = vadd.xlane.f32.xlu0 %v3005
        %v3007 = vpop.xlane.xlu0 %3006
        %v3008 = vrcp.pop %v3004
        %v3009 = vrcp.pop %v3007
        %v3010 = vmul.f32 %v2999, %v3008
        %v3011 = vmul.f32 %v3001, %v3009
        %v3012 = vpack.c.bf16 %v3011, %v3010
        %3013 = vrot.lane.b32.xlu0 %v988, 32
        %v3014 = vpop.permute.xlu0 %3013
        %v3017 = vsel %vm461, %v3012, 0
        %3019 = vmatprep.subr.bf16.mxu0 0
        %3020 = vmatpush1.bf16.msra.mxu0 0
        %3021 = vmatprep.subr.bf16.mxu0 0
        %3022 = vmatpush1.bf16.msra.mxu0 0
        %3023 = vmatprep.subr.bf16.mxu0 0
        %3024 = vmatpush1.bf16.msra.mxu0 0
        %3025 = vmatprep.subr.bf16.mxu0 0
        %3026 = vmatpush1.bf16.msra.mxu0 0
        %3027 = vmatprep.subr.bf16.mxu0 0
        %3028 = vmatpush1.bf16.msra.mxu0 0
        %3029 = vmatprep.subr.bf16.mxu0 0
        %3030 = vmatpush1.bf16.msra.mxu0 0
        %3031 = vmatprep.subr.bf16.mxu0 0
        %3032 = vmatpush1.bf16.msra.mxu0 0
        %3033 = vmatprep.subr.bf16.mxu0 0
        %3034 = vmatpush1.bf16.msra.mxu0 %v3014
        %3035 = vmatprep.subr.bf16.mxu0 0
        %3036 = vmatpush2.bf16.msra.mxu0 0
        %3037 = vmatprep.subr.bf16.mxu0 0
        %3038 = vmatpush2.bf16.msra.mxu0 0
        %3039 = vmatprep.subr.bf16.mxu0 0
        %3040 = vmatpush2.bf16.msra.mxu0 0
        %3041 = vmatprep.subr.bf16.mxu0 0
        %3042 = vmatpush2.bf16.msra.mxu0 0
        %3043 = vmatprep.subr.bf16.mxu0 0
        %3044 = vmatpush2.bf16.msra.mxu0 0
        %3045 = vmatprep.subr.bf16.mxu0 0
        %3046 = vmatpush2.bf16.msra.mxu0 0
        %3047 = vmatprep.subr.bf16.mxu0 0
        %3048 = vmatpush2.bf16.msra.mxu0 0
        %3049 = vmatprep.subr.bf16.mxu0 0
        %3050 = vmatpush2.bf16.msra.mxu0 0
        %3051 = vmatprep.mubr.bf16.mxu0 0
        %3052 = vmatmul.mubr.bf16.gmra.mxu0 %v3017
        %v3053 = vpop.f32.mrf.mxu0
        %v3054 = vadd.f32 0.0, %v3053
        %v3055 = vpop.f32.mrf.mxu0
        %v3056 = vpop.f32.mrf.mxu0
        %v3057 = vadd.f32 0.0, %v3056
        %v3058 = vpop.f32.mrf.mxu0
        %3059 = vdwg.mxu0
        %v3060 = vsel %vm411, %v3054, 1.0
        %v3061 = vsel %vm411, %v3057, 1.0
        %3062 = vxpose.xlu0.b32.start [1/16] %v2893, 128
        %3063 = vxpose.xlu0.b32.cont [2/16] %v2894, 128
        %3064 = vxpose.xlu0.b32.cont [3/16] 0.0, 128
        %3065 = vxpose.xlu0.b32.cont [4/16] 0.0, 128
        %3066 = vxpose.xlu0.b32.cont [5/16] 0.0, 128
        %3067 = vxpose.xlu0.b32.cont [6/16] 0.0, 128
        %3068 = vxpose.xlu0.b32.cont [7/16] 0.0, 128
        %3069 = vxpose.xlu0.b32.cont [8/16] 0.0, 128
        %3070 = vxpose.xlu0.b32.cont [9/16] 0.0, 128
        %3071 = vxpose.xlu0.b32.cont [10/16] 0.0, 128
        %3072 = vxpose.xlu0.b32.cont [11/16] 0.0, 128
        %3073 = vxpose.xlu0.b32.cont [12/16] 0.0, 128
        %3074 = vxpose.xlu0.b32.cont [13/16] 0.0, 128
        %3075 = vxpose.xlu0.b32.cont [14/16] 0.0, 128
        %3076 = vxpose.xlu0.b32.cont [15/16] 0.0, 128
        %3077 = vxpose.xlu0.b32.end [16/16] 0.0, 128
        %v3078 = vpop.trf.xlu0
        %v3079 = vpop.trf.xlu0
        %v3080 = vpop.trf.xlu0
        %v3081 = vpop.trf.xlu0
        %v3082 = vpop.trf.xlu0
        %v3083 = vpop.trf.xlu0
        %v3084 = vpop.trf.xlu0
        %v3085 = vpop.trf.xlu0
        %v3086 = vpop.trf.xlu0
        %v3087 = vpop.trf.xlu0
        %v3088 = vpop.trf.xlu0
        %v3089 = vpop.trf.xlu0
        %v3090 = vpop.trf.xlu0
        %v3091 = vpop.trf.xlu0
        %v3092 = vpop.trf.xlu0
        %v3093 = vpop.trf.xlu0
        %v3095 = vsel %vm1068, %v3078, 0
        %v3098 = vsel %vm1068, %v3079, 0
        %v3101 = vsel %vm1075, %v3061, 0
        %3103 = vmatprep.subr.mxu0 0.0
        %3104 = vmatpush1.msra.mxu0 0.0
        %3105 = vmatprep.subr.mxu0 0.0
        %3106 = vmatpush1.msra.mxu0 0.0
        %3107 = vmatprep.subr.mxu0 0.0
        %3108 = vmatpush1.msra.mxu0 0.0
        %3109 = vmatprep.subr.mxu0 0.0
        %3110 = vmatpush1.msra.mxu0 0.0
        %3111 = vmatprep.subr.mxu0 0.0
        %3112 = vmatpush1.msra.mxu0 0.0
        %3113 = vmatprep.subr.mxu0 0.0
        %3114 = vmatpush1.msra.mxu0 0.0
        %3115 = vmatprep.subr.mxu0 0.0
        %3116 = vmatpush1.msra.mxu0 0.0
        %3117 = vmatprep.subr.mxu0 0.0
        %3118 = vmatpush1.msra.mxu0 0.0
        %3119 = vmatprep.subr.mxu0 0.0
        %3120 = vmatpush1.msra.mxu0 0.0
        %3121 = vmatprep.subr.mxu0 0.0
        %3122 = vmatpush1.msra.mxu0 0.0
        %3123 = vmatprep.subr.mxu0 0.0
        %3124 = vmatpush1.msra.mxu0 0.0
        %3125 = vmatprep.subr.mxu0 0.0
        %3126 = vmatpush1.msra.mxu0 0.0
        %3127 = vmatprep.subr.mxu0 0.0
        %3128 = vmatpush1.msra.mxu0 0.0
        %3129 = vmatprep.subr.mxu0 0.0
        %3130 = vmatpush1.msra.mxu0 0.0
        %3131 = vmatprep.subr.mxu0 0.0
        %3132 = vmatpush1.msra.mxu0 %v3101
        %3133 = vmatprep.subr.mxu0 0.0
        %3134 = vmatpush1.msra.mxu0 %v3060
        %3135 = vmatprep.subr.mxu0 0.0
        %3136 = vmatpush2.msra.mxu0 0.0
        %3137 = vmatprep.subr.mxu0 0.0
        %3138 = vmatpush2.msra.mxu0 0.0
        %3139 = vmatprep.subr.mxu0 0.0
        %3140 = vmatpush2.msra.mxu0 0.0
        %3141 = vmatprep.subr.mxu0 0.0
        %3142 = vmatpush2.msra.mxu0 0.0
        %3143 = vmatprep.subr.mxu0 0.0
        %3144 = vmatpush2.msra.mxu0 0.0
        %3145 = vmatprep.subr.mxu0 0.0
        %3146 = vmatpush2.msra.mxu0 0.0
        %3147 = vmatprep.subr.mxu0 0.0
        %3148 = vmatpush2.msra.mxu0 0.0
        %3149 = vmatprep.subr.mxu0 0.0
        %3150 = vmatpush2.msra.mxu0 0.0
        %3151 = vmatprep.subr.mxu0 0.0
        %3152 = vmatpush2.msra.mxu0 0.0
        %3153 = vmatprep.subr.mxu0 0.0
        %3154 = vmatpush2.msra.mxu0 0.0
        %3155 = vmatprep.subr.mxu0 0.0
        %3156 = vmatpush2.msra.mxu0 0.0
        %3157 = vmatprep.subr.mxu0 0.0
        %3158 = vmatpush2.msra.mxu0 0.0
        %3159 = vmatprep.subr.mxu0 0.0
        %3160 = vmatpush2.msra.mxu0 0.0
        %3161 = vmatprep.subr.mxu0 0.0
        %3162 = vmatpush2.msra.mxu0 0.0
        %3163 = vmatprep.subr.mxu0 0.0
        %3164 = vmatpush2.msra.mxu0 0.0
        %3165 = vmatprep.subr.mxu0 0.0
        %3166 = vmatpush2.msra.mxu0 0.0
        %3167 = vmatprep.mubr.f32.mxu0 0.0
        %3168 = vmatmul.mubr.f32.gmra.mxu0 %v3095
        %v3169 = vpop.f32.mrf.mxu0
        %v3170 = vadd.f32 0.0, %v3169
        %v3171 = vpop.f32.mrf.mxu0
        %3172 = vmatprep.mubr.f32.mxu0 0.0
        %3173 = vmatmul.mubr.f32.gmra.mxu0 %v3098
        %v3174 = vpop.f32.mrf.mxu0
        %v3175 = vadd.f32 0.0, %v3174
        %v3176 = vpop.f32.mrf.mxu0
        %3177 = vdwg.mxu0
        %vm3178 = vcmp.gt.f32.partialorder %v3170, 0.5
        %vm3179 = vcmp.gt.f32.partialorder %v3175, 0.5
        %v3180 = vsel %vm3178, 1, 0
        %v3181 = vsel %vm3179, 1, 0
        %3182 = vset.pattern.permute.xlu0 32
        %3183 = vperm.xlu0 %3182, %v3180
        %v3184 = vpop.permute.xlu0 %3183
        %3185 = vset.pattern.permute.xlu0 32
        %3186 = vperm.xlu0 %3185, %v3181
        %v3187 = vpop.permute.xlu0 %3186
        %vm3188 = vcmp.eq.s32.totalorder %v3184, 1
        %vm3189 = vcmp.eq.s32.totalorder %v3187, 1
        %3190 = vrot.lane.b32.xlu0 %v381, 32
        %v3191 = vpop.permute.xlu0 %3190
        %3192 = vrot.lane.b32.xlu0 %v382, 32
        %v3193 = vpop.permute.xlu0 %3192
        %v3196 = vsel %vm3188, %v3170, %v3191
        %v3197 = vsel %vm3189, %v3175, %v3193
        %3200 = vrot.lane.b32.xlu0 %v3196, 96
        %v3201 = vpop.permute.xlu0 %3200
        %3202 = vrot.lane.b32.xlu0 %v3197, 96
        %v3203 = vpop.permute.xlu0 %3202
        %vm3206 = vcmask 1048320
        %3207 = vst.msk [vmem:[%s373] sm:$0xff] %vm3206, %v3201
        %3208 = vst.msk [vmem:[%s373 + $0x8] sm:$0xff] %vm3206, %v3203
        %s3209 = sand.u32 %s161, 1
        %s3210 = scalar_lea.sflag [#allocation4], %s3209
        %s3211 = sand.u32 %s161, 1
        %s3212 = smul.addr %s3211, 16
        %s3213 = scalar_lea.vmem [#allocation11], %s3212
        // Predicated region
        $region61: #{tpu_custom_call.1} parent=39 // pred_check
          %p3214 = pneg %p171
        $region62: #{tpu_custom_call.1} parent=39 // pred_check_branch
          %3216 = sbr.rel (%p3214) target = $region64
        $region63: #{tpu_custom_call.1} parent=39 // pred_region
          %s3218 = ssub.s32 256, 256
          %3219 = vsyncadd %s3210, %s3218
          %s3220 = smul.addr %s28, 2
          %s3221 = smul.addr %s3220, 128
          %s3222 = scalar_lea.hbm %s5, %s3221
          %s3223 = sshll.u32 %s3213, 4
          %s3224 = int_to_ptr.vmem [resolvable:$true] %s3223
          %3229 = dma.vmem_to_hbm [thread:$0]  %s3224, 256, %s3222, %s3210, 128, 128, 8
        $region64: #{tpu_custom_call.1} parent=39 // pred_fallthru
          _
      $region40: #{tpu_custom_call.1} parent=5 // pred_fallthru
        _
      %p3230 = scmp.le.s32.totalorder 2, %s23
      // Predicated region
      $region65: #{tpu_custom_call.1} parent=5 // pred_check
        %p3231 = pneg %p3230
      $region66: #{tpu_custom_call.1} parent=5 // pred_check_branch
        %3233 = sbr.rel (%p3231) target = $region68
      $region67: #{tpu_custom_call.1} parent=5 // pred_region
        %s3234 = ssub.s32 %s23, 2
        // Predicated region
        $region69: #{tpu_custom_call.1} parent=67 // pred_check
          %p3235 = pneg %p177
        $region70: #{tpu_custom_call.1} parent=67 // pred_check_branch
          %3237 = sbr.rel (%p3235) target = $region72
        $region71: #{tpu_custom_call.1} parent=67 // pred_region
          %s3238 = sand.u32 %s162, 1
          %s3239 = scalar_lea.sflag [#allocation4], %s3238
          %s3240 = sand.u32 %s162, 1
          %s3241 = smul.addr %s3240, 16
          %s3242 = scalar_lea.vmem [#allocation11], %s3241
          %3243 = dma.done %s3239, 256
        $region72: #{tpu_custom_call.1} parent=67 // pred_fallthru
          _
      $region68: #{tpu_custom_call.1} parent=5 // pred_fallthru
        _
    $region6: #{tpu_custom_call.1} parent=1 // loop_footer
      %s27 = sadd.s32 1, %s23
    $region7: #{tpu_custom_call.1} parent=1 // loop_footer_branch
      %22 = sbr.rel target = $region3
    $region8: #{tpu_custom_call.1} parent=1 // loop_exit
      _
    %3244 = vsyncpa [#allocation3], 1
    %s3245 = scalar_lea.sflag [#allocation3], 1
    %3246 = vsyncpa %s3245, 1
    %3247 = vsyncpa [#allocation6], 1
    %s3248 = scalar_lea.sflag [#allocation6], 1
    %3249 = vsyncpa %s3248, 1
    %3250 = vsyncpa [#allocation9], 1
    %s3251 = scalar_lea.sflag [#allocation9], 1
    %3252 = vsyncpa %s3251, 1
    %3253 = vsyncpa [#allocation4], 1
    %s3254 = scalar_lea.sflag [#allocation4], 1
    %3255 = vsyncpa %s3254, 1

</llo_original>
